<compile_context>
chip_gen: v7x
topology: tpu7x:2x2x1
jax: 0.10.0
libtpu: 0.0.40
codegen_flags: <defaults>
</compile_context>

<pallas_src>
import functools

import jax
import jax.numpy as jnp
from jax.experimental import pallas as pl
from jax.experimental.pallas import tpu as pltpu

BN_EPS = 1e-5
FC_PAD = 128  # lane-dense padded width of the fc output


# ---------------------------------------------------------------------------
# Fused kernel: conv1 + bn1 + relu + (layer1..layer4) + avgpool + fc
# ---------------------------------------------------------------------------
def resnet1d_fused_kernel(
    x_ref,                          # (N, 1)   f32  tokens of the single input channel
    pmat_ref,                       # (B, N)   bf16 avgpool matrix (hoisted to wrapper)
    c1w_ref, c1gb_ref,              # (1, 64)  f32, (2, 64) f32
    l1t_ref, l1s_ref, l1gb_ref,     # (64,64) bf16, (5,64,64) bf16, (12,64) f32
    l2t_hbm, l2s_hbm, l2gb_ref,     # l2 conv weights in HBM (ANY), gb in VMEM
    l3t_hbm, l3s_hbm, l3gb_ref,     # l3 conv weights in HBM (ANY), gb in VMEM
    l4t_hbm, l4s_hbm, l4gb_ref,     # l4 conv weights in HBM (ANY), gb in VMEM
    fcw_ref, fcb_ref,               # (512,128) bf16 (zero-padded), (1,128) f32
    o_ref,                          # (B, 128) f32
    # scratch:
    l2t_v, l2s_v, l3t_v, l3s_v, l4t_v, l4s_v,   # VMEM landing buffers
    sem,                            # DMA semaphores, shape (6,)
):
    # ---- Start HBM->VMEM prefetch of layer2/3/4 conv weights immediately so
    # ---- the DMAs overlap conv1 / layer1 / layer2 compute.
    copies = (
        pltpu.make_async_copy(l2t_hbm, l2t_v, sem.at[0]),
        pltpu.make_async_copy(l2s_hbm, l2s_v, sem.at[1]),
        pltpu.make_async_copy(l3t_hbm, l3t_v, sem.at[2]),
        pltpu.make_async_copy(l3s_hbm, l3s_v, sem.at[3]),
        pltpu.make_async_copy(l4t_hbm, l4t_v, sem.at[4]),
        pltpu.make_async_copy(l4s_hbm, l4s_v, sem.at[5]),
    )
    for cp in copies:
        cp.start()

    def bn(y, gb_ref, idx, relu):
        # Train-mode batch stats over axis 0 (= batch*length), biased variance,
        # folded into a per-channel affine: y*scale + shift.
        gamma = gb_ref[2 * idx:2 * idx + 1, :]       # (1, C)
        beta = gb_ref[2 * idx + 1:2 * idx + 2, :]    # (1, C)
        mean = jnp.mean(y, axis=0, keepdims=True)
        var = jnp.mean(y * y, axis=0, keepdims=True) - mean * mean
        var = jnp.maximum(var, 0.0)                  # guard f32 cancellation
        scale = gamma * jax.lax.rsqrt(var + BN_EPS)  # (1, C)
        shift = beta - mean * scale                  # (1, C)
        y = y * scale + shift
        if relu:
            y = jnp.maximum(y, 0.0)
        return y

    def conv(h, w_bf16):
        # 1x1 Conv1d == matmul over channels; bf16 MXU inputs, f32 accumulate.
        return jnp.dot(h.astype(jnp.bfloat16), w_bf16,
                       preferred_element_type=jnp.float32)

    def layer_group(h, t_ref, s_ref, gb_ref, blocks):
        # Block = [conv, bn, relu, conv, bn] (no residual add, per the spec).
        # Conv 0 of the group changes channel count (transition weight);
        # the remaining 2*blocks-1 convs are (Cout, Cout), stacked in s_ref.
        h = conv(h, t_ref[...])
        h = bn(h, gb_ref, 0, relu=True)
        for j in range(2 * blocks - 1):
            conv_idx = j + 1
            h = conv(h, s_ref[j])
            h = bn(h, gb_ref, conv_idx, relu=(conv_idx % 2 == 0))
        return h

    # conv1 (Cin = 1): VPU broadcast outer product instead of a padded MXU matmul.
    h = x_ref[...] * c1w_ref[...]                    # (N,1)*(1,64) -> (N,64) f32
    h = bn(h, c1gb_ref, 0, relu=True)
    # maxpool(kernel_size=1, stride=1) == identity

    h = layer_group(h, l1t_ref, l1s_ref, l1gb_ref, 3)      # -> (N, 64)

    copies[0].wait()
    copies[1].wait()
    h = layer_group(h, l2t_v, l2s_v, l2gb_ref, 4)           # -> (N, 128)

    copies[2].wait()
    copies[3].wait()
    h = layer_group(h, l3t_v, l3s_v, l3gb_ref, 6)            # -> (N, 256)

    copies[4].wait()
    copies[5].wait()
    h = layer_group(h, l4t_v, l4s_v, l4gb_ref, 3)            # -> (N, 512)

    # AdaptiveAvgPool1d(1): pooling matmul with the hoisted (B, N) bf16 matrix.
    pooled = jnp.dot(pmat_ref[...], h.astype(jnp.bfloat16),
                     preferred_element_type=jnp.float32)     # (B, 512)

    # fc: output padded to 128 lanes (unmasked lane-dense store); sliced outside.
    logits = jnp.dot(pooled.astype(jnp.bfloat16), fcw_ref[...],
                     preferred_element_type=jnp.float32)
    o_ref[...] = (logits + fcb_ref[...]).astype(o_ref.dtype)


# ---------------------------------------------------------------------------
# Wrapper
# ---------------------------------------------------------------------------
@functools.partial(jax.jit, static_argnames=("num_classes",))
def resnet1d_forward(params, x_ncl, num_classes=4):
    b, cin, l = x_ncl.shape                           # (B, 1, L), PyTorch NCL
    n = b * l
    x_tok = jnp.transpose(x_ncl, (0, 2, 1)).reshape(n, cin).astype(jnp.float32)

    # AdaptiveAvgPool1d(1) as a (B, N) segment-mean matrix, built once here.
    pmat = (jnp.repeat(jnp.eye(b, dtype=jnp.float32), l, axis=1)
            / float(l)).astype(jnp.bfloat16)

    inputs = (
        x_tok, pmat,
        params["c1_w"], params["c1_gb"],
        params["l1_tw"], params["l1_sw"], params["l1_gb"],
        params["l2_tw"], params["l2_sw"], params["l2_gb"],
        params["l3_tw"], params["l3_sw"], params["l3_gb"],
        params["l4_tw"], params["l4_sw"], params["l4_gb"],
        params["fc_w"], params["fc_b"],
    )

    vmem = pl.BlockSpec(memory_space=pltpu.MemorySpace.VMEM)
    hbm = pl.BlockSpec(memory_space=pl.ANY)   # manual DMA inside the kernel
    in_specs = [
        vmem, vmem,          # x, pmat
        vmem, vmem,          # conv1 w, gb
        vmem, vmem, vmem,    # layer1 t, s, gb
        hbm, hbm, vmem,      # layer2 t, s (HBM), gb
        hbm, hbm, vmem,      # layer3 t, s (HBM), gb
        hbm, hbm, vmem,      # layer4 t, s (HBM), gb
        vmem, vmem,          # fc w, b
    ]

    out_padded = pl.pallas_call(
        resnet1d_fused_kernel,
        out_shape=jax.ShapeDtypeStruct((b, FC_PAD), jnp.float32),
        in_specs=in_specs,
        out_specs=pl.BlockSpec(memory_space=pltpu.MemorySpace.VMEM),
        scratch_shapes=[
            pltpu.VMEM((64, 128), jnp.bfloat16),       # layer2 transition
            pltpu.VMEM((7, 128, 128), jnp.bfloat16),   # layer2 stacked convs
            pltpu.VMEM((128, 256), jnp.bfloat16),      # layer3 transition
            pltpu.VMEM((11, 256, 256), jnp.bfloat16),  # layer3 stacked convs
            pltpu.VMEM((256, 512), jnp.bfloat16),      # layer4 transition
            pltpu.VMEM((5, 512, 512), jnp.bfloat16),   # layer4 stacked convs
            pltpu.SemaphoreType.DMA((6,)),
        ],
        compiler_params=pltpu.CompilerParams(
            vmem_limit_bytes=32 * 1024 * 1024,   # ~5.5 MB resident; safe on v5e/v6e/v7x
        ),
    )(*inputs)
    return out_padded[:, :num_classes]


# ---------------------------------------------------------------------------
# Parameters (deterministic, synthetic) — already packed / stacked / bf16
# ---------------------------------------------------------------------------
def init_params(key, num_classes=4):
    keys = iter(jax.random.split(key, 128))

    def conv_w(cin, cout, dtype=jnp.bfloat16):
        w = jax.random.normal(next(keys), (cin, cout), jnp.float32) / jnp.sqrt(
            float(cin))
        return w.astype(dtype)

    def gb_rows(c):
        gamma = 1.0 + 0.1 * jax.random.normal(next(keys), (1, c), jnp.float32)
        beta = 0.1 * jax.random.normal(next(keys), (1, c), jnp.float32)
        return gamma, beta

    def make_group(cin, cout, blocks):
        tw = conv_w(cin, cout)                                        # block0.conv1
        sw = jnp.stack([conv_w(cout, cout) for _ in range(2 * blocks - 1)])
        gbs = []
        for _ in range(2 * blocks):
            g, be = gb_rows(cout)
            gbs += [g, be]
        gb = jnp.concatenate(gbs, axis=0)                             # (4*blocks, cout)
        return tw, sw, gb

    params = {}
    params["c1_w"] = conv_w(1, 64, dtype=jnp.float32)                 # VPU broadcast
    g, be = gb_rows(64)
    params["c1_gb"] = jnp.concatenate([g, be], axis=0)                # (2, 64)
    params["l1_tw"], params["l1_sw"], params["l1_gb"] = make_group(64, 64, 3)
    params["l2_tw"], params["l2_sw"], params["l2_gb"] = make_group(64, 128, 4)
    params["l3_tw"], params["l3_sw"], params["l3_gb"] = make_group(128, 256, 6)
    params["l4_tw"], params["l4_sw"], params["l4_gb"] = make_group(256, 512, 3)

    fc_w = jax.random.normal(next(keys), (512, num_classes), jnp.float32) / jnp.sqrt(
        512.0)
    fc_b = 0.1 * jax.random.normal(next(keys), (1, num_classes), jnp.float32)
    params["fc_w"] = jnp.pad(
        fc_w, ((0, 0), (0, FC_PAD - num_classes))).astype(jnp.bfloat16)
    params["fc_b"] = jnp.pad(fc_b, ((0, 0), (0, FC_PAD - num_classes)))
    return params


if __name__ == "__main__":
    key = jax.random.PRNGKey(0)
    kx, kp = jax.random.split(key)

    B, L, NUM_CLASSES = 2, 16, 4
    x = jax.random.normal(kx, (B, 1, L), jnp.float32)
    params = init_params(kp, num_classes=NUM_CLASSES)

    out = resnet1d_forward(params, x, num_classes=NUM_CLASSES)
    out = jax.block_until_ready(out)

    assert out.shape == (B, NUM_CLASSES), out.shape
    assert jnp.all(jnp.isfinite(out))
    print("KERNEL_OK")
</pallas_src>

<mosaic_0001>
module attributes {stable_mosaic.version = 11 : i64} {
  func.func @resnet1d_fused_kernel(%arg0: memref<32x1xf32, #tpu.memory_space<vmem>>, %arg1: memref<2x32xbf16, #tpu.memory_space<vmem>>, %arg2: memref<1x64xf32, #tpu.memory_space<vmem>>, %arg3: memref<2x64xf32, #tpu.memory_space<vmem>>, %arg4: memref<64x64xbf16, #tpu.memory_space<vmem>>, %arg5: memref<5x64x64xbf16, #tpu.memory_space<vmem>>, %arg6: memref<12x64xf32, #tpu.memory_space<vmem>>, %arg7: memref<64x128xbf16, #tpu.memory_space<any>>, %arg8: memref<7x128x128xbf16, #tpu.memory_space<any>>, %arg9: memref<16x128xf32, #tpu.memory_space<vmem>>, %arg10: memref<128x256xbf16, #tpu.memory_space<any>>, %arg11: memref<11x256x256xbf16, #tpu.memory_space<any>>, %arg12: memref<24x256xf32, #tpu.memory_space<vmem>>, %arg13: memref<256x512xbf16, #tpu.memory_space<any>>, %arg14: memref<5x512x512xbf16, #tpu.memory_space<any>>, %arg15: memref<12x512xf32, #tpu.memory_space<vmem>>, %arg16: memref<512x128xbf16, #tpu.memory_space<vmem>>, %arg17: memref<1x128xf32, #tpu.memory_space<vmem>>, %arg18: memref<2x128xf32, #tpu.memory_space<vmem>>, %arg19: memref<64x128xbf16, #tpu.memory_space<vmem>>, %arg20: memref<7x128x128xbf16, #tpu.memory_space<vmem>>, %arg21: memref<128x256xbf16, #tpu.memory_space<vmem>>, %arg22: memref<11x256x256xbf16, #tpu.memory_space<vmem>>, %arg23: memref<256x512xbf16, #tpu.memory_space<vmem>>, %arg24: memref<5x512x512xbf16, #tpu.memory_space<vmem>>, %arg25: memref<6x!tpu.dma_semaphore, #tpu.memory_space<semaphore_mem>>) attributes {dimension_semantics = [], scalar_prefetch = 0 : i64, scratch_operands = 7 : i64, tpu.core_type = #tpu.core_type<tc>} {
    %c0_i32 = arith.constant 0 : i32
    %0 = tpu.memref_slice %arg25[%c0_i32] : memref<6x!tpu.dma_semaphore, #tpu.memory_space<semaphore_mem>> -> memref<1x!tpu.dma_semaphore, #tpu.memory_space<semaphore_mem>>
    %1 = tpu.memref_squeeze %0 : memref<1x!tpu.dma_semaphore, #tpu.memory_space<semaphore_mem>> -> memref<!tpu.dma_semaphore, #tpu.memory_space<semaphore_mem>>
    tpu.enqueue_dma source(%arg7 : memref<64x128xbf16, #tpu.memory_space<any>>) target(%arg19 : memref<64x128xbf16, #tpu.memory_space<vmem>>) target_semaphore(%1 : memref<!tpu.dma_semaphore, #tpu.memory_space<semaphore_mem>>)
    %c1_i32 = arith.constant 1 : i32
    %2 = tpu.memref_slice %arg25[%c1_i32] : memref<6x!tpu.dma_semaphore, #tpu.memory_space<semaphore_mem>> -> memref<1x!tpu.dma_semaphore, #tpu.memory_space<semaphore_mem>>
    %3 = tpu.memref_squeeze %2 : memref<1x!tpu.dma_semaphore, #tpu.memory_space<semaphore_mem>> -> memref<!tpu.dma_semaphore, #tpu.memory_space<semaphore_mem>>
    tpu.enqueue_dma source(%arg8 : memref<7x128x128xbf16, #tpu.memory_space<any>>) target(%arg20 : memref<7x128x128xbf16, #tpu.memory_space<vmem>>) target_semaphore(%3 : memref<!tpu.dma_semaphore, #tpu.memory_space<semaphore_mem>>)
    %c2_i32 = arith.constant 2 : i32
    %4 = tpu.memref_slice %arg25[%c2_i32] : memref<6x!tpu.dma_semaphore, #tpu.memory_space<semaphore_mem>> -> memref<1x!tpu.dma_semaphore, #tpu.memory_space<semaphore_mem>>
    %5 = tpu.memref_squeeze %4 : memref<1x!tpu.dma_semaphore, #tpu.memory_space<semaphore_mem>> -> memref<!tpu.dma_semaphore, #tpu.memory_space<semaphore_mem>>
    tpu.enqueue_dma source(%arg10 : memref<128x256xbf16, #tpu.memory_space<any>>) target(%arg21 : memref<128x256xbf16, #tpu.memory_space<vmem>>) target_semaphore(%5 : memref<!tpu.dma_semaphore, #tpu.memory_space<semaphore_mem>>)
    %c3_i32 = arith.constant 3 : i32
    %6 = tpu.memref_slice %arg25[%c3_i32] : memref<6x!tpu.dma_semaphore, #tpu.memory_space<semaphore_mem>> -> memref<1x!tpu.dma_semaphore, #tpu.memory_space<semaphore_mem>>
    %7 = tpu.memref_squeeze %6 : memref<1x!tpu.dma_semaphore, #tpu.memory_space<semaphore_mem>> -> memref<!tpu.dma_semaphore, #tpu.memory_space<semaphore_mem>>
    tpu.enqueue_dma source(%arg11 : memref<11x256x256xbf16, #tpu.memory_space<any>>) target(%arg22 : memref<11x256x256xbf16, #tpu.memory_space<vmem>>) target_semaphore(%7 : memref<!tpu.dma_semaphore, #tpu.memory_space<semaphore_mem>>)
    %c4_i32 = arith.constant 4 : i32
    %8 = tpu.memref_slice %arg25[%c4_i32] : memref<6x!tpu.dma_semaphore, #tpu.memory_space<semaphore_mem>> -> memref<1x!tpu.dma_semaphore, #tpu.memory_space<semaphore_mem>>
    %9 = tpu.memref_squeeze %8 : memref<1x!tpu.dma_semaphore, #tpu.memory_space<semaphore_mem>> -> memref<!tpu.dma_semaphore, #tpu.memory_space<semaphore_mem>>
    tpu.enqueue_dma source(%arg13 : memref<256x512xbf16, #tpu.memory_space<any>>) target(%arg23 : memref<256x512xbf16, #tpu.memory_space<vmem>>) target_semaphore(%9 : memref<!tpu.dma_semaphore, #tpu.memory_space<semaphore_mem>>)
    %c5_i32 = arith.constant 5 : i32
    %10 = tpu.memref_slice %arg25[%c5_i32] : memref<6x!tpu.dma_semaphore, #tpu.memory_space<semaphore_mem>> -> memref<1x!tpu.dma_semaphore, #tpu.memory_space<semaphore_mem>>
    %11 = tpu.memref_squeeze %10 : memref<1x!tpu.dma_semaphore, #tpu.memory_space<semaphore_mem>> -> memref<!tpu.dma_semaphore, #tpu.memory_space<semaphore_mem>>
    tpu.enqueue_dma source(%arg14 : memref<5x512x512xbf16, #tpu.memory_space<any>>) target(%arg24 : memref<5x512x512xbf16, #tpu.memory_space<vmem>>) target_semaphore(%11 : memref<!tpu.dma_semaphore, #tpu.memory_space<semaphore_mem>>)
    %c0 = arith.constant 0 : index
    %c0_0 = arith.constant 0 : index
    %12 = vector.load %arg0[%c0, %c0_0] : memref<32x1xf32, #tpu.memory_space<vmem>>, vector<32x1xf32>
    %c0_1 = arith.constant 0 : index
    %c0_2 = arith.constant 0 : index
    %13 = vector.load %arg2[%c0_1, %c0_2] : memref<1x64xf32, #tpu.memory_space<vmem>>, vector<1x64xf32>
    %14 = vector.broadcast %12 : vector<32x1xf32> to vector<32x64xf32>
    %15 = vector.broadcast %13 : vector<1x64xf32> to vector<32x64xf32>
    %16 = arith.mulf %14, %15 : vector<32x64xf32>
    %c0_3 = arith.constant 0 : index
    %c0_4 = arith.constant 0 : index
    %17 = vector.load %arg3[%c0_3, %c0_4] : memref<2x64xf32, #tpu.memory_space<vmem>>, vector<1x64xf32>
    %c1 = arith.constant 1 : index
    %c0_5 = arith.constant 0 : index
    %18 = vector.load %arg3[%c1, %c0_5] : memref<2x64xf32, #tpu.memory_space<vmem>>, vector<1x64xf32>
    %cst = arith.constant dense<0.000000e+00> : vector<64xf32>
    %19 = vector.multi_reduction <add>, %16, %cst [0] : vector<32x64xf32> to vector<64xf32>
    %20 = vector.shape_cast %19 : vector<64xf32> to vector<1x64xf32>
    %cst_6 = arith.constant 3.200000e+01 : f32
    %21 = vector.broadcast %cst_6 : f32 to vector<1x64xf32>
    %22 = arith.divf %20, %21 : vector<1x64xf32>
    %23 = arith.mulf %16, %16 : vector<32x64xf32>
    %cst_7 = arith.constant dense<0.000000e+00> : vector<64xf32>
    %24 = vector.multi_reduction <add>, %23, %cst_7 [0] : vector<32x64xf32> to vector<64xf32>
    %25 = vector.shape_cast %24 : vector<64xf32> to vector<1x64xf32>
    %cst_8 = arith.constant 3.200000e+01 : f32
    %26 = vector.broadcast %cst_8 : f32 to vector<1x64xf32>
    %27 = arith.divf %25, %26 : vector<1x64xf32>
    %28 = arith.mulf %22, %22 : vector<1x64xf32>
    %29 = arith.subf %27, %28 : vector<1x64xf32>
    %cst_9 = arith.constant 0.000000e+00 : f32
    %30 = vector.broadcast %cst_9 : f32 to vector<1x64xf32>
    %31 = arith.maximumf %29, %30 : vector<1x64xf32>
    %cst_10 = arith.constant 9.99999974E-6 : f32
    %32 = vector.broadcast %cst_10 : f32 to vector<1x64xf32>
    %33 = arith.addf %31, %32 : vector<1x64xf32>
    %34 = math.rsqrt %33 : vector<1x64xf32>
    %35 = arith.mulf %17, %34 : vector<1x64xf32>
    %36 = arith.mulf %22, %35 : vector<1x64xf32>
    %37 = arith.subf %18, %36 : vector<1x64xf32>
    %38 = vector.broadcast %35 : vector<1x64xf32> to vector<32x64xf32>
    %39 = arith.mulf %16, %38 : vector<32x64xf32>
    %40 = vector.broadcast %37 : vector<1x64xf32> to vector<32x64xf32>
    %41 = arith.addf %39, %40 : vector<32x64xf32>
    %cst_11 = arith.constant 0.000000e+00 : f32
    %42 = vector.broadcast %cst_11 : f32 to vector<32x64xf32>
    %43 = arith.maximumf %41, %42 : vector<32x64xf32>
    %c0_12 = arith.constant 0 : index
    %c0_13 = arith.constant 0 : index
    %44 = vector.load %arg4[%c0_12, %c0_13] : memref<64x64xbf16, #tpu.memory_space<vmem>>, vector<64x64xbf16>
    %45 = arith.truncf %43 : vector<32x64xf32> to vector<32x64xbf16>
    %cst_14 = arith.constant dense<0.000000e+00> : vector<32x64xf32>
    %46 = tpu.matmul %45, %44, %cst_14 {dimension_numbers = #tpu.dot_dimension_numbers<[1], [0], [0], [1], [0, 0, 1, 1], [], []>} : vector<32x64xbf16>, vector<64x64xbf16>, vector<32x64xf32> -> vector<32x64xf32>
    %c0_15 = arith.constant 0 : index
    %c0_16 = arith.constant 0 : index
    %47 = vector.load %arg6[%c0_15, %c0_16] : memref<12x64xf32, #tpu.memory_space<vmem>>, vector<1x64xf32>
    %c1_17 = arith.constant 1 : index
    %c0_18 = arith.constant 0 : index
    %48 = vector.load %arg6[%c1_17, %c0_18] : memref<12x64xf32, #tpu.memory_space<vmem>>, vector<1x64xf32>
    %cst_19 = arith.constant dense<0.000000e+00> : vector<64xf32>
    %49 = vector.multi_reduction <add>, %46, %cst_19 [0] : vector<32x64xf32> to vector<64xf32>
    %50 = vector.shape_cast %49 : vector<64xf32> to vector<1x64xf32>
    %cst_20 = arith.constant 3.200000e+01 : f32
    %51 = vector.broadcast %cst_20 : f32 to vector<1x64xf32>
    %52 = arith.divf %50, %51 : vector<1x64xf32>
    %53 = arith.mulf %46, %46 : vector<32x64xf32>
    %cst_21 = arith.constant dense<0.000000e+00> : vector<64xf32>
    %54 = vector.multi_reduction <add>, %53, %cst_21 [0] : vector<32x64xf32> to vector<64xf32>
    %55 = vector.shape_cast %54 : vector<64xf32> to vector<1x64xf32>
    %cst_22 = arith.constant 3.200000e+01 : f32
    %56 = vector.broadcast %cst_22 : f32 to vector<1x64xf32>
    %57 = arith.divf %55, %56 : vector<1x64xf32>
    %58 = arith.mulf %52, %52 : vector<1x64xf32>
    %59 = arith.subf %57, %58 : vector<1x64xf32>
    %cst_23 = arith.constant 0.000000e+00 : f32
    %60 = vector.broadcast %cst_23 : f32 to vector<1x64xf32>
    %61 = arith.maximumf %59, %60 : vector<1x64xf32>
    %cst_24 = arith.constant 9.99999974E-6 : f32
    %62 = vector.broadcast %cst_24 : f32 to vector<1x64xf32>
    %63 = arith.addf %61, %62 : vector<1x64xf32>
    %64 = math.rsqrt %63 : vector<1x64xf32>
    %65 = arith.mulf %47, %64 : vector<1x64xf32>
    %66 = arith.mulf %52, %65 : vector<1x64xf32>
    %67 = arith.subf %48, %66 : vector<1x64xf32>
    %68 = vector.broadcast %65 : vector<1x64xf32> to vector<32x64xf32>
    %69 = arith.mulf %46, %68 : vector<32x64xf32>
    %70 = vector.broadcast %67 : vector<1x64xf32> to vector<32x64xf32>
    %71 = arith.addf %69, %70 : vector<32x64xf32>
    %cst_25 = arith.constant 0.000000e+00 : f32
    %72 = vector.broadcast %cst_25 : f32 to vector<32x64xf32>
    %73 = arith.maximumf %71, %72 : vector<32x64xf32>
    %c0_26 = arith.constant 0 : index
    %c0_27 = arith.constant 0 : index
    %c0_28 = arith.constant 0 : index
    %74 = vector.load %arg5[%c0_26, %c0_27, %c0_28] : memref<5x64x64xbf16, #tpu.memory_space<vmem>>, vector<1x64x64xbf16>
    %75 = vector.shape_cast %74 : vector<1x64x64xbf16> to vector<64x64xbf16>
    %76 = arith.truncf %73 : vector<32x64xf32> to vector<32x64xbf16>
    %cst_29 = arith.constant dense<0.000000e+00> : vector<32x64xf32>
    %77 = tpu.matmul %76, %75, %cst_29 {dimension_numbers = #tpu.dot_dimension_numbers<[1], [0], [0], [1], [0, 0, 1, 1], [], []>} : vector<32x64xbf16>, vector<64x64xbf16>, vector<32x64xf32> -> vector<32x64xf32>
    %c2 = arith.constant 2 : index
    %c0_30 = arith.constant 0 : index
    %78 = vector.load %arg6[%c2, %c0_30] : memref<12x64xf32, #tpu.memory_space<vmem>>, vector<1x64xf32>
    %c3 = arith.constant 3 : index
    %c0_31 = arith.constant 0 : index
    %79 = vector.load %arg6[%c3, %c0_31] : memref<12x64xf32, #tpu.memory_space<vmem>>, vector<1x64xf32>
    %cst_32 = arith.constant dense<0.000000e+00> : vector<64xf32>
    %80 = vector.multi_reduction <add>, %77, %cst_32 [0] : vector<32x64xf32> to vector<64xf32>
    %81 = vector.shape_cast %80 : vector<64xf32> to vector<1x64xf32>
    %cst_33 = arith.constant 3.200000e+01 : f32
    %82 = vector.broadcast %cst_33 : f32 to vector<1x64xf32>
    %83 = arith.divf %81, %82 : vector<1x64xf32>
    %84 = arith.mulf %77, %77 : vector<32x64xf32>
    %cst_34 = arith.constant dense<0.000000e+00> : vector<64xf32>
    %85 = vector.multi_reduction <add>, %84, %cst_34 [0] : vector<32x64xf32> to vector<64xf32>
    %86 = vector.shape_cast %85 : vector<64xf32> to vector<1x64xf32>
    %cst_35 = arith.constant 3.200000e+01 : f32
    %87 = vector.broadcast %cst_35 : f32 to vector<1x64xf32>
    %88 = arith.divf %86, %87 : vector<1x64xf32>
    %89 = arith.mulf %83, %83 : vector<1x64xf32>
    %90 = arith.subf %88, %89 : vector<1x64xf32>
    %cst_36 = arith.constant 0.000000e+00 : f32
    %91 = vector.broadcast %cst_36 : f32 to vector<1x64xf32>
    %92 = arith.maximumf %90, %91 : vector<1x64xf32>
    %cst_37 = arith.constant 9.99999974E-6 : f32
    %93 = vector.broadcast %cst_37 : f32 to vector<1x64xf32>
    %94 = arith.addf %92, %93 : vector<1x64xf32>
    %95 = math.rsqrt %94 : vector<1x64xf32>
    %96 = arith.mulf %78, %95 : vector<1x64xf32>
    %97 = arith.mulf %83, %96 : vector<1x64xf32>
    %98 = arith.subf %79, %97 : vector<1x64xf32>
    %99 = vector.broadcast %96 : vector<1x64xf32> to vector<32x64xf32>
    %100 = arith.mulf %77, %99 : vector<32x64xf32>
    %101 = vector.broadcast %98 : vector<1x64xf32> to vector<32x64xf32>
    %102 = arith.addf %100, %101 : vector<32x64xf32>
    %c1_38 = arith.constant 1 : index
    %c0_39 = arith.constant 0 : index
    %c0_40 = arith.constant 0 : index
    %103 = vector.load %arg5[%c1_38, %c0_39, %c0_40] : memref<5x64x64xbf16, #tpu.memory_space<vmem>>, vector<1x64x64xbf16>
    %104 = vector.shape_cast %103 : vector<1x64x64xbf16> to vector<64x64xbf16>
    %105 = arith.truncf %102 : vector<32x64xf32> to vector<32x64xbf16>
    %cst_41 = arith.constant dense<0.000000e+00> : vector<32x64xf32>
    %106 = tpu.matmul %105, %104, %cst_41 {dimension_numbers = #tpu.dot_dimension_numbers<[1], [0], [0], [1], [0, 0, 1, 1], [], []>} : vector<32x64xbf16>, vector<64x64xbf16>, vector<32x64xf32> -> vector<32x64xf32>
    %c4 = arith.constant 4 : index
    %c0_42 = arith.constant 0 : index
    %107 = vector.load %arg6[%c4, %c0_42] : memref<12x64xf32, #tpu.memory_space<vmem>>, vector<1x64xf32>
    %c5 = arith.constant 5 : index
    %c0_43 = arith.constant 0 : index
    %108 = vector.load %arg6[%c5, %c0_43] : memref<12x64xf32, #tpu.memory_space<vmem>>, vector<1x64xf32>
    %cst_44 = arith.constant dense<0.000000e+00> : vector<64xf32>
    %109 = vector.multi_reduction <add>, %106, %cst_44 [0] : vector<32x64xf32> to vector<64xf32>
    %110 = vector.shape_cast %109 : vector<64xf32> to vector<1x64xf32>
    %cst_45 = arith.constant 3.200000e+01 : f32
    %111 = vector.broadcast %cst_45 : f32 to vector<1x64xf32>
    %112 = arith.divf %110, %111 : vector<1x64xf32>
    %113 = arith.mulf %106, %106 : vector<32x64xf32>
    %cst_46 = arith.constant dense<0.000000e+00> : vector<64xf32>
    %114 = vector.multi_reduction <add>, %113, %cst_46 [0] : vector<32x64xf32> to vector<64xf32>
    %115 = vector.shape_cast %114 : vector<64xf32> to vector<1x64xf32>
    %cst_47 = arith.constant 3.200000e+01 : f32
    %116 = vector.broadcast %cst_47 : f32 to vector<1x64xf32>
    %117 = arith.divf %115, %116 : vector<1x64xf32>
    %118 = arith.mulf %112, %112 : vector<1x64xf32>
    %119 = arith.subf %117, %118 : vector<1x64xf32>
    %cst_48 = arith.constant 0.000000e+00 : f32
    %120 = vector.broadcast %cst_48 : f32 to vector<1x64xf32>
    %121 = arith.maximumf %119, %120 : vector<1x64xf32>
    %cst_49 = arith.constant 9.99999974E-6 : f32
    %122 = vector.broadcast %cst_49 : f32 to vector<1x64xf32>
    %123 = arith.addf %121, %122 : vector<1x64xf32>
    %124 = math.rsqrt %123 : vector<1x64xf32>
    %125 = arith.mulf %107, %124 : vector<1x64xf32>
    %126 = arith.mulf %112, %125 : vector<1x64xf32>
    %127 = arith.subf %108, %126 : vector<1x64xf32>
    %128 = vector.broadcast %125 : vector<1x64xf32> to vector<32x64xf32>
    %129 = arith.mulf %106, %128 : vector<32x64xf32>
    %130 = vector.broadcast %127 : vector<1x64xf32> to vector<32x64xf32>
    %131 = arith.addf %129, %130 : vector<32x64xf32>
    %cst_50 = arith.constant 0.000000e+00 : f32
    %132 = vector.broadcast %cst_50 : f32 to vector<32x64xf32>
    %133 = arith.maximumf %131, %132 : vector<32x64xf32>
    %c2_51 = arith.constant 2 : index
    %c0_52 = arith.constant 0 : index
    %c0_53 = arith.constant 0 : index
    %134 = vector.load %arg5[%c2_51, %c0_52, %c0_53] : memref<5x64x64xbf16, #tpu.memory_space<vmem>>, vector<1x64x64xbf16>
    %135 = vector.shape_cast %134 : vector<1x64x64xbf16> to vector<64x64xbf16>
    %136 = arith.truncf %133 : vector<32x64xf32> to vector<32x64xbf16>
    %cst_54 = arith.constant dense<0.000000e+00> : vector<32x64xf32>
    %137 = tpu.matmul %136, %135, %cst_54 {dimension_numbers = #tpu.dot_dimension_numbers<[1], [0], [0], [1], [0, 0, 1, 1], [], []>} : vector<32x64xbf16>, vector<64x64xbf16>, vector<32x64xf32> -> vector<32x64xf32>
    %c6 = arith.constant 6 : index
    %c0_55 = arith.constant 0 : index
    %138 = vector.load %arg6[%c6, %c0_55] : memref<12x64xf32, #tpu.memory_space<vmem>>, vector<1x64xf32>
    %c7 = arith.constant 7 : index
    %c0_56 = arith.constant 0 : index
    %139 = vector.load %arg6[%c7, %c0_56] : memref<12x64xf32, #tpu.memory_space<vmem>>, vector<1x64xf32>
    %cst_57 = arith.constant dense<0.000000e+00> : vector<64xf32>
    %140 = vector.multi_reduction <add>, %137, %cst_57 [0] : vector<32x64xf32> to vector<64xf32>
    %141 = vector.shape_cast %140 : vector<64xf32> to vector<1x64xf32>
    %cst_58 = arith.constant 3.200000e+01 : f32
    %142 = vector.broadcast %cst_58 : f32 to vector<1x64xf32>
    %143 = arith.divf %141, %142 : vector<1x64xf32>
    %144 = arith.mulf %137, %137 : vector<32x64xf32>
    %cst_59 = arith.constant dense<0.000000e+00> : vector<64xf32>
    %145 = vector.multi_reduction <add>, %144, %cst_59 [0] : vector<32x64xf32> to vector<64xf32>
    %146 = vector.shape_cast %145 : vector<64xf32> to vector<1x64xf32>
    %cst_60 = arith.constant 3.200000e+01 : f32
    %147 = vector.broadcast %cst_60 : f32 to vector<1x64xf32>
    %148 = arith.divf %146, %147 : vector<1x64xf32>
    %149 = arith.mulf %143, %143 : vector<1x64xf32>
    %150 = arith.subf %148, %149 : vector<1x64xf32>
    %cst_61 = arith.constant 0.000000e+00 : f32
    %151 = vector.broadcast %cst_61 : f32 to vector<1x64xf32>
    %152 = arith.maximumf %150, %151 : vector<1x64xf32>
    %cst_62 = arith.constant 9.99999974E-6 : f32
    %153 = vector.broadcast %cst_62 : f32 to vector<1x64xf32>
    %154 = arith.addf %152, %153 : vector<1x64xf32>
    %155 = math.rsqrt %154 : vector<1x64xf32>
    %156 = arith.mulf %138, %155 : vector<1x64xf32>
    %157 = arith.mulf %143, %156 : vector<1x64xf32>
    %158 = arith.subf %139, %157 : vector<1x64xf32>
    %159 = vector.broadcast %156 : vector<1x64xf32> to vector<32x64xf32>
    %160 = arith.mulf %137, %159 : vector<32x64xf32>
    %161 = vector.broadcast %158 : vector<1x64xf32> to vector<32x64xf32>
    %162 = arith.addf %160, %161 : vector<32x64xf32>
    %c3_63 = arith.constant 3 : index
    %c0_64 = arith.constant 0 : index
    %c0_65 = arith.constant 0 : index
    %163 = vector.load %arg5[%c3_63, %c0_64, %c0_65] : memref<5x64x64xbf16, #tpu.memory_space<vmem>>, vector<1x64x64xbf16>
    %164 = vector.shape_cast %163 : vector<1x64x64xbf16> to vector<64x64xbf16>
    %165 = arith.truncf %162 : vector<32x64xf32> to vector<32x64xbf16>
    %cst_66 = arith.constant dense<0.000000e+00> : vector<32x64xf32>
    %166 = tpu.matmul %165, %164, %cst_66 {dimension_numbers = #tpu.dot_dimension_numbers<[1], [0], [0], [1], [0, 0, 1, 1], [], []>} : vector<32x64xbf16>, vector<64x64xbf16>, vector<32x64xf32> -> vector<32x64xf32>
    %c8 = arith.constant 8 : index
    %c0_67 = arith.constant 0 : index
    %167 = vector.load %arg6[%c8, %c0_67] : memref<12x64xf32, #tpu.memory_space<vmem>>, vector<1x64xf32>
    %c9 = arith.constant 9 : index
    %c0_68 = arith.constant 0 : index
    %168 = vector.load %arg6[%c9, %c0_68] : memref<12x64xf32, #tpu.memory_space<vmem>>, vector<1x64xf32>
    %cst_69 = arith.constant dense<0.000000e+00> : vector<64xf32>
    %169 = vector.multi_reduction <add>, %166, %cst_69 [0] : vector<32x64xf32> to vector<64xf32>
    %170 = vector.shape_cast %169 : vector<64xf32> to vector<1x64xf32>
    %cst_70 = arith.constant 3.200000e+01 : f32
    %171 = vector.broadcast %cst_70 : f32 to vector<1x64xf32>
    %172 = arith.divf %170, %171 : vector<1x64xf32>
    %173 = arith.mulf %166, %166 : vector<32x64xf32>
    %cst_71 = arith.constant dense<0.000000e+00> : vector<64xf32>
    %174 = vector.multi_reduction <add>, %173, %cst_71 [0] : vector<32x64xf32> to vector<64xf32>
    %175 = vector.shape_cast %174 : vector<64xf32> to vector<1x64xf32>
    %cst_72 = arith.constant 3.200000e+01 : f32
    %176 = vector.broadcast %cst_72 : f32 to vector<1x64xf32>
    %177 = arith.divf %175, %176 : vector<1x64xf32>
    %178 = arith.mulf %172, %172 : vector<1x64xf32>
    %179 = arith.subf %177, %178 : vector<1x64xf32>
    %cst_73 = arith.constant 0.000000e+00 : f32
    %180 = vector.broadcast %cst_73 : f32 to vector<1x64xf32>
    %181 = arith.maximumf %179, %180 : vector<1x64xf32>
    %cst_74 = arith.constant 9.99999974E-6 : f32
    %182 = vector.broadcast %cst_74 : f32 to vector<1x64xf32>
    %183 = arith.addf %181, %182 : vector<1x64xf32>
    %184 = math.rsqrt %183 : vector<1x64xf32>
    %185 = arith.mulf %167, %184 : vector<1x64xf32>
    %186 = arith.mulf %172, %185 : vector<1x64xf32>
    %187 = arith.subf %168, %186 : vector<1x64xf32>
    %188 = vector.broadcast %185 : vector<1x64xf32> to vector<32x64xf32>
    %189 = arith.mulf %166, %188 : vector<32x64xf32>
    %190 = vector.broadcast %187 : vector<1x64xf32> to vector<32x64xf32>
    %191 = arith.addf %189, %190 : vector<32x64xf32>
    %cst_75 = arith.constant 0.000000e+00 : f32
    %192 = vector.broadcast %cst_75 : f32 to vector<32x64xf32>
    %193 = arith.maximumf %191, %192 : vector<32x64xf32>
    %c4_76 = arith.constant 4 : index
    %c0_77 = arith.constant 0 : index
    %c0_78 = arith.constant 0 : index
    %194 = vector.load %arg5[%c4_76, %c0_77, %c0_78] : memref<5x64x64xbf16, #tpu.memory_space<vmem>>, vector<1x64x64xbf16>
    %195 = vector.shape_cast %194 : vector<1x64x64xbf16> to vector<64x64xbf16>
    %196 = arith.truncf %193 : vector<32x64xf32> to vector<32x64xbf16>
    %cst_79 = arith.constant dense<0.000000e+00> : vector<32x64xf32>
    %197 = tpu.matmul %196, %195, %cst_79 {dimension_numbers = #tpu.dot_dimension_numbers<[1], [0], [0], [1], [0, 0, 1, 1], [], []>} : vector<32x64xbf16>, vector<64x64xbf16>, vector<32x64xf32> -> vector<32x64xf32>
    %c10 = arith.constant 10 : index
    %c0_80 = arith.constant 0 : index
    %198 = vector.load %arg6[%c10, %c0_80] : memref<12x64xf32, #tpu.memory_space<vmem>>, vector<1x64xf32>
    %c11 = arith.constant 11 : index
    %c0_81 = arith.constant 0 : index
    %199 = vector.load %arg6[%c11, %c0_81] : memref<12x64xf32, #tpu.memory_space<vmem>>, vector<1x64xf32>
    %cst_82 = arith.constant dense<0.000000e+00> : vector<64xf32>
    %200 = vector.multi_reduction <add>, %197, %cst_82 [0] : vector<32x64xf32> to vector<64xf32>
    %201 = vector.shape_cast %200 : vector<64xf32> to vector<1x64xf32>
    %cst_83 = arith.constant 3.200000e+01 : f32
    %202 = vector.broadcast %cst_83 : f32 to vector<1x64xf32>
    %203 = arith.divf %201, %202 : vector<1x64xf32>
    %204 = arith.mulf %197, %197 : vector<32x64xf32>
    %cst_84 = arith.constant dense<0.000000e+00> : vector<64xf32>
    %205 = vector.multi_reduction <add>, %204, %cst_84 [0] : vector<32x64xf32> to vector<64xf32>
    %206 = vector.shape_cast %205 : vector<64xf32> to vector<1x64xf32>
    %cst_85 = arith.constant 3.200000e+01 : f32
    %207 = vector.broadcast %cst_85 : f32 to vector<1x64xf32>
    %208 = arith.divf %206, %207 : vector<1x64xf32>
    %209 = arith.mulf %203, %203 : vector<1x64xf32>
    %210 = arith.subf %208, %209 : vector<1x64xf32>
    %cst_86 = arith.constant 0.000000e+00 : f32
    %211 = vector.broadcast %cst_86 : f32 to vector<1x64xf32>
    %212 = arith.maximumf %210, %211 : vector<1x64xf32>
    %cst_87 = arith.constant 9.99999974E-6 : f32
    %213 = vector.broadcast %cst_87 : f32 to vector<1x64xf32>
    %214 = arith.addf %212, %213 : vector<1x64xf32>
    %215 = math.rsqrt %214 : vector<1x64xf32>
    %216 = arith.mulf %198, %215 : vector<1x64xf32>
    %217 = arith.mulf %203, %216 : vector<1x64xf32>
    %218 = arith.subf %199, %217 : vector<1x64xf32>
    %219 = vector.broadcast %216 : vector<1x64xf32> to vector<32x64xf32>
    %220 = arith.mulf %197, %219 : vector<32x64xf32>
    %221 = vector.broadcast %218 : vector<1x64xf32> to vector<32x64xf32>
    %222 = arith.addf %220, %221 : vector<32x64xf32>
    %c0_i32_88 = arith.constant 0 : i32
    %223 = tpu.memref_slice %arg25[%c0_i32_88] : memref<6x!tpu.dma_semaphore, #tpu.memory_space<semaphore_mem>> -> memref<1x!tpu.dma_semaphore, #tpu.memory_space<semaphore_mem>>
    %224 = tpu.memref_squeeze %223 : memref<1x!tpu.dma_semaphore, #tpu.memory_space<semaphore_mem>> -> memref<!tpu.dma_semaphore, #tpu.memory_space<semaphore_mem>>
    tpu.wait_dma2 semaphore(%224 : memref<!tpu.dma_semaphore, #tpu.memory_space<semaphore_mem>>) src(%arg7 : memref<64x128xbf16, #tpu.memory_space<any>>) dst(%arg19 : memref<64x128xbf16, #tpu.memory_space<vmem>>)
    %c1_i32_89 = arith.constant 1 : i32
    %225 = tpu.memref_slice %arg25[%c1_i32_89] : memref<6x!tpu.dma_semaphore, #tpu.memory_space<semaphore_mem>> -> memref<1x!tpu.dma_semaphore, #tpu.memory_space<semaphore_mem>>
    %226 = tpu.memref_squeeze %225 : memref<1x!tpu.dma_semaphore, #tpu.memory_space<semaphore_mem>> -> memref<!tpu.dma_semaphore, #tpu.memory_space<semaphore_mem>>
    tpu.wait_dma2 semaphore(%226 : memref<!tpu.dma_semaphore, #tpu.memory_space<semaphore_mem>>) src(%arg8 : memref<7x128x128xbf16, #tpu.memory_space<any>>) dst(%arg20 : memref<7x128x128xbf16, #tpu.memory_space<vmem>>)
    %c0_90 = arith.constant 0 : index
    %c0_91 = arith.constant 0 : index
    %227 = vector.load %arg19[%c0_90, %c0_91] : memref<64x128xbf16, #tpu.memory_space<vmem>>, vector<64x128xbf16>
    %228 = arith.truncf %222 : vector<32x64xf32> to vector<32x64xbf16>
    %cst_92 = arith.constant dense<0.000000e+00> : vector<32x128xf32>
    %229 = tpu.matmul %228, %227, %cst_92 {dimension_numbers = #tpu.dot_dimension_numbers<[1], [0], [0], [1], [0, 0, 1, 1], [], []>} : vector<32x64xbf16>, vector<64x128xbf16>, vector<32x128xf32> -> vector<32x128xf32>
    %c0_93 = arith.constant 0 : index
    %c0_94 = arith.constant 0 : index
    %230 = vector.load %arg9[%c0_93, %c0_94] : memref<16x128xf32, #tpu.memory_space<vmem>>, vector<1x128xf32>
    %c1_95 = arith.constant 1 : index
    %c0_96 = arith.constant 0 : index
    %231 = vector.load %arg9[%c1_95, %c0_96] : memref<16x128xf32, #tpu.memory_space<vmem>>, vector<1x128xf32>
    %cst_97 = arith.constant dense<0.000000e+00> : vector<128xf32>
    %232 = vector.multi_reduction <add>, %229, %cst_97 [0] : vector<32x128xf32> to vector<128xf32>
    %233 = vector.shape_cast %232 : vector<128xf32> to vector<1x128xf32>
    %cst_98 = arith.constant 3.200000e+01 : f32
    %234 = vector.broadcast %cst_98 : f32 to vector<1x128xf32>
    %235 = arith.divf %233, %234 : vector<1x128xf32>
    %236 = arith.mulf %229, %229 : vector<32x128xf32>
    %cst_99 = arith.constant dense<0.000000e+00> : vector<128xf32>
    %237 = vector.multi_reduction <add>, %236, %cst_99 [0] : vector<32x128xf32> to vector<128xf32>
    %238 = vector.shape_cast %237 : vector<128xf32> to vector<1x128xf32>
    %cst_100 = arith.constant 3.200000e+01 : f32
    %239 = vector.broadcast %cst_100 : f32 to vector<1x128xf32>
    %240 = arith.divf %238, %239 : vector<1x128xf32>
    %241 = arith.mulf %235, %235 : vector<1x128xf32>
    %242 = arith.subf %240, %241 : vector<1x128xf32>
    %cst_101 = arith.constant 0.000000e+00 : f32
    %243 = vector.broadcast %cst_101 : f32 to vector<1x128xf32>
    %244 = arith.maximumf %242, %243 : vector<1x128xf32>
    %cst_102 = arith.constant 9.99999974E-6 : f32
    %245 = vector.broadcast %cst_102 : f32 to vector<1x128xf32>
    %246 = arith.addf %244, %245 : vector<1x128xf32>
    %247 = math.rsqrt %246 : vector<1x128xf32>
    %248 = arith.mulf %230, %247 : vector<1x128xf32>
    %249 = arith.mulf %235, %248 : vector<1x128xf32>
    %250 = arith.subf %231, %249 : vector<1x128xf32>
    %251 = vector.broadcast %248 : vector<1x128xf32> to vector<32x128xf32>
    %252 = arith.mulf %229, %251 : vector<32x128xf32>
    %253 = vector.broadcast %250 : vector<1x128xf32> to vector<32x128xf32>
    %254 = arith.addf %252, %253 : vector<32x128xf32>
    %cst_103 = arith.constant 0.000000e+00 : f32
    %255 = vector.broadcast %cst_103 : f32 to vector<32x128xf32>
    %256 = arith.maximumf %254, %255 : vector<32x128xf32>
    %c0_104 = arith.constant 0 : index
    %c0_105 = arith.constant 0 : index
    %c0_106 = arith.constant 0 : index
    %257 = vector.load %arg20[%c0_104, %c0_105, %c0_106] : memref<7x128x128xbf16, #tpu.memory_space<vmem>>, vector<1x128x128xbf16>
    %258 = vector.shape_cast %257 : vector<1x128x128xbf16> to vector<128x128xbf16>
    %259 = arith.truncf %256 : vector<32x128xf32> to vector<32x128xbf16>
    %cst_107 = arith.constant dense<0.000000e+00> : vector<32x128xf32>
    %260 = tpu.matmul %259, %258, %cst_107 {dimension_numbers = #tpu.dot_dimension_numbers<[1], [0], [0], [1], [0, 0, 1, 1], [], []>} : vector<32x128xbf16>, vector<128x128xbf16>, vector<32x128xf32> -> vector<32x128xf32>
    %c2_108 = arith.constant 2 : index
    %c0_109 = arith.constant 0 : index
    %261 = vector.load %arg9[%c2_108, %c0_109] : memref<16x128xf32, #tpu.memory_space<vmem>>, vector<1x128xf32>
    %c3_110 = arith.constant 3 : index
    %c0_111 = arith.constant 0 : index
    %262 = vector.load %arg9[%c3_110, %c0_111] : memref<16x128xf32, #tpu.memory_space<vmem>>, vector<1x128xf32>
    %cst_112 = arith.constant dense<0.000000e+00> : vector<128xf32>
    %263 = vector.multi_reduction <add>, %260, %cst_112 [0] : vector<32x128xf32> to vector<128xf32>
    %264 = vector.shape_cast %263 : vector<128xf32> to vector<1x128xf32>
    %cst_113 = arith.constant 3.200000e+01 : f32
    %265 = vector.broadcast %cst_113 : f32 to vector<1x128xf32>
    %266 = arith.divf %264, %265 : vector<1x128xf32>
    %267 = arith.mulf %260, %260 : vector<32x128xf32>
    %cst_114 = arith.constant dense<0.000000e+00> : vector<128xf32>
    %268 = vector.multi_reduction <add>, %267, %cst_114 [0] : vector<32x128xf32> to vector<128xf32>
    %269 = vector.shape_cast %268 : vector<128xf32> to vector<1x128xf32>
    %cst_115 = arith.constant 3.200000e+01 : f32
    %270 = vector.broadcast %cst_115 : f32 to vector<1x128xf32>
    %271 = arith.divf %269, %270 : vector<1x128xf32>
    %272 = arith.mulf %266, %266 : vector<1x128xf32>
    %273 = arith.subf %271, %272 : vector<1x128xf32>
    %cst_116 = arith.constant 0.000000e+00 : f32
    %274 = vector.broadcast %cst_116 : f32 to vector<1x128xf32>
    %275 = arith.maximumf %273, %274 : vector<1x128xf32>
    %cst_117 = arith.constant 9.99999974E-6 : f32
    %276 = vector.broadcast %cst_117 : f32 to vector<1x128xf32>
    %277 = arith.addf %275, %276 : vector<1x128xf32>
    %278 = math.rsqrt %277 : vector<1x128xf32>
    %279 = arith.mulf %261, %278 : vector<1x128xf32>
    %280 = arith.mulf %266, %279 : vector<1x128xf32>
    %281 = arith.subf %262, %280 : vector<1x128xf32>
    %282 = vector.broadcast %279 : vector<1x128xf32> to vector<32x128xf32>
    %283 = arith.mulf %260, %282 : vector<32x128xf32>
    %284 = vector.broadcast %281 : vector<1x128xf32> to vector<32x128xf32>
    %285 = arith.addf %283, %284 : vector<32x128xf32>
    %c1_118 = arith.constant 1 : index
    %c0_119 = arith.constant 0 : index
    %c0_120 = arith.constant 0 : index
    %286 = vector.load %arg20[%c1_118, %c0_119, %c0_120] : memref<7x128x128xbf16, #tpu.memory_space<vmem>>, vector<1x128x128xbf16>
    %287 = vector.shape_cast %286 : vector<1x128x128xbf16> to vector<128x128xbf16>
    %288 = arith.truncf %285 : vector<32x128xf32> to vector<32x128xbf16>
    %cst_121 = arith.constant dense<0.000000e+00> : vector<32x128xf32>
    %289 = tpu.matmul %288, %287, %cst_121 {dimension_numbers = #tpu.dot_dimension_numbers<[1], [0], [0], [1], [0, 0, 1, 1], [], []>} : vector<32x128xbf16>, vector<128x128xbf16>, vector<32x128xf32> -> vector<32x128xf32>
    %c4_122 = arith.constant 4 : index
    %c0_123 = arith.constant 0 : index
    %290 = vector.load %arg9[%c4_122, %c0_123] : memref<16x128xf32, #tpu.memory_space<vmem>>, vector<1x128xf32>
    %c5_124 = arith.constant 5 : index
    %c0_125 = arith.constant 0 : index
    %291 = vector.load %arg9[%c5_124, %c0_125] : memref<16x128xf32, #tpu.memory_space<vmem>>, vector<1x128xf32>
    %cst_126 = arith.constant dense<0.000000e+00> : vector<128xf32>
    %292 = vector.multi_reduction <add>, %289, %cst_126 [0] : vector<32x128xf32> to vector<128xf32>
    %293 = vector.shape_cast %292 : vector<128xf32> to vector<1x128xf32>
    %cst_127 = arith.constant 3.200000e+01 : f32
    %294 = vector.broadcast %cst_127 : f32 to vector<1x128xf32>
    %295 = arith.divf %293, %294 : vector<1x128xf32>
    %296 = arith.mulf %289, %289 : vector<32x128xf32>
    %cst_128 = arith.constant dense<0.000000e+00> : vector<128xf32>
    %297 = vector.multi_reduction <add>, %296, %cst_128 [0] : vector<32x128xf32> to vector<128xf32>
    %298 = vector.shape_cast %297 : vector<128xf32> to vector<1x128xf32>
    %cst_129 = arith.constant 3.200000e+01 : f32
    %299 = vector.broadcast %cst_129 : f32 to vector<1x128xf32>
    %300 = arith.divf %298, %299 : vector<1x128xf32>
    %301 = arith.mulf %295, %295 : vector<1x128xf32>
    %302 = arith.subf %300, %301 : vector<1x128xf32>
    %cst_130 = arith.constant 0.000000e+00 : f32
    %303 = vector.broadcast %cst_130 : f32 to vector<1x128xf32>
    %304 = arith.maximumf %302, %303 : vector<1x128xf32>
    %cst_131 = arith.constant 9.99999974E-6 : f32
    %305 = vector.broadcast %cst_131 : f32 to vector<1x128xf32>
    %306 = arith.addf %304, %305 : vector<1x128xf32>
    %307 = math.rsqrt %306 : vector<1x128xf32>
    %308 = arith.mulf %290, %307 : vector<1x128xf32>
    %309 = arith.mulf %295, %308 : vector<1x128xf32>
    %310 = arith.subf %291, %309 : vector<1x128xf32>
    %311 = vector.broadcast %308 : vector<1x128xf32> to vector<32x128xf32>
    %312 = arith.mulf %289, %311 : vector<32x128xf32>
    %313 = vector.broadcast %310 : vector<1x128xf32> to vector<32x128xf32>
    %314 = arith.addf %312, %313 : vector<32x128xf32>
    %cst_132 = arith.constant 0.000000e+00 : f32
    %315 = vector.broadcast %cst_132 : f32 to vector<32x128xf32>
    %316 = arith.maximumf %314, %315 : vector<32x128xf32>
    %c2_133 = arith.constant 2 : index
    %c0_134 = arith.constant 0 : index
    %c0_135 = arith.constant 0 : index
    %317 = vector.load %arg20[%c2_133, %c0_134, %c0_135] : memref<7x128x128xbf16, #tpu.memory_space<vmem>>, vector<1x128x128xbf16>
    %318 = vector.shape_cast %317 : vector<1x128x128xbf16> to vector<128x128xbf16>
    %319 = arith.truncf %316 : vector<32x128xf32> to vector<32x128xbf16>
    %cst_136 = arith.constant dense<0.000000e+00> : vector<32x128xf32>
    %320 = tpu.matmul %319, %318, %cst_136 {dimension_numbers = #tpu.dot_dimension_numbers<[1], [0], [0], [1], [0, 0, 1, 1], [], []>} : vector<32x128xbf16>, vector<128x128xbf16>, vector<32x128xf32> -> vector<32x128xf32>
    %c6_137 = arith.constant 6 : index
    %c0_138 = arith.constant 0 : index
    %321 = vector.load %arg9[%c6_137, %c0_138] : memref<16x128xf32, #tpu.memory_space<vmem>>, vector<1x128xf32>
    %c7_139 = arith.constant 7 : index
    %c0_140 = arith.constant 0 : index
    %322 = vector.load %arg9[%c7_139, %c0_140] : memref<16x128xf32, #tpu.memory_space<vmem>>, vector<1x128xf32>
    %cst_141 = arith.constant dense<0.000000e+00> : vector<128xf32>
    %323 = vector.multi_reduction <add>, %320, %cst_141 [0] : vector<32x128xf32> to vector<128xf32>
    %324 = vector.shape_cast %323 : vector<128xf32> to vector<1x128xf32>
    %cst_142 = arith.constant 3.200000e+01 : f32
    %325 = vector.broadcast %cst_142 : f32 to vector<1x128xf32>
    %326 = arith.divf %324, %325 : vector<1x128xf32>
    %327 = arith.mulf %320, %320 : vector<32x128xf32>
    %cst_143 = arith.constant dense<0.000000e+00> : vector<128xf32>
    %328 = vector.multi_reduction <add>, %327, %cst_143 [0] : vector<32x128xf32> to vector<128xf32>
    %329 = vector.shape_cast %328 : vector<128xf32> to vector<1x128xf32>
    %cst_144 = arith.constant 3.200000e+01 : f32
    %330 = vector.broadcast %cst_144 : f32 to vector<1x128xf32>
    %331 = arith.divf %329, %330 : vector<1x128xf32>
    %332 = arith.mulf %326, %326 : vector<1x128xf32>
    %333 = arith.subf %331, %332 : vector<1x128xf32>
    %cst_145 = arith.constant 0.000000e+00 : f32
    %334 = vector.broadcast %cst_145 : f32 to vector<1x128xf32>
    %335 = arith.maximumf %333, %334 : vector<1x128xf32>
    %cst_146 = arith.constant 9.99999974E-6 : f32
    %336 = vector.broadcast %cst_146 : f32 to vector<1x128xf32>
    %337 = arith.addf %335, %336 : vector<1x128xf32>
    %338 = math.rsqrt %337 : vector<1x128xf32>
    %339 = arith.mulf %321, %338 : vector<1x128xf32>
    %340 = arith.mulf %326, %339 : vector<1x128xf32>
    %341 = arith.subf %322, %340 : vector<1x128xf32>
    %342 = vector.broadcast %339 : vector<1x128xf32> to vector<32x128xf32>
    %343 = arith.mulf %320, %342 : vector<32x128xf32>
    %344 = vector.broadcast %341 : vector<1x128xf32> to vector<32x128xf32>
    %345 = arith.addf %343, %344 : vector<32x128xf32>
    %c3_147 = arith.constant 3 : index
    %c0_148 = arith.constant 0 : index
    %c0_149 = arith.constant 0 : index
    %346 = vector.load %arg20[%c3_147, %c0_148, %c0_149] : memref<7x128x128xbf16, #tpu.memory_space<vmem>>, vector<1x128x128xbf16>
    %347 = vector.shape_cast %346 : vector<1x128x128xbf16> to vector<128x128xbf16>
    %348 = arith.truncf %345 : vector<32x128xf32> to vector<32x128xbf16>
    %cst_150 = arith.constant dense<0.000000e+00> : vector<32x128xf32>
    %349 = tpu.matmul %348, %347, %cst_150 {dimension_numbers = #tpu.dot_dimension_numbers<[1], [0], [0], [1], [0, 0, 1, 1], [], []>} : vector<32x128xbf16>, vector<128x128xbf16>, vector<32x128xf32> -> vector<32x128xf32>
    %c8_151 = arith.constant 8 : index
    %c0_152 = arith.constant 0 : index
    %350 = vector.load %arg9[%c8_151, %c0_152] : memref<16x128xf32, #tpu.memory_space<vmem>>, vector<1x128xf32>
    %c9_153 = arith.constant 9 : index
    %c0_154 = arith.constant 0 : index
    %351 = vector.load %arg9[%c9_153, %c0_154] : memref<16x128xf32, #tpu.memory_space<vmem>>, vector<1x128xf32>
    %cst_155 = arith.constant dense<0.000000e+00> : vector<128xf32>
    %352 = vector.multi_reduction <add>, %349, %cst_155 [0] : vector<32x128xf32> to vector<128xf32>
    %353 = vector.shape_cast %352 : vector<128xf32> to vector<1x128xf32>
    %cst_156 = arith.constant 3.200000e+01 : f32
    %354 = vector.broadcast %cst_156 : f32 to vector<1x128xf32>
    %355 = arith.divf %353, %354 : vector<1x128xf32>
    %356 = arith.mulf %349, %349 : vector<32x128xf32>
    %cst_157 = arith.constant dense<0.000000e+00> : vector<128xf32>
    %357 = vector.multi_reduction <add>, %356, %cst_157 [0] : vector<32x128xf32> to vector<128xf32>
    %358 = vector.shape_cast %357 : vector<128xf32> to vector<1x128xf32>
    %cst_158 = arith.constant 3.200000e+01 : f32
    %359 = vector.broadcast %cst_158 : f32 to vector<1x128xf32>
    %360 = arith.divf %358, %359 : vector<1x128xf32>
    %361 = arith.mulf %355, %355 : vector<1x128xf32>
    %362 = arith.subf %360, %361 : vector<1x128xf32>
    %cst_159 = arith.constant 0.000000e+00 : f32
    %363 = vector.broadcast %cst_159 : f32 to vector<1x128xf32>
    %364 = arith.maximumf %362, %363 : vector<1x128xf32>
    %cst_160 = arith.constant 9.99999974E-6 : f32
    %365 = vector.broadcast %cst_160 : f32 to vector<1x128xf32>
    %366 = arith.addf %364, %365 : vector<1x128xf32>
    %367 = math.rsqrt %366 : vector<1x128xf32>
    %368 = arith.mulf %350, %367 : vector<1x128xf32>
    %369 = arith.mulf %355, %368 : vector<1x128xf32>
    %370 = arith.subf %351, %369 : vector<1x128xf32>
    %371 = vector.broadcast %368 : vector<1x128xf32> to vector<32x128xf32>
    %372 = arith.mulf %349, %371 : vector<32x128xf32>
    %373 = vector.broadcast %370 : vector<1x128xf32> to vector<32x128xf32>
    %374 = arith.addf %372, %373 : vector<32x128xf32>
    %cst_161 = arith.constant 0.000000e+00 : f32
    %375 = vector.broadcast %cst_161 : f32 to vector<32x128xf32>
    %376 = arith.maximumf %374, %375 : vector<32x128xf32>
    %c4_162 = arith.constant 4 : index
    %c0_163 = arith.constant 0 : index
    %c0_164 = arith.constant 0 : index
    %377 = vector.load %arg20[%c4_162, %c0_163, %c0_164] : memref<7x128x128xbf16, #tpu.memory_space<vmem>>, vector<1x128x128xbf16>
    %378 = vector.shape_cast %377 : vector<1x128x128xbf16> to vector<128x128xbf16>
    %379 = arith.truncf %376 : vector<32x128xf32> to vector<32x128xbf16>
    %cst_165 = arith.constant dense<0.000000e+00> : vector<32x128xf32>
    %380 = tpu.matmul %379, %378, %cst_165 {dimension_numbers = #tpu.dot_dimension_numbers<[1], [0], [0], [1], [0, 0, 1, 1], [], []>} : vector<32x128xbf16>, vector<128x128xbf16>, vector<32x128xf32> -> vector<32x128xf32>
    %c10_166 = arith.constant 10 : index
    %c0_167 = arith.constant 0 : index
    %381 = vector.load %arg9[%c10_166, %c0_167] : memref<16x128xf32, #tpu.memory_space<vmem>>, vector<1x128xf32>
    %c11_168 = arith.constant 11 : index
    %c0_169 = arith.constant 0 : index
    %382 = vector.load %arg9[%c11_168, %c0_169] : memref<16x128xf32, #tpu.memory_space<vmem>>, vector<1x128xf32>
    %cst_170 = arith.constant dense<0.000000e+00> : vector<128xf32>
    %383 = vector.multi_reduction <add>, %380, %cst_170 [0] : vector<32x128xf32> to vector<128xf32>
    %384 = vector.shape_cast %383 : vector<128xf32> to vector<1x128xf32>
    %cst_171 = arith.constant 3.200000e+01 : f32
    %385 = vector.broadcast %cst_171 : f32 to vector<1x128xf32>
    %386 = arith.divf %384, %385 : vector<1x128xf32>
    %387 = arith.mulf %380, %380 : vector<32x128xf32>
    %cst_172 = arith.constant dense<0.000000e+00> : vector<128xf32>
    %388 = vector.multi_reduction <add>, %387, %cst_172 [0] : vector<32x128xf32> to vector<128xf32>
    %389 = vector.shape_cast %388 : vector<128xf32> to vector<1x128xf32>
    %cst_173 = arith.constant 3.200000e+01 : f32
    %390 = vector.broadcast %cst_173 : f32 to vector<1x128xf32>
    %391 = arith.divf %389, %390 : vector<1x128xf32>
    %392 = arith.mulf %386, %386 : vector<1x128xf32>
    %393 = arith.subf %391, %392 : vector<1x128xf32>
    %cst_174 = arith.constant 0.000000e+00 : f32
    %394 = vector.broadcast %cst_174 : f32 to vector<1x128xf32>
    %395 = arith.maximumf %393, %394 : vector<1x128xf32>
    %cst_175 = arith.constant 9.99999974E-6 : f32
    %396 = vector.broadcast %cst_175 : f32 to vector<1x128xf32>
    %397 = arith.addf %395, %396 : vector<1x128xf32>
    %398 = math.rsqrt %397 : vector<1x128xf32>
    %399 = arith.mulf %381, %398 : vector<1x128xf32>
    %400 = arith.mulf %386, %399 : vector<1x128xf32>
    %401 = arith.subf %382, %400 : vector<1x128xf32>
    %402 = vector.broadcast %399 : vector<1x128xf32> to vector<32x128xf32>
    %403 = arith.mulf %380, %402 : vector<32x128xf32>
    %404 = vector.broadcast %401 : vector<1x128xf32> to vector<32x128xf32>
    %405 = arith.addf %403, %404 : vector<32x128xf32>
    %c5_176 = arith.constant 5 : index
    %c0_177 = arith.constant 0 : index
    %c0_178 = arith.constant 0 : index
    %406 = vector.load %arg20[%c5_176, %c0_177, %c0_178] : memref<7x128x128xbf16, #tpu.memory_space<vmem>>, vector<1x128x128xbf16>
    %407 = vector.shape_cast %406 : vector<1x128x128xbf16> to vector<128x128xbf16>
    %408 = arith.truncf %405 : vector<32x128xf32> to vector<32x128xbf16>
    %cst_179 = arith.constant dense<0.000000e+00> : vector<32x128xf32>
    %409 = tpu.matmul %408, %407, %cst_179 {dimension_numbers = #tpu.dot_dimension_numbers<[1], [0], [0], [1], [0, 0, 1, 1], [], []>} : vector<32x128xbf16>, vector<128x128xbf16>, vector<32x128xf32> -> vector<32x128xf32>
    %c12 = arith.constant 12 : index
    %c0_180 = arith.constant 0 : index
    %410 = vector.load %arg9[%c12, %c0_180] : memref<16x128xf32, #tpu.memory_space<vmem>>, vector<1x128xf32>
    %c13 = arith.constant 13 : index
    %c0_181 = arith.constant 0 : index
    %411 = vector.load %arg9[%c13, %c0_181] : memref<16x128xf32, #tpu.memory_space<vmem>>, vector<1x128xf32>
    %cst_182 = arith.constant dense<0.000000e+00> : vector<128xf32>
    %412 = vector.multi_reduction <add>, %409, %cst_182 [0] : vector<32x128xf32> to vector<128xf32>
    %413 = vector.shape_cast %412 : vector<128xf32> to vector<1x128xf32>
    %cst_183 = arith.constant 3.200000e+01 : f32
    %414 = vector.broadcast %cst_183 : f32 to vector<1x128xf32>
    %415 = arith.divf %413, %414 : vector<1x128xf32>
    %416 = arith.mulf %409, %409 : vector<32x128xf32>
    %cst_184 = arith.constant dense<0.000000e+00> : vector<128xf32>
    %417 = vector.multi_reduction <add>, %416, %cst_184 [0] : vector<32x128xf32> to vector<128xf32>
    %418 = vector.shape_cast %417 : vector<128xf32> to vector<1x128xf32>
    %cst_185 = arith.constant 3.200000e+01 : f32
    %419 = vector.broadcast %cst_185 : f32 to vector<1x128xf32>
    %420 = arith.divf %418, %419 : vector<1x128xf32>
    %421 = arith.mulf %415, %415 : vector<1x128xf32>
    %422 = arith.subf %420, %421 : vector<1x128xf32>
    %cst_186 = arith.constant 0.000000e+00 : f32
    %423 = vector.broadcast %cst_186 : f32 to vector<1x128xf32>
    %424 = arith.maximumf %422, %423 : vector<1x128xf32>
    %cst_187 = arith.constant 9.99999974E-6 : f32
    %425 = vector.broadcast %cst_187 : f32 to vector<1x128xf32>
    %426 = arith.addf %424, %425 : vector<1x128xf32>
    %427 = math.rsqrt %426 : vector<1x128xf32>
    %428 = arith.mulf %410, %427 : vector<1x128xf32>
    %429 = arith.mulf %415, %428 : vector<1x128xf32>
    %430 = arith.subf %411, %429 : vector<1x128xf32>
    %431 = vector.broadcast %428 : vector<1x128xf32> to vector<32x128xf32>
    %432 = arith.mulf %409, %431 : vector<32x128xf32>
    %433 = vector.broadcast %430 : vector<1x128xf32> to vector<32x128xf32>
    %434 = arith.addf %432, %433 : vector<32x128xf32>
    %cst_188 = arith.constant 0.000000e+00 : f32
    %435 = vector.broadcast %cst_188 : f32 to vector<32x128xf32>
    %436 = arith.maximumf %434, %435 : vector<32x128xf32>
    %c6_189 = arith.constant 6 : index
    %c0_190 = arith.constant 0 : index
    %c0_191 = arith.constant 0 : index
    %437 = vector.load %arg20[%c6_189, %c0_190, %c0_191] : memref<7x128x128xbf16, #tpu.memory_space<vmem>>, vector<1x128x128xbf16>
    %438 = vector.shape_cast %437 : vector<1x128x128xbf16> to vector<128x128xbf16>
    %439 = arith.truncf %436 : vector<32x128xf32> to vector<32x128xbf16>
    %cst_192 = arith.constant dense<0.000000e+00> : vector<32x128xf32>
    %440 = tpu.matmul %439, %438, %cst_192 {dimension_numbers = #tpu.dot_dimension_numbers<[1], [0], [0], [1], [0, 0, 1, 1], [], []>} : vector<32x128xbf16>, vector<128x128xbf16>, vector<32x128xf32> -> vector<32x128xf32>
    %c14 = arith.constant 14 : index
    %c0_193 = arith.constant 0 : index
    %441 = vector.load %arg9[%c14, %c0_193] : memref<16x128xf32, #tpu.memory_space<vmem>>, vector<1x128xf32>
    %c15 = arith.constant 15 : index
    %c0_194 = arith.constant 0 : index
    %442 = vector.load %arg9[%c15, %c0_194] : memref<16x128xf32, #tpu.memory_space<vmem>>, vector<1x128xf32>
    %cst_195 = arith.constant dense<0.000000e+00> : vector<128xf32>
    %443 = vector.multi_reduction <add>, %440, %cst_195 [0] : vector<32x128xf32> to vector<128xf32>
    %444 = vector.shape_cast %443 : vector<128xf32> to vector<1x128xf32>
    %cst_196 = arith.constant 3.200000e+01 : f32
    %445 = vector.broadcast %cst_196 : f32 to vector<1x128xf32>
    %446 = arith.divf %444, %445 : vector<1x128xf32>
    %447 = arith.mulf %440, %440 : vector<32x128xf32>
    %cst_197 = arith.constant dense<0.000000e+00> : vector<128xf32>
    %448 = vector.multi_reduction <add>, %447, %cst_197 [0] : vector<32x128xf32> to vector<128xf32>
    %449 = vector.shape_cast %448 : vector<128xf32> to vector<1x128xf32>
    %cst_198 = arith.constant 3.200000e+01 : f32
    %450 = vector.broadcast %cst_198 : f32 to vector<1x128xf32>
    %451 = arith.divf %449, %450 : vector<1x128xf32>
    %452 = arith.mulf %446, %446 : vector<1x128xf32>
    %453 = arith.subf %451, %452 : vector<1x128xf32>
    %cst_199 = arith.constant 0.000000e+00 : f32
    %454 = vector.broadcast %cst_199 : f32 to vector<1x128xf32>
    %455 = arith.maximumf %453, %454 : vector<1x128xf32>
    %cst_200 = arith.constant 9.99999974E-6 : f32
    %456 = vector.broadcast %cst_200 : f32 to vector<1x128xf32>
    %457 = arith.addf %455, %456 : vector<1x128xf32>
    %458 = math.rsqrt %457 : vector<1x128xf32>
    %459 = arith.mulf %441, %458 : vector<1x128xf32>
    %460 = arith.mulf %446, %459 : vector<1x128xf32>
    %461 = arith.subf %442, %460 : vector<1x128xf32>
    %462 = vector.broadcast %459 : vector<1x128xf32> to vector<32x128xf32>
    %463 = arith.mulf %440, %462 : vector<32x128xf32>
    %464 = vector.broadcast %461 : vector<1x128xf32> to vector<32x128xf32>
    %465 = arith.addf %463, %464 : vector<32x128xf32>
    %c2_i32_201 = arith.constant 2 : i32
    %466 = tpu.memref_slice %arg25[%c2_i32_201] : memref<6x!tpu.dma_semaphore, #tpu.memory_space<semaphore_mem>> -> memref<1x!tpu.dma_semaphore, #tpu.memory_space<semaphore_mem>>
    %467 = tpu.memref_squeeze %466 : memref<1x!tpu.dma_semaphore, #tpu.memory_space<semaphore_mem>> -> memref<!tpu.dma_semaphore, #tpu.memory_space<semaphore_mem>>
    tpu.wait_dma2 semaphore(%467 : memref<!tpu.dma_semaphore, #tpu.memory_space<semaphore_mem>>) src(%arg10 : memref<128x256xbf16, #tpu.memory_space<any>>) dst(%arg21 : memref<128x256xbf16, #tpu.memory_space<vmem>>)
    %c3_i32_202 = arith.constant 3 : i32
    %468 = tpu.memref_slice %arg25[%c3_i32_202] : memref<6x!tpu.dma_semaphore, #tpu.memory_space<semaphore_mem>> -> memref<1x!tpu.dma_semaphore, #tpu.memory_space<semaphore_mem>>
    %469 = tpu.memref_squeeze %468 : memref<1x!tpu.dma_semaphore, #tpu.memory_space<semaphore_mem>> -> memref<!tpu.dma_semaphore, #tpu.memory_space<semaphore_mem>>
    tpu.wait_dma2 semaphore(%469 : memref<!tpu.dma_semaphore, #tpu.memory_space<semaphore_mem>>) src(%arg11 : memref<11x256x256xbf16, #tpu.memory_space<any>>) dst(%arg22 : memref<11x256x256xbf16, #tpu.memory_space<vmem>>)
    %c0_203 = arith.constant 0 : index
    %c0_204 = arith.constant 0 : index
    %470 = vector.load %arg21[%c0_203, %c0_204] : memref<128x256xbf16, #tpu.memory_space<vmem>>, vector<128x256xbf16>
    %471 = arith.truncf %465 : vector<32x128xf32> to vector<32x128xbf16>
    %cst_205 = arith.constant dense<0.000000e+00> : vector<32x256xf32>
    %472 = tpu.matmul %471, %470, %cst_205 {dimension_numbers = #tpu.dot_dimension_numbers<[1], [0], [0], [1], [0, 0, 1, 1], [], []>} : vector<32x128xbf16>, vector<128x256xbf16>, vector<32x256xf32> -> vector<32x256xf32>
    %c0_206 = arith.constant 0 : index
    %c0_207 = arith.constant 0 : index
    %473 = vector.load %arg12[%c0_206, %c0_207] : memref<24x256xf32, #tpu.memory_space<vmem>>, vector<1x256xf32>
    %c1_208 = arith.constant 1 : index
    %c0_209 = arith.constant 0 : index
    %474 = vector.load %arg12[%c1_208, %c0_209] : memref<24x256xf32, #tpu.memory_space<vmem>>, vector<1x256xf32>
    %cst_210 = arith.constant dense<0.000000e+00> : vector<256xf32>
    %475 = vector.multi_reduction <add>, %472, %cst_210 [0] : vector<32x256xf32> to vector<256xf32>
    %476 = vector.shape_cast %475 : vector<256xf32> to vector<1x256xf32>
    %cst_211 = arith.constant 3.200000e+01 : f32
    %477 = vector.broadcast %cst_211 : f32 to vector<1x256xf32>
    %478 = arith.divf %476, %477 : vector<1x256xf32>
    %479 = arith.mulf %472, %472 : vector<32x256xf32>
    %cst_212 = arith.constant dense<0.000000e+00> : vector<256xf32>
    %480 = vector.multi_reduction <add>, %479, %cst_212 [0] : vector<32x256xf32> to vector<256xf32>
    %481 = vector.shape_cast %480 : vector<256xf32> to vector<1x256xf32>
    %cst_213 = arith.constant 3.200000e+01 : f32
    %482 = vector.broadcast %cst_213 : f32 to vector<1x256xf32>
    %483 = arith.divf %481, %482 : vector<1x256xf32>
    %484 = arith.mulf %478, %478 : vector<1x256xf32>
    %485 = arith.subf %483, %484 : vector<1x256xf32>
    %cst_214 = arith.constant 0.000000e+00 : f32
    %486 = vector.broadcast %cst_214 : f32 to vector<1x256xf32>
    %487 = arith.maximumf %485, %486 : vector<1x256xf32>
    %cst_215 = arith.constant 9.99999974E-6 : f32
    %488 = vector.broadcast %cst_215 : f32 to vector<1x256xf32>
    %489 = arith.addf %487, %488 : vector<1x256xf32>
    %490 = math.rsqrt %489 : vector<1x256xf32>
    %491 = arith.mulf %473, %490 : vector<1x256xf32>
    %492 = arith.mulf %478, %491 : vector<1x256xf32>
    %493 = arith.subf %474, %492 : vector<1x256xf32>
    %494 = vector.broadcast %491 : vector<1x256xf32> to vector<32x256xf32>
    %495 = arith.mulf %472, %494 : vector<32x256xf32>
    %496 = vector.broadcast %493 : vector<1x256xf32> to vector<32x256xf32>
    %497 = arith.addf %495, %496 : vector<32x256xf32>
    %cst_216 = arith.constant 0.000000e+00 : f32
    %498 = vector.broadcast %cst_216 : f32 to vector<32x256xf32>
    %499 = arith.maximumf %497, %498 : vector<32x256xf32>
    %c0_217 = arith.constant 0 : index
    %c0_218 = arith.constant 0 : index
    %c0_219 = arith.constant 0 : index
    %500 = vector.load %arg22[%c0_217, %c0_218, %c0_219] : memref<11x256x256xbf16, #tpu.memory_space<vmem>>, vector<1x256x256xbf16>
    %501 = vector.shape_cast %500 : vector<1x256x256xbf16> to vector<256x256xbf16>
    %502 = arith.truncf %499 : vector<32x256xf32> to vector<32x256xbf16>
    %cst_220 = arith.constant dense<0.000000e+00> : vector<32x256xf32>
    %503 = tpu.matmul %502, %501, %cst_220 {dimension_numbers = #tpu.dot_dimension_numbers<[1], [0], [0], [1], [0, 0, 1, 1], [], []>} : vector<32x256xbf16>, vector<256x256xbf16>, vector<32x256xf32> -> vector<32x256xf32>
    %c2_221 = arith.constant 2 : index
    %c0_222 = arith.constant 0 : index
    %504 = vector.load %arg12[%c2_221, %c0_222] : memref<24x256xf32, #tpu.memory_space<vmem>>, vector<1x256xf32>
    %c3_223 = arith.constant 3 : index
    %c0_224 = arith.constant 0 : index
    %505 = vector.load %arg12[%c3_223, %c0_224] : memref<24x256xf32, #tpu.memory_space<vmem>>, vector<1x256xf32>
    %cst_225 = arith.constant dense<0.000000e+00> : vector<256xf32>
    %506 = vector.multi_reduction <add>, %503, %cst_225 [0] : vector<32x256xf32> to vector<256xf32>
    %507 = vector.shape_cast %506 : vector<256xf32> to vector<1x256xf32>
    %cst_226 = arith.constant 3.200000e+01 : f32
    %508 = vector.broadcast %cst_226 : f32 to vector<1x256xf32>
    %509 = arith.divf %507, %508 : vector<1x256xf32>
    %510 = arith.mulf %503, %503 : vector<32x256xf32>
    %cst_227 = arith.constant dense<0.000000e+00> : vector<256xf32>
    %511 = vector.multi_reduction <add>, %510, %cst_227 [0] : vector<32x256xf32> to vector<256xf32>
    %512 = vector.shape_cast %511 : vector<256xf32> to vector<1x256xf32>
    %cst_228 = arith.constant 3.200000e+01 : f32
    %513 = vector.broadcast %cst_228 : f32 to vector<1x256xf32>
    %514 = arith.divf %512, %513 : vector<1x256xf32>
    %515 = arith.mulf %509, %509 : vector<1x256xf32>
    %516 = arith.subf %514, %515 : vector<1x256xf32>
    %cst_229 = arith.constant 0.000000e+00 : f32
    %517 = vector.broadcast %cst_229 : f32 to vector<1x256xf32>
    %518 = arith.maximumf %516, %517 : vector<1x256xf32>
    %cst_230 = arith.constant 9.99999974E-6 : f32
    %519 = vector.broadcast %cst_230 : f32 to vector<1x256xf32>
    %520 = arith.addf %518, %519 : vector<1x256xf32>
    %521 = math.rsqrt %520 : vector<1x256xf32>
    %522 = arith.mulf %504, %521 : vector<1x256xf32>
    %523 = arith.mulf %509, %522 : vector<1x256xf32>
    %524 = arith.subf %505, %523 : vector<1x256xf32>
    %525 = vector.broadcast %522 : vector<1x256xf32> to vector<32x256xf32>
    %526 = arith.mulf %503, %525 : vector<32x256xf32>
    %527 = vector.broadcast %524 : vector<1x256xf32> to vector<32x256xf32>
    %528 = arith.addf %526, %527 : vector<32x256xf32>
    %c1_231 = arith.constant 1 : index
    %c0_232 = arith.constant 0 : index
    %c0_233 = arith.constant 0 : index
    %529 = vector.load %arg22[%c1_231, %c0_232, %c0_233] : memref<11x256x256xbf16, #tpu.memory_space<vmem>>, vector<1x256x256xbf16>
    %530 = vector.shape_cast %529 : vector<1x256x256xbf16> to vector<256x256xbf16>
    %531 = arith.truncf %528 : vector<32x256xf32> to vector<32x256xbf16>
    %cst_234 = arith.constant dense<0.000000e+00> : vector<32x256xf32>
    %532 = tpu.matmul %531, %530, %cst_234 {dimension_numbers = #tpu.dot_dimension_numbers<[1], [0], [0], [1], [0, 0, 1, 1], [], []>} : vector<32x256xbf16>, vector<256x256xbf16>, vector<32x256xf32> -> vector<32x256xf32>
    %c4_235 = arith.constant 4 : index
    %c0_236 = arith.constant 0 : index
    %533 = vector.load %arg12[%c4_235, %c0_236] : memref<24x256xf32, #tpu.memory_space<vmem>>, vector<1x256xf32>
    %c5_237 = arith.constant 5 : index
    %c0_238 = arith.constant 0 : index
    %534 = vector.load %arg12[%c5_237, %c0_238] : memref<24x256xf32, #tpu.memory_space<vmem>>, vector<1x256xf32>
    %cst_239 = arith.constant dense<0.000000e+00> : vector<256xf32>
    %535 = vector.multi_reduction <add>, %532, %cst_239 [0] : vector<32x256xf32> to vector<256xf32>
    %536 = vector.shape_cast %535 : vector<256xf32> to vector<1x256xf32>
    %cst_240 = arith.constant 3.200000e+01 : f32
    %537 = vector.broadcast %cst_240 : f32 to vector<1x256xf32>
    %538 = arith.divf %536, %537 : vector<1x256xf32>
    %539 = arith.mulf %532, %532 : vector<32x256xf32>
    %cst_241 = arith.constant dense<0.000000e+00> : vector<256xf32>
    %540 = vector.multi_reduction <add>, %539, %cst_241 [0] : vector<32x256xf32> to vector<256xf32>
    %541 = vector.shape_cast %540 : vector<256xf32> to vector<1x256xf32>
    %cst_242 = arith.constant 3.200000e+01 : f32
    %542 = vector.broadcast %cst_242 : f32 to vector<1x256xf32>
    %543 = arith.divf %541, %542 : vector<1x256xf32>
    %544 = arith.mulf %538, %538 : vector<1x256xf32>
    %545 = arith.subf %543, %544 : vector<1x256xf32>
    %cst_243 = arith.constant 0.000000e+00 : f32
    %546 = vector.broadcast %cst_243 : f32 to vector<1x256xf32>
    %547 = arith.maximumf %545, %546 : vector<1x256xf32>
    %cst_244 = arith.constant 9.99999974E-6 : f32
    %548 = vector.broadcast %cst_244 : f32 to vector<1x256xf32>
    %549 = arith.addf %547, %548 : vector<1x256xf32>
    %550 = math.rsqrt %549 : vector<1x256xf32>
    %551 = arith.mulf %533, %550 : vector<1x256xf32>
    %552 = arith.mulf %538, %551 : vector<1x256xf32>
    %553 = arith.subf %534, %552 : vector<1x256xf32>
    %554 = vector.broadcast %551 : vector<1x256xf32> to vector<32x256xf32>
    %555 = arith.mulf %532, %554 : vector<32x256xf32>
    %556 = vector.broadcast %553 : vector<1x256xf32> to vector<32x256xf32>
    %557 = arith.addf %555, %556 : vector<32x256xf32>
    %cst_245 = arith.constant 0.000000e+00 : f32
    %558 = vector.broadcast %cst_245 : f32 to vector<32x256xf32>
    %559 = arith.maximumf %557, %558 : vector<32x256xf32>
    %c2_246 = arith.constant 2 : index
    %c0_247 = arith.constant 0 : index
    %c0_248 = arith.constant 0 : index
    %560 = vector.load %arg22[%c2_246, %c0_247, %c0_248] : memref<11x256x256xbf16, #tpu.memory_space<vmem>>, vector<1x256x256xbf16>
    %561 = vector.shape_cast %560 : vector<1x256x256xbf16> to vector<256x256xbf16>
    %562 = arith.truncf %559 : vector<32x256xf32> to vector<32x256xbf16>
    %cst_249 = arith.constant dense<0.000000e+00> : vector<32x256xf32>
    %563 = tpu.matmul %562, %561, %cst_249 {dimension_numbers = #tpu.dot_dimension_numbers<[1], [0], [0], [1], [0, 0, 1, 1], [], []>} : vector<32x256xbf16>, vector<256x256xbf16>, vector<32x256xf32> -> vector<32x256xf32>
    %c6_250 = arith.constant 6 : index
    %c0_251 = arith.constant 0 : index
    %564 = vector.load %arg12[%c6_250, %c0_251] : memref<24x256xf32, #tpu.memory_space<vmem>>, vector<1x256xf32>
    %c7_252 = arith.constant 7 : index
    %c0_253 = arith.constant 0 : index
    %565 = vector.load %arg12[%c7_252, %c0_253] : memref<24x256xf32, #tpu.memory_space<vmem>>, vector<1x256xf32>
    %cst_254 = arith.constant dense<0.000000e+00> : vector<256xf32>
    %566 = vector.multi_reduction <add>, %563, %cst_254 [0] : vector<32x256xf32> to vector<256xf32>
    %567 = vector.shape_cast %566 : vector<256xf32> to vector<1x256xf32>
    %cst_255 = arith.constant 3.200000e+01 : f32
    %568 = vector.broadcast %cst_255 : f32 to vector<1x256xf32>
    %569 = arith.divf %567, %568 : vector<1x256xf32>
    %570 = arith.mulf %563, %563 : vector<32x256xf32>
    %cst_256 = arith.constant dense<0.000000e+00> : vector<256xf32>
    %571 = vector.multi_reduction <add>, %570, %cst_256 [0] : vector<32x256xf32> to vector<256xf32>
    %572 = vector.shape_cast %571 : vector<256xf32> to vector<1x256xf32>
    %cst_257 = arith.constant 3.200000e+01 : f32
    %573 = vector.broadcast %cst_257 : f32 to vector<1x256xf32>
    %574 = arith.divf %572, %573 : vector<1x256xf32>
    %575 = arith.mulf %569, %569 : vector<1x256xf32>
    %576 = arith.subf %574, %575 : vector<1x256xf32>
    %cst_258 = arith.constant 0.000000e+00 : f32
    %577 = vector.broadcast %cst_258 : f32 to vector<1x256xf32>
    %578 = arith.maximumf %576, %577 : vector<1x256xf32>
    %cst_259 = arith.constant 9.99999974E-6 : f32
    %579 = vector.broadcast %cst_259 : f32 to vector<1x256xf32>
    %580 = arith.addf %578, %579 : vector<1x256xf32>
    %581 = math.rsqrt %580 : vector<1x256xf32>
    %582 = arith.mulf %564, %581 : vector<1x256xf32>
    %583 = arith.mulf %569, %582 : vector<1x256xf32>
    %584 = arith.subf %565, %583 : vector<1x256xf32>
    %585 = vector.broadcast %582 : vector<1x256xf32> to vector<32x256xf32>
    %586 = arith.mulf %563, %585 : vector<32x256xf32>
    %587 = vector.broadcast %584 : vector<1x256xf32> to vector<32x256xf32>
    %588 = arith.addf %586, %587 : vector<32x256xf32>
    %c3_260 = arith.constant 3 : index
    %c0_261 = arith.constant 0 : index
    %c0_262 = arith.constant 0 : index
    %589 = vector.load %arg22[%c3_260, %c0_261, %c0_262] : memref<11x256x256xbf16, #tpu.memory_space<vmem>>, vector<1x256x256xbf16>
    %590 = vector.shape_cast %589 : vector<1x256x256xbf16> to vector<256x256xbf16>
    %591 = arith.truncf %588 : vector<32x256xf32> to vector<32x256xbf16>
    %cst_263 = arith.constant dense<0.000000e+00> : vector<32x256xf32>
    %592 = tpu.matmul %591, %590, %cst_263 {dimension_numbers = #tpu.dot_dimension_numbers<[1], [0], [0], [1], [0, 0, 1, 1], [], []>} : vector<32x256xbf16>, vector<256x256xbf16>, vector<32x256xf32> -> vector<32x256xf32>
    %c8_264 = arith.constant 8 : index
    %c0_265 = arith.constant 0 : index
    %593 = vector.load %arg12[%c8_264, %c0_265] : memref<24x256xf32, #tpu.memory_space<vmem>>, vector<1x256xf32>
    %c9_266 = arith.constant 9 : index
    %c0_267 = arith.constant 0 : index
    %594 = vector.load %arg12[%c9_266, %c0_267] : memref<24x256xf32, #tpu.memory_space<vmem>>, vector<1x256xf32>
    %cst_268 = arith.constant dense<0.000000e+00> : vector<256xf32>
    %595 = vector.multi_reduction <add>, %592, %cst_268 [0] : vector<32x256xf32> to vector<256xf32>
    %596 = vector.shape_cast %595 : vector<256xf32> to vector<1x256xf32>
    %cst_269 = arith.constant 3.200000e+01 : f32
    %597 = vector.broadcast %cst_269 : f32 to vector<1x256xf32>
    %598 = arith.divf %596, %597 : vector<1x256xf32>
    %599 = arith.mulf %592, %592 : vector<32x256xf32>
    %cst_270 = arith.constant dense<0.000000e+00> : vector<256xf32>
    %600 = vector.multi_reduction <add>, %599, %cst_270 [0] : vector<32x256xf32> to vector<256xf32>
    %601 = vector.shape_cast %600 : vector<256xf32> to vector<1x256xf32>
    %cst_271 = arith.constant 3.200000e+01 : f32
    %602 = vector.broadcast %cst_271 : f32 to vector<1x256xf32>
    %603 = arith.divf %601, %602 : vector<1x256xf32>
    %604 = arith.mulf %598, %598 : vector<1x256xf32>
    %605 = arith.subf %603, %604 : vector<1x256xf32>
    %cst_272 = arith.constant 0.000000e+00 : f32
    %606 = vector.broadcast %cst_272 : f32 to vector<1x256xf32>
    %607 = arith.maximumf %605, %606 : vector<1x256xf32>
    %cst_273 = arith.constant 9.99999974E-6 : f32
    %608 = vector.broadcast %cst_273 : f32 to vector<1x256xf32>
    %609 = arith.addf %607, %608 : vector<1x256xf32>
    %610 = math.rsqrt %609 : vector<1x256xf32>
    %611 = arith.mulf %593, %610 : vector<1x256xf32>
    %612 = arith.mulf %598, %611 : vector<1x256xf32>
    %613 = arith.subf %594, %612 : vector<1x256xf32>
    %614 = vector.broadcast %611 : vector<1x256xf32> to vector<32x256xf32>
    %615 = arith.mulf %592, %614 : vector<32x256xf32>
    %616 = vector.broadcast %613 : vector<1x256xf32> to vector<32x256xf32>
    %617 = arith.addf %615, %616 : vector<32x256xf32>
    %cst_274 = arith.constant 0.000000e+00 : f32
    %618 = vector.broadcast %cst_274 : f32 to vector<32x256xf32>
    %619 = arith.maximumf %617, %618 : vector<32x256xf32>
    %c4_275 = arith.constant 4 : index
    %c0_276 = arith.constant 0 : index
    %c0_277 = arith.constant 0 : index
    %620 = vector.load %arg22[%c4_275, %c0_276, %c0_277] : memref<11x256x256xbf16, #tpu.memory_space<vmem>>, vector<1x256x256xbf16>
    %621 = vector.shape_cast %620 : vector<1x256x256xbf16> to vector<256x256xbf16>
    %622 = arith.truncf %619 : vector<32x256xf32> to vector<32x256xbf16>
    %cst_278 = arith.constant dense<0.000000e+00> : vector<32x256xf32>
    %623 = tpu.matmul %622, %621, %cst_278 {dimension_numbers = #tpu.dot_dimension_numbers<[1], [0], [0], [1], [0, 0, 1, 1], [], []>} : vector<32x256xbf16>, vector<256x256xbf16>, vector<32x256xf32> -> vector<32x256xf32>
    %c10_279 = arith.constant 10 : index
    %c0_280 = arith.constant 0 : index
    %624 = vector.load %arg12[%c10_279, %c0_280] : memref<24x256xf32, #tpu.memory_space<vmem>>, vector<1x256xf32>
    %c11_281 = arith.constant 11 : index
    %c0_282 = arith.constant 0 : index
    %625 = vector.load %arg12[%c11_281, %c0_282] : memref<24x256xf32, #tpu.memory_space<vmem>>, vector<1x256xf32>
    %cst_283 = arith.constant dense<0.000000e+00> : vector<256xf32>
    %626 = vector.multi_reduction <add>, %623, %cst_283 [0] : vector<32x256xf32> to vector<256xf32>
    %627 = vector.shape_cast %626 : vector<256xf32> to vector<1x256xf32>
    %cst_284 = arith.constant 3.200000e+01 : f32
    %628 = vector.broadcast %cst_284 : f32 to vector<1x256xf32>
    %629 = arith.divf %627, %628 : vector<1x256xf32>
    %630 = arith.mulf %623, %623 : vector<32x256xf32>
    %cst_285 = arith.constant dense<0.000000e+00> : vector<256xf32>
    %631 = vector.multi_reduction <add>, %630, %cst_285 [0] : vector<32x256xf32> to vector<256xf32>
    %632 = vector.shape_cast %631 : vector<256xf32> to vector<1x256xf32>
    %cst_286 = arith.constant 3.200000e+01 : f32
    %633 = vector.broadcast %cst_286 : f32 to vector<1x256xf32>
    %634 = arith.divf %632, %633 : vector<1x256xf32>
    %635 = arith.mulf %629, %629 : vector<1x256xf32>
    %636 = arith.subf %634, %635 : vector<1x256xf32>
    %cst_287 = arith.constant 0.000000e+00 : f32
    %637 = vector.broadcast %cst_287 : f32 to vector<1x256xf32>
    %638 = arith.maximumf %636, %637 : vector<1x256xf32>
    %cst_288 = arith.constant 9.99999974E-6 : f32
    %639 = vector.broadcast %cst_288 : f32 to vector<1x256xf32>
    %640 = arith.addf %638, %639 : vector<1x256xf32>
    %641 = math.rsqrt %640 : vector<1x256xf32>
    %642 = arith.mulf %624, %641 : vector<1x256xf32>
    %643 = arith.mulf %629, %642 : vector<1x256xf32>
    %644 = arith.subf %625, %643 : vector<1x256xf32>
    %645 = vector.broadcast %642 : vector<1x256xf32> to vector<32x256xf32>
    %646 = arith.mulf %623, %645 : vector<32x256xf32>
    %647 = vector.broadcast %644 : vector<1x256xf32> to vector<32x256xf32>
    %648 = arith.addf %646, %647 : vector<32x256xf32>
    %c5_289 = arith.constant 5 : index
    %c0_290 = arith.constant 0 : index
    %c0_291 = arith.constant 0 : index
    %649 = vector.load %arg22[%c5_289, %c0_290, %c0_291] : memref<11x256x256xbf16, #tpu.memory_space<vmem>>, vector<1x256x256xbf16>
    %650 = vector.shape_cast %649 : vector<1x256x256xbf16> to vector<256x256xbf16>
    %651 = arith.truncf %648 : vector<32x256xf32> to vector<32x256xbf16>
    %cst_292 = arith.constant dense<0.000000e+00> : vector<32x256xf32>
    %652 = tpu.matmul %651, %650, %cst_292 {dimension_numbers = #tpu.dot_dimension_numbers<[1], [0], [0], [1], [0, 0, 1, 1], [], []>} : vector<32x256xbf16>, vector<256x256xbf16>, vector<32x256xf32> -> vector<32x256xf32>
    %c12_293 = arith.constant 12 : index
    %c0_294 = arith.constant 0 : index
    %653 = vector.load %arg12[%c12_293, %c0_294] : memref<24x256xf32, #tpu.memory_space<vmem>>, vector<1x256xf32>
    %c13_295 = arith.constant 13 : index
    %c0_296 = arith.constant 0 : index
    %654 = vector.load %arg12[%c13_295, %c0_296] : memref<24x256xf32, #tpu.memory_space<vmem>>, vector<1x256xf32>
    %cst_297 = arith.constant dense<0.000000e+00> : vector<256xf32>
    %655 = vector.multi_reduction <add>, %652, %cst_297 [0] : vector<32x256xf32> to vector<256xf32>
    %656 = vector.shape_cast %655 : vector<256xf32> to vector<1x256xf32>
    %cst_298 = arith.constant 3.200000e+01 : f32
    %657 = vector.broadcast %cst_298 : f32 to vector<1x256xf32>
    %658 = arith.divf %656, %657 : vector<1x256xf32>
    %659 = arith.mulf %652, %652 : vector<32x256xf32>
    %cst_299 = arith.constant dense<0.000000e+00> : vector<256xf32>
    %660 = vector.multi_reduction <add>, %659, %cst_299 [0] : vector<32x256xf32> to vector<256xf32>
    %661 = vector.shape_cast %660 : vector<256xf32> to vector<1x256xf32>
    %cst_300 = arith.constant 3.200000e+01 : f32
    %662 = vector.broadcast %cst_300 : f32 to vector<1x256xf32>
    %663 = arith.divf %661, %662 : vector<1x256xf32>
    %664 = arith.mulf %658, %658 : vector<1x256xf32>
    %665 = arith.subf %663, %664 : vector<1x256xf32>
    %cst_301 = arith.constant 0.000000e+00 : f32
    %666 = vector.broadcast %cst_301 : f32 to vector<1x256xf32>
    %667 = arith.maximumf %665, %666 : vector<1x256xf32>
    %cst_302 = arith.constant 9.99999974E-6 : f32
    %668 = vector.broadcast %cst_302 : f32 to vector<1x256xf32>
    %669 = arith.addf %667, %668 : vector<1x256xf32>
    %670 = math.rsqrt %669 : vector<1x256xf32>
    %671 = arith.mulf %653, %670 : vector<1x256xf32>
    %672 = arith.mulf %658, %671 : vector<1x256xf32>
    %673 = arith.subf %654, %672 : vector<1x256xf32>
    %674 = vector.broadcast %671 : vector<1x256xf32> to vector<32x256xf32>
    %675 = arith.mulf %652, %674 : vector<32x256xf32>
    %676 = vector.broadcast %673 : vector<1x256xf32> to vector<32x256xf32>
    %677 = arith.addf %675, %676 : vector<32x256xf32>
    %cst_303 = arith.constant 0.000000e+00 : f32
    %678 = vector.broadcast %cst_303 : f32 to vector<32x256xf32>
    %679 = arith.maximumf %677, %678 : vector<32x256xf32>
    %c6_304 = arith.constant 6 : index
    %c0_305 = arith.constant 0 : index
    %c0_306 = arith.constant 0 : index
    %680 = vector.load %arg22[%c6_304, %c0_305, %c0_306] : memref<11x256x256xbf16, #tpu.memory_space<vmem>>, vector<1x256x256xbf16>
    %681 = vector.shape_cast %680 : vector<1x256x256xbf16> to vector<256x256xbf16>
    %682 = arith.truncf %679 : vector<32x256xf32> to vector<32x256xbf16>
    %cst_307 = arith.constant dense<0.000000e+00> : vector<32x256xf32>
    %683 = tpu.matmul %682, %681, %cst_307 {dimension_numbers = #tpu.dot_dimension_numbers<[1], [0], [0], [1], [0, 0, 1, 1], [], []>} : vector<32x256xbf16>, vector<256x256xbf16>, vector<32x256xf32> -> vector<32x256xf32>
    %c14_308 = arith.constant 14 : index
    %c0_309 = arith.constant 0 : index
    %684 = vector.load %arg12[%c14_308, %c0_309] : memref<24x256xf32, #tpu.memory_space<vmem>>, vector<1x256xf32>
    %c15_310 = arith.constant 15 : index
    %c0_311 = arith.constant 0 : index
    %685 = vector.load %arg12[%c15_310, %c0_311] : memref<24x256xf32, #tpu.memory_space<vmem>>, vector<1x256xf32>
    %cst_312 = arith.constant dense<0.000000e+00> : vector<256xf32>
    %686 = vector.multi_reduction <add>, %683, %cst_312 [0] : vector<32x256xf32> to vector<256xf32>
    %687 = vector.shape_cast %686 : vector<256xf32> to vector<1x256xf32>
    %cst_313 = arith.constant 3.200000e+01 : f32
    %688 = vector.broadcast %cst_313 : f32 to vector<1x256xf32>
    %689 = arith.divf %687, %688 : vector<1x256xf32>
    %690 = arith.mulf %683, %683 : vector<32x256xf32>
    %cst_314 = arith.constant dense<0.000000e+00> : vector<256xf32>
    %691 = vector.multi_reduction <add>, %690, %cst_314 [0] : vector<32x256xf32> to vector<256xf32>
    %692 = vector.shape_cast %691 : vector<256xf32> to vector<1x256xf32>
    %cst_315 = arith.constant 3.200000e+01 : f32
    %693 = vector.broadcast %cst_315 : f32 to vector<1x256xf32>
    %694 = arith.divf %692, %693 : vector<1x256xf32>
    %695 = arith.mulf %689, %689 : vector<1x256xf32>
    %696 = arith.subf %694, %695 : vector<1x256xf32>
    %cst_316 = arith.constant 0.000000e+00 : f32
    %697 = vector.broadcast %cst_316 : f32 to vector<1x256xf32>
    %698 = arith.maximumf %696, %697 : vector<1x256xf32>
    %cst_317 = arith.constant 9.99999974E-6 : f32
    %699 = vector.broadcast %cst_317 : f32 to vector<1x256xf32>
    %700 = arith.addf %698, %699 : vector<1x256xf32>
    %701 = math.rsqrt %700 : vector<1x256xf32>
    %702 = arith.mulf %684, %701 : vector<1x256xf32>
    %703 = arith.mulf %689, %702 : vector<1x256xf32>
    %704 = arith.subf %685, %703 : vector<1x256xf32>
    %705 = vector.broadcast %702 : vector<1x256xf32> to vector<32x256xf32>
    %706 = arith.mulf %683, %705 : vector<32x256xf32>
    %707 = vector.broadcast %704 : vector<1x256xf32> to vector<32x256xf32>
    %708 = arith.addf %706, %707 : vector<32x256xf32>
    %c7_318 = arith.constant 7 : index
    %c0_319 = arith.constant 0 : index
    %c0_320 = arith.constant 0 : index
    %709 = vector.load %arg22[%c7_318, %c0_319, %c0_320] : memref<11x256x256xbf16, #tpu.memory_space<vmem>>, vector<1x256x256xbf16>
    %710 = vector.shape_cast %709 : vector<1x256x256xbf16> to vector<256x256xbf16>
    %711 = arith.truncf %708 : vector<32x256xf32> to vector<32x256xbf16>
    %cst_321 = arith.constant dense<0.000000e+00> : vector<32x256xf32>
    %712 = tpu.matmul %711, %710, %cst_321 {dimension_numbers = #tpu.dot_dimension_numbers<[1], [0], [0], [1], [0, 0, 1, 1], [], []>} : vector<32x256xbf16>, vector<256x256xbf16>, vector<32x256xf32> -> vector<32x256xf32>
    %c16 = arith.constant 16 : index
    %c0_322 = arith.constant 0 : index
    %713 = vector.load %arg12[%c16, %c0_322] : memref<24x256xf32, #tpu.memory_space<vmem>>, vector<1x256xf32>
    %c17 = arith.constant 17 : index
    %c0_323 = arith.constant 0 : index
    %714 = vector.load %arg12[%c17, %c0_323] : memref<24x256xf32, #tpu.memory_space<vmem>>, vector<1x256xf32>
    %cst_324 = arith.constant dense<0.000000e+00> : vector<256xf32>
    %715 = vector.multi_reduction <add>, %712, %cst_324 [0] : vector<32x256xf32> to vector<256xf32>
    %716 = vector.shape_cast %715 : vector<256xf32> to vector<1x256xf32>
    %cst_325 = arith.constant 3.200000e+01 : f32
    %717 = vector.broadcast %cst_325 : f32 to vector<1x256xf32>
    %718 = arith.divf %716, %717 : vector<1x256xf32>
    %719 = arith.mulf %712, %712 : vector<32x256xf32>
    %cst_326 = arith.constant dense<0.000000e+00> : vector<256xf32>
    %720 = vector.multi_reduction <add>, %719, %cst_326 [0] : vector<32x256xf32> to vector<256xf32>
    %721 = vector.shape_cast %720 : vector<256xf32> to vector<1x256xf32>
    %cst_327 = arith.constant 3.200000e+01 : f32
    %722 = vector.broadcast %cst_327 : f32 to vector<1x256xf32>
    %723 = arith.divf %721, %722 : vector<1x256xf32>
    %724 = arith.mulf %718, %718 : vector<1x256xf32>
    %725 = arith.subf %723, %724 : vector<1x256xf32>
    %cst_328 = arith.constant 0.000000e+00 : f32
    %726 = vector.broadcast %cst_328 : f32 to vector<1x256xf32>
    %727 = arith.maximumf %725, %726 : vector<1x256xf32>
    %cst_329 = arith.constant 9.99999974E-6 : f32
    %728 = vector.broadcast %cst_329 : f32 to vector<1x256xf32>
    %729 = arith.addf %727, %728 : vector<1x256xf32>
    %730 = math.rsqrt %729 : vector<1x256xf32>
    %731 = arith.mulf %713, %730 : vector<1x256xf32>
    %732 = arith.mulf %718, %731 : vector<1x256xf32>
    %733 = arith.subf %714, %732 : vector<1x256xf32>
    %734 = vector.broadcast %731 : vector<1x256xf32> to vector<32x256xf32>
    %735 = arith.mulf %712, %734 : vector<32x256xf32>
    %736 = vector.broadcast %733 : vector<1x256xf32> to vector<32x256xf32>
    %737 = arith.addf %735, %736 : vector<32x256xf32>
    %cst_330 = arith.constant 0.000000e+00 : f32
    %738 = vector.broadcast %cst_330 : f32 to vector<32x256xf32>
    %739 = arith.maximumf %737, %738 : vector<32x256xf32>
    %c8_331 = arith.constant 8 : index
    %c0_332 = arith.constant 0 : index
    %c0_333 = arith.constant 0 : index
    %740 = vector.load %arg22[%c8_331, %c0_332, %c0_333] : memref<11x256x256xbf16, #tpu.memory_space<vmem>>, vector<1x256x256xbf16>
    %741 = vector.shape_cast %740 : vector<1x256x256xbf16> to vector<256x256xbf16>
    %742 = arith.truncf %739 : vector<32x256xf32> to vector<32x256xbf16>
    %cst_334 = arith.constant dense<0.000000e+00> : vector<32x256xf32>
    %743 = tpu.matmul %742, %741, %cst_334 {dimension_numbers = #tpu.dot_dimension_numbers<[1], [0], [0], [1], [0, 0, 1, 1], [], []>} : vector<32x256xbf16>, vector<256x256xbf16>, vector<32x256xf32> -> vector<32x256xf32>
    %c18 = arith.constant 18 : index
    %c0_335 = arith.constant 0 : index
    %744 = vector.load %arg12[%c18, %c0_335] : memref<24x256xf32, #tpu.memory_space<vmem>>, vector<1x256xf32>
    %c19 = arith.constant 19 : index
    %c0_336 = arith.constant 0 : index
    %745 = vector.load %arg12[%c19, %c0_336] : memref<24x256xf32, #tpu.memory_space<vmem>>, vector<1x256xf32>
    %cst_337 = arith.constant dense<0.000000e+00> : vector<256xf32>
    %746 = vector.multi_reduction <add>, %743, %cst_337 [0] : vector<32x256xf32> to vector<256xf32>
    %747 = vector.shape_cast %746 : vector<256xf32> to vector<1x256xf32>
    %cst_338 = arith.constant 3.200000e+01 : f32
    %748 = vector.broadcast %cst_338 : f32 to vector<1x256xf32>
    %749 = arith.divf %747, %748 : vector<1x256xf32>
    %750 = arith.mulf %743, %743 : vector<32x256xf32>
    %cst_339 = arith.constant dense<0.000000e+00> : vector<256xf32>
    %751 = vector.multi_reduction <add>, %750, %cst_339 [0] : vector<32x256xf32> to vector<256xf32>
    %752 = vector.shape_cast %751 : vector<256xf32> to vector<1x256xf32>
    %cst_340 = arith.constant 3.200000e+01 : f32
    %753 = vector.broadcast %cst_340 : f32 to vector<1x256xf32>
    %754 = arith.divf %752, %753 : vector<1x256xf32>
    %755 = arith.mulf %749, %749 : vector<1x256xf32>
    %756 = arith.subf %754, %755 : vector<1x256xf32>
    %cst_341 = arith.constant 0.000000e+00 : f32
    %757 = vector.broadcast %cst_341 : f32 to vector<1x256xf32>
    %758 = arith.maximumf %756, %757 : vector<1x256xf32>
    %cst_342 = arith.constant 9.99999974E-6 : f32
    %759 = vector.broadcast %cst_342 : f32 to vector<1x256xf32>
    %760 = arith.addf %758, %759 : vector<1x256xf32>
    %761 = math.rsqrt %760 : vector<1x256xf32>
    %762 = arith.mulf %744, %761 : vector<1x256xf32>
    %763 = arith.mulf %749, %762 : vector<1x256xf32>
    %764 = arith.subf %745, %763 : vector<1x256xf32>
    %765 = vector.broadcast %762 : vector<1x256xf32> to vector<32x256xf32>
    %766 = arith.mulf %743, %765 : vector<32x256xf32>
    %767 = vector.broadcast %764 : vector<1x256xf32> to vector<32x256xf32>
    %768 = arith.addf %766, %767 : vector<32x256xf32>
    %c9_343 = arith.constant 9 : index
    %c0_344 = arith.constant 0 : index
    %c0_345 = arith.constant 0 : index
    %769 = vector.load %arg22[%c9_343, %c0_344, %c0_345] : memref<11x256x256xbf16, #tpu.memory_space<vmem>>, vector<1x256x256xbf16>
    %770 = vector.shape_cast %769 : vector<1x256x256xbf16> to vector<256x256xbf16>
    %771 = arith.truncf %768 : vector<32x256xf32> to vector<32x256xbf16>
    %cst_346 = arith.constant dense<0.000000e+00> : vector<32x256xf32>
    %772 = tpu.matmul %771, %770, %cst_346 {dimension_numbers = #tpu.dot_dimension_numbers<[1], [0], [0], [1], [0, 0, 1, 1], [], []>} : vector<32x256xbf16>, vector<256x256xbf16>, vector<32x256xf32> -> vector<32x256xf32>
    %c20 = arith.constant 20 : index
    %c0_347 = arith.constant 0 : index
    %773 = vector.load %arg12[%c20, %c0_347] : memref<24x256xf32, #tpu.memory_space<vmem>>, vector<1x256xf32>
    %c21 = arith.constant 21 : index
    %c0_348 = arith.constant 0 : index
    %774 = vector.load %arg12[%c21, %c0_348] : memref<24x256xf32, #tpu.memory_space<vmem>>, vector<1x256xf32>
    %cst_349 = arith.constant dense<0.000000e+00> : vector<256xf32>
    %775 = vector.multi_reduction <add>, %772, %cst_349 [0] : vector<32x256xf32> to vector<256xf32>
    %776 = vector.shape_cast %775 : vector<256xf32> to vector<1x256xf32>
    %cst_350 = arith.constant 3.200000e+01 : f32
    %777 = vector.broadcast %cst_350 : f32 to vector<1x256xf32>
    %778 = arith.divf %776, %777 : vector<1x256xf32>
    %779 = arith.mulf %772, %772 : vector<32x256xf32>
    %cst_351 = arith.constant dense<0.000000e+00> : vector<256xf32>
    %780 = vector.multi_reduction <add>, %779, %cst_351 [0] : vector<32x256xf32> to vector<256xf32>
    %781 = vector.shape_cast %780 : vector<256xf32> to vector<1x256xf32>
    %cst_352 = arith.constant 3.200000e+01 : f32
    %782 = vector.broadcast %cst_352 : f32 to vector<1x256xf32>
    %783 = arith.divf %781, %782 : vector<1x256xf32>
    %784 = arith.mulf %778, %778 : vector<1x256xf32>
    %785 = arith.subf %783, %784 : vector<1x256xf32>
    %cst_353 = arith.constant 0.000000e+00 : f32
    %786 = vector.broadcast %cst_353 : f32 to vector<1x256xf32>
    %787 = arith.maximumf %785, %786 : vector<1x256xf32>
    %cst_354 = arith.constant 9.99999974E-6 : f32
    %788 = vector.broadcast %cst_354 : f32 to vector<1x256xf32>
    %789 = arith.addf %787, %788 : vector<1x256xf32>
    %790 = math.rsqrt %789 : vector<1x256xf32>
    %791 = arith.mulf %773, %790 : vector<1x256xf32>
    %792 = arith.mulf %778, %791 : vector<1x256xf32>
    %793 = arith.subf %774, %792 : vector<1x256xf32>
    %794 = vector.broadcast %791 : vector<1x256xf32> to vector<32x256xf32>
    %795 = arith.mulf %772, %794 : vector<32x256xf32>
    %796 = vector.broadcast %793 : vector<1x256xf32> to vector<32x256xf32>
    %797 = arith.addf %795, %796 : vector<32x256xf32>
    %cst_355 = arith.constant 0.000000e+00 : f32
    %798 = vector.broadcast %cst_355 : f32 to vector<32x256xf32>
    %799 = arith.maximumf %797, %798 : vector<32x256xf32>
    %c10_356 = arith.constant 10 : index
    %c0_357 = arith.constant 0 : index
    %c0_358 = arith.constant 0 : index
    %800 = vector.load %arg22[%c10_356, %c0_357, %c0_358] : memref<11x256x256xbf16, #tpu.memory_space<vmem>>, vector<1x256x256xbf16>
    %801 = vector.shape_cast %800 : vector<1x256x256xbf16> to vector<256x256xbf16>
    %802 = arith.truncf %799 : vector<32x256xf32> to vector<32x256xbf16>
    %cst_359 = arith.constant dense<0.000000e+00> : vector<32x256xf32>
    %803 = tpu.matmul %802, %801, %cst_359 {dimension_numbers = #tpu.dot_dimension_numbers<[1], [0], [0], [1], [0, 0, 1, 1], [], []>} : vector<32x256xbf16>, vector<256x256xbf16>, vector<32x256xf32> -> vector<32x256xf32>
    %c22 = arith.constant 22 : index
    %c0_360 = arith.constant 0 : index
    %804 = vector.load %arg12[%c22, %c0_360] : memref<24x256xf32, #tpu.memory_space<vmem>>, vector<1x256xf32>
    %c23 = arith.constant 23 : index
    %c0_361 = arith.constant 0 : index
    %805 = vector.load %arg12[%c23, %c0_361] : memref<24x256xf32, #tpu.memory_space<vmem>>, vector<1x256xf32>
    %cst_362 = arith.constant dense<0.000000e+00> : vector<256xf32>
    %806 = vector.multi_reduction <add>, %803, %cst_362 [0] : vector<32x256xf32> to vector<256xf32>
    %807 = vector.shape_cast %806 : vector<256xf32> to vector<1x256xf32>
    %cst_363 = arith.constant 3.200000e+01 : f32
    %808 = vector.broadcast %cst_363 : f32 to vector<1x256xf32>
    %809 = arith.divf %807, %808 : vector<1x256xf32>
    %810 = arith.mulf %803, %803 : vector<32x256xf32>
    %cst_364 = arith.constant dense<0.000000e+00> : vector<256xf32>
    %811 = vector.multi_reduction <add>, %810, %cst_364 [0] : vector<32x256xf32> to vector<256xf32>
    %812 = vector.shape_cast %811 : vector<256xf32> to vector<1x256xf32>
    %cst_365 = arith.constant 3.200000e+01 : f32
    %813 = vector.broadcast %cst_365 : f32 to vector<1x256xf32>
    %814 = arith.divf %812, %813 : vector<1x256xf32>
    %815 = arith.mulf %809, %809 : vector<1x256xf32>
    %816 = arith.subf %814, %815 : vector<1x256xf32>
    %cst_366 = arith.constant 0.000000e+00 : f32
    %817 = vector.broadcast %cst_366 : f32 to vector<1x256xf32>
    %818 = arith.maximumf %816, %817 : vector<1x256xf32>
    %cst_367 = arith.constant 9.99999974E-6 : f32
    %819 = vector.broadcast %cst_367 : f32 to vector<1x256xf32>
    %820 = arith.addf %818, %819 : vector<1x256xf32>
    %821 = math.rsqrt %820 : vector<1x256xf32>
    %822 = arith.mulf %804, %821 : vector<1x256xf32>
    %823 = arith.mulf %809, %822 : vector<1x256xf32>
    %824 = arith.subf %805, %823 : vector<1x256xf32>
    %825 = vector.broadcast %822 : vector<1x256xf32> to vector<32x256xf32>
    %826 = arith.mulf %803, %825 : vector<32x256xf32>
    %827 = vector.broadcast %824 : vector<1x256xf32> to vector<32x256xf32>
    %828 = arith.addf %826, %827 : vector<32x256xf32>
    %c4_i32_368 = arith.constant 4 : i32
    %829 = tpu.memref_slice %arg25[%c4_i32_368] : memref<6x!tpu.dma_semaphore, #tpu.memory_space<semaphore_mem>> -> memref<1x!tpu.dma_semaphore, #tpu.memory_space<semaphore_mem>>
    %830 = tpu.memref_squeeze %829 : memref<1x!tpu.dma_semaphore, #tpu.memory_space<semaphore_mem>> -> memref<!tpu.dma_semaphore, #tpu.memory_space<semaphore_mem>>
    tpu.wait_dma2 semaphore(%830 : memref<!tpu.dma_semaphore, #tpu.memory_space<semaphore_mem>>) src(%arg13 : memref<256x512xbf16, #tpu.memory_space<any>>) dst(%arg23 : memref<256x512xbf16, #tpu.memory_space<vmem>>)
    %c5_i32_369 = arith.constant 5 : i32
    %831 = tpu.memref_slice %arg25[%c5_i32_369] : memref<6x!tpu.dma_semaphore, #tpu.memory_space<semaphore_mem>> -> memref<1x!tpu.dma_semaphore, #tpu.memory_space<semaphore_mem>>
    %832 = tpu.memref_squeeze %831 : memref<1x!tpu.dma_semaphore, #tpu.memory_space<semaphore_mem>> -> memref<!tpu.dma_semaphore, #tpu.memory_space<semaphore_mem>>
    tpu.wait_dma2 semaphore(%832 : memref<!tpu.dma_semaphore, #tpu.memory_space<semaphore_mem>>) src(%arg14 : memref<5x512x512xbf16, #tpu.memory_space<any>>) dst(%arg24 : memref<5x512x512xbf16, #tpu.memory_space<vmem>>)
    %c0_370 = arith.constant 0 : index
    %c0_371 = arith.constant 0 : index
    %833 = vector.load %arg23[%c0_370, %c0_371] : memref<256x512xbf16, #tpu.memory_space<vmem>>, vector<256x512xbf16>
    %834 = arith.truncf %828 : vector<32x256xf32> to vector<32x256xbf16>
    %cst_372 = arith.constant dense<0.000000e+00> : vector<32x512xf32>
    %835 = tpu.matmul %834, %833, %cst_372 {dimension_numbers = #tpu.dot_dimension_numbers<[1], [0], [0], [1], [0, 0, 1, 1], [], []>} : vector<32x256xbf16>, vector<256x512xbf16>, vector<32x512xf32> -> vector<32x512xf32>
    %c0_373 = arith.constant 0 : index
    %c0_374 = arith.constant 0 : index
    %836 = vector.load %arg15[%c0_373, %c0_374] : memref<12x512xf32, #tpu.memory_space<vmem>>, vector<1x512xf32>
    %c1_375 = arith.constant 1 : index
    %c0_376 = arith.constant 0 : index
    %837 = vector.load %arg15[%c1_375, %c0_376] : memref<12x512xf32, #tpu.memory_space<vmem>>, vector<1x512xf32>
    %cst_377 = arith.constant dense<0.000000e+00> : vector<512xf32>
    %838 = vector.multi_reduction <add>, %835, %cst_377 [0] : vector<32x512xf32> to vector<512xf32>
    %839 = vector.shape_cast %838 : vector<512xf32> to vector<1x512xf32>
    %cst_378 = arith.constant 3.200000e+01 : f32
    %840 = vector.broadcast %cst_378 : f32 to vector<1x512xf32>
    %841 = arith.divf %839, %840 : vector<1x512xf32>
    %842 = arith.mulf %835, %835 : vector<32x512xf32>
    %cst_379 = arith.constant dense<0.000000e+00> : vector<512xf32>
    %843 = vector.multi_reduction <add>, %842, %cst_379 [0] : vector<32x512xf32> to vector<512xf32>
    %844 = vector.shape_cast %843 : vector<512xf32> to vector<1x512xf32>
    %cst_380 = arith.constant 3.200000e+01 : f32
    %845 = vector.broadcast %cst_380 : f32 to vector<1x512xf32>
    %846 = arith.divf %844, %845 : vector<1x512xf32>
    %847 = arith.mulf %841, %841 : vector<1x512xf32>
    %848 = arith.subf %846, %847 : vector<1x512xf32>
    %cst_381 = arith.constant 0.000000e+00 : f32
    %849 = vector.broadcast %cst_381 : f32 to vector<1x512xf32>
    %850 = arith.maximumf %848, %849 : vector<1x512xf32>
    %cst_382 = arith.constant 9.99999974E-6 : f32
    %851 = vector.broadcast %cst_382 : f32 to vector<1x512xf32>
    %852 = arith.addf %850, %851 : vector<1x512xf32>
    %853 = math.rsqrt %852 : vector<1x512xf32>
    %854 = arith.mulf %836, %853 : vector<1x512xf32>
    %855 = arith.mulf %841, %854 : vector<1x512xf32>
    %856 = arith.subf %837, %855 : vector<1x512xf32>
    %857 = vector.broadcast %854 : vector<1x512xf32> to vector<32x512xf32>
    %858 = arith.mulf %835, %857 : vector<32x512xf32>
    %859 = vector.broadcast %856 : vector<1x512xf32> to vector<32x512xf32>
    %860 = arith.addf %858, %859 : vector<32x512xf32>
    %cst_383 = arith.constant 0.000000e+00 : f32
    %861 = vector.broadcast %cst_383 : f32 to vector<32x512xf32>
    %862 = arith.maximumf %860, %861 : vector<32x512xf32>
    %c0_384 = arith.constant 0 : index
    %c0_385 = arith.constant 0 : index
    %c0_386 = arith.constant 0 : index
    %863 = vector.load %arg24[%c0_384, %c0_385, %c0_386] : memref<5x512x512xbf16, #tpu.memory_space<vmem>>, vector<1x512x512xbf16>
    %864 = vector.shape_cast %863 : vector<1x512x512xbf16> to vector<512x512xbf16>
    %865 = arith.truncf %862 : vector<32x512xf32> to vector<32x512xbf16>
    %cst_387 = arith.constant dense<0.000000e+00> : vector<32x512xf32>
    %866 = tpu.matmul %865, %864, %cst_387 {dimension_numbers = #tpu.dot_dimension_numbers<[1], [0], [0], [1], [0, 0, 1, 1], [], []>} : vector<32x512xbf16>, vector<512x512xbf16>, vector<32x512xf32> -> vector<32x512xf32>
    %c2_388 = arith.constant 2 : index
    %c0_389 = arith.constant 0 : index
    %867 = vector.load %arg15[%c2_388, %c0_389] : memref<12x512xf32, #tpu.memory_space<vmem>>, vector<1x512xf32>
    %c3_390 = arith.constant 3 : index
    %c0_391 = arith.constant 0 : index
    %868 = vector.load %arg15[%c3_390, %c0_391] : memref<12x512xf32, #tpu.memory_space<vmem>>, vector<1x512xf32>
    %cst_392 = arith.constant dense<0.000000e+00> : vector<512xf32>
    %869 = vector.multi_reduction <add>, %866, %cst_392 [0] : vector<32x512xf32> to vector<512xf32>
    %870 = vector.shape_cast %869 : vector<512xf32> to vector<1x512xf32>
    %cst_393 = arith.constant 3.200000e+01 : f32
    %871 = vector.broadcast %cst_393 : f32 to vector<1x512xf32>
    %872 = arith.divf %870, %871 : vector<1x512xf32>
    %873 = arith.mulf %866, %866 : vector<32x512xf32>
    %cst_394 = arith.constant dense<0.000000e+00> : vector<512xf32>
    %874 = vector.multi_reduction <add>, %873, %cst_394 [0] : vector<32x512xf32> to vector<512xf32>
    %875 = vector.shape_cast %874 : vector<512xf32> to vector<1x512xf32>
    %cst_395 = arith.constant 3.200000e+01 : f32
    %876 = vector.broadcast %cst_395 : f32 to vector<1x512xf32>
    %877 = arith.divf %875, %876 : vector<1x512xf32>
    %878 = arith.mulf %872, %872 : vector<1x512xf32>
    %879 = arith.subf %877, %878 : vector<1x512xf32>
    %cst_396 = arith.constant 0.000000e+00 : f32
    %880 = vector.broadcast %cst_396 : f32 to vector<1x512xf32>
    %881 = arith.maximumf %879, %880 : vector<1x512xf32>
    %cst_397 = arith.constant 9.99999974E-6 : f32
    %882 = vector.broadcast %cst_397 : f32 to vector<1x512xf32>
    %883 = arith.addf %881, %882 : vector<1x512xf32>
    %884 = math.rsqrt %883 : vector<1x512xf32>
    %885 = arith.mulf %867, %884 : vector<1x512xf32>
    %886 = arith.mulf %872, %885 : vector<1x512xf32>
    %887 = arith.subf %868, %886 : vector<1x512xf32>
    %888 = vector.broadcast %885 : vector<1x512xf32> to vector<32x512xf32>
    %889 = arith.mulf %866, %888 : vector<32x512xf32>
    %890 = vector.broadcast %887 : vector<1x512xf32> to vector<32x512xf32>
    %891 = arith.addf %889, %890 : vector<32x512xf32>
    %c1_398 = arith.constant 1 : index
    %c0_399 = arith.constant 0 : index
    %c0_400 = arith.constant 0 : index
    %892 = vector.load %arg24[%c1_398, %c0_399, %c0_400] : memref<5x512x512xbf16, #tpu.memory_space<vmem>>, vector<1x512x512xbf16>
    %893 = vector.shape_cast %892 : vector<1x512x512xbf16> to vector<512x512xbf16>
    %894 = arith.truncf %891 : vector<32x512xf32> to vector<32x512xbf16>
    %cst_401 = arith.constant dense<0.000000e+00> : vector<32x512xf32>
    %895 = tpu.matmul %894, %893, %cst_401 {dimension_numbers = #tpu.dot_dimension_numbers<[1], [0], [0], [1], [0, 0, 1, 1], [], []>} : vector<32x512xbf16>, vector<512x512xbf16>, vector<32x512xf32> -> vector<32x512xf32>
    %c4_402 = arith.constant 4 : index
    %c0_403 = arith.constant 0 : index
    %896 = vector.load %arg15[%c4_402, %c0_403] : memref<12x512xf32, #tpu.memory_space<vmem>>, vector<1x512xf32>
    %c5_404 = arith.constant 5 : index
    %c0_405 = arith.constant 0 : index
    %897 = vector.load %arg15[%c5_404, %c0_405] : memref<12x512xf32, #tpu.memory_space<vmem>>, vector<1x512xf32>
    %cst_406 = arith.constant dense<0.000000e+00> : vector<512xf32>
    %898 = vector.multi_reduction <add>, %895, %cst_406 [0] : vector<32x512xf32> to vector<512xf32>
    %899 = vector.shape_cast %898 : vector<512xf32> to vector<1x512xf32>
    %cst_407 = arith.constant 3.200000e+01 : f32
    %900 = vector.broadcast %cst_407 : f32 to vector<1x512xf32>
    %901 = arith.divf %899, %900 : vector<1x512xf32>
    %902 = arith.mulf %895, %895 : vector<32x512xf32>
    %cst_408 = arith.constant dense<0.000000e+00> : vector<512xf32>
    %903 = vector.multi_reduction <add>, %902, %cst_408 [0] : vector<32x512xf32> to vector<512xf32>
    %904 = vector.shape_cast %903 : vector<512xf32> to vector<1x512xf32>
    %cst_409 = arith.constant 3.200000e+01 : f32
    %905 = vector.broadcast %cst_409 : f32 to vector<1x512xf32>
    %906 = arith.divf %904, %905 : vector<1x512xf32>
    %907 = arith.mulf %901, %901 : vector<1x512xf32>
    %908 = arith.subf %906, %907 : vector<1x512xf32>
    %cst_410 = arith.constant 0.000000e+00 : f32
    %909 = vector.broadcast %cst_410 : f32 to vector<1x512xf32>
    %910 = arith.maximumf %908, %909 : vector<1x512xf32>
    %cst_411 = arith.constant 9.99999974E-6 : f32
    %911 = vector.broadcast %cst_411 : f32 to vector<1x512xf32>
    %912 = arith.addf %910, %911 : vector<1x512xf32>
    %913 = math.rsqrt %912 : vector<1x512xf32>
    %914 = arith.mulf %896, %913 : vector<1x512xf32>
    %915 = arith.mulf %901, %914 : vector<1x512xf32>
    %916 = arith.subf %897, %915 : vector<1x512xf32>
    %917 = vector.broadcast %914 : vector<1x512xf32> to vector<32x512xf32>
    %918 = arith.mulf %895, %917 : vector<32x512xf32>
    %919 = vector.broadcast %916 : vector<1x512xf32> to vector<32x512xf32>
    %920 = arith.addf %918, %919 : vector<32x512xf32>
    %cst_412 = arith.constant 0.000000e+00 : f32
    %921 = vector.broadcast %cst_412 : f32 to vector<32x512xf32>
    %922 = arith.maximumf %920, %921 : vector<32x512xf32>
    %c2_413 = arith.constant 2 : index
    %c0_414 = arith.constant 0 : index
    %c0_415 = arith.constant 0 : index
    %923 = vector.load %arg24[%c2_413, %c0_414, %c0_415] : memref<5x512x512xbf16, #tpu.memory_space<vmem>>, vector<1x512x512xbf16>
    %924 = vector.shape_cast %923 : vector<1x512x512xbf16> to vector<512x512xbf16>
    %925 = arith.truncf %922 : vector<32x512xf32> to vector<32x512xbf16>
    %cst_416 = arith.constant dense<0.000000e+00> : vector<32x512xf32>
    %926 = tpu.matmul %925, %924, %cst_416 {dimension_numbers = #tpu.dot_dimension_numbers<[1], [0], [0], [1], [0, 0, 1, 1], [], []>} : vector<32x512xbf16>, vector<512x512xbf16>, vector<32x512xf32> -> vector<32x512xf32>
    %c6_417 = arith.constant 6 : index
    %c0_418 = arith.constant 0 : index
    %927 = vector.load %arg15[%c6_417, %c0_418] : memref<12x512xf32, #tpu.memory_space<vmem>>, vector<1x512xf32>
    %c7_419 = arith.constant 7 : index
    %c0_420 = arith.constant 0 : index
    %928 = vector.load %arg15[%c7_419, %c0_420] : memref<12x512xf32, #tpu.memory_space<vmem>>, vector<1x512xf32>
    %cst_421 = arith.constant dense<0.000000e+00> : vector<512xf32>
    %929 = vector.multi_reduction <add>, %926, %cst_421 [0] : vector<32x512xf32> to vector<512xf32>
    %930 = vector.shape_cast %929 : vector<512xf32> to vector<1x512xf32>
    %cst_422 = arith.constant 3.200000e+01 : f32
    %931 = vector.broadcast %cst_422 : f32 to vector<1x512xf32>
    %932 = arith.divf %930, %931 : vector<1x512xf32>
    %933 = arith.mulf %926, %926 : vector<32x512xf32>
    %cst_423 = arith.constant dense<0.000000e+00> : vector<512xf32>
    %934 = vector.multi_reduction <add>, %933, %cst_423 [0] : vector<32x512xf32> to vector<512xf32>
    %935 = vector.shape_cast %934 : vector<512xf32> to vector<1x512xf32>
    %cst_424 = arith.constant 3.200000e+01 : f32
    %936 = vector.broadcast %cst_424 : f32 to vector<1x512xf32>
    %937 = arith.divf %935, %936 : vector<1x512xf32>
    %938 = arith.mulf %932, %932 : vector<1x512xf32>
    %939 = arith.subf %937, %938 : vector<1x512xf32>
    %cst_425 = arith.constant 0.000000e+00 : f32
    %940 = vector.broadcast %cst_425 : f32 to vector<1x512xf32>
    %941 = arith.maximumf %939, %940 : vector<1x512xf32>
    %cst_426 = arith.constant 9.99999974E-6 : f32
    %942 = vector.broadcast %cst_426 : f32 to vector<1x512xf32>
    %943 = arith.addf %941, %942 : vector<1x512xf32>
    %944 = math.rsqrt %943 : vector<1x512xf32>
    %945 = arith.mulf %927, %944 : vector<1x512xf32>
    %946 = arith.mulf %932, %945 : vector<1x512xf32>
    %947 = arith.subf %928, %946 : vector<1x512xf32>
    %948 = vector.broadcast %945 : vector<1x512xf32> to vector<32x512xf32>
    %949 = arith.mulf %926, %948 : vector<32x512xf32>
    %950 = vector.broadcast %947 : vector<1x512xf32> to vector<32x512xf32>
    %951 = arith.addf %949, %950 : vector<32x512xf32>
    %c3_427 = arith.constant 3 : index
    %c0_428 = arith.constant 0 : index
    %c0_429 = arith.constant 0 : index
    %952 = vector.load %arg24[%c3_427, %c0_428, %c0_429] : memref<5x512x512xbf16, #tpu.memory_space<vmem>>, vector<1x512x512xbf16>
    %953 = vector.shape_cast %952 : vector<1x512x512xbf16> to vector<512x512xbf16>
    %954 = arith.truncf %951 : vector<32x512xf32> to vector<32x512xbf16>
    %cst_430 = arith.constant dense<0.000000e+00> : vector<32x512xf32>
    %955 = tpu.matmul %954, %953, %cst_430 {dimension_numbers = #tpu.dot_dimension_numbers<[1], [0], [0], [1], [0, 0, 1, 1], [], []>} : vector<32x512xbf16>, vector<512x512xbf16>, vector<32x512xf32> -> vector<32x512xf32>
    %c8_431 = arith.constant 8 : index
    %c0_432 = arith.constant 0 : index
    %956 = vector.load %arg15[%c8_431, %c0_432] : memref<12x512xf32, #tpu.memory_space<vmem>>, vector<1x512xf32>
    %c9_433 = arith.constant 9 : index
    %c0_434 = arith.constant 0 : index
    %957 = vector.load %arg15[%c9_433, %c0_434] : memref<12x512xf32, #tpu.memory_space<vmem>>, vector<1x512xf32>
    %cst_435 = arith.constant dense<0.000000e+00> : vector<512xf32>
    %958 = vector.multi_reduction <add>, %955, %cst_435 [0] : vector<32x512xf32> to vector<512xf32>
    %959 = vector.shape_cast %958 : vector<512xf32> to vector<1x512xf32>
    %cst_436 = arith.constant 3.200000e+01 : f32
    %960 = vector.broadcast %cst_436 : f32 to vector<1x512xf32>
    %961 = arith.divf %959, %960 : vector<1x512xf32>
    %962 = arith.mulf %955, %955 : vector<32x512xf32>
    %cst_437 = arith.constant dense<0.000000e+00> : vector<512xf32>
    %963 = vector.multi_reduction <add>, %962, %cst_437 [0] : vector<32x512xf32> to vector<512xf32>
    %964 = vector.shape_cast %963 : vector<512xf32> to vector<1x512xf32>
    %cst_438 = arith.constant 3.200000e+01 : f32
    %965 = vector.broadcast %cst_438 : f32 to vector<1x512xf32>
    %966 = arith.divf %964, %965 : vector<1x512xf32>
    %967 = arith.mulf %961, %961 : vector<1x512xf32>
    %968 = arith.subf %966, %967 : vector<1x512xf32>
    %cst_439 = arith.constant 0.000000e+00 : f32
    %969 = vector.broadcast %cst_439 : f32 to vector<1x512xf32>
    %970 = arith.maximumf %968, %969 : vector<1x512xf32>
    %cst_440 = arith.constant 9.99999974E-6 : f32
    %971 = vector.broadcast %cst_440 : f32 to vector<1x512xf32>
    %972 = arith.addf %970, %971 : vector<1x512xf32>
    %973 = math.rsqrt %972 : vector<1x512xf32>
    %974 = arith.mulf %956, %973 : vector<1x512xf32>
    %975 = arith.mulf %961, %974 : vector<1x512xf32>
    %976 = arith.subf %957, %975 : vector<1x512xf32>
    %977 = vector.broadcast %974 : vector<1x512xf32> to vector<32x512xf32>
    %978 = arith.mulf %955, %977 : vector<32x512xf32>
    %979 = vector.broadcast %976 : vector<1x512xf32> to vector<32x512xf32>
    %980 = arith.addf %978, %979 : vector<32x512xf32>
    %cst_441 = arith.constant 0.000000e+00 : f32
    %981 = vector.broadcast %cst_441 : f32 to vector<32x512xf32>
    %982 = arith.maximumf %980, %981 : vector<32x512xf32>
    %c4_442 = arith.constant 4 : index
    %c0_443 = arith.constant 0 : index
    %c0_444 = arith.constant 0 : index
    %983 = vector.load %arg24[%c4_442, %c0_443, %c0_444] : memref<5x512x512xbf16, #tpu.memory_space<vmem>>, vector<1x512x512xbf16>
    %984 = vector.shape_cast %983 : vector<1x512x512xbf16> to vector<512x512xbf16>
    %985 = arith.truncf %982 : vector<32x512xf32> to vector<32x512xbf16>
    %cst_445 = arith.constant dense<0.000000e+00> : vector<32x512xf32>
    %986 = tpu.matmul %985, %984, %cst_445 {dimension_numbers = #tpu.dot_dimension_numbers<[1], [0], [0], [1], [0, 0, 1, 1], [], []>} : vector<32x512xbf16>, vector<512x512xbf16>, vector<32x512xf32> -> vector<32x512xf32>
    %c10_446 = arith.constant 10 : index
    %c0_447 = arith.constant 0 : index
    %987 = vector.load %arg15[%c10_446, %c0_447] : memref<12x512xf32, #tpu.memory_space<vmem>>, vector<1x512xf32>
    %c11_448 = arith.constant 11 : index
    %c0_449 = arith.constant 0 : index
    %988 = vector.load %arg15[%c11_448, %c0_449] : memref<12x512xf32, #tpu.memory_space<vmem>>, vector<1x512xf32>
    %cst_450 = arith.constant dense<0.000000e+00> : vector<512xf32>
    %989 = vector.multi_reduction <add>, %986, %cst_450 [0] : vector<32x512xf32> to vector<512xf32>
    %990 = vector.shape_cast %989 : vector<512xf32> to vector<1x512xf32>
    %cst_451 = arith.constant 3.200000e+01 : f32
    %991 = vector.broadcast %cst_451 : f32 to vector<1x512xf32>
    %992 = arith.divf %990, %991 : vector<1x512xf32>
    %993 = arith.mulf %986, %986 : vector<32x512xf32>
    %cst_452 = arith.constant dense<0.000000e+00> : vector<512xf32>
    %994 = vector.multi_reduction <add>, %993, %cst_452 [0] : vector<32x512xf32> to vector<512xf32>
    %995 = vector.shape_cast %994 : vector<512xf32> to vector<1x512xf32>
    %cst_453 = arith.constant 3.200000e+01 : f32
    %996 = vector.broadcast %cst_453 : f32 to vector<1x512xf32>
    %997 = arith.divf %995, %996 : vector<1x512xf32>
    %998 = arith.mulf %992, %992 : vector<1x512xf32>
    %999 = arith.subf %997, %998 : vector<1x512xf32>
    %cst_454 = arith.constant 0.000000e+00 : f32
    %1000 = vector.broadcast %cst_454 : f32 to vector<1x512xf32>
    %1001 = arith.maximumf %999, %1000 : vector<1x512xf32>
    %cst_455 = arith.constant 9.99999974E-6 : f32
    %1002 = vector.broadcast %cst_455 : f32 to vector<1x512xf32>
    %1003 = arith.addf %1001, %1002 : vector<1x512xf32>
    %1004 = math.rsqrt %1003 : vector<1x512xf32>
    %1005 = arith.mulf %987, %1004 : vector<1x512xf32>
    %1006 = arith.mulf %992, %1005 : vector<1x512xf32>
    %1007 = arith.subf %988, %1006 : vector<1x512xf32>
    %1008 = vector.broadcast %1005 : vector<1x512xf32> to vector<32x512xf32>
    %1009 = arith.mulf %986, %1008 : vector<32x512xf32>
    %1010 = vector.broadcast %1007 : vector<1x512xf32> to vector<32x512xf32>
    %1011 = arith.addf %1009, %1010 : vector<32x512xf32>
    %c0_456 = arith.constant 0 : index
    %c0_457 = arith.constant 0 : index
    %1012 = vector.load %arg1[%c0_456, %c0_457] : memref<2x32xbf16, #tpu.memory_space<vmem>>, vector<2x32xbf16>
    %1013 = arith.truncf %1011 : vector<32x512xf32> to vector<32x512xbf16>
    %cst_458 = arith.constant dense<0.000000e+00> : vector<2x512xf32>
    %1014 = tpu.matmul %1012, %1013, %cst_458 {dimension_numbers = #tpu.dot_dimension_numbers<[1], [0], [0], [1], [0, 0, 1, 1], [], []>} : vector<2x32xbf16>, vector<32x512xbf16>, vector<2x512xf32> -> vector<2x512xf32>
    %1015 = arith.truncf %1014 : vector<2x512xf32> to vector<2x512xbf16>
    %c0_459 = arith.constant 0 : index
    %c0_460 = arith.constant 0 : index
    %1016 = vector.load %arg16[%c0_459, %c0_460] : memref<512x128xbf16, #tpu.memory_space<vmem>>, vector<512x128xbf16>
    %cst_461 = arith.constant dense<0.000000e+00> : vector<2x128xf32>
    %1017 = tpu.matmul %1015, %1016, %cst_461 {dimension_numbers = #tpu.dot_dimension_numbers<[1], [0], [0], [1], [0, 0, 1, 1], [], []>} : vector<2x512xbf16>, vector<512x128xbf16>, vector<2x128xf32> -> vector<2x128xf32>
    %c0_462 = arith.constant 0 : index
    %c0_463 = arith.constant 0 : index
    %1018 = vector.load %arg17[%c0_462, %c0_463] : memref<1x128xf32, #tpu.memory_space<vmem>>, vector<1x128xf32>
    %1019 = vector.broadcast %1018 : vector<1x128xf32> to vector<2x128xf32>
    %1020 = arith.addf %1017, %1019 : vector<2x128xf32>
    %c0_464 = arith.constant 0 : index
    %c0_465 = arith.constant 0 : index
    %1021 = vector.load %arg18[%c0_464, %c0_465] : memref<2x128xf32, #tpu.memory_space<vmem>>, vector<2x128xf32>
    tpu.vector_store %arg18[%c0_464, %c0_465], %1020 {strides = array<i32>} : memref<2x128xf32, #tpu.memory_space<vmem>>, vector<2x128xf32>,
    return
  }
}

</mosaic_0001>

<llo_original>
// kernel: resnet1d_forward.1
$region0: #{resnet1d_forward.1}
  #allocation0 [shape = 'u32[]', space=smem, size = 0x4, offset = 0x4, fixed_abs, tag = 'smem constant byte address 0x4 - core index']
  #allocation1 [shape = 'u32[144,128]{1,0:T(1,128)}', space=vmem, size = 0x12000, scoped, tag = 'internal scratch']
  #allocation2 [shape = 'bf16[64,128]{1,0:T(16,128)(2,1)}', space=vmem, size = 0x4000, scoped, tag = 'scratch operand']
  #allocation3 [shape = 'bf16[7,128,128]{2,1,0:T(16,128)(2,1)}', space=vmem, size = 0x38000, scoped, tag = 'scratch operand']
  #allocation4 [shape = 'bf16[128,256]{1,0:T(16,128)(2,1)}', space=vmem, size = 0x10000, scoped, tag = 'scratch operand']
  #allocation5 [shape = 'bf16[11,256,256]{2,1,0:T(16,128)(2,1)}', space=vmem, size = 0x160000, scoped, tag = 'scratch operand']
  #allocation6 [shape = 'bf16[256,512]{1,0:T(16,128)(2,1)}', space=vmem, size = 0x40000, scoped, tag = 'scratch operand']
  #allocation7 [shape = 'bf16[5,512,512]{2,1,0:T(16,128)(2,1)}', space=vmem, size = 0x280000, scoped, tag = 'scratch operand']
  #allocation8 [shape = 's32[6]{0}', space=sflag, size = 0x18, scoped, tag = 'scratch operand']
  #allocation27 [shape = 's32[]', space=sflag, size = 0x4, offset = 0, fixed_abs, tag = 'sflag constant byte address 0x0 - dummy sync flag']
  #allocation28 [shape = 's32[]', space=sflag, size = 0x4, offset = 0, fixed_abs, tag = 'sflag constant byte address 0x0 - dummy sync flag']
  #allocation29 [shape = 'u32[]', space=smem, size = 0x4, offset = 0x44, fixed_abs, tag = 'smem constant byte address 0x44 - assertion arg 0']
  #allocation30 [shape = 'u32[]', space=smem, size = 0x4, offset = 0x48, fixed_abs, tag = 'smem constant byte address 0x48 - assertion arg 1']
  #allocation31 [shape = 's32[]', space=sflag, size = 0x4, offset = 0, fixed_abs, tag = 'sflag constant byte address 0x0 - dummy sync flag']
  #allocation32 [shape = 's32[]', space=sflag, size = 0x4, offset = 0, fixed_abs, tag = 'sflag constant byte address 0x0 - dummy sync flag']
  #allocation33 [shape = 's32[]', space=sflag, size = 0x4, offset = 0, fixed_abs, tag = 'sflag constant byte address 0x0 - dummy sync flag']
  #allocation35 [shape = 's32[]', space=sflag, size = 0x4, offset = 0, fixed_abs, tag = 'sflag constant byte address 0x0 - dummy sync flag']
  #allocation37 [shape = 's32[]', space=sflag, size = 0x4, offset = 0, fixed_abs, tag = 'sflag constant byte address 0x0 - dummy sync flag']
  #allocation39 [shape = 's32[]', space=sflag, size = 0x4, offset = 0, fixed_abs, tag = 'sflag constant byte address 0x0 - dummy sync flag']
  %s0 = inlined_call_operand.vmem [shape: f32[32,1], index: 0, kind: input, shape index: {}]
  %s1 = inlined_call_operand.vmem [shape: bf16[2,32], index: 1, kind: input, shape index: {}]
  %s2 = inlined_call_operand.hbm [shape: f32[1,64], index: 2, kind: input, shape index: {}]
  %s3 = inlined_call_operand.hbm [shape: f32[2,64], index: 3, kind: input, shape index: {}]
  %s4 = inlined_call_operand.hbm [shape: bf16[64,64], index: 4, kind: input, shape index: {}]
  %s5 = inlined_call_operand.hbm [shape: bf16[5,64,64], index: 5, kind: input, shape index: {}]
  %s6 = inlined_call_operand.hbm [shape: f32[12,64], index: 6, kind: input, shape index: {}]
  %s7 = inlined_call_operand.hbm [shape: bf16[64,128], index: 7, kind: input, shape index: {}]
  %s8 = inlined_call_operand.hbm [shape: bf16[7,128,128], index: 8, kind: input, shape index: {}]
  %s9 = inlined_call_operand.hbm [shape: f32[16,128], index: 9, kind: input, shape index: {}]
  %s10 = inlined_call_operand.hbm [shape: bf16[128,256], index: 10, kind: input, shape index: {}]
  %s11 = inlined_call_operand.hbm [shape: bf16[11,256,256], index: 11, kind: input, shape index: {}]
  %s12 = inlined_call_operand.hbm [shape: f32[24,256], index: 12, kind: input, shape index: {}]
  %s13 = inlined_call_operand.hbm [shape: bf16[256,512], index: 13, kind: input, shape index: {}]
  %s14 = inlined_call_operand.hbm [shape: bf16[5,512,512], index: 14, kind: input, shape index: {}]
  %s15 = inlined_call_operand.hbm [shape: f32[12,512], index: 15, kind: input, shape index: {}]
  %s16 = inlined_call_operand.hbm [shape: bf16[512,128], index: 16, kind: input, shape index: {}]
  %s17 = inlined_call_operand.hbm [shape: f32[1,128], index: 17, kind: input, shape index: {}]
  %s18 = inlined_call_operand.hbm [shape: f32[2,128], index: 18, kind: output, shape index: {}]
  %s19 = sld [smem:[#allocation0]]
  $region106: #{resnet1d_forward.1} parent=0
    _
  %s21 = ssub.s32 1, %s19
  %s22 = scalar_select 0, %s21, %s19
  $region1: #{resnet1d_forward.1} parent=0
    #allocation9 [shape = 'u8[512]{0}', space=vmem, size = 0x400, scoped, tag = 'input window, operand 2, single buffered']
    #allocation10 [shape = 's32[1]{0}', space=sflag, size = 0x4, scoped, tag = 'scoped memory for resnet1d_forward.1']
    #allocation11 [shape = 's32[1]{0}', space=sflag, size = 0x4, scoped, tag = 'scoped memory for resnet1d_forward.1']
    #allocation12 [shape = 'u8[1024]{0}', space=vmem, size = 0x400, scoped, tag = 'input window, operand 3, single buffered']
    #allocation13 [shape = 's32[1]{0}', space=sflag, size = 0x4, scoped, tag = 'scoped memory for resnet1d_forward.1']
    #allocation14 [shape = 'u8[16384]{0}', space=vmem, size = 0x4000, scoped, tag = 'input window, operand 4, single buffered']
    #allocation15 [shape = 'u8[81920]{0}', space=vmem, size = 0x14000, scoped, tag = 'input window, operand 5, single buffered']
    #allocation16 [shape = 's32[1]{0}', space=sflag, size = 0x4, scoped, tag = 'scoped memory for resnet1d_forward.1']
    #allocation17 [shape = 'u8[8192]{0}', space=vmem, size = 0x2000, scoped, tag = 'input window, operand 6, single buffered']
    #allocation18 [shape = 'u8[8192]{0}', space=vmem, size = 0x2000, scoped, tag = 'input window, operand 9, single buffered']
    #allocation19 [shape = 's32[1]{0}', space=sflag, size = 0x4, scoped, tag = 'scoped memory for resnet1d_forward.1']
    #allocation20 [shape = 'u8[24576]{0}', space=vmem, size = 0x6000, scoped, tag = 'input window, operand 12, single buffered']
    #allocation21 [shape = 'u8[32768]{0}', space=vmem, size = 0x8000, scoped, tag = 'input window, operand 15, single buffered']
    #allocation22 [shape = 's32[1]{0}', space=sflag, size = 0x4, scoped, tag = 'scoped memory for resnet1d_forward.1']
    #allocation23 [shape = 'u8[131072]{0}', space=vmem, size = 0x20000, scoped, tag = 'input window, operand 16, single buffered']
    #allocation24 [shape = 'u8[512]{0}', space=vmem, size = 0x400, scoped, tag = 'input window, operand 17, single buffered']
    #allocation25 [shape = 's32[1]{0}', space=sflag, size = 0x4, scoped, tag = 'scoped memory for resnet1d_forward.1']
    #allocation26 [shape = 'u8[1024]{0}', space=vmem, size = 0x400, scoped, tag = 'output window, operand 0, single buffered']
    #allocation34 [shape = 'u32[9]{0}', space=smem, size = 0x24, scoped, tag = 'DMA stride descriptor']
    #allocation36 [shape = 'u32[9]{0}', space=smem, size = 0x24, scoped, tag = 'DMA stride descriptor']
    #allocation38 [shape = 'u32[9]{0}', space=smem, size = 0x24, scoped, tag = 'DMA stride descriptor']
    #allocation40 [shape = 'u32[9]{0}', space=smem, size = 0x24, scoped, tag = 'DMA stride descriptor']
    %23 = vsyncpa [#allocation10], 0
    %24 = vsyncpa [#allocation13], 0
    %25 = vsyncpa [#allocation16], 0
    %26 = vsyncpa [#allocation19], 0
    %27 = vsyncpa [#allocation22], 0
    %28 = vsyncpa [#allocation25], 0
    %29 = vsyncpa [#allocation11], 0
    // Predicated region
    $region2: #{resnet1d_forward.1} parent=1 // pred_check
      _
    $region3: #{resnet1d_forward.1} parent=1 // pred_check_branch
      %31 = sbr.rel (0) target = $region5
    $region4: #{resnet1d_forward.1} parent=1 // pred_region
      _
    $region5: #{resnet1d_forward.1} parent=1 // pred_fallthru
      _
    // Predicated region
    $region6: #{resnet1d_forward.1} parent=1 // pred_check
      _
    $region7: #{resnet1d_forward.1} parent=1 // pred_check_branch
      %33 = sbr.rel (0) target = $region9
    $region8: #{resnet1d_forward.1} parent=1 // pred_region
      _
    $region9: #{resnet1d_forward.1} parent=1 // pred_fallthru
      _
    // Predicated region
    $region10: #{resnet1d_forward.1} parent=1 // pred_check
      _
    $region11: #{resnet1d_forward.1} parent=1 // pred_check_branch
      %35 = sbr.rel (0) target = $region13
    $region12: #{resnet1d_forward.1} parent=1 // pred_region
      %s37 = ssub.s32 16, 16
      %38 = vsyncadd [#allocation10], %s37
      %s40 = sshll.u32 [#allocation9], 4
      %s41 = int_to_ptr.vmem [resolvable:$true] %s40
      %43 = dma.hbm_to_vmem [thread:$0]  %s2, 16, %s41, [#allocation10]
    $region13: #{resnet1d_forward.1} parent=1 // pred_fallthru
      _
    // Predicated region
    $region14: #{resnet1d_forward.1} parent=1 // pred_check
      _
    $region15: #{resnet1d_forward.1} parent=1 // pred_check_branch
      %45 = sbr.rel (0) target = $region17
    $region16: #{resnet1d_forward.1} parent=1 // pred_region
      %s47 = ssub.s32 32, 32
      %48 = vsyncadd [#allocation13], %s47
      %s50 = sshll.u32 [#allocation12], 4
      %s51 = int_to_ptr.vmem [resolvable:$true] %s50
      %53 = dma.hbm_to_vmem [thread:$0]  %s3, 32, %s51, [#allocation13]
    $region17: #{resnet1d_forward.1} parent=1 // pred_fallthru
      _
    // Predicated region
    $region18: #{resnet1d_forward.1} parent=1 // pred_check
      _
    $region19: #{resnet1d_forward.1} parent=1 // pred_check_branch
      %55 = sbr.rel (0) target = $region21
    $region20: #{resnet1d_forward.1} parent=1 // pred_region
      %s57 = ssub.s32 512, 512
      %58 = vsyncadd [#allocation13], %s57
      %s59 = sshll.u32 [#allocation14], 4
      %s60 = int_to_ptr.vmem [resolvable:$true] %s59
      %65 = dma.hbm_to_vmem [thread:$0]  %s4, 512, %s60, [#allocation13], 64, 64, 4
    $region21: #{resnet1d_forward.1} parent=1 // pred_fallthru
      _
    // Predicated region
    $region22: #{resnet1d_forward.1} parent=1 // pred_check
      _
    $region23: #{resnet1d_forward.1} parent=1 // pred_check_branch
      %67 = sbr.rel (0) target = $region25
    $region24: #{resnet1d_forward.1} parent=1 // pred_region
      %s69 = ssub.s32 2560, 2560
      %70 = vsyncadd [#allocation16], %s69
      %s71 = sshll.u32 [#allocation15], 4
      %s72 = int_to_ptr.vmem [resolvable:$true] %s71
      %77 = dma.hbm_to_vmem [thread:$0]  %s5, 2560, %s72, [#allocation16], 64, 64, 4
    $region25: #{resnet1d_forward.1} parent=1 // pred_fallthru
      _
    // Predicated region
    $region26: #{resnet1d_forward.1} parent=1 // pred_check
      _
    $region27: #{resnet1d_forward.1} parent=1 // pred_check_branch
      %79 = sbr.rel (0) target = $region29
    $region28: #{resnet1d_forward.1} parent=1 // pred_region
      %s81 = ssub.s32 256, 256
      %82 = vsyncadd [#allocation16], %s81
      %s83 = sshll.u32 [#allocation17], 4
      %s84 = int_to_ptr.vmem [resolvable:$true] %s83
      %89 = dma.hbm_to_vmem [thread:$0]  %s6, 256, %s84, [#allocation16], 128, 128, 8
    $region29: #{resnet1d_forward.1} parent=1 // pred_fallthru
      _
    // Predicated region
    $region30: #{resnet1d_forward.1} parent=1 // pred_check
      _
    $region31: #{resnet1d_forward.1} parent=1 // pred_check_branch
      %91 = sbr.rel (0) target = $region33
    $region32: #{resnet1d_forward.1} parent=1 // pred_region
      %s93 = ssub.s32 256, 256
      %94 = vsyncadd [#allocation19], %s93
      %s95 = sshll.u32 [#allocation18], 4
      %s96 = int_to_ptr.vmem [resolvable:$true] %s95
      %101 = dma.hbm_to_vmem [thread:$0]  %s9, 256, %s96, [#allocation19], 128, 128, 8
    $region33: #{resnet1d_forward.1} parent=1 // pred_fallthru
      _
    // Predicated region
    $region34: #{resnet1d_forward.1} parent=1 // pred_check
      _
    $region35: #{resnet1d_forward.1} parent=1 // pred_check_branch
      %103 = sbr.rel (0) target = $region37
    $region36: #{resnet1d_forward.1} parent=1 // pred_region
      %s105 = ssub.s32 768, 768
      %106 = vsyncadd [#allocation19], %s105
      %s107 = sshll.u32 [#allocation20], 4
      %s108 = int_to_ptr.vmem [resolvable:$true] %s107
      %113 = dma.hbm_to_vmem [thread:$0]  %s12, 768, %s108, [#allocation19], 256, 256, 16
    $region37: #{resnet1d_forward.1} parent=1 // pred_fallthru
      _
    // Predicated region
    $region38: #{resnet1d_forward.1} parent=1 // pred_check
      _
    $region39: #{resnet1d_forward.1} parent=1 // pred_check_branch
      %115 = sbr.rel (0) target = $region41
    $region40: #{resnet1d_forward.1} parent=1 // pred_region
      %s117 = ssub.s32 1024, 1024
      %118 = vsyncadd [#allocation22], %s117
      %s119 = sshll.u32 [#allocation21], 4
      %s120 = int_to_ptr.vmem [resolvable:$true] %s119
      %125 = dma.hbm_to_vmem [thread:$0]  %s15, 1024, %s120, [#allocation22], 512, 512, 32
    $region41: #{resnet1d_forward.1} parent=1 // pred_fallthru
      _
    // Predicated region
    $region42: #{resnet1d_forward.1} parent=1 // pred_check
      _
    $region43: #{resnet1d_forward.1} parent=1 // pred_check_branch
      %127 = sbr.rel (0) target = $region45
    $region44: #{resnet1d_forward.1} parent=1 // pred_region
      %s129 = ssub.s32 4096, 4096
      %130 = vsyncadd [#allocation22], %s129
      %s131 = sshll.u32 [#allocation23], 4
      %s132 = int_to_ptr.vmem [resolvable:$true] %s131
      %137 = dma.hbm_to_vmem [thread:$0]  %s16, 4096, %s132, [#allocation22], 64, 64, 4
    $region45: #{resnet1d_forward.1} parent=1 // pred_fallthru
      _
    // Predicated region
    $region46: #{resnet1d_forward.1} parent=1 // pred_check
      _
    $region47: #{resnet1d_forward.1} parent=1 // pred_check_branch
      %139 = sbr.rel (0) target = $region49
    $region48: #{resnet1d_forward.1} parent=1 // pred_region
      %s141 = ssub.s32 16, 16
      %142 = vsyncadd [#allocation25], %s141
      %s144 = sshll.u32 [#allocation24], 4
      %s145 = int_to_ptr.vmem [resolvable:$true] %s144
      %147 = dma.hbm_to_vmem [thread:$0]  %s17, 16, %s145, [#allocation25]
    $region49: #{resnet1d_forward.1} parent=1 // pred_fallthru
      _
    // Predicated region
    $region50: #{resnet1d_forward.1} parent=1 // pred_check
      _
    $region51: #{resnet1d_forward.1} parent=1 // pred_check_branch
      %149 = sbr.rel (0) target = $region53
    $region52: #{resnet1d_forward.1} parent=1 // pred_region
      %150 = dma.done [#allocation10], 16
    $region53: #{resnet1d_forward.1} parent=1 // pred_fallthru
      _
    // Predicated region
    $region54: #{resnet1d_forward.1} parent=1 // pred_check
      _
    $region55: #{resnet1d_forward.1} parent=1 // pred_check_branch
      %152 = sbr.rel (0) target = $region57
    $region56: #{resnet1d_forward.1} parent=1 // pred_region
      %153 = dma.done [#allocation13], 32
    $region57: #{resnet1d_forward.1} parent=1 // pred_fallthru
      _
    // Predicated region
    $region58: #{resnet1d_forward.1} parent=1 // pred_check
      _
    $region59: #{resnet1d_forward.1} parent=1 // pred_check_branch
      %155 = sbr.rel (0) target = $region61
    $region60: #{resnet1d_forward.1} parent=1 // pred_region
      %156 = dma.done [#allocation13], 512
    $region61: #{resnet1d_forward.1} parent=1 // pred_fallthru
      _
    // Predicated region
    $region62: #{resnet1d_forward.1} parent=1 // pred_check
      _
    $region63: #{resnet1d_forward.1} parent=1 // pred_check_branch
      %158 = sbr.rel (0) target = $region65
    $region64: #{resnet1d_forward.1} parent=1 // pred_region
      %159 = dma.done [#allocation16], 2560
    $region65: #{resnet1d_forward.1} parent=1 // pred_fallthru
      _
    // Predicated region
    $region66: #{resnet1d_forward.1} parent=1 // pred_check
      _
    $region67: #{resnet1d_forward.1} parent=1 // pred_check_branch
      %161 = sbr.rel (0) target = $region69
    $region68: #{resnet1d_forward.1} parent=1 // pred_region
      %162 = dma.done [#allocation16], 256
    $region69: #{resnet1d_forward.1} parent=1 // pred_fallthru
      _
    // Predicated region
    $region70: #{resnet1d_forward.1} parent=1 // pred_check
      _
    $region71: #{resnet1d_forward.1} parent=1 // pred_check_branch
      %164 = sbr.rel (0) target = $region73
    $region72: #{resnet1d_forward.1} parent=1 // pred_region
      %165 = dma.done [#allocation19], 256
    $region73: #{resnet1d_forward.1} parent=1 // pred_fallthru
      _
    // Predicated region
    $region74: #{resnet1d_forward.1} parent=1 // pred_check
      _
    $region75: #{resnet1d_forward.1} parent=1 // pred_check_branch
      %167 = sbr.rel (0) target = $region77
    $region76: #{resnet1d_forward.1} parent=1 // pred_region
      %168 = dma.done [#allocation19], 768
    $region77: #{resnet1d_forward.1} parent=1 // pred_fallthru
      _
    // Predicated region
    $region78: #{resnet1d_forward.1} parent=1 // pred_check
      _
    $region79: #{resnet1d_forward.1} parent=1 // pred_check_branch
      %170 = sbr.rel (0) target = $region81
    $region80: #{resnet1d_forward.1} parent=1 // pred_region
      %171 = dma.done [#allocation22], 1024
    $region81: #{resnet1d_forward.1} parent=1 // pred_fallthru
      _
    // Predicated region
    $region82: #{resnet1d_forward.1} parent=1 // pred_check
      _
    $region83: #{resnet1d_forward.1} parent=1 // pred_check_branch
      %173 = sbr.rel (0) target = $region85
    $region84: #{resnet1d_forward.1} parent=1 // pred_region
      %174 = dma.done [#allocation22], 4096
    $region85: #{resnet1d_forward.1} parent=1 // pred_fallthru
      _
    // Predicated region
    $region86: #{resnet1d_forward.1} parent=1 // pred_check
      _
    $region87: #{resnet1d_forward.1} parent=1 // pred_check_branch
      %176 = sbr.rel (0) target = $region89
    $region88: #{resnet1d_forward.1} parent=1 // pred_region
      %177 = dma.done [#allocation25], 16
    $region89: #{resnet1d_forward.1} parent=1 // pred_fallthru
      _
    // Predicated region
    $region90: #{resnet1d_forward.1} parent=1 // pred_check
      _
    $region91: #{resnet1d_forward.1} parent=1 // pred_check_branch
      %180 = sbr.rel target = $region93
    $region92: #{resnet1d_forward.1} parent=1 // pred_region
      %181 = sst [smem:[#allocation29]] [#allocation28]
      %182 = sst [smem:[#allocation30]] [#allocation27]
    $region93: #{resnet1d_forward.1} parent=1 // pred_fallthru
      _
    %184 = shalt.err (0)
    %s186 = sshll.u32 [#allocation2], 4
    %s187 = int_to_ptr.vmem [resolvable:$true] %s186
    %189 = dma.hbm_to_vmem [thread:$0]  %s7, 512, %s187, [#allocation8]
    %s190 = scalar_lea.sflag [#allocation8], 1
    // Predicated region
    $region94: #{resnet1d_forward.1} parent=1 // pred_check
      _
    $region95: #{resnet1d_forward.1} parent=1 // pred_check_branch
      %192 = sbr.rel target = $region97
    $region96: #{resnet1d_forward.1} parent=1 // pred_region
      %193 = sst [smem:[#allocation29]] [#allocation32]
      %194 = sst [smem:[#allocation30]] [#allocation31]
    $region97: #{resnet1d_forward.1} parent=1 // pred_fallthru
      _
    %196 = shalt.err (0)
    %s198 = sshll.u32 [#allocation3], 4
    %s199 = int_to_ptr.vmem [resolvable:$true] %s198
    %201 = dma.hbm_to_vmem [thread:$0]  %s8, 7168, %s199, %s190
    %s202 = scalar_lea.sflag [#allocation8], 2
    %s204 = sshll.u32 1, 14
    %s205 = sxor.u32 4294967295, %s204
    %s207 = sld [smem:[#allocation0]]
    %s208 = sadd.s32 2, %s207
    %s210 = sshll.u32 7, 26
    %s211 = sxor.u32 4294967295, %s210
    %s212 = sand.u32 0, %s211
    %s213 = sshll.u32 %s208, 26
    %s214 = sor.u32 %s212, %s213
    %s215 = sshll.u32 [#allocation4], 4
    %s216 = int_to_ptr.vmem [resolvable:$true] %s215
    %219 = sst [smem:[#allocation34]] 256
    %s220 = scalar_lea.smem [#allocation34], 1
    %221 = sst [smem:[%s220]] 256
    %s222 = scalar_lea.smem [#allocation34], 2
    %223 = sst [smem:[%s222]] 2
    %s224 = scalar_lea.smem [#allocation34], 3
    %225 = sst [smem:[%s224]] 64
    %s226 = scalar_lea.smem [#allocation34], 4
    %227 = sst [smem:[%s226]] 128
    %s228 = scalar_lea.smem [#allocation34], 5
    %229 = sst [smem:[%s228]] 2
    %s230 = scalar_lea.smem [#allocation34], 6
    %231 = sst [smem:[%s230]] 128
    %s232 = scalar_lea.smem [#allocation34], 7
    %233 = sst [smem:[%s232]] 64
    %s234 = scalar_lea.smem [#allocation34], 8
    %235 = sst [smem:[%s234]] 4
    %237 = dma.general %s10, 2048, %s216, %s202, [#allocation33], [#allocation34], %s214, 0
    %s238 = scalar_lea.sflag [#allocation8], 3
    %s240 = sshll.u32 1, 14
    %s241 = sxor.u32 4294967295, %s240
    %s243 = sadd.s32 2, %s207
    %s245 = sshll.u32 7, 26
    %s246 = sxor.u32 4294967295, %s245
    %s247 = sand.u32 0, %s246
    %s248 = sshll.u32 %s243, 26
    %s249 = sor.u32 %s247, %s248
    %s250 = sshll.u32 [#allocation5], 4
    %s251 = int_to_ptr.vmem [resolvable:$true] %s250
    %254 = sst [smem:[#allocation36]] 256
    %s255 = scalar_lea.smem [#allocation36], 1
    %256 = sst [smem:[%s255]] 256
    %s257 = scalar_lea.smem [#allocation36], 2
    %258 = sst [smem:[%s257]] 2
    %s259 = scalar_lea.smem [#allocation36], 3
    %260 = sst [smem:[%s259]] 64
    %s261 = scalar_lea.smem [#allocation36], 4
    %262 = sst [smem:[%s261]] 128
    %s263 = scalar_lea.smem [#allocation36], 5
    %264 = sst [smem:[%s263]] 2
    %s265 = scalar_lea.smem [#allocation36], 6
    %266 = sst [smem:[%s265]] 128
    %s267 = scalar_lea.smem [#allocation36], 7
    %268 = sst [smem:[%s267]] 64
    %s269 = scalar_lea.smem [#allocation36], 8
    %270 = sst [smem:[%s269]] 4
    %272 = dma.general %s11, 45056, %s251, %s238, [#allocation35], [#allocation36], %s249, 0
    %s273 = scalar_lea.sflag [#allocation8], 4
    %s275 = sshll.u32 1, 14
    %s276 = sxor.u32 4294967295, %s275
    %s278 = sadd.s32 2, %s207
    %s280 = sshll.u32 7, 26
    %s281 = sxor.u32 4294967295, %s280
    %s282 = sand.u32 0, %s281
    %s283 = sshll.u32 %s278, 26
    %s284 = sor.u32 %s282, %s283
    %s285 = sshll.u32 [#allocation6], 4
    %s286 = int_to_ptr.vmem [resolvable:$true] %s285
    %289 = sst [smem:[#allocation38]] 512
    %s290 = scalar_lea.smem [#allocation38], 1
    %291 = sst [smem:[%s290]] 512
    %s292 = scalar_lea.smem [#allocation38], 2
    %293 = sst [smem:[%s292]] 4
    %s294 = scalar_lea.smem [#allocation38], 3
    %295 = sst [smem:[%s294]] 64
    %s296 = scalar_lea.smem [#allocation38], 4
    %297 = sst [smem:[%s296]] 128
    %s298 = scalar_lea.smem [#allocation38], 5
    %299 = sst [smem:[%s298]] 2
    %s300 = scalar_lea.smem [#allocation38], 6
    %301 = sst [smem:[%s300]] 256
    %s302 = scalar_lea.smem [#allocation38], 7
    %303 = sst [smem:[%s302]] 64
    %s304 = scalar_lea.smem [#allocation38], 8
    %305 = sst [smem:[%s304]] 4
    %307 = dma.general %s13, 8192, %s286, %s273, [#allocation37], [#allocation38], %s284, 0
    %s308 = scalar_lea.sflag [#allocation8], 5
    %s310 = sshll.u32 1, 14
    %s311 = sxor.u32 4294967295, %s310
    %s313 = sadd.s32 2, %s207
    %s315 = sshll.u32 7, 26
    %s316 = sxor.u32 4294967295, %s315
    %s317 = sand.u32 0, %s316
    %s318 = sshll.u32 %s313, 26
    %s319 = sor.u32 %s317, %s318
    %s320 = sshll.u32 [#allocation7], 4
    %s321 = int_to_ptr.vmem [resolvable:$true] %s320
    %324 = sst [smem:[#allocation40]] 512
    %s325 = scalar_lea.smem [#allocation40], 1
    %326 = sst [smem:[%s325]] 512
    %s327 = scalar_lea.smem [#allocation40], 2
    %328 = sst [smem:[%s327]] 4
    %s329 = scalar_lea.smem [#allocation40], 3
    %330 = sst [smem:[%s329]] 64
    %s331 = scalar_lea.smem [#allocation40], 4
    %332 = sst [smem:[%s331]] 128
    %s333 = scalar_lea.smem [#allocation40], 5
    %334 = sst [smem:[%s333]] 2
    %s335 = scalar_lea.smem [#allocation40], 6
    %336 = sst [smem:[%s335]] 256
    %s337 = scalar_lea.smem [#allocation40], 7
    %338 = sst [smem:[%s337]] 64
    %s339 = scalar_lea.smem [#allocation40], 8
    %340 = sst [smem:[%s339]] 4
    %342 = dma.general %s14, 81920, %s321, %s308, [#allocation39], [#allocation40], %s319, 0
    %v343 = vld [vmem:[%s0] sm:$0xff]
    %v344 = vld [vmem:[%s0 + $0x8] sm:$0xff]
    %v345 = vld [vmem:[%s0 + $0x10] sm:$0xff]
    %v346 = vld [vmem:[%s0 + $0x18] sm:$0xff]
    %v347 = vld [vmem:[#allocation9] sm:$0x1]
    %349 = vset.pattern.permute.xlu0 0
    %350 = vperm.xlu0 %349, %v343
    %v351 = vpop.permute.xlu0 %350
    %354 = vset.pattern.permute.xlu0 0
    %355 = vperm.xlu0 %354, %v344
    %v356 = vpop.permute.xlu0 %355
    %359 = vset.pattern.permute.xlu0 0
    %360 = vperm.xlu0 %359, %v345
    %v361 = vpop.permute.xlu0 %360
    %364 = vset.pattern.permute.xlu0 0
    %365 = vperm.xlu0 %364, %v346
    %v366 = vpop.permute.xlu0 %365
    %v369 = vlaneseq
    %v370 = vshrl.u32 %v369, 7
    %v371 = vsub.s32 0, %v370
    %v372 = vrot.slane %v347, %v371
    %v374 = vmul.f32 %v351, %v372
    %v375 = vmul.f32 %v356, %v372
    %v376 = vmul.f32 %v361, %v372
    %v377 = vmul.f32 %v366, %v372
    %v378 = vld [vmem:[#allocation12] sm:$0x1]
    %v379 = vld [vmem:[#allocation12 + $0x1] sm:$0x1]
    %vm380 = vcmask 523264
    %v381 = vsel %vm380, %v374, 0.0
    %v382 = vsel %vm380, %v375, 0.0
    %v383 = vadd.f32 %v381, %v382
    %v384 = vsel %vm380, %v376, 0.0
    %v385 = vadd.f32 %v383, %v384
    %v386 = vsel %vm380, %v377, 0.0
    %v387 = vadd.f32 %v385, %v386
    %v388 = vrot.slane %v387, 4
    %v389 = vadd.f32 %v387, %v388
    %v390 = vrot.slane %v389, 2
    %v391 = vadd.f32 %v389, %v390
    %v392 = vrot.slane %v391, 1
    %v393 = vadd.f32 %v391, %v392
    %v394 = vrcp.pop 32.0
    %v395 = vmul.f32 %v393, %v394
    %v396 = vmul.f32 %v374, %v374
    %v397 = vmul.f32 %v375, %v375
    %v398 = vmul.f32 %v376, %v376
    %v399 = vmul.f32 %v377, %v377
    %v400 = vsel %vm380, %v396, 0.0
    %v401 = vsel %vm380, %v397, 0.0
    %v402 = vadd.f32 %v400, %v401
    %v403 = vsel %vm380, %v398, 0.0
    %v404 = vadd.f32 %v402, %v403
    %v405 = vsel %vm380, %v399, 0.0
    %v406 = vadd.f32 %v404, %v405
    %v407 = vrot.slane %v406, 4
    %v408 = vadd.f32 %v406, %v407
    %v409 = vrot.slane %v408, 2
    %v410 = vadd.f32 %v408, %v409
    %v411 = vrot.slane %v410, 1
    %v412 = vadd.f32 %v410, %v411
    %v413 = vmul.f32 %v412, %v394
    %v414 = vmul.f32 %v395, %v395
    %v415 = vsub.f32 %v413, %v414
    %v416 = vmax.f32 %v415, 0.0
    %v417 = vadd.f32 %v416, 1e-05
    %v418 = vrsqrt.pop %v417
    %v419 = vmul.f32 %v378, %v418
    %v420 = vmul.f32 %v395, %v419
    %v421 = vsub.f32 %v379, %v420
    %v422 = vlaneseq
    %v423 = vshrl.u32 %v422, 7
    %v424 = vsub.s32 0, %v423
    %v425 = vrot.slane %v419, %v424
    %v426 = vmul.f32 %v374, %v425
    %v427 = vmul.f32 %v375, %v425
    %v428 = vmul.f32 %v376, %v425
    %v429 = vmul.f32 %v377, %v425
    %v430 = vlaneseq
    %v431 = vshrl.u32 %v430, 7
    %v432 = vsub.s32 0, %v431
    %v433 = vrot.slane %v421, %v432
    %v434 = vadd.f32 %v426, %v433
    %v435 = vadd.f32 %v427, %v433
    %v436 = vadd.f32 %v428, %v433
    %v437 = vadd.f32 %v429, %v433
    %v438 = vmax.f32 %v434, 0.0
    %v439 = vmax.f32 %v435, 0.0
    %v440 = vmax.f32 %v436, 0.0
    %v441 = vmax.f32 %v437, 0.0
    %v442 = vld [vmem:[#allocation14] sm:$0xf]
    %v443 = vld [vmem:[#allocation14 + $0x4] sm:$0xf]
    %v444 = vld [vmem:[#allocation14 + $0x8] sm:$0xf]
    %v445 = vld [vmem:[#allocation14 + $0xc] sm:$0xf]
    %v446 = vld [vmem:[#allocation14 + $0x10] sm:$0xf]
    %v447 = vld [vmem:[#allocation14 + $0x14] sm:$0xf]
    %v448 = vld [vmem:[#allocation14 + $0x18] sm:$0xf]
    %v449 = vld [vmem:[#allocation14 + $0x1c] sm:$0xf]
    %v450 = vpack.c.bf16 %v439, %v438
    %v451 = vpack.c.bf16 %v441, %v440
    %v460 = vunpack.c.l.b16 %v442
    %v461 = vunpack.c.l.b16 %v443
    %v462 = vunpack.c.l.b16 %v444
    %v463 = vunpack.c.l.b16 %v445
    %v464 = vunpack.c.l.b16 %v446
    %v465 = vunpack.c.l.b16 %v447
    %v466 = vunpack.c.l.b16 %v448
    %v467 = vunpack.c.l.b16 %v449
    %v468 = vpack.c.b16 %v461, %v460
    %v469 = vpack.c.b16 %v463, %v462
    %v470 = vpack.c.b16 %v465, %v464
    %v471 = vpack.c.b16 %v467, %v466
    %v477 = vsel %vm380, %v450, 0
    %v480 = vsel %vm380, %v451, 0
    %482 = vmatprep.subr.bf16.mxu0 0
    %483 = vmatpush1.bf16.msra.mxu0 %v468
    %484 = vmatprep.subr.bf16.mxu0 0
    %485 = vmatpush1.bf16.msra.mxu0 %v469
    %486 = vmatprep.subr.bf16.mxu0 0
    %487 = vmatpush1.bf16.msra.mxu0 %v470
    %488 = vmatprep.subr.bf16.mxu0 0
    %489 = vmatpush1.bf16.msra.mxu0 %v471
    %490 = vmatprep.subr.bf16.mxu0 0
    %491 = vmatpush1.bf16.msra.mxu0 0
    %492 = vmatprep.subr.bf16.mxu0 0
    %493 = vmatpush1.bf16.msra.mxu0 0
    %494 = vmatprep.subr.bf16.mxu0 0
    %495 = vmatpush1.bf16.msra.mxu0 0
    %496 = vmatprep.subr.bf16.mxu0 0
    %497 = vmatpush1.bf16.msra.mxu0 0
    %498 = vmatprep.subr.bf16.mxu0 0
    %499 = vmatpush1.bf16.msra.mxu0 0
    %500 = vmatprep.subr.bf16.mxu0 0
    %501 = vmatpush1.bf16.msra.mxu0 0
    %502 = vmatprep.subr.bf16.mxu0 0
    %503 = vmatpush1.bf16.msra.mxu0 0
    %504 = vmatprep.subr.bf16.mxu0 0
    %505 = vmatpush1.bf16.msra.mxu0 0
    %506 = vmatprep.subr.bf16.mxu0 0
    %507 = vmatpush1.bf16.msra.mxu0 0
    %508 = vmatprep.subr.bf16.mxu0 0
    %509 = vmatpush1.bf16.msra.mxu0 0
    %510 = vmatprep.subr.bf16.mxu0 0
    %511 = vmatpush1.bf16.msra.mxu0 0
    %512 = vmatprep.subr.bf16.mxu0 0
    %513 = vmatpush1.bf16.msra.mxu0 0
    %514 = vmatprep.mubr.bf16.mxu0 0
    %515 = vmatmul.mubr.bf16.gmra.mrb[0].mxu0 %v477
    %v516 = vpop.f32.mrb[0].mxu0
    %v517 = vadd.f32 0.0, %v516
    %v518 = vpop.f32.mrb[0].mxu0
    %v519 = vpop.f32.mrb[0].mxu0
    %v520 = vadd.f32 0.0, %v519
    %v521 = vpop.f32.mrb[0].mxu0
    %522 = vmatprep.mubr.bf16.mxu0 0
    %523 = vmatmul.mubr.bf16.gmra.mrb[0].mxu0 %v480
    %v524 = vpop.f32.mrb[0].mxu0
    %v525 = vadd.f32 0.0, %v524
    %v526 = vpop.f32.mrb[0].mxu0
    %v527 = vpop.f32.mrb[0].mxu0
    %v528 = vadd.f32 0.0, %v527
    %v529 = vpop.f32.mrb[0].mxu0
    %530 = vdwg.mxu0
    %v531 = vld [vmem:[#allocation17] sm:$0x1]
    %v532 = vld [vmem:[#allocation17 + $0x1] sm:$0x1]
    %v533 = vsel %vm380, %v517, 0.0
    %v534 = vsel %vm380, %v520, 0.0
    %v535 = vadd.f32 %v533, %v534
    %v536 = vsel %vm380, %v525, 0.0
    %v537 = vadd.f32 %v535, %v536
    %v538 = vsel %vm380, %v528, 0.0
    %v539 = vadd.f32 %v537, %v538
    %v540 = vrot.slane %v539, 4
    %v541 = vadd.f32 %v539, %v540
    %v542 = vrot.slane %v541, 2
    %v543 = vadd.f32 %v541, %v542
    %v544 = vrot.slane %v543, 1
    %v545 = vadd.f32 %v543, %v544
    %v546 = vmul.f32 %v545, %v394
    %v547 = vmul.f32 %v517, %v517
    %v548 = vmul.f32 %v520, %v520
    %v549 = vmul.f32 %v525, %v525
    %v550 = vmul.f32 %v528, %v528
    %v551 = vsel %vm380, %v547, 0.0
    %v552 = vsel %vm380, %v548, 0.0
    %v553 = vadd.f32 %v551, %v552
    %v554 = vsel %vm380, %v549, 0.0
    %v555 = vadd.f32 %v553, %v554
    %v556 = vsel %vm380, %v550, 0.0
    %v557 = vadd.f32 %v555, %v556
    %v558 = vrot.slane %v557, 4
    %v559 = vadd.f32 %v557, %v558
    %v560 = vrot.slane %v559, 2
    %v561 = vadd.f32 %v559, %v560
    %v562 = vrot.slane %v561, 1
    %v563 = vadd.f32 %v561, %v562
    %v564 = vmul.f32 %v563, %v394
    %v565 = vmul.f32 %v546, %v546
    %v566 = vsub.f32 %v564, %v565
    %v567 = vmax.f32 %v566, 0.0
    %v568 = vadd.f32 %v567, 1e-05
    %v569 = vrsqrt.pop %v568
    %v570 = vmul.f32 %v531, %v569
    %v571 = vmul.f32 %v546, %v570
    %v572 = vsub.f32 %v532, %v571
    %v573 = vlaneseq
    %v574 = vshrl.u32 %v573, 7
    %v575 = vsub.s32 0, %v574
    %v576 = vrot.slane %v570, %v575
    %v577 = vmul.f32 %v517, %v576
    %v578 = vmul.f32 %v520, %v576
    %v579 = vmul.f32 %v525, %v576
    %v580 = vmul.f32 %v528, %v576
    %v581 = vlaneseq
    %v582 = vshrl.u32 %v581, 7
    %v583 = vsub.s32 0, %v582
    %v584 = vrot.slane %v572, %v583
    %v585 = vadd.f32 %v577, %v584
    %v586 = vadd.f32 %v578, %v584
    %v587 = vadd.f32 %v579, %v584
    %v588 = vadd.f32 %v580, %v584
    %v589 = vmax.f32 %v585, 0.0
    %v590 = vmax.f32 %v586, 0.0
    %v591 = vmax.f32 %v587, 0.0
    %v592 = vmax.f32 %v588, 0.0
    %v593 = vld [vmem:[#allocation15] sm:$0xf]
    %v594 = vld [vmem:[#allocation15 + $0x4] sm:$0xf]
    %v595 = vld [vmem:[#allocation15 + $0x8] sm:$0xf]
    %v596 = vld [vmem:[#allocation15 + $0xc] sm:$0xf]
    %v597 = vld [vmem:[#allocation15 + $0x10] sm:$0xf]
    %v598 = vld [vmem:[#allocation15 + $0x14] sm:$0xf]
    %v599 = vld [vmem:[#allocation15 + $0x18] sm:$0xf]
    %v600 = vld [vmem:[#allocation15 + $0x1c] sm:$0xf]
    %v601 = vpack.c.bf16 %v590, %v589
    %v602 = vpack.c.bf16 %v592, %v591
    %v611 = vunpack.c.l.b16 %v593
    %v612 = vunpack.c.l.b16 %v594
    %v613 = vunpack.c.l.b16 %v595
    %v614 = vunpack.c.l.b16 %v596
    %v615 = vunpack.c.l.b16 %v597
    %v616 = vunpack.c.l.b16 %v598
    %v617 = vunpack.c.l.b16 %v599
    %v618 = vunpack.c.l.b16 %v600
    %v619 = vpack.c.b16 %v612, %v611
    %v620 = vpack.c.b16 %v614, %v613
    %v621 = vpack.c.b16 %v616, %v615
    %v622 = vpack.c.b16 %v618, %v617
    %v628 = vsel %vm380, %v601, 0
    %v631 = vsel %vm380, %v602, 0
    %633 = vmatprep.subr.bf16.mxu0 0
    %634 = vmatpush1.bf16.msra.mxu0 %v619
    %635 = vmatprep.subr.bf16.mxu0 0
    %636 = vmatpush1.bf16.msra.mxu0 %v620
    %637 = vmatprep.subr.bf16.mxu0 0
    %638 = vmatpush1.bf16.msra.mxu0 %v621
    %639 = vmatprep.subr.bf16.mxu0 0
    %640 = vmatpush1.bf16.msra.mxu0 %v622
    %641 = vmatprep.subr.bf16.mxu0 0
    %642 = vmatpush1.bf16.msra.mxu0 0
    %643 = vmatprep.subr.bf16.mxu0 0
    %644 = vmatpush1.bf16.msra.mxu0 0
    %645 = vmatprep.subr.bf16.mxu0 0
    %646 = vmatpush1.bf16.msra.mxu0 0
    %647 = vmatprep.subr.bf16.mxu0 0
    %648 = vmatpush1.bf16.msra.mxu0 0
    %649 = vmatprep.subr.bf16.mxu0 0
    %650 = vmatpush1.bf16.msra.mxu0 0
    %651 = vmatprep.subr.bf16.mxu0 0
    %652 = vmatpush1.bf16.msra.mxu0 0
    %653 = vmatprep.subr.bf16.mxu0 0
    %654 = vmatpush1.bf16.msra.mxu0 0
    %655 = vmatprep.subr.bf16.mxu0 0
    %656 = vmatpush1.bf16.msra.mxu0 0
    %657 = vmatprep.subr.bf16.mxu0 0
    %658 = vmatpush1.bf16.msra.mxu0 0
    %659 = vmatprep.subr.bf16.mxu0 0
    %660 = vmatpush1.bf16.msra.mxu0 0
    %661 = vmatprep.subr.bf16.mxu0 0
    %662 = vmatpush1.bf16.msra.mxu0 0
    %663 = vmatprep.subr.bf16.mxu0 0
    %664 = vmatpush1.bf16.msra.mxu0 0
    %665 = vmatprep.mubr.bf16.mxu0 0
    %666 = vmatmul.mubr.bf16.gmra.mrb[0].mxu0 %v628
    %v667 = vpop.f32.mrb[0].mxu0
    %v668 = vadd.f32 0.0, %v667
    %v669 = vpop.f32.mrb[0].mxu0
    %v670 = vpop.f32.mrb[0].mxu0
    %v671 = vadd.f32 0.0, %v670
    %v672 = vpop.f32.mrb[0].mxu0
    %673 = vmatprep.mubr.bf16.mxu0 0
    %674 = vmatmul.mubr.bf16.gmra.mrb[0].mxu0 %v631
    %v675 = vpop.f32.mrb[0].mxu0
    %v676 = vadd.f32 0.0, %v675
    %v677 = vpop.f32.mrb[0].mxu0
    %v678 = vpop.f32.mrb[0].mxu0
    %v679 = vadd.f32 0.0, %v678
    %v680 = vpop.f32.mrb[0].mxu0
    %681 = vdwg.mxu0
    %v682 = vld [vmem:[#allocation17 + $0x2] sm:$0x1]
    %v683 = vld [vmem:[#allocation17 + $0x3] sm:$0x1]
    %v684 = vsel %vm380, %v668, 0.0
    %v685 = vsel %vm380, %v671, 0.0
    %v686 = vadd.f32 %v684, %v685
    %v687 = vsel %vm380, %v676, 0.0
    %v688 = vadd.f32 %v686, %v687
    %v689 = vsel %vm380, %v679, 0.0
    %v690 = vadd.f32 %v688, %v689
    %v691 = vrot.slane %v690, 4
    %v692 = vadd.f32 %v690, %v691
    %v693 = vrot.slane %v692, 2
    %v694 = vadd.f32 %v692, %v693
    %v695 = vrot.slane %v694, 1
    %v696 = vadd.f32 %v694, %v695
    %v697 = vmul.f32 %v696, %v394
    %v698 = vmul.f32 %v668, %v668
    %v699 = vmul.f32 %v671, %v671
    %v700 = vmul.f32 %v676, %v676
    %v701 = vmul.f32 %v679, %v679
    %v702 = vsel %vm380, %v698, 0.0
    %v703 = vsel %vm380, %v699, 0.0
    %v704 = vadd.f32 %v702, %v703
    %v705 = vsel %vm380, %v700, 0.0
    %v706 = vadd.f32 %v704, %v705
    %v707 = vsel %vm380, %v701, 0.0
    %v708 = vadd.f32 %v706, %v707
    %v709 = vrot.slane %v708, 4
    %v710 = vadd.f32 %v708, %v709
    %v711 = vrot.slane %v710, 2
    %v712 = vadd.f32 %v710, %v711
    %v713 = vrot.slane %v712, 1
    %v714 = vadd.f32 %v712, %v713
    %v715 = vmul.f32 %v714, %v394
    %v716 = vmul.f32 %v697, %v697
    %v717 = vsub.f32 %v715, %v716
    %v718 = vmax.f32 %v717, 0.0
    %v719 = vadd.f32 %v718, 1e-05
    %v720 = vrsqrt.pop %v719
    %v721 = vmul.f32 %v682, %v720
    %v722 = vmul.f32 %v697, %v721
    %v723 = vsub.f32 %v683, %v722
    %v724 = vlaneseq
    %v725 = vshrl.u32 %v724, 7
    %v726 = vsub.s32 0, %v725
    %v727 = vrot.slane %v721, %v726
    %v728 = vmul.f32 %v668, %v727
    %v729 = vmul.f32 %v671, %v727
    %v730 = vmul.f32 %v676, %v727
    %v731 = vmul.f32 %v679, %v727
    %v732 = vlaneseq
    %v733 = vshrl.u32 %v732, 7
    %v734 = vsub.s32 0, %v733
    %v735 = vrot.slane %v723, %v734
    %v736 = vadd.f32 %v728, %v735
    %v737 = vadd.f32 %v729, %v735
    %v738 = vadd.f32 %v730, %v735
    %v739 = vadd.f32 %v731, %v735
    %s740 = scalar_lea.vmem [#allocation15], 32
    %v741 = vld [vmem:[%s740] sm:$0xf]
    %v742 = vld [vmem:[%s740 + $0x4] sm:$0xf]
    %v743 = vld [vmem:[%s740 + $0x8] sm:$0xf]
    %v744 = vld [vmem:[%s740 + $0xc] sm:$0xf]
    %v745 = vld [vmem:[%s740 + $0x10] sm:$0xf]
    %v746 = vld [vmem:[%s740 + $0x14] sm:$0xf]
    %v747 = vld [vmem:[%s740 + $0x18] sm:$0xf]
    %v748 = vld [vmem:[%s740 + $0x1c] sm:$0xf]
    %v749 = vpack.c.bf16 %v737, %v736
    %v750 = vpack.c.bf16 %v739, %v738
    %v759 = vunpack.c.l.b16 %v741
    %v760 = vunpack.c.l.b16 %v742
    %v761 = vunpack.c.l.b16 %v743
    %v762 = vunpack.c.l.b16 %v744
    %v763 = vunpack.c.l.b16 %v745
    %v764 = vunpack.c.l.b16 %v746
    %v765 = vunpack.c.l.b16 %v747
    %v766 = vunpack.c.l.b16 %v748
    %v767 = vpack.c.b16 %v760, %v759
    %v768 = vpack.c.b16 %v762, %v761
    %v769 = vpack.c.b16 %v764, %v763
    %v770 = vpack.c.b16 %v766, %v765
    %v776 = vsel %vm380, %v749, 0
    %v779 = vsel %vm380, %v750, 0
    %781 = vmatprep.subr.bf16.mxu0 0
    %782 = vmatpush1.bf16.msra.mxu0 %v767
    %783 = vmatprep.subr.bf16.mxu0 0
    %784 = vmatpush1.bf16.msra.mxu0 %v768
    %785 = vmatprep.subr.bf16.mxu0 0
    %786 = vmatpush1.bf16.msra.mxu0 %v769
    %787 = vmatprep.subr.bf16.mxu0 0
    %788 = vmatpush1.bf16.msra.mxu0 %v770
    %789 = vmatprep.subr.bf16.mxu0 0
    %790 = vmatpush1.bf16.msra.mxu0 0
    %791 = vmatprep.subr.bf16.mxu0 0
    %792 = vmatpush1.bf16.msra.mxu0 0
    %793 = vmatprep.subr.bf16.mxu0 0
    %794 = vmatpush1.bf16.msra.mxu0 0
    %795 = vmatprep.subr.bf16.mxu0 0
    %796 = vmatpush1.bf16.msra.mxu0 0
    %797 = vmatprep.subr.bf16.mxu0 0
    %798 = vmatpush1.bf16.msra.mxu0 0
    %799 = vmatprep.subr.bf16.mxu0 0
    %800 = vmatpush1.bf16.msra.mxu0 0
    %801 = vmatprep.subr.bf16.mxu0 0
    %802 = vmatpush1.bf16.msra.mxu0 0
    %803 = vmatprep.subr.bf16.mxu0 0
    %804 = vmatpush1.bf16.msra.mxu0 0
    %805 = vmatprep.subr.bf16.mxu0 0
    %806 = vmatpush1.bf16.msra.mxu0 0
    %807 = vmatprep.subr.bf16.mxu0 0
    %808 = vmatpush1.bf16.msra.mxu0 0
    %809 = vmatprep.subr.bf16.mxu0 0
    %810 = vmatpush1.bf16.msra.mxu0 0
    %811 = vmatprep.subr.bf16.mxu0 0
    %812 = vmatpush1.bf16.msra.mxu0 0
    %813 = vmatprep.mubr.bf16.mxu0 0
    %814 = vmatmul.mubr.bf16.gmra.mrb[0].mxu0 %v776
    %v815 = vpop.f32.mrb[0].mxu0
    %v816 = vadd.f32 0.0, %v815
    %v817 = vpop.f32.mrb[0].mxu0
    %v818 = vpop.f32.mrb[0].mxu0
    %v819 = vadd.f32 0.0, %v818
    %v820 = vpop.f32.mrb[0].mxu0
    %821 = vmatprep.mubr.bf16.mxu0 0
    %822 = vmatmul.mubr.bf16.gmra.mrb[0].mxu0 %v779
    %v823 = vpop.f32.mrb[0].mxu0
    %v824 = vadd.f32 0.0, %v823
    %v825 = vpop.f32.mrb[0].mxu0
    %v826 = vpop.f32.mrb[0].mxu0
    %v827 = vadd.f32 0.0, %v826
    %v828 = vpop.f32.mrb[0].mxu0
    %829 = vdwg.mxu0
    %v830 = vld [vmem:[#allocation17 + $0x4] sm:$0x1]
    %v831 = vld [vmem:[#allocation17 + $0x5] sm:$0x1]
    %v832 = vsel %vm380, %v816, 0.0
    %v833 = vsel %vm380, %v819, 0.0
    %v834 = vadd.f32 %v832, %v833
    %v835 = vsel %vm380, %v824, 0.0
    %v836 = vadd.f32 %v834, %v835
    %v837 = vsel %vm380, %v827, 0.0
    %v838 = vadd.f32 %v836, %v837
    %v839 = vrot.slane %v838, 4
    %v840 = vadd.f32 %v838, %v839
    %v841 = vrot.slane %v840, 2
    %v842 = vadd.f32 %v840, %v841
    %v843 = vrot.slane %v842, 1
    %v844 = vadd.f32 %v842, %v843
    %v845 = vmul.f32 %v844, %v394
    %v846 = vmul.f32 %v816, %v816
    %v847 = vmul.f32 %v819, %v819
    %v848 = vmul.f32 %v824, %v824
    %v849 = vmul.f32 %v827, %v827
    %v850 = vsel %vm380, %v846, 0.0
    %v851 = vsel %vm380, %v847, 0.0
    %v852 = vadd.f32 %v850, %v851
    %v853 = vsel %vm380, %v848, 0.0
    %v854 = vadd.f32 %v852, %v853
    %v855 = vsel %vm380, %v849, 0.0
    %v856 = vadd.f32 %v854, %v855
    %v857 = vrot.slane %v856, 4
    %v858 = vadd.f32 %v856, %v857
    %v859 = vrot.slane %v858, 2
    %v860 = vadd.f32 %v858, %v859
    %v861 = vrot.slane %v860, 1
    %v862 = vadd.f32 %v860, %v861
    %v863 = vmul.f32 %v862, %v394
    %v864 = vmul.f32 %v845, %v845
    %v865 = vsub.f32 %v863, %v864
    %v866 = vmax.f32 %v865, 0.0
    %v867 = vadd.f32 %v866, 1e-05
    %v868 = vrsqrt.pop %v867
    %v869 = vmul.f32 %v830, %v868
    %v870 = vmul.f32 %v845, %v869
    %v871 = vsub.f32 %v831, %v870
    %v872 = vlaneseq
    %v873 = vshrl.u32 %v872, 7
    %v874 = vsub.s32 0, %v873
    %v875 = vrot.slane %v869, %v874
    %v876 = vmul.f32 %v816, %v875
    %v877 = vmul.f32 %v819, %v875
    %v878 = vmul.f32 %v824, %v875
    %v879 = vmul.f32 %v827, %v875
    %v880 = vlaneseq
    %v881 = vshrl.u32 %v880, 7
    %v882 = vsub.s32 0, %v881
    %v883 = vrot.slane %v871, %v882
    %v884 = vadd.f32 %v876, %v883
    %v885 = vadd.f32 %v877, %v883
    %v886 = vadd.f32 %v878, %v883
    %v887 = vadd.f32 %v879, %v883
    %v888 = vmax.f32 %v884, 0.0
    %v889 = vmax.f32 %v885, 0.0
    %v890 = vmax.f32 %v886, 0.0
    %v891 = vmax.f32 %v887, 0.0
    %s892 = scalar_lea.vmem [#allocation15], 64
    %v893 = vld [vmem:[%s892] sm:$0xf]
    %v894 = vld [vmem:[%s892 + $0x4] sm:$0xf]
    %v895 = vld [vmem:[%s892 + $0x8] sm:$0xf]
    %v896 = vld [vmem:[%s892 + $0xc] sm:$0xf]
    %v897 = vld [vmem:[%s892 + $0x10] sm:$0xf]
    %v898 = vld [vmem:[%s892 + $0x14] sm:$0xf]
    %v899 = vld [vmem:[%s892 + $0x18] sm:$0xf]
    %v900 = vld [vmem:[%s892 + $0x1c] sm:$0xf]
    %v901 = vpack.c.bf16 %v889, %v888
    %v902 = vpack.c.bf16 %v891, %v890
    %v911 = vunpack.c.l.b16 %v893
    %v912 = vunpack.c.l.b16 %v894
    %v913 = vunpack.c.l.b16 %v895
    %v914 = vunpack.c.l.b16 %v896
    %v915 = vunpack.c.l.b16 %v897
    %v916 = vunpack.c.l.b16 %v898
    %v917 = vunpack.c.l.b16 %v899
    %v918 = vunpack.c.l.b16 %v900
    %v919 = vpack.c.b16 %v912, %v911
    %v920 = vpack.c.b16 %v914, %v913
    %v921 = vpack.c.b16 %v916, %v915
    %v922 = vpack.c.b16 %v918, %v917
    %v928 = vsel %vm380, %v901, 0
    %v931 = vsel %vm380, %v902, 0
    %933 = vmatprep.subr.bf16.mxu0 0
    %934 = vmatpush1.bf16.msra.mxu0 %v919
    %935 = vmatprep.subr.bf16.mxu0 0
    %936 = vmatpush1.bf16.msra.mxu0 %v920
    %937 = vmatprep.subr.bf16.mxu0 0
    %938 = vmatpush1.bf16.msra.mxu0 %v921
    %939 = vmatprep.subr.bf16.mxu0 0
    %940 = vmatpush1.bf16.msra.mxu0 %v922
    %941 = vmatprep.subr.bf16.mxu0 0
    %942 = vmatpush1.bf16.msra.mxu0 0
    %943 = vmatprep.subr.bf16.mxu0 0
    %944 = vmatpush1.bf16.msra.mxu0 0
    %945 = vmatprep.subr.bf16.mxu0 0
    %946 = vmatpush1.bf16.msra.mxu0 0
    %947 = vmatprep.subr.bf16.mxu0 0
    %948 = vmatpush1.bf16.msra.mxu0 0
    %949 = vmatprep.subr.bf16.mxu0 0
    %950 = vmatpush1.bf16.msra.mxu0 0
    %951 = vmatprep.subr.bf16.mxu0 0
    %952 = vmatpush1.bf16.msra.mxu0 0
    %953 = vmatprep.subr.bf16.mxu0 0
    %954 = vmatpush1.bf16.msra.mxu0 0
    %955 = vmatprep.subr.bf16.mxu0 0
    %956 = vmatpush1.bf16.msra.mxu0 0
    %957 = vmatprep.subr.bf16.mxu0 0
    %958 = vmatpush1.bf16.msra.mxu0 0
    %959 = vmatprep.subr.bf16.mxu0 0
    %960 = vmatpush1.bf16.msra.mxu0 0
    %961 = vmatprep.subr.bf16.mxu0 0
    %962 = vmatpush1.bf16.msra.mxu0 0
    %963 = vmatprep.subr.bf16.mxu0 0
    %964 = vmatpush1.bf16.msra.mxu0 0
    %965 = vmatprep.mubr.bf16.mxu0 0
    %966 = vmatmul.mubr.bf16.gmra.mrb[0].mxu0 %v928
    %v967 = vpop.f32.mrb[0].mxu0
    %v968 = vadd.f32 0.0, %v967
    %v969 = vpop.f32.mrb[0].mxu0
    %v970 = vpop.f32.mrb[0].mxu0
    %v971 = vadd.f32 0.0, %v970
    %v972 = vpop.f32.mrb[0].mxu0
    %973 = vmatprep.mubr.bf16.mxu0 0
    %974 = vmatmul.mubr.bf16.gmra.mrb[0].mxu0 %v931
    %v975 = vpop.f32.mrb[0].mxu0
    %v976 = vadd.f32 0.0, %v975
    %v977 = vpop.f32.mrb[0].mxu0
    %v978 = vpop.f32.mrb[0].mxu0
    %v979 = vadd.f32 0.0, %v978
    %v980 = vpop.f32.mrb[0].mxu0
    %981 = vdwg.mxu0
    %v982 = vld [vmem:[#allocation17 + $0x6] sm:$0x1]
    %v983 = vld [vmem:[#allocation17 + $0x7] sm:$0x1]
    %v984 = vsel %vm380, %v968, 0.0
    %v985 = vsel %vm380, %v971, 0.0
    %v986 = vadd.f32 %v984, %v985
    %v987 = vsel %vm380, %v976, 0.0
    %v988 = vadd.f32 %v986, %v987
    %v989 = vsel %vm380, %v979, 0.0
    %v990 = vadd.f32 %v988, %v989
    %v991 = vrot.slane %v990, 4
    %v992 = vadd.f32 %v990, %v991
    %v993 = vrot.slane %v992, 2
    %v994 = vadd.f32 %v992, %v993
    %v995 = vrot.slane %v994, 1
    %v996 = vadd.f32 %v994, %v995
    %v997 = vmul.f32 %v996, %v394
    %v998 = vmul.f32 %v968, %v968
    %v999 = vmul.f32 %v971, %v971
    %v1000 = vmul.f32 %v976, %v976
    %v1001 = vmul.f32 %v979, %v979
    %v1002 = vsel %vm380, %v998, 0.0
    %v1003 = vsel %vm380, %v999, 0.0
    %v1004 = vadd.f32 %v1002, %v1003
    %v1005 = vsel %vm380, %v1000, 0.0
    %v1006 = vadd.f32 %v1004, %v1005
    %v1007 = vsel %vm380, %v1001, 0.0
    %v1008 = vadd.f32 %v1006, %v1007
    %v1009 = vrot.slane %v1008, 4
    %v1010 = vadd.f32 %v1008, %v1009
    %v1011 = vrot.slane %v1010, 2
    %v1012 = vadd.f32 %v1010, %v1011
    %v1013 = vrot.slane %v1012, 1
    %v1014 = vadd.f32 %v1012, %v1013
    %v1015 = vmul.f32 %v1014, %v394
    %v1016 = vmul.f32 %v997, %v997
    %v1017 = vsub.f32 %v1015, %v1016
    %v1018 = vmax.f32 %v1017, 0.0
    %v1019 = vadd.f32 %v1018, 1e-05
    %v1020 = vrsqrt.pop %v1019
    %v1021 = vmul.f32 %v982, %v1020
    %v1022 = vmul.f32 %v997, %v1021
    %v1023 = vsub.f32 %v983, %v1022
    %v1024 = vlaneseq
    %v1025 = vshrl.u32 %v1024, 7
    %v1026 = vsub.s32 0, %v1025
    %v1027 = vrot.slane %v1021, %v1026
    %v1028 = vmul.f32 %v968, %v1027
    %v1029 = vmul.f32 %v971, %v1027
    %v1030 = vmul.f32 %v976, %v1027
    %v1031 = vmul.f32 %v979, %v1027
    %v1032 = vlaneseq
    %v1033 = vshrl.u32 %v1032, 7
    %v1034 = vsub.s32 0, %v1033
    %v1035 = vrot.slane %v1023, %v1034
    %v1036 = vadd.f32 %v1028, %v1035
    %v1037 = vadd.f32 %v1029, %v1035
    %v1038 = vadd.f32 %v1030, %v1035
    %v1039 = vadd.f32 %v1031, %v1035
    %s1040 = scalar_lea.vmem [#allocation15], 96
    %v1041 = vld [vmem:[%s1040] sm:$0xf]
    %v1042 = vld [vmem:[%s1040 + $0x4] sm:$0xf]
    %v1043 = vld [vmem:[%s1040 + $0x8] sm:$0xf]
    %v1044 = vld [vmem:[%s1040 + $0xc] sm:$0xf]
    %v1045 = vld [vmem:[%s1040 + $0x10] sm:$0xf]
    %v1046 = vld [vmem:[%s1040 + $0x14] sm:$0xf]
    %v1047 = vld [vmem:[%s1040 + $0x18] sm:$0xf]
    %v1048 = vld [vmem:[%s1040 + $0x1c] sm:$0xf]
    %v1049 = vpack.c.bf16 %v1037, %v1036
    %v1050 = vpack.c.bf16 %v1039, %v1038
    %v1059 = vunpack.c.l.b16 %v1041
    %v1060 = vunpack.c.l.b16 %v1042
    %v1061 = vunpack.c.l.b16 %v1043
    %v1062 = vunpack.c.l.b16 %v1044
    %v1063 = vunpack.c.l.b16 %v1045
    %v1064 = vunpack.c.l.b16 %v1046
    %v1065 = vunpack.c.l.b16 %v1047
    %v1066 = vunpack.c.l.b16 %v1048
    %v1067 = vpack.c.b16 %v1060, %v1059
    %v1068 = vpack.c.b16 %v1062, %v1061
    %v1069 = vpack.c.b16 %v1064, %v1063
    %v1070 = vpack.c.b16 %v1066, %v1065
    %v1076 = vsel %vm380, %v1049, 0
    %v1079 = vsel %vm380, %v1050, 0
    %1081 = vmatprep.subr.bf16.mxu0 0
    %1082 = vmatpush1.bf16.msra.mxu0 %v1067
    %1083 = vmatprep.subr.bf16.mxu0 0
    %1084 = vmatpush1.bf16.msra.mxu0 %v1068
    %1085 = vmatprep.subr.bf16.mxu0 0
    %1086 = vmatpush1.bf16.msra.mxu0 %v1069
    %1087 = vmatprep.subr.bf16.mxu0 0
    %1088 = vmatpush1.bf16.msra.mxu0 %v1070
    %1089 = vmatprep.subr.bf16.mxu0 0
    %1090 = vmatpush1.bf16.msra.mxu0 0
    %1091 = vmatprep.subr.bf16.mxu0 0
    %1092 = vmatpush1.bf16.msra.mxu0 0
    %1093 = vmatprep.subr.bf16.mxu0 0
    %1094 = vmatpush1.bf16.msra.mxu0 0
    %1095 = vmatprep.subr.bf16.mxu0 0
    %1096 = vmatpush1.bf16.msra.mxu0 0
    %1097 = vmatprep.subr.bf16.mxu0 0
    %1098 = vmatpush1.bf16.msra.mxu0 0
    %1099 = vmatprep.subr.bf16.mxu0 0
    %1100 = vmatpush1.bf16.msra.mxu0 0
    %1101 = vmatprep.subr.bf16.mxu0 0
    %1102 = vmatpush1.bf16.msra.mxu0 0
    %1103 = vmatprep.subr.bf16.mxu0 0
    %1104 = vmatpush1.bf16.msra.mxu0 0
    %1105 = vmatprep.subr.bf16.mxu0 0
    %1106 = vmatpush1.bf16.msra.mxu0 0
    %1107 = vmatprep.subr.bf16.mxu0 0
    %1108 = vmatpush1.bf16.msra.mxu0 0
    %1109 = vmatprep.subr.bf16.mxu0 0
    %1110 = vmatpush1.bf16.msra.mxu0 0
    %1111 = vmatprep.subr.bf16.mxu0 0
    %1112 = vmatpush1.bf16.msra.mxu0 0
    %1113 = vmatprep.mubr.bf16.mxu0 0
    %1114 = vmatmul.mubr.bf16.gmra.mrb[0].mxu0 %v1076
    %v1115 = vpop.f32.mrb[0].mxu0
    %v1116 = vadd.f32 0.0, %v1115
    %v1117 = vpop.f32.mrb[0].mxu0
    %v1118 = vpop.f32.mrb[0].mxu0
    %v1119 = vadd.f32 0.0, %v1118
    %v1120 = vpop.f32.mrb[0].mxu0
    %1121 = vmatprep.mubr.bf16.mxu0 0
    %1122 = vmatmul.mubr.bf16.gmra.mrb[0].mxu0 %v1079
    %v1123 = vpop.f32.mrb[0].mxu0
    %v1124 = vadd.f32 0.0, %v1123
    %v1125 = vpop.f32.mrb[0].mxu0
    %v1126 = vpop.f32.mrb[0].mxu0
    %v1127 = vadd.f32 0.0, %v1126
    %v1128 = vpop.f32.mrb[0].mxu0
    %1129 = vdwg.mxu0
    %v1130 = vld [vmem:[#allocation17 + $0x8] sm:$0x1]
    %v1131 = vld [vmem:[#allocation17 + $0x9] sm:$0x1]
    %v1132 = vsel %vm380, %v1116, 0.0
    %v1133 = vsel %vm380, %v1119, 0.0
    %v1134 = vadd.f32 %v1132, %v1133
    %v1135 = vsel %vm380, %v1124, 0.0
    %v1136 = vadd.f32 %v1134, %v1135
    %v1137 = vsel %vm380, %v1127, 0.0
    %v1138 = vadd.f32 %v1136, %v1137
    %v1139 = vrot.slane %v1138, 4
    %v1140 = vadd.f32 %v1138, %v1139
    %v1141 = vrot.slane %v1140, 2
    %v1142 = vadd.f32 %v1140, %v1141
    %v1143 = vrot.slane %v1142, 1
    %v1144 = vadd.f32 %v1142, %v1143
    %v1145 = vmul.f32 %v1144, %v394
    %v1146 = vmul.f32 %v1116, %v1116
    %v1147 = vmul.f32 %v1119, %v1119
    %v1148 = vmul.f32 %v1124, %v1124
    %v1149 = vmul.f32 %v1127, %v1127
    %v1150 = vsel %vm380, %v1146, 0.0
    %v1151 = vsel %vm380, %v1147, 0.0
    %v1152 = vadd.f32 %v1150, %v1151
    %v1153 = vsel %vm380, %v1148, 0.0
    %v1154 = vadd.f32 %v1152, %v1153
    %v1155 = vsel %vm380, %v1149, 0.0
    %v1156 = vadd.f32 %v1154, %v1155
    %v1157 = vrot.slane %v1156, 4
    %v1158 = vadd.f32 %v1156, %v1157
    %v1159 = vrot.slane %v1158, 2
    %v1160 = vadd.f32 %v1158, %v1159
    %v1161 = vrot.slane %v1160, 1
    %v1162 = vadd.f32 %v1160, %v1161
    %v1163 = vmul.f32 %v1162, %v394
    %v1164 = vmul.f32 %v1145, %v1145
    %v1165 = vsub.f32 %v1163, %v1164
    %v1166 = vmax.f32 %v1165, 0.0
    %v1167 = vadd.f32 %v1166, 1e-05
    %v1168 = vrsqrt.pop %v1167
    %v1169 = vmul.f32 %v1130, %v1168
    %v1170 = vmul.f32 %v1145, %v1169
    %v1171 = vsub.f32 %v1131, %v1170
    %v1172 = vlaneseq
    %v1173 = vshrl.u32 %v1172, 7
    %v1174 = vsub.s32 0, %v1173
    %v1175 = vrot.slane %v1169, %v1174
    %v1176 = vmul.f32 %v1116, %v1175
    %v1177 = vmul.f32 %v1119, %v1175
    %v1178 = vmul.f32 %v1124, %v1175
    %v1179 = vmul.f32 %v1127, %v1175
    %v1180 = vlaneseq
    %v1181 = vshrl.u32 %v1180, 7
    %v1182 = vsub.s32 0, %v1181
    %v1183 = vrot.slane %v1171, %v1182
    %v1184 = vadd.f32 %v1176, %v1183
    %v1185 = vadd.f32 %v1177, %v1183
    %v1186 = vadd.f32 %v1178, %v1183
    %v1187 = vadd.f32 %v1179, %v1183
    %v1188 = vmax.f32 %v1184, 0.0
    %v1189 = vmax.f32 %v1185, 0.0
    %v1190 = vmax.f32 %v1186, 0.0
    %v1191 = vmax.f32 %v1187, 0.0
    %s1192 = scalar_lea.vmem [#allocation15], 128
    %v1193 = vld [vmem:[%s1192] sm:$0xf]
    %v1194 = vld [vmem:[%s1192 + $0x4] sm:$0xf]
    %v1195 = vld [vmem:[%s1192 + $0x8] sm:$0xf]
    %v1196 = vld [vmem:[%s1192 + $0xc] sm:$0xf]
    %v1197 = vld [vmem:[%s1192 + $0x10] sm:$0xf]
    %v1198 = vld [vmem:[%s1192 + $0x14] sm:$0xf]
    %v1199 = vld [vmem:[%s1192 + $0x18] sm:$0xf]
    %v1200 = vld [vmem:[%s1192 + $0x1c] sm:$0xf]
    %v1201 = vpack.c.bf16 %v1189, %v1188
    %v1202 = vpack.c.bf16 %v1191, %v1190
    %v1211 = vunpack.c.l.b16 %v1193
    %v1212 = vunpack.c.l.b16 %v1194
    %v1213 = vunpack.c.l.b16 %v1195
    %v1214 = vunpack.c.l.b16 %v1196
    %v1215 = vunpack.c.l.b16 %v1197
    %v1216 = vunpack.c.l.b16 %v1198
    %v1217 = vunpack.c.l.b16 %v1199
    %v1218 = vunpack.c.l.b16 %v1200
    %v1219 = vpack.c.b16 %v1212, %v1211
    %v1220 = vpack.c.b16 %v1214, %v1213
    %v1221 = vpack.c.b16 %v1216, %v1215
    %v1222 = vpack.c.b16 %v1218, %v1217
    %v1228 = vsel %vm380, %v1201, 0
    %v1231 = vsel %vm380, %v1202, 0
    %1233 = vmatprep.subr.bf16.mxu0 0
    %1234 = vmatpush1.bf16.msra.mxu0 %v1219
    %1235 = vmatprep.subr.bf16.mxu0 0
    %1236 = vmatpush1.bf16.msra.mxu0 %v1220
    %1237 = vmatprep.subr.bf16.mxu0 0
    %1238 = vmatpush1.bf16.msra.mxu0 %v1221
    %1239 = vmatprep.subr.bf16.mxu0 0
    %1240 = vmatpush1.bf16.msra.mxu0 %v1222
    %1241 = vmatprep.subr.bf16.mxu0 0
    %1242 = vmatpush1.bf16.msra.mxu0 0
    %1243 = vmatprep.subr.bf16.mxu0 0
    %1244 = vmatpush1.bf16.msra.mxu0 0
    %1245 = vmatprep.subr.bf16.mxu0 0
    %1246 = vmatpush1.bf16.msra.mxu0 0
    %1247 = vmatprep.subr.bf16.mxu0 0
    %1248 = vmatpush1.bf16.msra.mxu0 0
    %1249 = vmatprep.subr.bf16.mxu0 0
    %1250 = vmatpush1.bf16.msra.mxu0 0
    %1251 = vmatprep.subr.bf16.mxu0 0
    %1252 = vmatpush1.bf16.msra.mxu0 0
    %1253 = vmatprep.subr.bf16.mxu0 0
    %1254 = vmatpush1.bf16.msra.mxu0 0
    %1255 = vmatprep.subr.bf16.mxu0 0
    %1256 = vmatpush1.bf16.msra.mxu0 0
    %1257 = vmatprep.subr.bf16.mxu0 0
    %1258 = vmatpush1.bf16.msra.mxu0 0
    %1259 = vmatprep.subr.bf16.mxu0 0
    %1260 = vmatpush1.bf16.msra.mxu0 0
    %1261 = vmatprep.subr.bf16.mxu0 0
    %1262 = vmatpush1.bf16.msra.mxu0 0
    %1263 = vmatprep.subr.bf16.mxu0 0
    %1264 = vmatpush1.bf16.msra.mxu0 0
    %1265 = vmatprep.mubr.bf16.mxu0 0
    %1266 = vmatmul.mubr.bf16.gmra.mrb[0].mxu0 %v1228
    %v1267 = vpop.f32.mrb[0].mxu0
    %v1268 = vadd.f32 0.0, %v1267
    %v1269 = vpop.f32.mrb[0].mxu0
    %v1270 = vpop.f32.mrb[0].mxu0
    %v1271 = vadd.f32 0.0, %v1270
    %v1272 = vpop.f32.mrb[0].mxu0
    %1273 = vmatprep.mubr.bf16.mxu0 0
    %1274 = vmatmul.mubr.bf16.gmra.mrb[0].mxu0 %v1231
    %v1275 = vpop.f32.mrb[0].mxu0
    %v1276 = vadd.f32 0.0, %v1275
    %v1277 = vpop.f32.mrb[0].mxu0
    %v1278 = vpop.f32.mrb[0].mxu0
    %v1279 = vadd.f32 0.0, %v1278
    %v1280 = vpop.f32.mrb[0].mxu0
    %1281 = vdwg.mxu0
    %v1282 = vld [vmem:[#allocation17 + $0xa] sm:$0x1]
    %v1283 = vld [vmem:[#allocation17 + $0xb] sm:$0x1]
    %v1284 = vsel %vm380, %v1268, 0.0
    %v1285 = vsel %vm380, %v1271, 0.0
    %v1286 = vadd.f32 %v1284, %v1285
    %v1287 = vsel %vm380, %v1276, 0.0
    %v1288 = vadd.f32 %v1286, %v1287
    %v1289 = vsel %vm380, %v1279, 0.0
    %v1290 = vadd.f32 %v1288, %v1289
    %v1291 = vrot.slane %v1290, 4
    %v1292 = vadd.f32 %v1290, %v1291
    %v1293 = vrot.slane %v1292, 2
    %v1294 = vadd.f32 %v1292, %v1293
    %v1295 = vrot.slane %v1294, 1
    %v1296 = vadd.f32 %v1294, %v1295
    %v1297 = vmul.f32 %v1296, %v394
    %v1298 = vmul.f32 %v1268, %v1268
    %v1299 = vmul.f32 %v1271, %v1271
    %v1300 = vmul.f32 %v1276, %v1276
    %v1301 = vmul.f32 %v1279, %v1279
    %v1302 = vsel %vm380, %v1298, 0.0
    %v1303 = vsel %vm380, %v1299, 0.0
    %v1304 = vadd.f32 %v1302, %v1303
    %v1305 = vsel %vm380, %v1300, 0.0
    %v1306 = vadd.f32 %v1304, %v1305
    %v1307 = vsel %vm380, %v1301, 0.0
    %v1308 = vadd.f32 %v1306, %v1307
    %v1309 = vrot.slane %v1308, 4
    %v1310 = vadd.f32 %v1308, %v1309
    %v1311 = vrot.slane %v1310, 2
    %v1312 = vadd.f32 %v1310, %v1311
    %v1313 = vrot.slane %v1312, 1
    %v1314 = vadd.f32 %v1312, %v1313
    %v1315 = vmul.f32 %v1314, %v394
    %v1316 = vmul.f32 %v1297, %v1297
    %v1317 = vsub.f32 %v1315, %v1316
    %v1318 = vmax.f32 %v1317, 0.0
    %v1319 = vadd.f32 %v1318, 1e-05
    %v1320 = vrsqrt.pop %v1319
    %v1321 = vmul.f32 %v1282, %v1320
    %v1322 = vmul.f32 %v1297, %v1321
    %v1323 = vsub.f32 %v1283, %v1322
    %v1324 = vlaneseq
    %v1325 = vshrl.u32 %v1324, 7
    %v1326 = vsub.s32 0, %v1325
    %v1327 = vrot.slane %v1321, %v1326
    %v1328 = vmul.f32 %v1268, %v1327
    %v1329 = vmul.f32 %v1271, %v1327
    %v1330 = vmul.f32 %v1276, %v1327
    %v1331 = vmul.f32 %v1279, %v1327
    %v1332 = vlaneseq
    %v1333 = vshrl.u32 %v1332, 7
    %v1334 = vsub.s32 0, %v1333
    %v1335 = vrot.slane %v1323, %v1334
    %v1336 = vadd.f32 %v1328, %v1335
    %v1337 = vadd.f32 %v1329, %v1335
    %v1338 = vadd.f32 %v1330, %v1335
    %v1339 = vadd.f32 %v1331, %v1335
    %s1340 = smul.u32 4, 8
    %s1341 = smul.u32 %s1340, 1
    %s1342 = sshll.u32 %s1341, 4
    %1343 = dma.done [#allocation8], %s1342
    %s1344 = smul.u32 4, 7
    %s1345 = smul.u32 %s1344, 16
    %s1346 = smul.u32 %s1345, 1
    %s1347 = sshll.u32 %s1346, 4
    %1348 = dma.done %s190, %s1347
    %v1349 = vld [vmem:[#allocation2] sm:$0xff]
    %v1350 = vld [vmem:[#allocation2 + $0x8] sm:$0xff]
    %v1351 = vld [vmem:[#allocation2 + $0x10] sm:$0xff]
    %v1352 = vld [vmem:[#allocation2 + $0x18] sm:$0xff]
    %v1353 = vpack.c.bf16 %v1337, %v1336
    %v1354 = vpack.c.bf16 %v1339, %v1338
    %v1356 = vsel %vm380, %v1353, 0
    %v1359 = vsel %vm380, %v1354, 0
    %1361 = vmatprep.subr.bf16.mxu0 0
    %1362 = vmatpush1.bf16.msra.mxu0 %v1349
    %1363 = vmatprep.subr.bf16.mxu0 0
    %1364 = vmatpush1.bf16.msra.mxu0 %v1350
    %1365 = vmatprep.subr.bf16.mxu0 0
    %1366 = vmatpush1.bf16.msra.mxu0 %v1351
    %1367 = vmatprep.subr.bf16.mxu0 0
    %1368 = vmatpush1.bf16.msra.mxu0 %v1352
    %1369 = vmatprep.subr.bf16.mxu0 0
    %1370 = vmatpush1.bf16.msra.mxu0 0
    %1371 = vmatprep.subr.bf16.mxu0 0
    %1372 = vmatpush1.bf16.msra.mxu0 0
    %1373 = vmatprep.subr.bf16.mxu0 0
    %1374 = vmatpush1.bf16.msra.mxu0 0
    %1375 = vmatprep.subr.bf16.mxu0 0
    %1376 = vmatpush1.bf16.msra.mxu0 0
    %1377 = vmatprep.subr.bf16.mxu0 0
    %1378 = vmatpush1.bf16.msra.mxu0 0
    %1379 = vmatprep.subr.bf16.mxu0 0
    %1380 = vmatpush1.bf16.msra.mxu0 0
    %1381 = vmatprep.subr.bf16.mxu0 0
    %1382 = vmatpush1.bf16.msra.mxu0 0
    %1383 = vmatprep.subr.bf16.mxu0 0
    %1384 = vmatpush1.bf16.msra.mxu0 0
    %1385 = vmatprep.subr.bf16.mxu0 0
    %1386 = vmatpush1.bf16.msra.mxu0 0
    %1387 = vmatprep.subr.bf16.mxu0 0
    %1388 = vmatpush1.bf16.msra.mxu0 0
    %1389 = vmatprep.subr.bf16.mxu0 0
    %1390 = vmatpush1.bf16.msra.mxu0 0
    %1391 = vmatprep.subr.bf16.mxu0 0
    %1392 = vmatpush1.bf16.msra.mxu0 0
    %1393 = vmatprep.mubr.bf16.mxu0 0
    %1394 = vmatmul.mubr.bf16.gmra.mrb[0].mxu0 %v1356
    %v1395 = vpop.f32.mrb[0].mxu0
    %v1396 = vadd.f32 0.0, %v1395
    %v1397 = vpop.f32.mrb[0].mxu0
    %v1398 = vpop.f32.mrb[0].mxu0
    %v1399 = vadd.f32 0.0, %v1398
    %v1400 = vpop.f32.mrb[0].mxu0
    %1401 = vmatprep.mubr.bf16.mxu0 0
    %1402 = vmatmul.mubr.bf16.gmra.mrb[0].mxu0 %v1359
    %v1403 = vpop.f32.mrb[0].mxu0
    %v1404 = vadd.f32 0.0, %v1403
    %v1405 = vpop.f32.mrb[0].mxu0
    %v1406 = vpop.f32.mrb[0].mxu0
    %v1407 = vadd.f32 0.0, %v1406
    %v1408 = vpop.f32.mrb[0].mxu0
    %1409 = vdwg.mxu0
    %v1410 = vld [vmem:[#allocation18] sm:$0x1]
    %v1411 = vld [vmem:[#allocation18 + $0x1] sm:$0x1]
    %v1412 = vadd.f32 %v1396, %v1399
    %v1413 = vadd.f32 %v1412, %v1404
    %v1414 = vadd.f32 %v1413, %v1407
    %v1415 = vrot.slane %v1414, 4
    %v1416 = vadd.f32 %v1414, %v1415
    %v1417 = vrot.slane %v1416, 2
    %v1418 = vadd.f32 %v1416, %v1417
    %v1419 = vrot.slane %v1418, 1
    %v1420 = vadd.f32 %v1418, %v1419
    %v1421 = vmul.f32 %v1420, %v394
    %v1422 = vmul.f32 %v1396, %v1396
    %v1423 = vmul.f32 %v1399, %v1399
    %v1424 = vmul.f32 %v1404, %v1404
    %v1425 = vmul.f32 %v1407, %v1407
    %v1426 = vadd.f32 %v1422, %v1423
    %v1427 = vadd.f32 %v1426, %v1424
    %v1428 = vadd.f32 %v1427, %v1425
    %v1429 = vrot.slane %v1428, 4
    %v1430 = vadd.f32 %v1428, %v1429
    %v1431 = vrot.slane %v1430, 2
    %v1432 = vadd.f32 %v1430, %v1431
    %v1433 = vrot.slane %v1432, 1
    %v1434 = vadd.f32 %v1432, %v1433
    %v1435 = vmul.f32 %v1434, %v394
    %v1436 = vmul.f32 %v1421, %v1421
    %v1437 = vsub.f32 %v1435, %v1436
    %v1438 = vmax.f32 %v1437, 0.0
    %v1439 = vadd.f32 %v1438, 1e-05
    %v1440 = vrsqrt.pop %v1439
    %v1441 = vmul.f32 %v1410, %v1440
    %v1442 = vmul.f32 %v1421, %v1441
    %v1443 = vsub.f32 %v1411, %v1442
    %v1444 = vlaneseq
    %v1445 = vshrl.u32 %v1444, 7
    %v1446 = vsub.s32 0, %v1445
    %v1447 = vrot.slane %v1441, %v1446
    %v1448 = vmul.f32 %v1396, %v1447
    %v1449 = vmul.f32 %v1399, %v1447
    %v1450 = vmul.f32 %v1404, %v1447
    %v1451 = vmul.f32 %v1407, %v1447
    %v1452 = vlaneseq
    %v1453 = vshrl.u32 %v1452, 7
    %v1454 = vsub.s32 0, %v1453
    %v1455 = vrot.slane %v1443, %v1454
    %v1456 = vadd.f32 %v1448, %v1455
    %v1457 = vadd.f32 %v1449, %v1455
    %v1458 = vadd.f32 %v1450, %v1455
    %v1459 = vadd.f32 %v1451, %v1455
    %v1460 = vmax.f32 %v1456, 0.0
    %v1461 = vmax.f32 %v1457, 0.0
    %v1462 = vmax.f32 %v1458, 0.0
    %v1463 = vmax.f32 %v1459, 0.0
    %v1464 = vld [vmem:[#allocation3] sm:$0xff]
    %v1465 = vld [vmem:[#allocation3 + $0x8] sm:$0xff]
    %v1466 = vld [vmem:[#allocation3 + $0x10] sm:$0xff]
    %v1467 = vld [vmem:[#allocation3 + $0x18] sm:$0xff]
    %v1468 = vld [vmem:[#allocation3 + $0x20] sm:$0xff]
    %v1469 = vld [vmem:[#allocation3 + $0x28] sm:$0xff]
    %v1470 = vld [vmem:[#allocation3 + $0x30] sm:$0xff]
    %v1471 = vld [vmem:[#allocation3 + $0x38] sm:$0xff]
    %v1472 = vpack.c.bf16 %v1461, %v1460
    %v1473 = vpack.c.bf16 %v1463, %v1462
    %1474 = vmatprep.subr.bf16.mxu0 0
    %1475 = vmatpush1.bf16.msra.mxu0 %v1464
    %1476 = vmatprep.subr.bf16.mxu0 0
    %1477 = vmatpush1.bf16.msra.mxu0 %v1465
    %1478 = vmatprep.subr.bf16.mxu0 0
    %1479 = vmatpush1.bf16.msra.mxu0 %v1466
    %1480 = vmatprep.subr.bf16.mxu0 0
    %1481 = vmatpush1.bf16.msra.mxu0 %v1467
    %1482 = vmatprep.subr.bf16.mxu0 0
    %1483 = vmatpush1.bf16.msra.mxu0 %v1468
    %1484 = vmatprep.subr.bf16.mxu0 0
    %1485 = vmatpush1.bf16.msra.mxu0 %v1469
    %1486 = vmatprep.subr.bf16.mxu0 0
    %1487 = vmatpush1.bf16.msra.mxu0 %v1470
    %1488 = vmatprep.subr.bf16.mxu0 0
    %1489 = vmatpush1.bf16.msra.mxu0 %v1471
    %1490 = vmatprep.subr.bf16.mxu0 0
    %1491 = vmatpush1.bf16.msra.mxu0 0
    %1492 = vmatprep.subr.bf16.mxu0 0
    %1493 = vmatpush1.bf16.msra.mxu0 0
    %1494 = vmatprep.subr.bf16.mxu0 0
    %1495 = vmatpush1.bf16.msra.mxu0 0
    %1496 = vmatprep.subr.bf16.mxu0 0
    %1497 = vmatpush1.bf16.msra.mxu0 0
    %1498 = vmatprep.subr.bf16.mxu0 0
    %1499 = vmatpush1.bf16.msra.mxu0 0
    %1500 = vmatprep.subr.bf16.mxu0 0
    %1501 = vmatpush1.bf16.msra.mxu0 0
    %1502 = vmatprep.subr.bf16.mxu0 0
    %1503 = vmatpush1.bf16.msra.mxu0 0
    %1504 = vmatprep.subr.bf16.mxu0 0
    %1505 = vmatpush1.bf16.msra.mxu0 0
    %1506 = vmatprep.mubr.bf16.mxu0 0
    %1507 = vmatmul.mubr.bf16.gmra.mrb[0].mxu0 %v1472
    %v1508 = vpop.f32.mrb[0].mxu0
    %v1509 = vadd.f32 0.0, %v1508
    %v1510 = vpop.f32.mrb[0].mxu0
    %v1511 = vpop.f32.mrb[0].mxu0
    %v1512 = vadd.f32 0.0, %v1511
    %v1513 = vpop.f32.mrb[0].mxu0
    %1514 = vmatprep.mubr.bf16.mxu0 0
    %1515 = vmatmul.mubr.bf16.gmra.mrb[0].mxu0 %v1473
    %v1516 = vpop.f32.mrb[0].mxu0
    %v1517 = vadd.f32 0.0, %v1516
    %v1518 = vpop.f32.mrb[0].mxu0
    %v1519 = vpop.f32.mrb[0].mxu0
    %v1520 = vadd.f32 0.0, %v1519
    %v1521 = vpop.f32.mrb[0].mxu0
    %1522 = vdwg.mxu0
    %v1523 = vld [vmem:[#allocation18 + $0x2] sm:$0x1]
    %v1524 = vld [vmem:[#allocation18 + $0x3] sm:$0x1]
    %v1525 = vadd.f32 %v1509, %v1512
    %v1526 = vadd.f32 %v1525, %v1517
    %v1527 = vadd.f32 %v1526, %v1520
    %v1528 = vrot.slane %v1527, 4
    %v1529 = vadd.f32 %v1527, %v1528
    %v1530 = vrot.slane %v1529, 2
    %v1531 = vadd.f32 %v1529, %v1530
    %v1532 = vrot.slane %v1531, 1
    %v1533 = vadd.f32 %v1531, %v1532
    %v1534 = vmul.f32 %v1533, %v394
    %v1535 = vmul.f32 %v1509, %v1509
    %v1536 = vmul.f32 %v1512, %v1512
    %v1537 = vmul.f32 %v1517, %v1517
    %v1538 = vmul.f32 %v1520, %v1520
    %v1539 = vadd.f32 %v1535, %v1536
    %v1540 = vadd.f32 %v1539, %v1537
    %v1541 = vadd.f32 %v1540, %v1538
    %v1542 = vrot.slane %v1541, 4
    %v1543 = vadd.f32 %v1541, %v1542
    %v1544 = vrot.slane %v1543, 2
    %v1545 = vadd.f32 %v1543, %v1544
    %v1546 = vrot.slane %v1545, 1
    %v1547 = vadd.f32 %v1545, %v1546
    %v1548 = vmul.f32 %v1547, %v394
    %v1549 = vmul.f32 %v1534, %v1534
    %v1550 = vsub.f32 %v1548, %v1549
    %v1551 = vmax.f32 %v1550, 0.0
    %v1552 = vadd.f32 %v1551, 1e-05
    %v1553 = vrsqrt.pop %v1552
    %v1554 = vmul.f32 %v1523, %v1553
    %v1555 = vmul.f32 %v1534, %v1554
    %v1556 = vsub.f32 %v1524, %v1555
    %v1557 = vlaneseq
    %v1558 = vshrl.u32 %v1557, 7
    %v1559 = vsub.s32 0, %v1558
    %v1560 = vrot.slane %v1554, %v1559
    %v1561 = vmul.f32 %v1509, %v1560
    %v1562 = vmul.f32 %v1512, %v1560
    %v1563 = vmul.f32 %v1517, %v1560
    %v1564 = vmul.f32 %v1520, %v1560
    %v1565 = vlaneseq
    %v1566 = vshrl.u32 %v1565, 7
    %v1567 = vsub.s32 0, %v1566
    %v1568 = vrot.slane %v1556, %v1567
    %v1569 = vadd.f32 %v1561, %v1568
    %v1570 = vadd.f32 %v1562, %v1568
    %v1571 = vadd.f32 %v1563, %v1568
    %v1572 = vadd.f32 %v1564, %v1568
    %s1573 = scalar_lea.vmem [#allocation3], 64
    %v1574 = vld [vmem:[%s1573] sm:$0xff]
    %v1575 = vld [vmem:[%s1573 + $0x8] sm:$0xff]
    %v1576 = vld [vmem:[%s1573 + $0x10] sm:$0xff]
    %v1577 = vld [vmem:[%s1573 + $0x18] sm:$0xff]
    %v1578 = vld [vmem:[%s1573 + $0x20] sm:$0xff]
    %v1579 = vld [vmem:[%s1573 + $0x28] sm:$0xff]
    %v1580 = vld [vmem:[%s1573 + $0x30] sm:$0xff]
    %v1581 = vld [vmem:[%s1573 + $0x38] sm:$0xff]
    %v1582 = vpack.c.bf16 %v1570, %v1569
    %v1583 = vpack.c.bf16 %v1572, %v1571
    %1584 = vmatprep.subr.bf16.mxu0 0
    %1585 = vmatpush1.bf16.msra.mxu0 %v1574
    %1586 = vmatprep.subr.bf16.mxu0 0
    %1587 = vmatpush1.bf16.msra.mxu0 %v1575
    %1588 = vmatprep.subr.bf16.mxu0 0
    %1589 = vmatpush1.bf16.msra.mxu0 %v1576
    %1590 = vmatprep.subr.bf16.mxu0 0
    %1591 = vmatpush1.bf16.msra.mxu0 %v1577
    %1592 = vmatprep.subr.bf16.mxu0 0
    %1593 = vmatpush1.bf16.msra.mxu0 %v1578
    %1594 = vmatprep.subr.bf16.mxu0 0
    %1595 = vmatpush1.bf16.msra.mxu0 %v1579
    %1596 = vmatprep.subr.bf16.mxu0 0
    %1597 = vmatpush1.bf16.msra.mxu0 %v1580
    %1598 = vmatprep.subr.bf16.mxu0 0
    %1599 = vmatpush1.bf16.msra.mxu0 %v1581
    %1600 = vmatprep.subr.bf16.mxu0 0
    %1601 = vmatpush1.bf16.msra.mxu0 0
    %1602 = vmatprep.subr.bf16.mxu0 0
    %1603 = vmatpush1.bf16.msra.mxu0 0
    %1604 = vmatprep.subr.bf16.mxu0 0
    %1605 = vmatpush1.bf16.msra.mxu0 0
    %1606 = vmatprep.subr.bf16.mxu0 0
    %1607 = vmatpush1.bf16.msra.mxu0 0
    %1608 = vmatprep.subr.bf16.mxu0 0
    %1609 = vmatpush1.bf16.msra.mxu0 0
    %1610 = vmatprep.subr.bf16.mxu0 0
    %1611 = vmatpush1.bf16.msra.mxu0 0
    %1612 = vmatprep.subr.bf16.mxu0 0
    %1613 = vmatpush1.bf16.msra.mxu0 0
    %1614 = vmatprep.subr.bf16.mxu0 0
    %1615 = vmatpush1.bf16.msra.mxu0 0
    %1616 = vmatprep.mubr.bf16.mxu0 0
    %1617 = vmatmul.mubr.bf16.gmra.mrb[0].mxu0 %v1582
    %v1618 = vpop.f32.mrb[0].mxu0
    %v1619 = vadd.f32 0.0, %v1618
    %v1620 = vpop.f32.mrb[0].mxu0
    %v1621 = vpop.f32.mrb[0].mxu0
    %v1622 = vadd.f32 0.0, %v1621
    %v1623 = vpop.f32.mrb[0].mxu0
    %1624 = vmatprep.mubr.bf16.mxu0 0
    %1625 = vmatmul.mubr.bf16.gmra.mrb[0].mxu0 %v1583
    %v1626 = vpop.f32.mrb[0].mxu0
    %v1627 = vadd.f32 0.0, %v1626
    %v1628 = vpop.f32.mrb[0].mxu0
    %v1629 = vpop.f32.mrb[0].mxu0
    %v1630 = vadd.f32 0.0, %v1629
    %v1631 = vpop.f32.mrb[0].mxu0
    %1632 = vdwg.mxu0
    %v1633 = vld [vmem:[#allocation18 + $0x4] sm:$0x1]
    %v1634 = vld [vmem:[#allocation18 + $0x5] sm:$0x1]
    %v1635 = vadd.f32 %v1619, %v1622
    %v1636 = vadd.f32 %v1635, %v1627
    %v1637 = vadd.f32 %v1636, %v1630
    %v1638 = vrot.slane %v1637, 4
    %v1639 = vadd.f32 %v1637, %v1638
    %v1640 = vrot.slane %v1639, 2
    %v1641 = vadd.f32 %v1639, %v1640
    %v1642 = vrot.slane %v1641, 1
    %v1643 = vadd.f32 %v1641, %v1642
    %v1644 = vmul.f32 %v1643, %v394
    %v1645 = vmul.f32 %v1619, %v1619
    %v1646 = vmul.f32 %v1622, %v1622
    %v1647 = vmul.f32 %v1627, %v1627
    %v1648 = vmul.f32 %v1630, %v1630
    %v1649 = vadd.f32 %v1645, %v1646
    %v1650 = vadd.f32 %v1649, %v1647
    %v1651 = vadd.f32 %v1650, %v1648
    %v1652 = vrot.slane %v1651, 4
    %v1653 = vadd.f32 %v1651, %v1652
    %v1654 = vrot.slane %v1653, 2
    %v1655 = vadd.f32 %v1653, %v1654
    %v1656 = vrot.slane %v1655, 1
    %v1657 = vadd.f32 %v1655, %v1656
    %v1658 = vmul.f32 %v1657, %v394
    %v1659 = vmul.f32 %v1644, %v1644
    %v1660 = vsub.f32 %v1658, %v1659
    %v1661 = vmax.f32 %v1660, 0.0
    %v1662 = vadd.f32 %v1661, 1e-05
    %v1663 = vrsqrt.pop %v1662
    %v1664 = vmul.f32 %v1633, %v1663
    %v1665 = vmul.f32 %v1644, %v1664
    %v1666 = vsub.f32 %v1634, %v1665
    %v1667 = vlaneseq
    %v1668 = vshrl.u32 %v1667, 7
    %v1669 = vsub.s32 0, %v1668
    %v1670 = vrot.slane %v1664, %v1669
    %v1671 = vmul.f32 %v1619, %v1670
    %v1672 = vmul.f32 %v1622, %v1670
    %v1673 = vmul.f32 %v1627, %v1670
    %v1674 = vmul.f32 %v1630, %v1670
    %v1675 = vlaneseq
    %v1676 = vshrl.u32 %v1675, 7
    %v1677 = vsub.s32 0, %v1676
    %v1678 = vrot.slane %v1666, %v1677
    %v1679 = vadd.f32 %v1671, %v1678
    %v1680 = vadd.f32 %v1672, %v1678
    %v1681 = vadd.f32 %v1673, %v1678
    %v1682 = vadd.f32 %v1674, %v1678
    %v1683 = vmax.f32 %v1679, 0.0
    %v1684 = vmax.f32 %v1680, 0.0
    %v1685 = vmax.f32 %v1681, 0.0
    %v1686 = vmax.f32 %v1682, 0.0
    %s1687 = scalar_lea.vmem [#allocation3], 128
    %v1688 = vld [vmem:[%s1687] sm:$0xff]
    %v1689 = vld [vmem:[%s1687 + $0x8] sm:$0xff]
    %v1690 = vld [vmem:[%s1687 + $0x10] sm:$0xff]
    %v1691 = vld [vmem:[%s1687 + $0x18] sm:$0xff]
    %v1692 = vld [vmem:[%s1687 + $0x20] sm:$0xff]
    %v1693 = vld [vmem:[%s1687 + $0x28] sm:$0xff]
    %v1694 = vld [vmem:[%s1687 + $0x30] sm:$0xff]
    %v1695 = vld [vmem:[%s1687 + $0x38] sm:$0xff]
    %v1696 = vpack.c.bf16 %v1684, %v1683
    %v1697 = vpack.c.bf16 %v1686, %v1685
    %1698 = vmatprep.subr.bf16.mxu0 0
    %1699 = vmatpush1.bf16.msra.mxu0 %v1688
    %1700 = vmatprep.subr.bf16.mxu0 0
    %1701 = vmatpush1.bf16.msra.mxu0 %v1689
    %1702 = vmatprep.subr.bf16.mxu0 0
    %1703 = vmatpush1.bf16.msra.mxu0 %v1690
    %1704 = vmatprep.subr.bf16.mxu0 0
    %1705 = vmatpush1.bf16.msra.mxu0 %v1691
    %1706 = vmatprep.subr.bf16.mxu0 0
    %1707 = vmatpush1.bf16.msra.mxu0 %v1692
    %1708 = vmatprep.subr.bf16.mxu0 0
    %1709 = vmatpush1.bf16.msra.mxu0 %v1693
    %1710 = vmatprep.subr.bf16.mxu0 0
    %1711 = vmatpush1.bf16.msra.mxu0 %v1694
    %1712 = vmatprep.subr.bf16.mxu0 0
    %1713 = vmatpush1.bf16.msra.mxu0 %v1695
    %1714 = vmatprep.subr.bf16.mxu0 0
    %1715 = vmatpush1.bf16.msra.mxu0 0
    %1716 = vmatprep.subr.bf16.mxu0 0
    %1717 = vmatpush1.bf16.msra.mxu0 0
    %1718 = vmatprep.subr.bf16.mxu0 0
    %1719 = vmatpush1.bf16.msra.mxu0 0
    %1720 = vmatprep.subr.bf16.mxu0 0
    %1721 = vmatpush1.bf16.msra.mxu0 0
    %1722 = vmatprep.subr.bf16.mxu0 0
    %1723 = vmatpush1.bf16.msra.mxu0 0
    %1724 = vmatprep.subr.bf16.mxu0 0
    %1725 = vmatpush1.bf16.msra.mxu0 0
    %1726 = vmatprep.subr.bf16.mxu0 0
    %1727 = vmatpush1.bf16.msra.mxu0 0
    %1728 = vmatprep.subr.bf16.mxu0 0
    %1729 = vmatpush1.bf16.msra.mxu0 0
    %1730 = vmatprep.mubr.bf16.mxu0 0
    %1731 = vmatmul.mubr.bf16.gmra.mrb[0].mxu0 %v1696
    %v1732 = vpop.f32.mrb[0].mxu0
    %v1733 = vadd.f32 0.0, %v1732
    %v1734 = vpop.f32.mrb[0].mxu0
    %v1735 = vpop.f32.mrb[0].mxu0
    %v1736 = vadd.f32 0.0, %v1735
    %v1737 = vpop.f32.mrb[0].mxu0
    %1738 = vmatprep.mubr.bf16.mxu0 0
    %1739 = vmatmul.mubr.bf16.gmra.mrb[0].mxu0 %v1697
    %v1740 = vpop.f32.mrb[0].mxu0
    %v1741 = vadd.f32 0.0, %v1740
    %v1742 = vpop.f32.mrb[0].mxu0
    %v1743 = vpop.f32.mrb[0].mxu0
    %v1744 = vadd.f32 0.0, %v1743
    %v1745 = vpop.f32.mrb[0].mxu0
    %1746 = vdwg.mxu0
    %v1747 = vld [vmem:[#allocation18 + $0x6] sm:$0x1]
    %v1748 = vld [vmem:[#allocation18 + $0x7] sm:$0x1]
    %v1749 = vadd.f32 %v1733, %v1736
    %v1750 = vadd.f32 %v1749, %v1741
    %v1751 = vadd.f32 %v1750, %v1744
    %v1752 = vrot.slane %v1751, 4
    %v1753 = vadd.f32 %v1751, %v1752
    %v1754 = vrot.slane %v1753, 2
    %v1755 = vadd.f32 %v1753, %v1754
    %v1756 = vrot.slane %v1755, 1
    %v1757 = vadd.f32 %v1755, %v1756
    %v1758 = vmul.f32 %v1757, %v394
    %v1759 = vmul.f32 %v1733, %v1733
    %v1760 = vmul.f32 %v1736, %v1736
    %v1761 = vmul.f32 %v1741, %v1741
    %v1762 = vmul.f32 %v1744, %v1744
    %v1763 = vadd.f32 %v1759, %v1760
    %v1764 = vadd.f32 %v1763, %v1761
    %v1765 = vadd.f32 %v1764, %v1762
    %v1766 = vrot.slane %v1765, 4
    %v1767 = vadd.f32 %v1765, %v1766
    %v1768 = vrot.slane %v1767, 2
    %v1769 = vadd.f32 %v1767, %v1768
    %v1770 = vrot.slane %v1769, 1
    %v1771 = vadd.f32 %v1769, %v1770
    %v1772 = vmul.f32 %v1771, %v394
    %v1773 = vmul.f32 %v1758, %v1758
    %v1774 = vsub.f32 %v1772, %v1773
    %v1775 = vmax.f32 %v1774, 0.0
    %v1776 = vadd.f32 %v1775, 1e-05
    %v1777 = vrsqrt.pop %v1776
    %v1778 = vmul.f32 %v1747, %v1777
    %v1779 = vmul.f32 %v1758, %v1778
    %v1780 = vsub.f32 %v1748, %v1779
    %v1781 = vlaneseq
    %v1782 = vshrl.u32 %v1781, 7
    %v1783 = vsub.s32 0, %v1782
    %v1784 = vrot.slane %v1778, %v1783
    %v1785 = vmul.f32 %v1733, %v1784
    %v1786 = vmul.f32 %v1736, %v1784
    %v1787 = vmul.f32 %v1741, %v1784
    %v1788 = vmul.f32 %v1744, %v1784
    %v1789 = vlaneseq
    %v1790 = vshrl.u32 %v1789, 7
    %v1791 = vsub.s32 0, %v1790
    %v1792 = vrot.slane %v1780, %v1791
    %v1793 = vadd.f32 %v1785, %v1792
    %v1794 = vadd.f32 %v1786, %v1792
    %v1795 = vadd.f32 %v1787, %v1792
    %v1796 = vadd.f32 %v1788, %v1792
    %s1797 = scalar_lea.vmem [#allocation3], 192
    %v1798 = vld [vmem:[%s1797] sm:$0xff]
    %v1799 = vld [vmem:[%s1797 + $0x8] sm:$0xff]
    %v1800 = vld [vmem:[%s1797 + $0x10] sm:$0xff]
    %v1801 = vld [vmem:[%s1797 + $0x18] sm:$0xff]
    %v1802 = vld [vmem:[%s1797 + $0x20] sm:$0xff]
    %v1803 = vld [vmem:[%s1797 + $0x28] sm:$0xff]
    %v1804 = vld [vmem:[%s1797 + $0x30] sm:$0xff]
    %v1805 = vld [vmem:[%s1797 + $0x38] sm:$0xff]
    %v1806 = vpack.c.bf16 %v1794, %v1793
    %v1807 = vpack.c.bf16 %v1796, %v1795
    %1808 = vmatprep.subr.bf16.mxu0 0
    %1809 = vmatpush1.bf16.msra.mxu0 %v1798
    %1810 = vmatprep.subr.bf16.mxu0 0
    %1811 = vmatpush1.bf16.msra.mxu0 %v1799
    %1812 = vmatprep.subr.bf16.mxu0 0
    %1813 = vmatpush1.bf16.msra.mxu0 %v1800
    %1814 = vmatprep.subr.bf16.mxu0 0
    %1815 = vmatpush1.bf16.msra.mxu0 %v1801
    %1816 = vmatprep.subr.bf16.mxu0 0
    %1817 = vmatpush1.bf16.msra.mxu0 %v1802
    %1818 = vmatprep.subr.bf16.mxu0 0
    %1819 = vmatpush1.bf16.msra.mxu0 %v1803
    %1820 = vmatprep.subr.bf16.mxu0 0
    %1821 = vmatpush1.bf16.msra.mxu0 %v1804
    %1822 = vmatprep.subr.bf16.mxu0 0
    %1823 = vmatpush1.bf16.msra.mxu0 %v1805
    %1824 = vmatprep.subr.bf16.mxu0 0
    %1825 = vmatpush1.bf16.msra.mxu0 0
    %1826 = vmatprep.subr.bf16.mxu0 0
    %1827 = vmatpush1.bf16.msra.mxu0 0
    %1828 = vmatprep.subr.bf16.mxu0 0
    %1829 = vmatpush1.bf16.msra.mxu0 0
    %1830 = vmatprep.subr.bf16.mxu0 0
    %1831 = vmatpush1.bf16.msra.mxu0 0
    %1832 = vmatprep.subr.bf16.mxu0 0
    %1833 = vmatpush1.bf16.msra.mxu0 0
    %1834 = vmatprep.subr.bf16.mxu0 0
    %1835 = vmatpush1.bf16.msra.mxu0 0
    %1836 = vmatprep.subr.bf16.mxu0 0
    %1837 = vmatpush1.bf16.msra.mxu0 0
    %1838 = vmatprep.subr.bf16.mxu0 0
    %1839 = vmatpush1.bf16.msra.mxu0 0
    %1840 = vmatprep.mubr.bf16.mxu0 0
    %1841 = vmatmul.mubr.bf16.gmra.mrb[0].mxu0 %v1806
    %v1842 = vpop.f32.mrb[0].mxu0
    %v1843 = vadd.f32 0.0, %v1842
    %v1844 = vpop.f32.mrb[0].mxu0
    %v1845 = vpop.f32.mrb[0].mxu0
    %v1846 = vadd.f32 0.0, %v1845
    %v1847 = vpop.f32.mrb[0].mxu0
    %1848 = vmatprep.mubr.bf16.mxu0 0
    %1849 = vmatmul.mubr.bf16.gmra.mrb[0].mxu0 %v1807
    %v1850 = vpop.f32.mrb[0].mxu0
    %v1851 = vadd.f32 0.0, %v1850
    %v1852 = vpop.f32.mrb[0].mxu0
    %v1853 = vpop.f32.mrb[0].mxu0
    %v1854 = vadd.f32 0.0, %v1853
    %v1855 = vpop.f32.mrb[0].mxu0
    %1856 = vdwg.mxu0
    %v1857 = vld [vmem:[#allocation18 + $0x8] sm:$0x1]
    %v1858 = vld [vmem:[#allocation18 + $0x9] sm:$0x1]
    %v1859 = vadd.f32 %v1843, %v1846
    %v1860 = vadd.f32 %v1859, %v1851
    %v1861 = vadd.f32 %v1860, %v1854
    %v1862 = vrot.slane %v1861, 4
    %v1863 = vadd.f32 %v1861, %v1862
    %v1864 = vrot.slane %v1863, 2
    %v1865 = vadd.f32 %v1863, %v1864
    %v1866 = vrot.slane %v1865, 1
    %v1867 = vadd.f32 %v1865, %v1866
    %v1868 = vmul.f32 %v1867, %v394
    %v1869 = vmul.f32 %v1843, %v1843
    %v1870 = vmul.f32 %v1846, %v1846
    %v1871 = vmul.f32 %v1851, %v1851
    %v1872 = vmul.f32 %v1854, %v1854
    %v1873 = vadd.f32 %v1869, %v1870
    %v1874 = vadd.f32 %v1873, %v1871
    %v1875 = vadd.f32 %v1874, %v1872
    %v1876 = vrot.slane %v1875, 4
    %v1877 = vadd.f32 %v1875, %v1876
    %v1878 = vrot.slane %v1877, 2
    %v1879 = vadd.f32 %v1877, %v1878
    %v1880 = vrot.slane %v1879, 1
    %v1881 = vadd.f32 %v1879, %v1880
    %v1882 = vmul.f32 %v1881, %v394
    %v1883 = vmul.f32 %v1868, %v1868
    %v1884 = vsub.f32 %v1882, %v1883
    %v1885 = vmax.f32 %v1884, 0.0
    %v1886 = vadd.f32 %v1885, 1e-05
    %v1887 = vrsqrt.pop %v1886
    %v1888 = vmul.f32 %v1857, %v1887
    %v1889 = vmul.f32 %v1868, %v1888
    %v1890 = vsub.f32 %v1858, %v1889
    %v1891 = vlaneseq
    %v1892 = vshrl.u32 %v1891, 7
    %v1893 = vsub.s32 0, %v1892
    %v1894 = vrot.slane %v1888, %v1893
    %v1895 = vmul.f32 %v1843, %v1894
    %v1896 = vmul.f32 %v1846, %v1894
    %v1897 = vmul.f32 %v1851, %v1894
    %v1898 = vmul.f32 %v1854, %v1894
    %v1899 = vlaneseq
    %v1900 = vshrl.u32 %v1899, 7
    %v1901 = vsub.s32 0, %v1900
    %v1902 = vrot.slane %v1890, %v1901
    %v1903 = vadd.f32 %v1895, %v1902
    %v1904 = vadd.f32 %v1896, %v1902
    %v1905 = vadd.f32 %v1897, %v1902
    %v1906 = vadd.f32 %v1898, %v1902
    %v1907 = vmax.f32 %v1903, 0.0
    %v1908 = vmax.f32 %v1904, 0.0
    %v1909 = vmax.f32 %v1905, 0.0
    %v1910 = vmax.f32 %v1906, 0.0
    %s1911 = scalar_lea.vmem [#allocation3], 256
    %v1912 = vld [vmem:[%s1911] sm:$0xff]
    %v1913 = vld [vmem:[%s1911 + $0x8] sm:$0xff]
    %v1914 = vld [vmem:[%s1911 + $0x10] sm:$0xff]
    %v1915 = vld [vmem:[%s1911 + $0x18] sm:$0xff]
    %v1916 = vld [vmem:[%s1911 + $0x20] sm:$0xff]
    %v1917 = vld [vmem:[%s1911 + $0x28] sm:$0xff]
    %v1918 = vld [vmem:[%s1911 + $0x30] sm:$0xff]
    %v1919 = vld [vmem:[%s1911 + $0x38] sm:$0xff]
    %v1920 = vpack.c.bf16 %v1908, %v1907
    %v1921 = vpack.c.bf16 %v1910, %v1909
    %1922 = vmatprep.subr.bf16.mxu0 0
    %1923 = vmatpush1.bf16.msra.mxu0 %v1912
    %1924 = vmatprep.subr.bf16.mxu0 0
    %1925 = vmatpush1.bf16.msra.mxu0 %v1913
    %1926 = vmatprep.subr.bf16.mxu0 0
    %1927 = vmatpush1.bf16.msra.mxu0 %v1914
    %1928 = vmatprep.subr.bf16.mxu0 0
    %1929 = vmatpush1.bf16.msra.mxu0 %v1915
    %1930 = vmatprep.subr.bf16.mxu0 0
    %1931 = vmatpush1.bf16.msra.mxu0 %v1916
    %1932 = vmatprep.subr.bf16.mxu0 0
    %1933 = vmatpush1.bf16.msra.mxu0 %v1917
    %1934 = vmatprep.subr.bf16.mxu0 0
    %1935 = vmatpush1.bf16.msra.mxu0 %v1918
    %1936 = vmatprep.subr.bf16.mxu0 0
    %1937 = vmatpush1.bf16.msra.mxu0 %v1919
    %1938 = vmatprep.subr.bf16.mxu0 0
    %1939 = vmatpush1.bf16.msra.mxu0 0
    %1940 = vmatprep.subr.bf16.mxu0 0
    %1941 = vmatpush1.bf16.msra.mxu0 0
    %1942 = vmatprep.subr.bf16.mxu0 0
    %1943 = vmatpush1.bf16.msra.mxu0 0
    %1944 = vmatprep.subr.bf16.mxu0 0
    %1945 = vmatpush1.bf16.msra.mxu0 0
    %1946 = vmatprep.subr.bf16.mxu0 0
    %1947 = vmatpush1.bf16.msra.mxu0 0
    %1948 = vmatprep.subr.bf16.mxu0 0
    %1949 = vmatpush1.bf16.msra.mxu0 0
    %1950 = vmatprep.subr.bf16.mxu0 0
    %1951 = vmatpush1.bf16.msra.mxu0 0
    %1952 = vmatprep.subr.bf16.mxu0 0
    %1953 = vmatpush1.bf16.msra.mxu0 0
    %1954 = vmatprep.mubr.bf16.mxu0 0
    %1955 = vmatmul.mubr.bf16.gmra.mrb[0].mxu0 %v1920
    %v1956 = vpop.f32.mrb[0].mxu0
    %v1957 = vadd.f32 0.0, %v1956
    %v1958 = vpop.f32.mrb[0].mxu0
    %v1959 = vpop.f32.mrb[0].mxu0
    %v1960 = vadd.f32 0.0, %v1959
    %v1961 = vpop.f32.mrb[0].mxu0
    %1962 = vmatprep.mubr.bf16.mxu0 0
    %1963 = vmatmul.mubr.bf16.gmra.mrb[0].mxu0 %v1921
    %v1964 = vpop.f32.mrb[0].mxu0
    %v1965 = vadd.f32 0.0, %v1964
    %v1966 = vpop.f32.mrb[0].mxu0
    %v1967 = vpop.f32.mrb[0].mxu0
    %v1968 = vadd.f32 0.0, %v1967
    %v1969 = vpop.f32.mrb[0].mxu0
    %1970 = vdwg.mxu0
    %v1971 = vld [vmem:[#allocation18 + $0xa] sm:$0x1]
    %v1972 = vld [vmem:[#allocation18 + $0xb] sm:$0x1]
    %v1973 = vadd.f32 %v1957, %v1960
    %v1974 = vadd.f32 %v1973, %v1965
    %v1975 = vadd.f32 %v1974, %v1968
    %v1976 = vrot.slane %v1975, 4
    %v1977 = vadd.f32 %v1975, %v1976
    %v1978 = vrot.slane %v1977, 2
    %v1979 = vadd.f32 %v1977, %v1978
    %v1980 = vrot.slane %v1979, 1
    %v1981 = vadd.f32 %v1979, %v1980
    %v1982 = vmul.f32 %v1981, %v394
    %v1983 = vmul.f32 %v1957, %v1957
    %v1984 = vmul.f32 %v1960, %v1960
    %v1985 = vmul.f32 %v1965, %v1965
    %v1986 = vmul.f32 %v1968, %v1968
    %v1987 = vadd.f32 %v1983, %v1984
    %v1988 = vadd.f32 %v1987, %v1985
    %v1989 = vadd.f32 %v1988, %v1986
    %v1990 = vrot.slane %v1989, 4
    %v1991 = vadd.f32 %v1989, %v1990
    %v1992 = vrot.slane %v1991, 2
    %v1993 = vadd.f32 %v1991, %v1992
    %v1994 = vrot.slane %v1993, 1
    %v1995 = vadd.f32 %v1993, %v1994
    %v1996 = vmul.f32 %v1995, %v394
    %v1997 = vmul.f32 %v1982, %v1982
    %v1998 = vsub.f32 %v1996, %v1997
    %v1999 = vmax.f32 %v1998, 0.0
    %v2000 = vadd.f32 %v1999, 1e-05
    %v2001 = vrsqrt.pop %v2000
    %v2002 = vmul.f32 %v1971, %v2001
    %v2003 = vmul.f32 %v1982, %v2002
    %v2004 = vsub.f32 %v1972, %v2003
    %v2005 = vlaneseq
    %v2006 = vshrl.u32 %v2005, 7
    %v2007 = vsub.s32 0, %v2006
    %v2008 = vrot.slane %v2002, %v2007
    %v2009 = vmul.f32 %v1957, %v2008
    %v2010 = vmul.f32 %v1960, %v2008
    %v2011 = vmul.f32 %v1965, %v2008
    %v2012 = vmul.f32 %v1968, %v2008
    %v2013 = vlaneseq
    %v2014 = vshrl.u32 %v2013, 7
    %v2015 = vsub.s32 0, %v2014
    %v2016 = vrot.slane %v2004, %v2015
    %v2017 = vadd.f32 %v2009, %v2016
    %v2018 = vadd.f32 %v2010, %v2016
    %v2019 = vadd.f32 %v2011, %v2016
    %v2020 = vadd.f32 %v2012, %v2016
    %s2021 = scalar_lea.vmem [#allocation3], 320
    %v2022 = vld [vmem:[%s2021] sm:$0xff]
    %v2023 = vld [vmem:[%s2021 + $0x8] sm:$0xff]
    %v2024 = vld [vmem:[%s2021 + $0x10] sm:$0xff]
    %v2025 = vld [vmem:[%s2021 + $0x18] sm:$0xff]
    %v2026 = vld [vmem:[%s2021 + $0x20] sm:$0xff]
    %v2027 = vld [vmem:[%s2021 + $0x28] sm:$0xff]
    %v2028 = vld [vmem:[%s2021 + $0x30] sm:$0xff]
    %v2029 = vld [vmem:[%s2021 + $0x38] sm:$0xff]
    %v2030 = vpack.c.bf16 %v2018, %v2017
    %v2031 = vpack.c.bf16 %v2020, %v2019
    %2032 = vmatprep.subr.bf16.mxu0 0
    %2033 = vmatpush1.bf16.msra.mxu0 %v2022
    %2034 = vmatprep.subr.bf16.mxu0 0
    %2035 = vmatpush1.bf16.msra.mxu0 %v2023
    %2036 = vmatprep.subr.bf16.mxu0 0
    %2037 = vmatpush1.bf16.msra.mxu0 %v2024
    %2038 = vmatprep.subr.bf16.mxu0 0
    %2039 = vmatpush1.bf16.msra.mxu0 %v2025
    %2040 = vmatprep.subr.bf16.mxu0 0
    %2041 = vmatpush1.bf16.msra.mxu0 %v2026
    %2042 = vmatprep.subr.bf16.mxu0 0
    %2043 = vmatpush1.bf16.msra.mxu0 %v2027
    %2044 = vmatprep.subr.bf16.mxu0 0
    %2045 = vmatpush1.bf16.msra.mxu0 %v2028
    %2046 = vmatprep.subr.bf16.mxu0 0
    %2047 = vmatpush1.bf16.msra.mxu0 %v2029
    %2048 = vmatprep.subr.bf16.mxu0 0
    %2049 = vmatpush1.bf16.msra.mxu0 0
    %2050 = vmatprep.subr.bf16.mxu0 0
    %2051 = vmatpush1.bf16.msra.mxu0 0
    %2052 = vmatprep.subr.bf16.mxu0 0
    %2053 = vmatpush1.bf16.msra.mxu0 0
    %2054 = vmatprep.subr.bf16.mxu0 0
    %2055 = vmatpush1.bf16.msra.mxu0 0
    %2056 = vmatprep.subr.bf16.mxu0 0
    %2057 = vmatpush1.bf16.msra.mxu0 0
    %2058 = vmatprep.subr.bf16.mxu0 0
    %2059 = vmatpush1.bf16.msra.mxu0 0
    %2060 = vmatprep.subr.bf16.mxu0 0
    %2061 = vmatpush1.bf16.msra.mxu0 0
    %2062 = vmatprep.subr.bf16.mxu0 0
    %2063 = vmatpush1.bf16.msra.mxu0 0
    %2064 = vmatprep.mubr.bf16.mxu0 0
    %2065 = vmatmul.mubr.bf16.gmra.mrb[0].mxu0 %v2030
    %v2066 = vpop.f32.mrb[0].mxu0
    %v2067 = vadd.f32 0.0, %v2066
    %v2068 = vpop.f32.mrb[0].mxu0
    %v2069 = vpop.f32.mrb[0].mxu0
    %v2070 = vadd.f32 0.0, %v2069
    %v2071 = vpop.f32.mrb[0].mxu0
    %2072 = vmatprep.mubr.bf16.mxu0 0
    %2073 = vmatmul.mubr.bf16.gmra.mrb[0].mxu0 %v2031
    %v2074 = vpop.f32.mrb[0].mxu0
    %v2075 = vadd.f32 0.0, %v2074
    %v2076 = vpop.f32.mrb[0].mxu0
    %v2077 = vpop.f32.mrb[0].mxu0
    %v2078 = vadd.f32 0.0, %v2077
    %v2079 = vpop.f32.mrb[0].mxu0
    %2080 = vdwg.mxu0
    %v2081 = vld [vmem:[#allocation18 + $0xc] sm:$0x1]
    %v2082 = vld [vmem:[#allocation18 + $0xd] sm:$0x1]
    %v2083 = vadd.f32 %v2067, %v2070
    %v2084 = vadd.f32 %v2083, %v2075
    %v2085 = vadd.f32 %v2084, %v2078
    %v2086 = vrot.slane %v2085, 4
    %v2087 = vadd.f32 %v2085, %v2086
    %v2088 = vrot.slane %v2087, 2
    %v2089 = vadd.f32 %v2087, %v2088
    %v2090 = vrot.slane %v2089, 1
    %v2091 = vadd.f32 %v2089, %v2090
    %v2092 = vmul.f32 %v2091, %v394
    %v2093 = vmul.f32 %v2067, %v2067
    %v2094 = vmul.f32 %v2070, %v2070
    %v2095 = vmul.f32 %v2075, %v2075
    %v2096 = vmul.f32 %v2078, %v2078
    %v2097 = vadd.f32 %v2093, %v2094
    %v2098 = vadd.f32 %v2097, %v2095
    %v2099 = vadd.f32 %v2098, %v2096
    %v2100 = vrot.slane %v2099, 4
    %v2101 = vadd.f32 %v2099, %v2100
    %v2102 = vrot.slane %v2101, 2
    %v2103 = vadd.f32 %v2101, %v2102
    %v2104 = vrot.slane %v2103, 1
    %v2105 = vadd.f32 %v2103, %v2104
    %v2106 = vmul.f32 %v2105, %v394
    %v2107 = vmul.f32 %v2092, %v2092
    %v2108 = vsub.f32 %v2106, %v2107
    %v2109 = vmax.f32 %v2108, 0.0
    %v2110 = vadd.f32 %v2109, 1e-05
    %v2111 = vrsqrt.pop %v2110
    %v2112 = vmul.f32 %v2081, %v2111
    %v2113 = vmul.f32 %v2092, %v2112
    %v2114 = vsub.f32 %v2082, %v2113
    %v2115 = vlaneseq
    %v2116 = vshrl.u32 %v2115, 7
    %v2117 = vsub.s32 0, %v2116
    %v2118 = vrot.slane %v2112, %v2117
    %v2119 = vmul.f32 %v2067, %v2118
    %v2120 = vmul.f32 %v2070, %v2118
    %v2121 = vmul.f32 %v2075, %v2118
    %v2122 = vmul.f32 %v2078, %v2118
    %v2123 = vlaneseq
    %v2124 = vshrl.u32 %v2123, 7
    %v2125 = vsub.s32 0, %v2124
    %v2126 = vrot.slane %v2114, %v2125
    %v2127 = vadd.f32 %v2119, %v2126
    %v2128 = vadd.f32 %v2120, %v2126
    %v2129 = vadd.f32 %v2121, %v2126
    %v2130 = vadd.f32 %v2122, %v2126
    %v2131 = vmax.f32 %v2127, 0.0
    %v2132 = vmax.f32 %v2128, 0.0
    %v2133 = vmax.f32 %v2129, 0.0
    %v2134 = vmax.f32 %v2130, 0.0
    %s2135 = scalar_lea.vmem [#allocation3], 384
    %v2136 = vld [vmem:[%s2135] sm:$0xff]
    %v2137 = vld [vmem:[%s2135 + $0x8] sm:$0xff]
    %v2138 = vld [vmem:[%s2135 + $0x10] sm:$0xff]
    %v2139 = vld [vmem:[%s2135 + $0x18] sm:$0xff]
    %v2140 = vld [vmem:[%s2135 + $0x20] sm:$0xff]
    %v2141 = vld [vmem:[%s2135 + $0x28] sm:$0xff]
    %v2142 = vld [vmem:[%s2135 + $0x30] sm:$0xff]
    %v2143 = vld [vmem:[%s2135 + $0x38] sm:$0xff]
    %v2144 = vpack.c.bf16 %v2132, %v2131
    %v2145 = vpack.c.bf16 %v2134, %v2133
    %2146 = vmatprep.subr.bf16.mxu0 0
    %2147 = vmatpush1.bf16.msra.mxu0 %v2136
    %2148 = vmatprep.subr.bf16.mxu0 0
    %2149 = vmatpush1.bf16.msra.mxu0 %v2137
    %2150 = vmatprep.subr.bf16.mxu0 0
    %2151 = vmatpush1.bf16.msra.mxu0 %v2138
    %2152 = vmatprep.subr.bf16.mxu0 0
    %2153 = vmatpush1.bf16.msra.mxu0 %v2139
    %2154 = vmatprep.subr.bf16.mxu0 0
    %2155 = vmatpush1.bf16.msra.mxu0 %v2140
    %2156 = vmatprep.subr.bf16.mxu0 0
    %2157 = vmatpush1.bf16.msra.mxu0 %v2141
    %2158 = vmatprep.subr.bf16.mxu0 0
    %2159 = vmatpush1.bf16.msra.mxu0 %v2142
    %2160 = vmatprep.subr.bf16.mxu0 0
    %2161 = vmatpush1.bf16.msra.mxu0 %v2143
    %2162 = vmatprep.subr.bf16.mxu0 0
    %2163 = vmatpush1.bf16.msra.mxu0 0
    %2164 = vmatprep.subr.bf16.mxu0 0
    %2165 = vmatpush1.bf16.msra.mxu0 0
    %2166 = vmatprep.subr.bf16.mxu0 0
    %2167 = vmatpush1.bf16.msra.mxu0 0
    %2168 = vmatprep.subr.bf16.mxu0 0
    %2169 = vmatpush1.bf16.msra.mxu0 0
    %2170 = vmatprep.subr.bf16.mxu0 0
    %2171 = vmatpush1.bf16.msra.mxu0 0
    %2172 = vmatprep.subr.bf16.mxu0 0
    %2173 = vmatpush1.bf16.msra.mxu0 0
    %2174 = vmatprep.subr.bf16.mxu0 0
    %2175 = vmatpush1.bf16.msra.mxu0 0
    %2176 = vmatprep.subr.bf16.mxu0 0
    %2177 = vmatpush1.bf16.msra.mxu0 0
    %2178 = vmatprep.mubr.bf16.mxu0 0
    %2179 = vmatmul.mubr.bf16.gmra.mrb[0].mxu0 %v2144
    %v2180 = vpop.f32.mrb[0].mxu0
    %v2181 = vadd.f32 0.0, %v2180
    %v2182 = vpop.f32.mrb[0].mxu0
    %v2183 = vpop.f32.mrb[0].mxu0
    %v2184 = vadd.f32 0.0, %v2183
    %v2185 = vpop.f32.mrb[0].mxu0
    %2186 = vmatprep.mubr.bf16.mxu0 0
    %2187 = vmatmul.mubr.bf16.gmra.mrb[0].mxu0 %v2145
    %v2188 = vpop.f32.mrb[0].mxu0
    %v2189 = vadd.f32 0.0, %v2188
    %v2190 = vpop.f32.mrb[0].mxu0
    %v2191 = vpop.f32.mrb[0].mxu0
    %v2192 = vadd.f32 0.0, %v2191
    %v2193 = vpop.f32.mrb[0].mxu0
    %2194 = vdwg.mxu0
    %v2195 = vld [vmem:[#allocation18 + $0xe] sm:$0x1]
    %v2196 = vld [vmem:[#allocation18 + $0xf] sm:$0x1]
    %v2197 = vadd.f32 %v2181, %v2184
    %v2198 = vadd.f32 %v2197, %v2189
    %v2199 = vadd.f32 %v2198, %v2192
    %v2200 = vrot.slane %v2199, 4
    %v2201 = vadd.f32 %v2199, %v2200
    %v2202 = vrot.slane %v2201, 2
    %v2203 = vadd.f32 %v2201, %v2202
    %v2204 = vrot.slane %v2203, 1
    %v2205 = vadd.f32 %v2203, %v2204
    %v2206 = vmul.f32 %v2205, %v394
    %v2207 = vmul.f32 %v2181, %v2181
    %v2208 = vmul.f32 %v2184, %v2184
    %v2209 = vmul.f32 %v2189, %v2189
    %v2210 = vmul.f32 %v2192, %v2192
    %v2211 = vadd.f32 %v2207, %v2208
    %v2212 = vadd.f32 %v2211, %v2209
    %v2213 = vadd.f32 %v2212, %v2210
    %v2214 = vrot.slane %v2213, 4
    %v2215 = vadd.f32 %v2213, %v2214
    %v2216 = vrot.slane %v2215, 2
    %v2217 = vadd.f32 %v2215, %v2216
    %v2218 = vrot.slane %v2217, 1
    %v2219 = vadd.f32 %v2217, %v2218
    %v2220 = vmul.f32 %v2219, %v394
    %v2221 = vmul.f32 %v2206, %v2206
    %v2222 = vsub.f32 %v2220, %v2221
    %v2223 = vmax.f32 %v2222, 0.0
    %v2224 = vadd.f32 %v2223, 1e-05
    %v2225 = vrsqrt.pop %v2224
    %v2226 = vmul.f32 %v2195, %v2225
    %v2227 = vmul.f32 %v2206, %v2226
    %v2228 = vsub.f32 %v2196, %v2227
    %v2229 = vlaneseq
    %v2230 = vshrl.u32 %v2229, 7
    %v2231 = vsub.s32 0, %v2230
    %v2232 = vrot.slane %v2226, %v2231
    %v2233 = vmul.f32 %v2181, %v2232
    %v2234 = vmul.f32 %v2184, %v2232
    %v2235 = vmul.f32 %v2189, %v2232
    %v2236 = vmul.f32 %v2192, %v2232
    %v2237 = vlaneseq
    %v2238 = vshrl.u32 %v2237, 7
    %v2239 = vsub.s32 0, %v2238
    %v2240 = vrot.slane %v2228, %v2239
    %v2241 = vadd.f32 %v2233, %v2240
    %v2242 = vadd.f32 %v2234, %v2240
    %v2243 = vadd.f32 %v2235, %v2240
    %v2244 = vadd.f32 %v2236, %v2240
    %s2245 = smul.u32 4, 16
    %s2246 = smul.u32 %s2245, 2
    %s2247 = sshll.u32 %s2246, 4
    %2248 = dma.done %s202, %s2247
    %s2249 = smul.u32 4, 11
    %s2250 = smul.u32 %s2249, 32
    %s2251 = smul.u32 %s2250, 2
    %s2252 = sshll.u32 %s2251, 4
    %2253 = dma.done %s238, %s2252
    %v2254 = vld [vmem:[#allocation4] sm:$0xff]
    %v2255 = vld [vmem:[#allocation4 + $0x8] sm:$0xff]
    %v2256 = vld [vmem:[#allocation4 + $0x10] sm:$0xff]
    %v2257 = vld [vmem:[#allocation4 + $0x18] sm:$0xff]
    %v2258 = vld [vmem:[#allocation4 + $0x20] sm:$0xff]
    %v2259 = vld [vmem:[#allocation4 + $0x28] sm:$0xff]
    %v2260 = vld [vmem:[#allocation4 + $0x30] sm:$0xff]
    %v2261 = vld [vmem:[#allocation4 + $0x38] sm:$0xff]
    %v2262 = vld [vmem:[#allocation4 + $0x40] sm:$0xff]
    %v2263 = vld [vmem:[#allocation4 + $0x48] sm:$0xff]
    %v2264 = vld [vmem:[#allocation4 + $0x50] sm:$0xff]
    %v2265 = vld [vmem:[#allocation4 + $0x58] sm:$0xff]
    %v2266 = vld [vmem:[#allocation4 + $0x60] sm:$0xff]
    %v2267 = vld [vmem:[#allocation4 + $0x68] sm:$0xff]
    %v2268 = vld [vmem:[#allocation4 + $0x70] sm:$0xff]
    %v2269 = vld [vmem:[#allocation4 + $0x78] sm:$0xff]
    %v2270 = vpack.c.bf16 %v2242, %v2241
    %v2271 = vpack.c.bf16 %v2244, %v2243
    %2272 = vmatprep.subr.bf16.mxu0 %v2255
    %2273 = vmatpush1.bf16.msra.mxu0 %v2254
    %2274 = vmatprep.subr.bf16.mxu0 %v2257
    %2275 = vmatpush1.bf16.msra.mxu0 %v2256
    %2276 = vmatprep.subr.bf16.mxu0 %v2259
    %2277 = vmatpush1.bf16.msra.mxu0 %v2258
    %2278 = vmatprep.subr.bf16.mxu0 %v2261
    %2279 = vmatpush1.bf16.msra.mxu0 %v2260
    %2280 = vmatprep.subr.bf16.mxu0 %v2263
    %2281 = vmatpush1.bf16.msra.mxu0 %v2262
    %2282 = vmatprep.subr.bf16.mxu0 %v2265
    %2283 = vmatpush1.bf16.msra.mxu0 %v2264
    %2284 = vmatprep.subr.bf16.mxu0 %v2267
    %2285 = vmatpush1.bf16.msra.mxu0 %v2266
    %2286 = vmatprep.subr.bf16.mxu0 %v2269
    %2287 = vmatpush1.bf16.msra.mxu0 %v2268
    %2288 = vmatprep.subr.bf16.mxu0 0
    %2289 = vmatpush1.bf16.msra.mxu0 0
    %2290 = vmatprep.subr.bf16.mxu0 0
    %2291 = vmatpush1.bf16.msra.mxu0 0
    %2292 = vmatprep.subr.bf16.mxu0 0
    %2293 = vmatpush1.bf16.msra.mxu0 0
    %2294 = vmatprep.subr.bf16.mxu0 0
    %2295 = vmatpush1.bf16.msra.mxu0 0
    %2296 = vmatprep.subr.bf16.mxu0 0
    %2297 = vmatpush1.bf16.msra.mxu0 0
    %2298 = vmatprep.subr.bf16.mxu0 0
    %2299 = vmatpush1.bf16.msra.mxu0 0
    %2300 = vmatprep.subr.bf16.mxu0 0
    %2301 = vmatpush1.bf16.msra.mxu0 0
    %2302 = vmatprep.subr.bf16.mxu0 0
    %2303 = vmatpush1.bf16.msra.mxu0 0
    %2304 = vmatprep.mubr.bf16.mxu0 0
    %2305 = vmatmul.mubr.bf16.gmra.mrb[0].mxu0 %v2270
    %v2306 = vpop.f32.mrb[0].mxu0
    %v2307 = vadd.f32 0.0, %v2306
    %v2308 = vpop.f32.mrb[0].mxu0
    %v2309 = vadd.f32 0.0, %v2308
    %v2310 = vpop.f32.mrb[0].mxu0
    %v2311 = vadd.f32 0.0, %v2310
    %v2312 = vpop.f32.mrb[0].mxu0
    %v2313 = vadd.f32 0.0, %v2312
    %2314 = vmatprep.mubr.bf16.mxu0 0
    %2315 = vmatmul.mubr.bf16.gmra.mrb[0].mxu0 %v2271
    %v2316 = vpop.f32.mrb[0].mxu0
    %v2317 = vadd.f32 0.0, %v2316
    %v2318 = vpop.f32.mrb[0].mxu0
    %v2319 = vadd.f32 0.0, %v2318
    %v2320 = vpop.f32.mrb[0].mxu0
    %v2321 = vadd.f32 0.0, %v2320
    %v2322 = vpop.f32.mrb[0].mxu0
    %v2323 = vadd.f32 0.0, %v2322
    %2324 = vdwg.mxu0
    %v2325 = vld [vmem:[#allocation20] ss:$8 sm:$0x3]
    %s2326 = scalar_lea.vmem [#allocation20], 1
    %v2327 = vld [vmem:[%s2326] ss:$8 sm:$0x3]
    %v2328 = vadd.f32 %v2307, %v2311
    %v2329 = vadd.f32 %v2328, %v2317
    %v2330 = vadd.f32 %v2329, %v2321
    %v2331 = vrot.slane %v2330, 4
    %v2332 = vadd.f32 %v2330, %v2331
    %v2333 = vrot.slane %v2332, 2
    %v2334 = vadd.f32 %v2332, %v2333
    %v2335 = vrot.slane %v2334, 1
    %v2336 = vadd.f32 %v2334, %v2335
    %v2337 = vadd.f32 %v2309, %v2313
    %v2338 = vadd.f32 %v2337, %v2319
    %v2339 = vadd.f32 %v2338, %v2323
    %v2340 = vrot.slane %v2339, 4
    %v2341 = vadd.f32 %v2339, %v2340
    %v2342 = vrot.slane %v2341, 2
    %v2343 = vadd.f32 %v2341, %v2342
    %v2344 = vrot.slane %v2343, 1
    %v2345 = vadd.f32 %v2343, %v2344
    %v2346 = vmul.f32 %v2336, %v394
    %v2347 = vmul.f32 %v2345, %v394
    %v2348 = vmul.f32 %v2307, %v2307
    %v2349 = vmul.f32 %v2309, %v2309
    %v2350 = vmul.f32 %v2311, %v2311
    %v2351 = vmul.f32 %v2313, %v2313
    %v2352 = vmul.f32 %v2317, %v2317
    %v2353 = vmul.f32 %v2319, %v2319
    %v2354 = vmul.f32 %v2321, %v2321
    %v2355 = vmul.f32 %v2323, %v2323
    %v2356 = vadd.f32 %v2348, %v2350
    %v2357 = vadd.f32 %v2356, %v2352
    %v2358 = vadd.f32 %v2357, %v2354
    %v2359 = vrot.slane %v2358, 4
    %v2360 = vadd.f32 %v2358, %v2359
    %v2361 = vrot.slane %v2360, 2
    %v2362 = vadd.f32 %v2360, %v2361
    %v2363 = vrot.slane %v2362, 1
    %v2364 = vadd.f32 %v2362, %v2363
    %v2365 = vadd.f32 %v2349, %v2351
    %v2366 = vadd.f32 %v2365, %v2353
    %v2367 = vadd.f32 %v2366, %v2355
    %v2368 = vrot.slane %v2367, 4
    %v2369 = vadd.f32 %v2367, %v2368
    %v2370 = vrot.slane %v2369, 2
    %v2371 = vadd.f32 %v2369, %v2370
    %v2372 = vrot.slane %v2371, 1
    %v2373 = vadd.f32 %v2371, %v2372
    %v2374 = vmul.f32 %v2364, %v394
    %v2375 = vmul.f32 %v2373, %v394
    %v2376 = vmul.f32 %v2346, %v2346
    %v2377 = vmul.f32 %v2347, %v2347
    %v2378 = vsub.f32 %v2374, %v2376
    %v2379 = vsub.f32 %v2375, %v2377
    %v2380 = vmax.f32 %v2378, 0.0
    %v2381 = vmax.f32 %v2379, 0.0
    %v2382 = vadd.f32 %v2380, 1e-05
    %v2383 = vadd.f32 %v2381, 1e-05
    %v2384 = vrsqrt.pop %v2382
    %v2385 = vrsqrt.pop %v2383
    %v2388 = vcombine.low %v2384, %v2385
    %v2390 = vunpack.c.l.s4 1966171168
    %v2391 = vunpack.c.0.s8 %v2390
    %v2392 = vlaneseq
    %v2393 = vshrl.u32 %v2392, 7
    %v2394 = vsub.s32 %v2391, %v2393
    %v2395 = vrot.slane %v2388, %v2394
    %v2397 = vunpack.c.l.s4 1966171168
    %v2398 = vunpack.c.0.s8 %v2397
    %v2399 = vlaneseq
    %v2400 = vshrl.u32 %v2399, 7
    %v2401 = vsub.s32 %v2398, %v2400
    %v2402 = vrot.slane %v2395, %v2401
    %v2404 = vmul.f32 %v2325, %v2402
    %v2406 = vlaneseq
    %v2407 = vshrl.u32 %v2406, 7
    %v2408 = vsub.s32 0, %v2407
    %v2409 = vrot.slane %v2404, %v2408
    %v2410 = vlaneseq
    %v2411 = vshrl.u32 %v2410, 7
    %v2412 = vsub.s32 1, %v2411
    %v2413 = vrot.slane %v2404, %v2412
    %v2416 = vmul.f32 %v2346, %v2409
    %v2417 = vmul.f32 %v2347, %v2413
    %v2420 = vcombine.low %v2416, %v2417
    %v2422 = vunpack.c.l.s4 1966171168
    %v2423 = vunpack.c.0.s8 %v2422
    %v2424 = vlaneseq
    %v2425 = vshrl.u32 %v2424, 7
    %v2426 = vsub.s32 %v2423, %v2425
    %v2427 = vrot.slane %v2420, %v2426
    %v2429 = vunpack.c.l.s4 1966171168
    %v2430 = vunpack.c.0.s8 %v2429
    %v2431 = vlaneseq
    %v2432 = vshrl.u32 %v2431, 7
    %v2433 = vsub.s32 %v2430, %v2432
    %v2434 = vrot.slane %v2427, %v2433
    %v2436 = vsub.f32 %v2327, %v2434
    %v2437 = vmul.f32 %v2307, %v2409
    %v2438 = vmul.f32 %v2309, %v2413
    %v2439 = vmul.f32 %v2311, %v2409
    %v2440 = vmul.f32 %v2313, %v2413
    %v2441 = vmul.f32 %v2317, %v2409
    %v2442 = vmul.f32 %v2319, %v2413
    %v2443 = vmul.f32 %v2321, %v2409
    %v2444 = vmul.f32 %v2323, %v2413
    %v2446 = vlaneseq
    %v2447 = vshrl.u32 %v2446, 7
    %v2448 = vsub.s32 0, %v2447
    %v2449 = vrot.slane %v2436, %v2448
    %v2450 = vlaneseq
    %v2451 = vshrl.u32 %v2450, 7
    %v2452 = vsub.s32 1, %v2451
    %v2453 = vrot.slane %v2436, %v2452
    %v2456 = vadd.f32 %v2437, %v2449
    %v2457 = vadd.f32 %v2438, %v2453
    %v2458 = vadd.f32 %v2439, %v2449
    %v2459 = vadd.f32 %v2440, %v2453
    %v2460 = vadd.f32 %v2441, %v2449
    %v2461 = vadd.f32 %v2442, %v2453
    %v2462 = vadd.f32 %v2443, %v2449
    %v2463 = vadd.f32 %v2444, %v2453
    %v2464 = vmax.f32 %v2456, 0.0
    %v2465 = vmax.f32 %v2457, 0.0
    %v2466 = vmax.f32 %v2458, 0.0
    %v2467 = vmax.f32 %v2459, 0.0
    %v2468 = vmax.f32 %v2460, 0.0
    %v2469 = vmax.f32 %v2461, 0.0
    %v2470 = vmax.f32 %v2462, 0.0
    %v2471 = vmax.f32 %v2463, 0.0
    %v2472 = vld [vmem:[#allocation5] sm:$0xff]
    %v2473 = vld [vmem:[#allocation5 + $0x8] sm:$0xff]
    %v2474 = vld [vmem:[#allocation5 + $0x10] sm:$0xff]
    %v2475 = vld [vmem:[#allocation5 + $0x18] sm:$0xff]
    %v2476 = vld [vmem:[#allocation5 + $0x20] sm:$0xff]
    %v2477 = vld [vmem:[#allocation5 + $0x28] sm:$0xff]
    %v2478 = vld [vmem:[#allocation5 + $0x30] sm:$0xff]
    %v2479 = vld [vmem:[#allocation5 + $0x38] sm:$0xff]
    %v2480 = vld [vmem:[#allocation5 + $0x40] sm:$0xff]
    %v2481 = vld [vmem:[#allocation5 + $0x48] sm:$0xff]
    %v2482 = vld [vmem:[#allocation5 + $0x50] sm:$0xff]
    %v2483 = vld [vmem:[#allocation5 + $0x58] sm:$0xff]
    %v2484 = vld [vmem:[#allocation5 + $0x60] sm:$0xff]
    %v2485 = vld [vmem:[#allocation5 + $0x68] sm:$0xff]
    %v2486 = vld [vmem:[#allocation5 + $0x70] sm:$0xff]
    %v2487 = vld [vmem:[#allocation5 + $0x78] sm:$0xff]
    %v2488 = vld [vmem:[#allocation5 + $0x80] sm:$0xff]
    %v2489 = vld [vmem:[#allocation5 + $0x88] sm:$0xff]
    %v2490 = vld [vmem:[#allocation5 + $0x90] sm:$0xff]
    %v2491 = vld [vmem:[#allocation5 + $0x98] sm:$0xff]
    %v2492 = vld [vmem:[#allocation5 + $0xa0] sm:$0xff]
    %v2493 = vld [vmem:[#allocation5 + $0xa8] sm:$0xff]
    %v2494 = vld [vmem:[#allocation5 + $0xb0] sm:$0xff]
    %v2495 = vld [vmem:[#allocation5 + $0xb8] sm:$0xff]
    %v2496 = vld [vmem:[#allocation5 + $0xc0] sm:$0xff]
    %v2497 = vld [vmem:[#allocation5 + $0xc8] sm:$0xff]
    %v2498 = vld [vmem:[#allocation5 + $0xd0] sm:$0xff]
    %v2499 = vld [vmem:[#allocation5 + $0xd8] sm:$0xff]
    %v2500 = vld [vmem:[#allocation5 + $0xe0] sm:$0xff]
    %v2501 = vld [vmem:[#allocation5 + $0xe8] sm:$0xff]
    %v2502 = vld [vmem:[#allocation5 + $0xf0] sm:$0xff]
    %v2503 = vld [vmem:[#allocation5 + $0xf8] sm:$0xff]
    %v2504 = vpack.c.bf16 %v2466, %v2464
    %v2505 = vpack.c.bf16 %v2467, %v2465
    %v2506 = vpack.c.bf16 %v2470, %v2468
    %v2507 = vpack.c.bf16 %v2471, %v2469
    %2508 = vmatprep.subr.bf16.mxu0 %v2473
    %2509 = vmatpush1.bf16.msra.mxu0 %v2472
    %2510 = vmatprep.subr.bf16.mxu0 %v2475
    %2511 = vmatpush1.bf16.msra.mxu0 %v2474
    %2512 = vmatprep.subr.bf16.mxu0 %v2477
    %2513 = vmatpush1.bf16.msra.mxu0 %v2476
    %2514 = vmatprep.subr.bf16.mxu0 %v2479
    %2515 = vmatpush1.bf16.msra.mxu0 %v2478
    %2516 = vmatprep.subr.bf16.mxu0 %v2481
    %2517 = vmatpush1.bf16.msra.mxu0 %v2480
    %2518 = vmatprep.subr.bf16.mxu0 %v2483
    %2519 = vmatpush1.bf16.msra.mxu0 %v2482
    %2520 = vmatprep.subr.bf16.mxu0 %v2485
    %2521 = vmatpush1.bf16.msra.mxu0 %v2484
    %2522 = vmatprep.subr.bf16.mxu0 %v2487
    %2523 = vmatpush1.bf16.msra.mxu0 %v2486
    %2524 = vmatprep.subr.bf16.mxu0 %v2489
    %2525 = vmatpush1.bf16.msra.mxu0 %v2488
    %2526 = vmatprep.subr.bf16.mxu0 %v2491
    %2527 = vmatpush1.bf16.msra.mxu0 %v2490
    %2528 = vmatprep.subr.bf16.mxu0 %v2493
    %2529 = vmatpush1.bf16.msra.mxu0 %v2492
    %2530 = vmatprep.subr.bf16.mxu0 %v2495
    %2531 = vmatpush1.bf16.msra.mxu0 %v2494
    %2532 = vmatprep.subr.bf16.mxu0 %v2497
    %2533 = vmatpush1.bf16.msra.mxu0 %v2496
    %2534 = vmatprep.subr.bf16.mxu0 %v2499
    %2535 = vmatpush1.bf16.msra.mxu0 %v2498
    %2536 = vmatprep.subr.bf16.mxu0 %v2501
    %2537 = vmatpush1.bf16.msra.mxu0 %v2500
    %2538 = vmatprep.subr.bf16.mxu0 %v2503
    %2539 = vmatpush1.bf16.msra.mxu0 %v2502
    %2540 = vmatprep.mubr.bf16.mxu0 %v2505
    %2541 = vmatmul.mubr.bf16.gmra.mrb[0].mxu0 %v2504
    %v2542 = vpop.f32.mrb[0].mxu0
    %v2543 = vadd.f32 0.0, %v2542
    %v2544 = vpop.f32.mrb[0].mxu0
    %v2545 = vadd.f32 0.0, %v2544
    %v2546 = vpop.f32.mrb[0].mxu0
    %v2547 = vadd.f32 0.0, %v2546
    %v2548 = vpop.f32.mrb[0].mxu0
    %v2549 = vadd.f32 0.0, %v2548
    %2550 = vmatprep.mubr.bf16.mxu0 %v2507
    %2551 = vmatmul.mubr.bf16.gmra.mrb[0].mxu0 %v2506
    %v2552 = vpop.f32.mrb[0].mxu0
    %v2553 = vadd.f32 0.0, %v2552
    %v2554 = vpop.f32.mrb[0].mxu0
    %v2555 = vadd.f32 0.0, %v2554
    %v2556 = vpop.f32.mrb[0].mxu0
    %v2557 = vadd.f32 0.0, %v2556
    %v2558 = vpop.f32.mrb[0].mxu0
    %v2559 = vadd.f32 0.0, %v2558
    %2560 = vdwg.mxu0
    %s2561 = scalar_lea.vmem [#allocation20], 2
    %v2562 = vld [vmem:[%s2561] ss:$8 sm:$0x3]
    %s2563 = scalar_lea.vmem [#allocation20], 3
    %v2564 = vld [vmem:[%s2563] ss:$8 sm:$0x3]
    %v2565 = vadd.f32 %v2543, %v2547
    %v2566 = vadd.f32 %v2565, %v2553
    %v2567 = vadd.f32 %v2566, %v2557
    %v2568 = vrot.slane %v2567, 4
    %v2569 = vadd.f32 %v2567, %v2568
    %v2570 = vrot.slane %v2569, 2
    %v2571 = vadd.f32 %v2569, %v2570
    %v2572 = vrot.slane %v2571, 1
    %v2573 = vadd.f32 %v2571, %v2572
    %v2574 = vadd.f32 %v2545, %v2549
    %v2575 = vadd.f32 %v2574, %v2555
    %v2576 = vadd.f32 %v2575, %v2559
    %v2577 = vrot.slane %v2576, 4
    %v2578 = vadd.f32 %v2576, %v2577
    %v2579 = vrot.slane %v2578, 2
    %v2580 = vadd.f32 %v2578, %v2579
    %v2581 = vrot.slane %v2580, 1
    %v2582 = vadd.f32 %v2580, %v2581
    %v2583 = vmul.f32 %v2573, %v394
    %v2584 = vmul.f32 %v2582, %v394
    %v2585 = vmul.f32 %v2543, %v2543
    %v2586 = vmul.f32 %v2545, %v2545
    %v2587 = vmul.f32 %v2547, %v2547
    %v2588 = vmul.f32 %v2549, %v2549
    %v2589 = vmul.f32 %v2553, %v2553
    %v2590 = vmul.f32 %v2555, %v2555
    %v2591 = vmul.f32 %v2557, %v2557
    %v2592 = vmul.f32 %v2559, %v2559
    %v2593 = vadd.f32 %v2585, %v2587
    %v2594 = vadd.f32 %v2593, %v2589
    %v2595 = vadd.f32 %v2594, %v2591
    %v2596 = vrot.slane %v2595, 4
    %v2597 = vadd.f32 %v2595, %v2596
    %v2598 = vrot.slane %v2597, 2
    %v2599 = vadd.f32 %v2597, %v2598
    %v2600 = vrot.slane %v2599, 1
    %v2601 = vadd.f32 %v2599, %v2600
    %v2602 = vadd.f32 %v2586, %v2588
    %v2603 = vadd.f32 %v2602, %v2590
    %v2604 = vadd.f32 %v2603, %v2592
    %v2605 = vrot.slane %v2604, 4
    %v2606 = vadd.f32 %v2604, %v2605
    %v2607 = vrot.slane %v2606, 2
    %v2608 = vadd.f32 %v2606, %v2607
    %v2609 = vrot.slane %v2608, 1
    %v2610 = vadd.f32 %v2608, %v2609
    %v2611 = vmul.f32 %v2601, %v394
    %v2612 = vmul.f32 %v2610, %v394
    %v2613 = vmul.f32 %v2583, %v2583
    %v2614 = vmul.f32 %v2584, %v2584
    %v2615 = vsub.f32 %v2611, %v2613
    %v2616 = vsub.f32 %v2612, %v2614
    %v2617 = vmax.f32 %v2615, 0.0
    %v2618 = vmax.f32 %v2616, 0.0
    %v2619 = vadd.f32 %v2617, 1e-05
    %v2620 = vadd.f32 %v2618, 1e-05
    %v2621 = vrsqrt.pop %v2619
    %v2622 = vrsqrt.pop %v2620
    %v2625 = vcombine.low %v2621, %v2622
    %v2627 = vunpack.c.l.s4 1966171168
    %v2628 = vunpack.c.0.s8 %v2627
    %v2629 = vlaneseq
    %v2630 = vshrl.u32 %v2629, 7
    %v2631 = vsub.s32 %v2628, %v2630
    %v2632 = vrot.slane %v2625, %v2631
    %v2634 = vunpack.c.l.s4 1966171168
    %v2635 = vunpack.c.0.s8 %v2634
    %v2636 = vlaneseq
    %v2637 = vshrl.u32 %v2636, 7
    %v2638 = vsub.s32 %v2635, %v2637
    %v2639 = vrot.slane %v2632, %v2638
    %v2641 = vmul.f32 %v2562, %v2639
    %v2643 = vlaneseq
    %v2644 = vshrl.u32 %v2643, 7
    %v2645 = vsub.s32 0, %v2644
    %v2646 = vrot.slane %v2641, %v2645
    %v2647 = vlaneseq
    %v2648 = vshrl.u32 %v2647, 7
    %v2649 = vsub.s32 1, %v2648
    %v2650 = vrot.slane %v2641, %v2649
    %v2653 = vmul.f32 %v2583, %v2646
    %v2654 = vmul.f32 %v2584, %v2650
    %v2657 = vcombine.low %v2653, %v2654
    %v2659 = vunpack.c.l.s4 1966171168
    %v2660 = vunpack.c.0.s8 %v2659
    %v2661 = vlaneseq
    %v2662 = vshrl.u32 %v2661, 7
    %v2663 = vsub.s32 %v2660, %v2662
    %v2664 = vrot.slane %v2657, %v2663
    %v2666 = vunpack.c.l.s4 1966171168
    %v2667 = vunpack.c.0.s8 %v2666
    %v2668 = vlaneseq
    %v2669 = vshrl.u32 %v2668, 7
    %v2670 = vsub.s32 %v2667, %v2669
    %v2671 = vrot.slane %v2664, %v2670
    %v2673 = vsub.f32 %v2564, %v2671
    %v2674 = vmul.f32 %v2543, %v2646
    %v2675 = vmul.f32 %v2545, %v2650
    %v2676 = vmul.f32 %v2547, %v2646
    %v2677 = vmul.f32 %v2549, %v2650
    %v2678 = vmul.f32 %v2553, %v2646
    %v2679 = vmul.f32 %v2555, %v2650
    %v2680 = vmul.f32 %v2557, %v2646
    %v2681 = vmul.f32 %v2559, %v2650
    %v2683 = vlaneseq
    %v2684 = vshrl.u32 %v2683, 7
    %v2685 = vsub.s32 0, %v2684
    %v2686 = vrot.slane %v2673, %v2685
    %v2687 = vlaneseq
    %v2688 = vshrl.u32 %v2687, 7
    %v2689 = vsub.s32 1, %v2688
    %v2690 = vrot.slane %v2673, %v2689
    %v2693 = vadd.f32 %v2674, %v2686
    %v2694 = vadd.f32 %v2675, %v2690
    %v2695 = vadd.f32 %v2676, %v2686
    %v2696 = vadd.f32 %v2677, %v2690
    %v2697 = vadd.f32 %v2678, %v2686
    %v2698 = vadd.f32 %v2679, %v2690
    %v2699 = vadd.f32 %v2680, %v2686
    %v2700 = vadd.f32 %v2681, %v2690
    %s2701 = scalar_lea.vmem [#allocation5], 256
    %v2702 = vld [vmem:[%s2701] sm:$0xff]
    %v2703 = vld [vmem:[%s2701 + $0x8] sm:$0xff]
    %v2704 = vld [vmem:[%s2701 + $0x10] sm:$0xff]
    %v2705 = vld [vmem:[%s2701 + $0x18] sm:$0xff]
    %v2706 = vld [vmem:[%s2701 + $0x20] sm:$0xff]
    %v2707 = vld [vmem:[%s2701 + $0x28] sm:$0xff]
    %v2708 = vld [vmem:[%s2701 + $0x30] sm:$0xff]
    %v2709 = vld [vmem:[%s2701 + $0x38] sm:$0xff]
    %v2710 = vld [vmem:[%s2701 + $0x40] sm:$0xff]
    %v2711 = vld [vmem:[%s2701 + $0x48] sm:$0xff]
    %v2712 = vld [vmem:[%s2701 + $0x50] sm:$0xff]
    %v2713 = vld [vmem:[%s2701 + $0x58] sm:$0xff]
    %v2714 = vld [vmem:[%s2701 + $0x60] sm:$0xff]
    %v2715 = vld [vmem:[%s2701 + $0x68] sm:$0xff]
    %v2716 = vld [vmem:[%s2701 + $0x70] sm:$0xff]
    %v2717 = vld [vmem:[%s2701 + $0x78] sm:$0xff]
    %v2718 = vld [vmem:[%s2701 + $0x80] sm:$0xff]
    %v2719 = vld [vmem:[%s2701 + $0x88] sm:$0xff]
    %v2720 = vld [vmem:[%s2701 + $0x90] sm:$0xff]
    %v2721 = vld [vmem:[%s2701 + $0x98] sm:$0xff]
    %v2722 = vld [vmem:[%s2701 + $0xa0] sm:$0xff]
    %v2723 = vld [vmem:[%s2701 + $0xa8] sm:$0xff]
    %v2724 = vld [vmem:[%s2701 + $0xb0] sm:$0xff]
    %v2725 = vld [vmem:[%s2701 + $0xb8] sm:$0xff]
    %v2726 = vld [vmem:[%s2701 + $0xc0] sm:$0xff]
    %v2727 = vld [vmem:[%s2701 + $0xc8] sm:$0xff]
    %v2728 = vld [vmem:[%s2701 + $0xd0] sm:$0xff]
    %v2729 = vld [vmem:[%s2701 + $0xd8] sm:$0xff]
    %v2730 = vld [vmem:[%s2701 + $0xe0] sm:$0xff]
    %v2731 = vld [vmem:[%s2701 + $0xe8] sm:$0xff]
    %v2732 = vld [vmem:[%s2701 + $0xf0] sm:$0xff]
    %v2733 = vld [vmem:[%s2701 + $0xf8] sm:$0xff]
    %v2734 = vpack.c.bf16 %v2695, %v2693
    %v2735 = vpack.c.bf16 %v2696, %v2694
    %v2736 = vpack.c.bf16 %v2699, %v2697
    %v2737 = vpack.c.bf16 %v2700, %v2698
    %2738 = vmatprep.subr.bf16.mxu0 %v2703
    %2739 = vmatpush1.bf16.msra.mxu0 %v2702
    %2740 = vmatprep.subr.bf16.mxu0 %v2705
    %2741 = vmatpush1.bf16.msra.mxu0 %v2704
    %2742 = vmatprep.subr.bf16.mxu0 %v2707
    %2743 = vmatpush1.bf16.msra.mxu0 %v2706
    %2744 = vmatprep.subr.bf16.mxu0 %v2709
    %2745 = vmatpush1.bf16.msra.mxu0 %v2708
    %2746 = vmatprep.subr.bf16.mxu0 %v2711
    %2747 = vmatpush1.bf16.msra.mxu0 %v2710
    %2748 = vmatprep.subr.bf16.mxu0 %v2713
    %2749 = vmatpush1.bf16.msra.mxu0 %v2712
    %2750 = vmatprep.subr.bf16.mxu0 %v2715
    %2751 = vmatpush1.bf16.msra.mxu0 %v2714
    %2752 = vmatprep.subr.bf16.mxu0 %v2717
    %2753 = vmatpush1.bf16.msra.mxu0 %v2716
    %2754 = vmatprep.subr.bf16.mxu0 %v2719
    %2755 = vmatpush1.bf16.msra.mxu0 %v2718
    %2756 = vmatprep.subr.bf16.mxu0 %v2721
    %2757 = vmatpush1.bf16.msra.mxu0 %v2720
    %2758 = vmatprep.subr.bf16.mxu0 %v2723
    %2759 = vmatpush1.bf16.msra.mxu0 %v2722
    %2760 = vmatprep.subr.bf16.mxu0 %v2725
    %2761 = vmatpush1.bf16.msra.mxu0 %v2724
    %2762 = vmatprep.subr.bf16.mxu0 %v2727
    %2763 = vmatpush1.bf16.msra.mxu0 %v2726
    %2764 = vmatprep.subr.bf16.mxu0 %v2729
    %2765 = vmatpush1.bf16.msra.mxu0 %v2728
    %2766 = vmatprep.subr.bf16.mxu0 %v2731
    %2767 = vmatpush1.bf16.msra.mxu0 %v2730
    %2768 = vmatprep.subr.bf16.mxu0 %v2733
    %2769 = vmatpush1.bf16.msra.mxu0 %v2732
    %2770 = vmatprep.mubr.bf16.mxu0 %v2735
    %2771 = vmatmul.mubr.bf16.gmra.mrb[0].mxu0 %v2734
    %v2772 = vpop.f32.mrb[0].mxu0
    %v2773 = vadd.f32 0.0, %v2772
    %v2774 = vpop.f32.mrb[0].mxu0
    %v2775 = vadd.f32 0.0, %v2774
    %v2776 = vpop.f32.mrb[0].mxu0
    %v2777 = vadd.f32 0.0, %v2776
    %v2778 = vpop.f32.mrb[0].mxu0
    %v2779 = vadd.f32 0.0, %v2778
    %2780 = vmatprep.mubr.bf16.mxu0 %v2737
    %2781 = vmatmul.mubr.bf16.gmra.mrb[0].mxu0 %v2736
    %v2782 = vpop.f32.mrb[0].mxu0
    %v2783 = vadd.f32 0.0, %v2782
    %v2784 = vpop.f32.mrb[0].mxu0
    %v2785 = vadd.f32 0.0, %v2784
    %v2786 = vpop.f32.mrb[0].mxu0
    %v2787 = vadd.f32 0.0, %v2786
    %v2788 = vpop.f32.mrb[0].mxu0
    %v2789 = vadd.f32 0.0, %v2788
    %2790 = vdwg.mxu0
    %s2791 = scalar_lea.vmem [#allocation20], 4
    %v2792 = vld [vmem:[%s2791] ss:$8 sm:$0x3]
    %s2793 = scalar_lea.vmem [#allocation20], 5
    %v2794 = vld [vmem:[%s2793] ss:$8 sm:$0x3]
    %v2795 = vadd.f32 %v2773, %v2777
    %v2796 = vadd.f32 %v2795, %v2783
    %v2797 = vadd.f32 %v2796, %v2787
    %v2798 = vrot.slane %v2797, 4
    %v2799 = vadd.f32 %v2797, %v2798
    %v2800 = vrot.slane %v2799, 2
    %v2801 = vadd.f32 %v2799, %v2800
    %v2802 = vrot.slane %v2801, 1
    %v2803 = vadd.f32 %v2801, %v2802
    %v2804 = vadd.f32 %v2775, %v2779
    %v2805 = vadd.f32 %v2804, %v2785
    %v2806 = vadd.f32 %v2805, %v2789
    %v2807 = vrot.slane %v2806, 4
    %v2808 = vadd.f32 %v2806, %v2807
    %v2809 = vrot.slane %v2808, 2
    %v2810 = vadd.f32 %v2808, %v2809
    %v2811 = vrot.slane %v2810, 1
    %v2812 = vadd.f32 %v2810, %v2811
    %v2813 = vmul.f32 %v2803, %v394
    %v2814 = vmul.f32 %v2812, %v394
    %v2815 = vmul.f32 %v2773, %v2773
    %v2816 = vmul.f32 %v2775, %v2775
    %v2817 = vmul.f32 %v2777, %v2777
    %v2818 = vmul.f32 %v2779, %v2779
    %v2819 = vmul.f32 %v2783, %v2783
    %v2820 = vmul.f32 %v2785, %v2785
    %v2821 = vmul.f32 %v2787, %v2787
    %v2822 = vmul.f32 %v2789, %v2789
    %v2823 = vadd.f32 %v2815, %v2817
    %v2824 = vadd.f32 %v2823, %v2819
    %v2825 = vadd.f32 %v2824, %v2821
    %v2826 = vrot.slane %v2825, 4
    %v2827 = vadd.f32 %v2825, %v2826
    %v2828 = vrot.slane %v2827, 2
    %v2829 = vadd.f32 %v2827, %v2828
    %v2830 = vrot.slane %v2829, 1
    %v2831 = vadd.f32 %v2829, %v2830
    %v2832 = vadd.f32 %v2816, %v2818
    %v2833 = vadd.f32 %v2832, %v2820
    %v2834 = vadd.f32 %v2833, %v2822
    %v2835 = vrot.slane %v2834, 4
    %v2836 = vadd.f32 %v2834, %v2835
    %v2837 = vrot.slane %v2836, 2
    %v2838 = vadd.f32 %v2836, %v2837
    %v2839 = vrot.slane %v2838, 1
    %v2840 = vadd.f32 %v2838, %v2839
    %v2841 = vmul.f32 %v2831, %v394
    %v2842 = vmul.f32 %v2840, %v394
    %v2843 = vmul.f32 %v2813, %v2813
    %v2844 = vmul.f32 %v2814, %v2814
    %v2845 = vsub.f32 %v2841, %v2843
    %v2846 = vsub.f32 %v2842, %v2844
    %v2847 = vmax.f32 %v2845, 0.0
    %v2848 = vmax.f32 %v2846, 0.0
    %v2849 = vadd.f32 %v2847, 1e-05
    %v2850 = vadd.f32 %v2848, 1e-05
    %v2851 = vrsqrt.pop %v2849
    %v2852 = vrsqrt.pop %v2850
    %v2855 = vcombine.low %v2851, %v2852
    %v2857 = vunpack.c.l.s4 1966171168
    %v2858 = vunpack.c.0.s8 %v2857
    %v2859 = vlaneseq
    %v2860 = vshrl.u32 %v2859, 7
    %v2861 = vsub.s32 %v2858, %v2860
    %v2862 = vrot.slane %v2855, %v2861
    %v2864 = vunpack.c.l.s4 1966171168
    %v2865 = vunpack.c.0.s8 %v2864
    %v2866 = vlaneseq
    %v2867 = vshrl.u32 %v2866, 7
    %v2868 = vsub.s32 %v2865, %v2867
    %v2869 = vrot.slane %v2862, %v2868
    %v2871 = vmul.f32 %v2792, %v2869
    %v2873 = vlaneseq
    %v2874 = vshrl.u32 %v2873, 7
    %v2875 = vsub.s32 0, %v2874
    %v2876 = vrot.slane %v2871, %v2875
    %v2877 = vlaneseq
    %v2878 = vshrl.u32 %v2877, 7
    %v2879 = vsub.s32 1, %v2878
    %v2880 = vrot.slane %v2871, %v2879
    %v2883 = vmul.f32 %v2813, %v2876
    %v2884 = vmul.f32 %v2814, %v2880
    %v2887 = vcombine.low %v2883, %v2884
    %v2889 = vunpack.c.l.s4 1966171168
    %v2890 = vunpack.c.0.s8 %v2889
    %v2891 = vlaneseq
    %v2892 = vshrl.u32 %v2891, 7
    %v2893 = vsub.s32 %v2890, %v2892
    %v2894 = vrot.slane %v2887, %v2893
    %v2896 = vunpack.c.l.s4 1966171168
    %v2897 = vunpack.c.0.s8 %v2896
    %v2898 = vlaneseq
    %v2899 = vshrl.u32 %v2898, 7
    %v2900 = vsub.s32 %v2897, %v2899
    %v2901 = vrot.slane %v2894, %v2900
    %v2903 = vsub.f32 %v2794, %v2901
    %v2904 = vmul.f32 %v2773, %v2876
    %v2905 = vmul.f32 %v2775, %v2880
    %v2906 = vmul.f32 %v2777, %v2876
    %v2907 = vmul.f32 %v2779, %v2880
    %v2908 = vmul.f32 %v2783, %v2876
    %v2909 = vmul.f32 %v2785, %v2880
    %v2910 = vmul.f32 %v2787, %v2876
    %v2911 = vmul.f32 %v2789, %v2880
    %v2913 = vlaneseq
    %v2914 = vshrl.u32 %v2913, 7
    %v2915 = vsub.s32 0, %v2914
    %v2916 = vrot.slane %v2903, %v2915
    %v2917 = vlaneseq
    %v2918 = vshrl.u32 %v2917, 7
    %v2919 = vsub.s32 1, %v2918
    %v2920 = vrot.slane %v2903, %v2919
    %v2923 = vadd.f32 %v2904, %v2916
    %v2924 = vadd.f32 %v2905, %v2920
    %v2925 = vadd.f32 %v2906, %v2916
    %v2926 = vadd.f32 %v2907, %v2920
    %v2927 = vadd.f32 %v2908, %v2916
    %v2928 = vadd.f32 %v2909, %v2920
    %v2929 = vadd.f32 %v2910, %v2916
    %v2930 = vadd.f32 %v2911, %v2920
    %v2931 = vmax.f32 %v2923, 0.0
    %v2932 = vmax.f32 %v2924, 0.0
    %v2933 = vmax.f32 %v2925, 0.0
    %v2934 = vmax.f32 %v2926, 0.0
    %v2935 = vmax.f32 %v2927, 0.0
    %v2936 = vmax.f32 %v2928, 0.0
    %v2937 = vmax.f32 %v2929, 0.0
    %v2938 = vmax.f32 %v2930, 0.0
    %s2939 = scalar_lea.vmem [#allocation5], 512
    %v2940 = vld [vmem:[%s2939] sm:$0xff]
    %v2941 = vld [vmem:[%s2939 + $0x8] sm:$0xff]
    %v2942 = vld [vmem:[%s2939 + $0x10] sm:$0xff]
    %v2943 = vld [vmem:[%s2939 + $0x18] sm:$0xff]
    %v2944 = vld [vmem:[%s2939 + $0x20] sm:$0xff]
    %v2945 = vld [vmem:[%s2939 + $0x28] sm:$0xff]
    %v2946 = vld [vmem:[%s2939 + $0x30] sm:$0xff]
    %v2947 = vld [vmem:[%s2939 + $0x38] sm:$0xff]
    %v2948 = vld [vmem:[%s2939 + $0x40] sm:$0xff]
    %v2949 = vld [vmem:[%s2939 + $0x48] sm:$0xff]
    %v2950 = vld [vmem:[%s2939 + $0x50] sm:$0xff]
    %v2951 = vld [vmem:[%s2939 + $0x58] sm:$0xff]
    %v2952 = vld [vmem:[%s2939 + $0x60] sm:$0xff]
    %v2953 = vld [vmem:[%s2939 + $0x68] sm:$0xff]
    %v2954 = vld [vmem:[%s2939 + $0x70] sm:$0xff]
    %v2955 = vld [vmem:[%s2939 + $0x78] sm:$0xff]
    %v2956 = vld [vmem:[%s2939 + $0x80] sm:$0xff]
    %v2957 = vld [vmem:[%s2939 + $0x88] sm:$0xff]
    %v2958 = vld [vmem:[%s2939 + $0x90] sm:$0xff]
    %v2959 = vld [vmem:[%s2939 + $0x98] sm:$0xff]
    %v2960 = vld [vmem:[%s2939 + $0xa0] sm:$0xff]
    %v2961 = vld [vmem:[%s2939 + $0xa8] sm:$0xff]
    %v2962 = vld [vmem:[%s2939 + $0xb0] sm:$0xff]
    %v2963 = vld [vmem:[%s2939 + $0xb8] sm:$0xff]
    %v2964 = vld [vmem:[%s2939 + $0xc0] sm:$0xff]
    %v2965 = vld [vmem:[%s2939 + $0xc8] sm:$0xff]
    %v2966 = vld [vmem:[%s2939 + $0xd0] sm:$0xff]
    %v2967 = vld [vmem:[%s2939 + $0xd8] sm:$0xff]
    %v2968 = vld [vmem:[%s2939 + $0xe0] sm:$0xff]
    %v2969 = vld [vmem:[%s2939 + $0xe8] sm:$0xff]
    %v2970 = vld [vmem:[%s2939 + $0xf0] sm:$0xff]
    %v2971 = vld [vmem:[%s2939 + $0xf8] sm:$0xff]
    %v2972 = vpack.c.bf16 %v2933, %v2931
    %v2973 = vpack.c.bf16 %v2934, %v2932
    %v2974 = vpack.c.bf16 %v2937, %v2935
    %v2975 = vpack.c.bf16 %v2938, %v2936
    %2976 = vmatprep.subr.bf16.mxu0 %v2941
    %2977 = vmatpush1.bf16.msra.mxu0 %v2940
    %2978 = vmatprep.subr.bf16.mxu0 %v2943
    %2979 = vmatpush1.bf16.msra.mxu0 %v2942
    %2980 = vmatprep.subr.bf16.mxu0 %v2945
    %2981 = vmatpush1.bf16.msra.mxu0 %v2944
    %2982 = vmatprep.subr.bf16.mxu0 %v2947
    %2983 = vmatpush1.bf16.msra.mxu0 %v2946
    %2984 = vmatprep.subr.bf16.mxu0 %v2949
    %2985 = vmatpush1.bf16.msra.mxu0 %v2948
    %2986 = vmatprep.subr.bf16.mxu0 %v2951
    %2987 = vmatpush1.bf16.msra.mxu0 %v2950
    %2988 = vmatprep.subr.bf16.mxu0 %v2953
    %2989 = vmatpush1.bf16.msra.mxu0 %v2952
    %2990 = vmatprep.subr.bf16.mxu0 %v2955
    %2991 = vmatpush1.bf16.msra.mxu0 %v2954
    %2992 = vmatprep.subr.bf16.mxu0 %v2957
    %2993 = vmatpush1.bf16.msra.mxu0 %v2956
    %2994 = vmatprep.subr.bf16.mxu0 %v2959
    %2995 = vmatpush1.bf16.msra.mxu0 %v2958
    %2996 = vmatprep.subr.bf16.mxu0 %v2961
    %2997 = vmatpush1.bf16.msra.mxu0 %v2960
    %2998 = vmatprep.subr.bf16.mxu0 %v2963
    %2999 = vmatpush1.bf16.msra.mxu0 %v2962
    %3000 = vmatprep.subr.bf16.mxu0 %v2965
    %3001 = vmatpush1.bf16.msra.mxu0 %v2964
    %3002 = vmatprep.subr.bf16.mxu0 %v2967
    %3003 = vmatpush1.bf16.msra.mxu0 %v2966
    %3004 = vmatprep.subr.bf16.mxu0 %v2969
    %3005 = vmatpush1.bf16.msra.mxu0 %v2968
    %3006 = vmatprep.subr.bf16.mxu0 %v2971
    %3007 = vmatpush1.bf16.msra.mxu0 %v2970
    %3008 = vmatprep.mubr.bf16.mxu0 %v2973
    %3009 = vmatmul.mubr.bf16.gmra.mrb[0].mxu0 %v2972
    %v3010 = vpop.f32.mrb[0].mxu0
    %v3011 = vadd.f32 0.0, %v3010
    %v3012 = vpop.f32.mrb[0].mxu0
    %v3013 = vadd.f32 0.0, %v3012
    %v3014 = vpop.f32.mrb[0].mxu0
    %v3015 = vadd.f32 0.0, %v3014
    %v3016 = vpop.f32.mrb[0].mxu0
    %v3017 = vadd.f32 0.0, %v3016
    %3018 = vmatprep.mubr.bf16.mxu0 %v2975
    %3019 = vmatmul.mubr.bf16.gmra.mrb[0].mxu0 %v2974
    %v3020 = vpop.f32.mrb[0].mxu0
    %v3021 = vadd.f32 0.0, %v3020
    %v3022 = vpop.f32.mrb[0].mxu0
    %v3023 = vadd.f32 0.0, %v3022
    %v3024 = vpop.f32.mrb[0].mxu0
    %v3025 = vadd.f32 0.0, %v3024
    %v3026 = vpop.f32.mrb[0].mxu0
    %v3027 = vadd.f32 0.0, %v3026
    %3028 = vdwg.mxu0
    %s3029 = scalar_lea.vmem [#allocation20], 6
    %v3030 = vld [vmem:[%s3029] ss:$8 sm:$0x3]
    %s3031 = scalar_lea.vmem [#allocation20], 7
    %v3032 = vld [vmem:[%s3031] ss:$8 sm:$0x3]
    %v3033 = vadd.f32 %v3011, %v3015
    %v3034 = vadd.f32 %v3033, %v3021
    %v3035 = vadd.f32 %v3034, %v3025
    %v3036 = vrot.slane %v3035, 4
    %v3037 = vadd.f32 %v3035, %v3036
    %v3038 = vrot.slane %v3037, 2
    %v3039 = vadd.f32 %v3037, %v3038
    %v3040 = vrot.slane %v3039, 1
    %v3041 = vadd.f32 %v3039, %v3040
    %v3042 = vadd.f32 %v3013, %v3017
    %v3043 = vadd.f32 %v3042, %v3023
    %v3044 = vadd.f32 %v3043, %v3027
    %v3045 = vrot.slane %v3044, 4
    %v3046 = vadd.f32 %v3044, %v3045
    %v3047 = vrot.slane %v3046, 2
    %v3048 = vadd.f32 %v3046, %v3047
    %v3049 = vrot.slane %v3048, 1
    %v3050 = vadd.f32 %v3048, %v3049
    %v3051 = vmul.f32 %v3041, %v394
    %v3052 = vmul.f32 %v3050, %v394
    %v3053 = vmul.f32 %v3011, %v3011
    %v3054 = vmul.f32 %v3013, %v3013
    %v3055 = vmul.f32 %v3015, %v3015
    %v3056 = vmul.f32 %v3017, %v3017
    %v3057 = vmul.f32 %v3021, %v3021
    %v3058 = vmul.f32 %v3023, %v3023
    %v3059 = vmul.f32 %v3025, %v3025
    %v3060 = vmul.f32 %v3027, %v3027
    %v3061 = vadd.f32 %v3053, %v3055
    %v3062 = vadd.f32 %v3061, %v3057
    %v3063 = vadd.f32 %v3062, %v3059
    %v3064 = vrot.slane %v3063, 4
    %v3065 = vadd.f32 %v3063, %v3064
    %v3066 = vrot.slane %v3065, 2
    %v3067 = vadd.f32 %v3065, %v3066
    %v3068 = vrot.slane %v3067, 1
    %v3069 = vadd.f32 %v3067, %v3068
    %v3070 = vadd.f32 %v3054, %v3056
    %v3071 = vadd.f32 %v3070, %v3058
    %v3072 = vadd.f32 %v3071, %v3060
    %v3073 = vrot.slane %v3072, 4
    %v3074 = vadd.f32 %v3072, %v3073
    %v3075 = vrot.slane %v3074, 2
    %v3076 = vadd.f32 %v3074, %v3075
    %v3077 = vrot.slane %v3076, 1
    %v3078 = vadd.f32 %v3076, %v3077
    %v3079 = vmul.f32 %v3069, %v394
    %v3080 = vmul.f32 %v3078, %v394
    %v3081 = vmul.f32 %v3051, %v3051
    %v3082 = vmul.f32 %v3052, %v3052
    %v3083 = vsub.f32 %v3079, %v3081
    %v3084 = vsub.f32 %v3080, %v3082
    %v3085 = vmax.f32 %v3083, 0.0
    %v3086 = vmax.f32 %v3084, 0.0
    %v3087 = vadd.f32 %v3085, 1e-05
    %v3088 = vadd.f32 %v3086, 1e-05
    %v3089 = vrsqrt.pop %v3087
    %v3090 = vrsqrt.pop %v3088
    %v3093 = vcombine.low %v3089, %v3090
    %v3095 = vunpack.c.l.s4 1966171168
    %v3096 = vunpack.c.0.s8 %v3095
    %v3097 = vlaneseq
    %v3098 = vshrl.u32 %v3097, 7
    %v3099 = vsub.s32 %v3096, %v3098
    %v3100 = vrot.slane %v3093, %v3099
    %v3102 = vunpack.c.l.s4 1966171168
    %v3103 = vunpack.c.0.s8 %v3102
    %v3104 = vlaneseq
    %v3105 = vshrl.u32 %v3104, 7
    %v3106 = vsub.s32 %v3103, %v3105
    %v3107 = vrot.slane %v3100, %v3106
    %v3109 = vmul.f32 %v3030, %v3107
    %v3111 = vlaneseq
    %v3112 = vshrl.u32 %v3111, 7
    %v3113 = vsub.s32 0, %v3112
    %v3114 = vrot.slane %v3109, %v3113
    %v3115 = vlaneseq
    %v3116 = vshrl.u32 %v3115, 7
    %v3117 = vsub.s32 1, %v3116
    %v3118 = vrot.slane %v3109, %v3117
    %v3121 = vmul.f32 %v3051, %v3114
    %v3122 = vmul.f32 %v3052, %v3118
    %v3125 = vcombine.low %v3121, %v3122
    %v3127 = vunpack.c.l.s4 1966171168
    %v3128 = vunpack.c.0.s8 %v3127
    %v3129 = vlaneseq
    %v3130 = vshrl.u32 %v3129, 7
    %v3131 = vsub.s32 %v3128, %v3130
    %v3132 = vrot.slane %v3125, %v3131
    %v3134 = vunpack.c.l.s4 1966171168
    %v3135 = vunpack.c.0.s8 %v3134
    %v3136 = vlaneseq
    %v3137 = vshrl.u32 %v3136, 7
    %v3138 = vsub.s32 %v3135, %v3137
    %v3139 = vrot.slane %v3132, %v3138
    %v3141 = vsub.f32 %v3032, %v3139
    %v3142 = vmul.f32 %v3011, %v3114
    %v3143 = vmul.f32 %v3013, %v3118
    %v3144 = vmul.f32 %v3015, %v3114
    %v3145 = vmul.f32 %v3017, %v3118
    %v3146 = vmul.f32 %v3021, %v3114
    %v3147 = vmul.f32 %v3023, %v3118
    %v3148 = vmul.f32 %v3025, %v3114
    %v3149 = vmul.f32 %v3027, %v3118
    %v3151 = vlaneseq
    %v3152 = vshrl.u32 %v3151, 7
    %v3153 = vsub.s32 0, %v3152
    %v3154 = vrot.slane %v3141, %v3153
    %v3155 = vlaneseq
    %v3156 = vshrl.u32 %v3155, 7
    %v3157 = vsub.s32 1, %v3156
    %v3158 = vrot.slane %v3141, %v3157
    %v3161 = vadd.f32 %v3142, %v3154
    %v3162 = vadd.f32 %v3143, %v3158
    %v3163 = vadd.f32 %v3144, %v3154
    %v3164 = vadd.f32 %v3145, %v3158
    %v3165 = vadd.f32 %v3146, %v3154
    %v3166 = vadd.f32 %v3147, %v3158
    %v3167 = vadd.f32 %v3148, %v3154
    %v3168 = vadd.f32 %v3149, %v3158
    %s3169 = scalar_lea.vmem [#allocation5], 768
    %v3170 = vld [vmem:[%s3169] sm:$0xff]
    %v3171 = vld [vmem:[%s3169 + $0x8] sm:$0xff]
    %v3172 = vld [vmem:[%s3169 + $0x10] sm:$0xff]
    %v3173 = vld [vmem:[%s3169 + $0x18] sm:$0xff]
    %v3174 = vld [vmem:[%s3169 + $0x20] sm:$0xff]
    %v3175 = vld [vmem:[%s3169 + $0x28] sm:$0xff]
    %v3176 = vld [vmem:[%s3169 + $0x30] sm:$0xff]
    %v3177 = vld [vmem:[%s3169 + $0x38] sm:$0xff]
    %v3178 = vld [vmem:[%s3169 + $0x40] sm:$0xff]
    %v3179 = vld [vmem:[%s3169 + $0x48] sm:$0xff]
    %v3180 = vld [vmem:[%s3169 + $0x50] sm:$0xff]
    %v3181 = vld [vmem:[%s3169 + $0x58] sm:$0xff]
    %v3182 = vld [vmem:[%s3169 + $0x60] sm:$0xff]
    %v3183 = vld [vmem:[%s3169 + $0x68] sm:$0xff]
    %v3184 = vld [vmem:[%s3169 + $0x70] sm:$0xff]
    %v3185 = vld [vmem:[%s3169 + $0x78] sm:$0xff]
    %v3186 = vld [vmem:[%s3169 + $0x80] sm:$0xff]
    %v3187 = vld [vmem:[%s3169 + $0x88] sm:$0xff]
    %v3188 = vld [vmem:[%s3169 + $0x90] sm:$0xff]
    %v3189 = vld [vmem:[%s3169 + $0x98] sm:$0xff]
    %v3190 = vld [vmem:[%s3169 + $0xa0] sm:$0xff]
    %v3191 = vld [vmem:[%s3169 + $0xa8] sm:$0xff]
    %v3192 = vld [vmem:[%s3169 + $0xb0] sm:$0xff]
    %v3193 = vld [vmem:[%s3169 + $0xb8] sm:$0xff]
    %v3194 = vld [vmem:[%s3169 + $0xc0] sm:$0xff]
    %v3195 = vld [vmem:[%s3169 + $0xc8] sm:$0xff]
    %v3196 = vld [vmem:[%s3169 + $0xd0] sm:$0xff]
    %v3197 = vld [vmem:[%s3169 + $0xd8] sm:$0xff]
    %v3198 = vld [vmem:[%s3169 + $0xe0] sm:$0xff]
    %v3199 = vld [vmem:[%s3169 + $0xe8] sm:$0xff]
    %v3200 = vld [vmem:[%s3169 + $0xf0] sm:$0xff]
    %v3201 = vld [vmem:[%s3169 + $0xf8] sm:$0xff]
    %v3202 = vpack.c.bf16 %v3163, %v3161
    %v3203 = vpack.c.bf16 %v3164, %v3162
    %v3204 = vpack.c.bf16 %v3167, %v3165
    %v3205 = vpack.c.bf16 %v3168, %v3166
    %3206 = vmatprep.subr.bf16.mxu0 %v3171
    %3207 = vmatpush1.bf16.msra.mxu0 %v3170
    %3208 = vmatprep.subr.bf16.mxu0 %v3173
    %3209 = vmatpush1.bf16.msra.mxu0 %v3172
    %3210 = vmatprep.subr.bf16.mxu0 %v3175
    %3211 = vmatpush1.bf16.msra.mxu0 %v3174
    %3212 = vmatprep.subr.bf16.mxu0 %v3177
    %3213 = vmatpush1.bf16.msra.mxu0 %v3176
    %3214 = vmatprep.subr.bf16.mxu0 %v3179
    %3215 = vmatpush1.bf16.msra.mxu0 %v3178
    %3216 = vmatprep.subr.bf16.mxu0 %v3181
    %3217 = vmatpush1.bf16.msra.mxu0 %v3180
    %3218 = vmatprep.subr.bf16.mxu0 %v3183
    %3219 = vmatpush1.bf16.msra.mxu0 %v3182
    %3220 = vmatprep.subr.bf16.mxu0 %v3185
    %3221 = vmatpush1.bf16.msra.mxu0 %v3184
    %3222 = vmatprep.subr.bf16.mxu0 %v3187
    %3223 = vmatpush1.bf16.msra.mxu0 %v3186
    %3224 = vmatprep.subr.bf16.mxu0 %v3189
    %3225 = vmatpush1.bf16.msra.mxu0 %v3188
    %3226 = vmatprep.subr.bf16.mxu0 %v3191
    %3227 = vmatpush1.bf16.msra.mxu0 %v3190
    %3228 = vmatprep.subr.bf16.mxu0 %v3193
    %3229 = vmatpush1.bf16.msra.mxu0 %v3192
    %3230 = vmatprep.subr.bf16.mxu0 %v3195
    %3231 = vmatpush1.bf16.msra.mxu0 %v3194
    %3232 = vmatprep.subr.bf16.mxu0 %v3197
    %3233 = vmatpush1.bf16.msra.mxu0 %v3196
    %3234 = vmatprep.subr.bf16.mxu0 %v3199
    %3235 = vmatpush1.bf16.msra.mxu0 %v3198
    %3236 = vmatprep.subr.bf16.mxu0 %v3201
    %3237 = vmatpush1.bf16.msra.mxu0 %v3200
    %3238 = vmatprep.mubr.bf16.mxu0 %v3203
    %3239 = vmatmul.mubr.bf16.gmra.mrb[0].mxu0 %v3202
    %v3240 = vpop.f32.mrb[0].mxu0
    %v3241 = vadd.f32 0.0, %v3240
    %v3242 = vpop.f32.mrb[0].mxu0
    %v3243 = vadd.f32 0.0, %v3242
    %v3244 = vpop.f32.mrb[0].mxu0
    %v3245 = vadd.f32 0.0, %v3244
    %v3246 = vpop.f32.mrb[0].mxu0
    %v3247 = vadd.f32 0.0, %v3246
    %3248 = vmatprep.mubr.bf16.mxu0 %v3205
    %3249 = vmatmul.mubr.bf16.gmra.mrb[0].mxu0 %v3204
    %v3250 = vpop.f32.mrb[0].mxu0
    %v3251 = vadd.f32 0.0, %v3250
    %v3252 = vpop.f32.mrb[0].mxu0
    %v3253 = vadd.f32 0.0, %v3252
    %v3254 = vpop.f32.mrb[0].mxu0
    %v3255 = vadd.f32 0.0, %v3254
    %v3256 = vpop.f32.mrb[0].mxu0
    %v3257 = vadd.f32 0.0, %v3256
    %3258 = vdwg.mxu0
    %s3259 = scalar_lea.vmem [#allocation20], 16
    %v3260 = vld [vmem:[%s3259] ss:$8 sm:$0x3]
    %s3261 = scalar_lea.vmem [#allocation20], 17
    %v3262 = vld [vmem:[%s3261] ss:$8 sm:$0x3]
    %v3263 = vadd.f32 %v3241, %v3245
    %v3264 = vadd.f32 %v3263, %v3251
    %v3265 = vadd.f32 %v3264, %v3255
    %v3266 = vrot.slane %v3265, 4
    %v3267 = vadd.f32 %v3265, %v3266
    %v3268 = vrot.slane %v3267, 2
    %v3269 = vadd.f32 %v3267, %v3268
    %v3270 = vrot.slane %v3269, 1
    %v3271 = vadd.f32 %v3269, %v3270
    %v3272 = vadd.f32 %v3243, %v3247
    %v3273 = vadd.f32 %v3272, %v3253
    %v3274 = vadd.f32 %v3273, %v3257
    %v3275 = vrot.slane %v3274, 4
    %v3276 = vadd.f32 %v3274, %v3275
    %v3277 = vrot.slane %v3276, 2
    %v3278 = vadd.f32 %v3276, %v3277
    %v3279 = vrot.slane %v3278, 1
    %v3280 = vadd.f32 %v3278, %v3279
    %v3281 = vmul.f32 %v3271, %v394
    %v3282 = vmul.f32 %v3280, %v394
    %v3283 = vmul.f32 %v3241, %v3241
    %v3284 = vmul.f32 %v3243, %v3243
    %v3285 = vmul.f32 %v3245, %v3245
    %v3286 = vmul.f32 %v3247, %v3247
    %v3287 = vmul.f32 %v3251, %v3251
    %v3288 = vmul.f32 %v3253, %v3253
    %v3289 = vmul.f32 %v3255, %v3255
    %v3290 = vmul.f32 %v3257, %v3257
    %v3291 = vadd.f32 %v3283, %v3285
    %v3292 = vadd.f32 %v3291, %v3287
    %v3293 = vadd.f32 %v3292, %v3289
    %v3294 = vrot.slane %v3293, 4
    %v3295 = vadd.f32 %v3293, %v3294
    %v3296 = vrot.slane %v3295, 2
    %v3297 = vadd.f32 %v3295, %v3296
    %v3298 = vrot.slane %v3297, 1
    %v3299 = vadd.f32 %v3297, %v3298
    %v3300 = vadd.f32 %v3284, %v3286
    %v3301 = vadd.f32 %v3300, %v3288
    %v3302 = vadd.f32 %v3301, %v3290
    %v3303 = vrot.slane %v3302, 4
    %v3304 = vadd.f32 %v3302, %v3303
    %v3305 = vrot.slane %v3304, 2
    %v3306 = vadd.f32 %v3304, %v3305
    %v3307 = vrot.slane %v3306, 1
    %v3308 = vadd.f32 %v3306, %v3307
    %v3309 = vmul.f32 %v3299, %v394
    %v3310 = vmul.f32 %v3308, %v394
    %v3311 = vmul.f32 %v3281, %v3281
    %v3312 = vmul.f32 %v3282, %v3282
    %v3313 = vsub.f32 %v3309, %v3311
    %v3314 = vsub.f32 %v3310, %v3312
    %v3315 = vmax.f32 %v3313, 0.0
    %v3316 = vmax.f32 %v3314, 0.0
    %v3317 = vadd.f32 %v3315, 1e-05
    %v3318 = vadd.f32 %v3316, 1e-05
    %v3319 = vrsqrt.pop %v3317
    %v3320 = vrsqrt.pop %v3318
    %v3323 = vcombine.low %v3319, %v3320
    %v3325 = vunpack.c.l.s4 1966171168
    %v3326 = vunpack.c.0.s8 %v3325
    %v3327 = vlaneseq
    %v3328 = vshrl.u32 %v3327, 7
    %v3329 = vsub.s32 %v3326, %v3328
    %v3330 = vrot.slane %v3323, %v3329
    %v3332 = vunpack.c.l.s4 1966171168
    %v3333 = vunpack.c.0.s8 %v3332
    %v3334 = vlaneseq
    %v3335 = vshrl.u32 %v3334, 7
    %v3336 = vsub.s32 %v3333, %v3335
    %v3337 = vrot.slane %v3330, %v3336
    %v3339 = vmul.f32 %v3260, %v3337
    %v3341 = vlaneseq
    %v3342 = vshrl.u32 %v3341, 7
    %v3343 = vsub.s32 0, %v3342
    %v3344 = vrot.slane %v3339, %v3343
    %v3345 = vlaneseq
    %v3346 = vshrl.u32 %v3345, 7
    %v3347 = vsub.s32 1, %v3346
    %v3348 = vrot.slane %v3339, %v3347
    %v3351 = vmul.f32 %v3281, %v3344
    %v3352 = vmul.f32 %v3282, %v3348
    %v3355 = vcombine.low %v3351, %v3352
    %v3357 = vunpack.c.l.s4 1966171168
    %v3358 = vunpack.c.0.s8 %v3357
    %v3359 = vlaneseq
    %v3360 = vshrl.u32 %v3359, 7
    %v3361 = vsub.s32 %v3358, %v3360
    %v3362 = vrot.slane %v3355, %v3361
    %v3364 = vunpack.c.l.s4 1966171168
    %v3365 = vunpack.c.0.s8 %v3364
    %v3366 = vlaneseq
    %v3367 = vshrl.u32 %v3366, 7
    %v3368 = vsub.s32 %v3365, %v3367
    %v3369 = vrot.slane %v3362, %v3368
    %v3371 = vsub.f32 %v3262, %v3369
    %v3372 = vmul.f32 %v3241, %v3344
    %v3373 = vmul.f32 %v3243, %v3348
    %v3374 = vmul.f32 %v3245, %v3344
    %v3375 = vmul.f32 %v3247, %v3348
    %v3376 = vmul.f32 %v3251, %v3344
    %v3377 = vmul.f32 %v3253, %v3348
    %v3378 = vmul.f32 %v3255, %v3344
    %v3379 = vmul.f32 %v3257, %v3348
    %v3381 = vlaneseq
    %v3382 = vshrl.u32 %v3381, 7
    %v3383 = vsub.s32 0, %v3382
    %v3384 = vrot.slane %v3371, %v3383
    %v3385 = vlaneseq
    %v3386 = vshrl.u32 %v3385, 7
    %v3387 = vsub.s32 1, %v3386
    %v3388 = vrot.slane %v3371, %v3387
    %v3391 = vadd.f32 %v3372, %v3384
    %v3392 = vadd.f32 %v3373, %v3388
    %v3393 = vadd.f32 %v3374, %v3384
    %v3394 = vadd.f32 %v3375, %v3388
    %v3395 = vadd.f32 %v3376, %v3384
    %v3396 = vadd.f32 %v3377, %v3388
    %v3397 = vadd.f32 %v3378, %v3384
    %v3398 = vadd.f32 %v3379, %v3388
    %v3399 = vmax.f32 %v3391, 0.0
    %v3400 = vmax.f32 %v3392, 0.0
    %v3401 = vmax.f32 %v3393, 0.0
    %v3402 = vmax.f32 %v3394, 0.0
    %v3403 = vmax.f32 %v3395, 0.0
    %v3404 = vmax.f32 %v3396, 0.0
    %v3405 = vmax.f32 %v3397, 0.0
    %v3406 = vmax.f32 %v3398, 0.0
    %s3407 = scalar_lea.vmem [#allocation5], 1024
    %v3408 = vld [vmem:[%s3407] sm:$0xff]
    %v3409 = vld [vmem:[%s3407 + $0x8] sm:$0xff]
    %v3410 = vld [vmem:[%s3407 + $0x10] sm:$0xff]
    %v3411 = vld [vmem:[%s3407 + $0x18] sm:$0xff]
    %v3412 = vld [vmem:[%s3407 + $0x20] sm:$0xff]
    %v3413 = vld [vmem:[%s3407 + $0x28] sm:$0xff]
    %v3414 = vld [vmem:[%s3407 + $0x30] sm:$0xff]
    %v3415 = vld [vmem:[%s3407 + $0x38] sm:$0xff]
    %v3416 = vld [vmem:[%s3407 + $0x40] sm:$0xff]
    %v3417 = vld [vmem:[%s3407 + $0x48] sm:$0xff]
    %v3418 = vld [vmem:[%s3407 + $0x50] sm:$0xff]
    %v3419 = vld [vmem:[%s3407 + $0x58] sm:$0xff]
    %v3420 = vld [vmem:[%s3407 + $0x60] sm:$0xff]
    %v3421 = vld [vmem:[%s3407 + $0x68] sm:$0xff]
    %v3422 = vld [vmem:[%s3407 + $0x70] sm:$0xff]
    %v3423 = vld [vmem:[%s3407 + $0x78] sm:$0xff]
    %v3424 = vld [vmem:[%s3407 + $0x80] sm:$0xff]
    %v3425 = vld [vmem:[%s3407 + $0x88] sm:$0xff]
    %v3426 = vld [vmem:[%s3407 + $0x90] sm:$0xff]
    %v3427 = vld [vmem:[%s3407 + $0x98] sm:$0xff]
    %v3428 = vld [vmem:[%s3407 + $0xa0] sm:$0xff]
    %v3429 = vld [vmem:[%s3407 + $0xa8] sm:$0xff]
    %v3430 = vld [vmem:[%s3407 + $0xb0] sm:$0xff]
    %v3431 = vld [vmem:[%s3407 + $0xb8] sm:$0xff]
    %v3432 = vld [vmem:[%s3407 + $0xc0] sm:$0xff]
    %v3433 = vld [vmem:[%s3407 + $0xc8] sm:$0xff]
    %v3434 = vld [vmem:[%s3407 + $0xd0] sm:$0xff]
    %v3435 = vld [vmem:[%s3407 + $0xd8] sm:$0xff]
    %v3436 = vld [vmem:[%s3407 + $0xe0] sm:$0xff]
    %v3437 = vld [vmem:[%s3407 + $0xe8] sm:$0xff]
    %v3438 = vld [vmem:[%s3407 + $0xf0] sm:$0xff]
    %v3439 = vld [vmem:[%s3407 + $0xf8] sm:$0xff]
    %v3440 = vpack.c.bf16 %v3401, %v3399
    %v3441 = vpack.c.bf16 %v3402, %v3400
    %v3442 = vpack.c.bf16 %v3405, %v3403
    %v3443 = vpack.c.bf16 %v3406, %v3404
    %3444 = vmatprep.subr.bf16.mxu0 %v3409
    %3445 = vmatpush1.bf16.msra.mxu0 %v3408
    %3446 = vmatprep.subr.bf16.mxu0 %v3411
    %3447 = vmatpush1.bf16.msra.mxu0 %v3410
    %3448 = vmatprep.subr.bf16.mxu0 %v3413
    %3449 = vmatpush1.bf16.msra.mxu0 %v3412
    %3450 = vmatprep.subr.bf16.mxu0 %v3415
    %3451 = vmatpush1.bf16.msra.mxu0 %v3414
    %3452 = vmatprep.subr.bf16.mxu0 %v3417
    %3453 = vmatpush1.bf16.msra.mxu0 %v3416
    %3454 = vmatprep.subr.bf16.mxu0 %v3419
    %3455 = vmatpush1.bf16.msra.mxu0 %v3418
    %3456 = vmatprep.subr.bf16.mxu0 %v3421
    %3457 = vmatpush1.bf16.msra.mxu0 %v3420
    %3458 = vmatprep.subr.bf16.mxu0 %v3423
    %3459 = vmatpush1.bf16.msra.mxu0 %v3422
    %3460 = vmatprep.subr.bf16.mxu0 %v3425
    %3461 = vmatpush1.bf16.msra.mxu0 %v3424
    %3462 = vmatprep.subr.bf16.mxu0 %v3427
    %3463 = vmatpush1.bf16.msra.mxu0 %v3426
    %3464 = vmatprep.subr.bf16.mxu0 %v3429
    %3465 = vmatpush1.bf16.msra.mxu0 %v3428
    %3466 = vmatprep.subr.bf16.mxu0 %v3431
    %3467 = vmatpush1.bf16.msra.mxu0 %v3430
    %3468 = vmatprep.subr.bf16.mxu0 %v3433
    %3469 = vmatpush1.bf16.msra.mxu0 %v3432
    %3470 = vmatprep.subr.bf16.mxu0 %v3435
    %3471 = vmatpush1.bf16.msra.mxu0 %v3434
    %3472 = vmatprep.subr.bf16.mxu0 %v3437
    %3473 = vmatpush1.bf16.msra.mxu0 %v3436
    %3474 = vmatprep.subr.bf16.mxu0 %v3439
    %3475 = vmatpush1.bf16.msra.mxu0 %v3438
    %3476 = vmatprep.mubr.bf16.mxu0 %v3441
    %3477 = vmatmul.mubr.bf16.gmra.mrb[0].mxu0 %v3440
    %v3478 = vpop.f32.mrb[0].mxu0
    %v3479 = vadd.f32 0.0, %v3478
    %v3480 = vpop.f32.mrb[0].mxu0
    %v3481 = vadd.f32 0.0, %v3480
    %v3482 = vpop.f32.mrb[0].mxu0
    %v3483 = vadd.f32 0.0, %v3482
    %v3484 = vpop.f32.mrb[0].mxu0
    %v3485 = vadd.f32 0.0, %v3484
    %3486 = vmatprep.mubr.bf16.mxu0 %v3443
    %3487 = vmatmul.mubr.bf16.gmra.mrb[0].mxu0 %v3442
    %v3488 = vpop.f32.mrb[0].mxu0
    %v3489 = vadd.f32 0.0, %v3488
    %v3490 = vpop.f32.mrb[0].mxu0
    %v3491 = vadd.f32 0.0, %v3490
    %v3492 = vpop.f32.mrb[0].mxu0
    %v3493 = vadd.f32 0.0, %v3492
    %v3494 = vpop.f32.mrb[0].mxu0
    %v3495 = vadd.f32 0.0, %v3494
    %3496 = vdwg.mxu0
    %s3497 = scalar_lea.vmem [#allocation20], 18
    %v3498 = vld [vmem:[%s3497] ss:$8 sm:$0x3]
    %s3499 = scalar_lea.vmem [#allocation20], 19
    %v3500 = vld [vmem:[%s3499] ss:$8 sm:$0x3]
    %v3501 = vadd.f32 %v3479, %v3483
    %v3502 = vadd.f32 %v3501, %v3489
    %v3503 = vadd.f32 %v3502, %v3493
    %v3504 = vrot.slane %v3503, 4
    %v3505 = vadd.f32 %v3503, %v3504
    %v3506 = vrot.slane %v3505, 2
    %v3507 = vadd.f32 %v3505, %v3506
    %v3508 = vrot.slane %v3507, 1
    %v3509 = vadd.f32 %v3507, %v3508
    %v3510 = vadd.f32 %v3481, %v3485
    %v3511 = vadd.f32 %v3510, %v3491
    %v3512 = vadd.f32 %v3511, %v3495
    %v3513 = vrot.slane %v3512, 4
    %v3514 = vadd.f32 %v3512, %v3513
    %v3515 = vrot.slane %v3514, 2
    %v3516 = vadd.f32 %v3514, %v3515
    %v3517 = vrot.slane %v3516, 1
    %v3518 = vadd.f32 %v3516, %v3517
    %v3519 = vmul.f32 %v3509, %v394
    %v3520 = vmul.f32 %v3518, %v394
    %v3521 = vmul.f32 %v3479, %v3479
    %v3522 = vmul.f32 %v3481, %v3481
    %v3523 = vmul.f32 %v3483, %v3483
    %v3524 = vmul.f32 %v3485, %v3485
    %v3525 = vmul.f32 %v3489, %v3489
    %v3526 = vmul.f32 %v3491, %v3491
    %v3527 = vmul.f32 %v3493, %v3493
    %v3528 = vmul.f32 %v3495, %v3495
    %v3529 = vadd.f32 %v3521, %v3523
    %v3530 = vadd.f32 %v3529, %v3525
    %v3531 = vadd.f32 %v3530, %v3527
    %v3532 = vrot.slane %v3531, 4
    %v3533 = vadd.f32 %v3531, %v3532
    %v3534 = vrot.slane %v3533, 2
    %v3535 = vadd.f32 %v3533, %v3534
    %v3536 = vrot.slane %v3535, 1
    %v3537 = vadd.f32 %v3535, %v3536
    %v3538 = vadd.f32 %v3522, %v3524
    %v3539 = vadd.f32 %v3538, %v3526
    %v3540 = vadd.f32 %v3539, %v3528
    %v3541 = vrot.slane %v3540, 4
    %v3542 = vadd.f32 %v3540, %v3541
    %v3543 = vrot.slane %v3542, 2
    %v3544 = vadd.f32 %v3542, %v3543
    %v3545 = vrot.slane %v3544, 1
    %v3546 = vadd.f32 %v3544, %v3545
    %v3547 = vmul.f32 %v3537, %v394
    %v3548 = vmul.f32 %v3546, %v394
    %v3549 = vmul.f32 %v3519, %v3519
    %v3550 = vmul.f32 %v3520, %v3520
    %v3551 = vsub.f32 %v3547, %v3549
    %v3552 = vsub.f32 %v3548, %v3550
    %v3553 = vmax.f32 %v3551, 0.0
    %v3554 = vmax.f32 %v3552, 0.0
    %v3555 = vadd.f32 %v3553, 1e-05
    %v3556 = vadd.f32 %v3554, 1e-05
    %v3557 = vrsqrt.pop %v3555
    %v3558 = vrsqrt.pop %v3556
    %v3561 = vcombine.low %v3557, %v3558
    %v3563 = vunpack.c.l.s4 1966171168
    %v3564 = vunpack.c.0.s8 %v3563
    %v3565 = vlaneseq
    %v3566 = vshrl.u32 %v3565, 7
    %v3567 = vsub.s32 %v3564, %v3566
    %v3568 = vrot.slane %v3561, %v3567
    %v3570 = vunpack.c.l.s4 1966171168
    %v3571 = vunpack.c.0.s8 %v3570
    %v3572 = vlaneseq
    %v3573 = vshrl.u32 %v3572, 7
    %v3574 = vsub.s32 %v3571, %v3573
    %v3575 = vrot.slane %v3568, %v3574
    %v3577 = vmul.f32 %v3498, %v3575
    %v3579 = vlaneseq
    %v3580 = vshrl.u32 %v3579, 7
    %v3581 = vsub.s32 0, %v3580
    %v3582 = vrot.slane %v3577, %v3581
    %v3583 = vlaneseq
    %v3584 = vshrl.u32 %v3583, 7
    %v3585 = vsub.s32 1, %v3584
    %v3586 = vrot.slane %v3577, %v3585
    %v3589 = vmul.f32 %v3519, %v3582
    %v3590 = vmul.f32 %v3520, %v3586
    %v3593 = vcombine.low %v3589, %v3590
    %v3595 = vunpack.c.l.s4 1966171168
    %v3596 = vunpack.c.0.s8 %v3595
    %v3597 = vlaneseq
    %v3598 = vshrl.u32 %v3597, 7
    %v3599 = vsub.s32 %v3596, %v3598
    %v3600 = vrot.slane %v3593, %v3599
    %v3602 = vunpack.c.l.s4 1966171168
    %v3603 = vunpack.c.0.s8 %v3602
    %v3604 = vlaneseq
    %v3605 = vshrl.u32 %v3604, 7
    %v3606 = vsub.s32 %v3603, %v3605
    %v3607 = vrot.slane %v3600, %v3606
    %v3609 = vsub.f32 %v3500, %v3607
    %v3610 = vmul.f32 %v3479, %v3582
    %v3611 = vmul.f32 %v3481, %v3586
    %v3612 = vmul.f32 %v3483, %v3582
    %v3613 = vmul.f32 %v3485, %v3586
    %v3614 = vmul.f32 %v3489, %v3582
    %v3615 = vmul.f32 %v3491, %v3586
    %v3616 = vmul.f32 %v3493, %v3582
    %v3617 = vmul.f32 %v3495, %v3586
    %v3619 = vlaneseq
    %v3620 = vshrl.u32 %v3619, 7
    %v3621 = vsub.s32 0, %v3620
    %v3622 = vrot.slane %v3609, %v3621
    %v3623 = vlaneseq
    %v3624 = vshrl.u32 %v3623, 7
    %v3625 = vsub.s32 1, %v3624
    %v3626 = vrot.slane %v3609, %v3625
    %v3629 = vadd.f32 %v3610, %v3622
    %v3630 = vadd.f32 %v3611, %v3626
    %v3631 = vadd.f32 %v3612, %v3622
    %v3632 = vadd.f32 %v3613, %v3626
    %v3633 = vadd.f32 %v3614, %v3622
    %v3634 = vadd.f32 %v3615, %v3626
    %v3635 = vadd.f32 %v3616, %v3622
    %v3636 = vadd.f32 %v3617, %v3626
    %s3637 = scalar_lea.vmem [#allocation5], 1280
    %v3638 = vld [vmem:[%s3637] sm:$0xff]
    %v3639 = vld [vmem:[%s3637 + $0x8] sm:$0xff]
    %v3640 = vld [vmem:[%s3637 + $0x10] sm:$0xff]
    %v3641 = vld [vmem:[%s3637 + $0x18] sm:$0xff]
    %v3642 = vld [vmem:[%s3637 + $0x20] sm:$0xff]
    %v3643 = vld [vmem:[%s3637 + $0x28] sm:$0xff]
    %v3644 = vld [vmem:[%s3637 + $0x30] sm:$0xff]
    %v3645 = vld [vmem:[%s3637 + $0x38] sm:$0xff]
    %v3646 = vld [vmem:[%s3637 + $0x40] sm:$0xff]
    %v3647 = vld [vmem:[%s3637 + $0x48] sm:$0xff]
    %v3648 = vld [vmem:[%s3637 + $0x50] sm:$0xff]
    %v3649 = vld [vmem:[%s3637 + $0x58] sm:$0xff]
    %v3650 = vld [vmem:[%s3637 + $0x60] sm:$0xff]
    %v3651 = vld [vmem:[%s3637 + $0x68] sm:$0xff]
    %v3652 = vld [vmem:[%s3637 + $0x70] sm:$0xff]
    %v3653 = vld [vmem:[%s3637 + $0x78] sm:$0xff]
    %v3654 = vld [vmem:[%s3637 + $0x80] sm:$0xff]
    %v3655 = vld [vmem:[%s3637 + $0x88] sm:$0xff]
    %v3656 = vld [vmem:[%s3637 + $0x90] sm:$0xff]
    %v3657 = vld [vmem:[%s3637 + $0x98] sm:$0xff]
    %v3658 = vld [vmem:[%s3637 + $0xa0] sm:$0xff]
    %v3659 = vld [vmem:[%s3637 + $0xa8] sm:$0xff]
    %v3660 = vld [vmem:[%s3637 + $0xb0] sm:$0xff]
    %v3661 = vld [vmem:[%s3637 + $0xb8] sm:$0xff]
    %v3662 = vld [vmem:[%s3637 + $0xc0] sm:$0xff]
    %v3663 = vld [vmem:[%s3637 + $0xc8] sm:$0xff]
    %v3664 = vld [vmem:[%s3637 + $0xd0] sm:$0xff]
    %v3665 = vld [vmem:[%s3637 + $0xd8] sm:$0xff]
    %v3666 = vld [vmem:[%s3637 + $0xe0] sm:$0xff]
    %v3667 = vld [vmem:[%s3637 + $0xe8] sm:$0xff]
    %v3668 = vld [vmem:[%s3637 + $0xf0] sm:$0xff]
    %v3669 = vld [vmem:[%s3637 + $0xf8] sm:$0xff]
    %v3670 = vpack.c.bf16 %v3631, %v3629
    %v3671 = vpack.c.bf16 %v3632, %v3630
    %v3672 = vpack.c.bf16 %v3635, %v3633
    %v3673 = vpack.c.bf16 %v3636, %v3634
    %3674 = vmatprep.subr.bf16.mxu0 %v3639
    %3675 = vmatpush1.bf16.msra.mxu0 %v3638
    %3676 = vmatprep.subr.bf16.mxu0 %v3641
    %3677 = vmatpush1.bf16.msra.mxu0 %v3640
    %3678 = vmatprep.subr.bf16.mxu0 %v3643
    %3679 = vmatpush1.bf16.msra.mxu0 %v3642
    %3680 = vmatprep.subr.bf16.mxu0 %v3645
    %3681 = vmatpush1.bf16.msra.mxu0 %v3644
    %3682 = vmatprep.subr.bf16.mxu0 %v3647
    %3683 = vmatpush1.bf16.msra.mxu0 %v3646
    %3684 = vmatprep.subr.bf16.mxu0 %v3649
    %3685 = vmatpush1.bf16.msra.mxu0 %v3648
    %3686 = vmatprep.subr.bf16.mxu0 %v3651
    %3687 = vmatpush1.bf16.msra.mxu0 %v3650
    %3688 = vmatprep.subr.bf16.mxu0 %v3653
    %3689 = vmatpush1.bf16.msra.mxu0 %v3652
    %3690 = vmatprep.subr.bf16.mxu0 %v3655
    %3691 = vmatpush1.bf16.msra.mxu0 %v3654
    %3692 = vmatprep.subr.bf16.mxu0 %v3657
    %3693 = vmatpush1.bf16.msra.mxu0 %v3656
    %3694 = vmatprep.subr.bf16.mxu0 %v3659
    %3695 = vmatpush1.bf16.msra.mxu0 %v3658
    %3696 = vmatprep.subr.bf16.mxu0 %v3661
    %3697 = vmatpush1.bf16.msra.mxu0 %v3660
    %3698 = vmatprep.subr.bf16.mxu0 %v3663
    %3699 = vmatpush1.bf16.msra.mxu0 %v3662
    %3700 = vmatprep.subr.bf16.mxu0 %v3665
    %3701 = vmatpush1.bf16.msra.mxu0 %v3664
    %3702 = vmatprep.subr.bf16.mxu0 %v3667
    %3703 = vmatpush1.bf16.msra.mxu0 %v3666
    %3704 = vmatprep.subr.bf16.mxu0 %v3669
    %3705 = vmatpush1.bf16.msra.mxu0 %v3668
    %3706 = vmatprep.mubr.bf16.mxu0 %v3671
    %3707 = vmatmul.mubr.bf16.gmra.mrb[0].mxu0 %v3670
    %v3708 = vpop.f32.mrb[0].mxu0
    %v3709 = vadd.f32 0.0, %v3708
    %v3710 = vpop.f32.mrb[0].mxu0
    %v3711 = vadd.f32 0.0, %v3710
    %v3712 = vpop.f32.mrb[0].mxu0
    %v3713 = vadd.f32 0.0, %v3712
    %v3714 = vpop.f32.mrb[0].mxu0
    %v3715 = vadd.f32 0.0, %v3714
    %3716 = vmatprep.mubr.bf16.mxu0 %v3673
    %3717 = vmatmul.mubr.bf16.gmra.mrb[0].mxu0 %v3672
    %v3718 = vpop.f32.mrb[0].mxu0
    %v3719 = vadd.f32 0.0, %v3718
    %v3720 = vpop.f32.mrb[0].mxu0
    %v3721 = vadd.f32 0.0, %v3720
    %v3722 = vpop.f32.mrb[0].mxu0
    %v3723 = vadd.f32 0.0, %v3722
    %v3724 = vpop.f32.mrb[0].mxu0
    %v3725 = vadd.f32 0.0, %v3724
    %3726 = vdwg.mxu0
    %s3727 = scalar_lea.vmem [#allocation20], 20
    %v3728 = vld [vmem:[%s3727] ss:$8 sm:$0x3]
    %s3729 = scalar_lea.vmem [#allocation20], 21
    %v3730 = vld [vmem:[%s3729] ss:$8 sm:$0x3]
    %v3731 = vadd.f32 %v3709, %v3713
    %v3732 = vadd.f32 %v3731, %v3719
    %v3733 = vadd.f32 %v3732, %v3723
    %v3734 = vrot.slane %v3733, 4
    %v3735 = vadd.f32 %v3733, %v3734
    %v3736 = vrot.slane %v3735, 2
    %v3737 = vadd.f32 %v3735, %v3736
    %v3738 = vrot.slane %v3737, 1
    %v3739 = vadd.f32 %v3737, %v3738
    %v3740 = vadd.f32 %v3711, %v3715
    %v3741 = vadd.f32 %v3740, %v3721
    %v3742 = vadd.f32 %v3741, %v3725
    %v3743 = vrot.slane %v3742, 4
    %v3744 = vadd.f32 %v3742, %v3743
    %v3745 = vrot.slane %v3744, 2
    %v3746 = vadd.f32 %v3744, %v3745
    %v3747 = vrot.slane %v3746, 1
    %v3748 = vadd.f32 %v3746, %v3747
    %v3749 = vmul.f32 %v3739, %v394
    %v3750 = vmul.f32 %v3748, %v394
    %v3751 = vmul.f32 %v3709, %v3709
    %v3752 = vmul.f32 %v3711, %v3711
    %v3753 = vmul.f32 %v3713, %v3713
    %v3754 = vmul.f32 %v3715, %v3715
    %v3755 = vmul.f32 %v3719, %v3719
    %v3756 = vmul.f32 %v3721, %v3721
    %v3757 = vmul.f32 %v3723, %v3723
    %v3758 = vmul.f32 %v3725, %v3725
    %v3759 = vadd.f32 %v3751, %v3753
    %v3760 = vadd.f32 %v3759, %v3755
    %v3761 = vadd.f32 %v3760, %v3757
    %v3762 = vrot.slane %v3761, 4
    %v3763 = vadd.f32 %v3761, %v3762
    %v3764 = vrot.slane %v3763, 2
    %v3765 = vadd.f32 %v3763, %v3764
    %v3766 = vrot.slane %v3765, 1
    %v3767 = vadd.f32 %v3765, %v3766
    %v3768 = vadd.f32 %v3752, %v3754
    %v3769 = vadd.f32 %v3768, %v3756
    %v3770 = vadd.f32 %v3769, %v3758
    %v3771 = vrot.slane %v3770, 4
    %v3772 = vadd.f32 %v3770, %v3771
    %v3773 = vrot.slane %v3772, 2
    %v3774 = vadd.f32 %v3772, %v3773
    %v3775 = vrot.slane %v3774, 1
    %v3776 = vadd.f32 %v3774, %v3775
    %v3777 = vmul.f32 %v3767, %v394
    %v3778 = vmul.f32 %v3776, %v394
    %v3779 = vmul.f32 %v3749, %v3749
    %v3780 = vmul.f32 %v3750, %v3750
    %v3781 = vsub.f32 %v3777, %v3779
    %v3782 = vsub.f32 %v3778, %v3780
    %v3783 = vmax.f32 %v3781, 0.0
    %v3784 = vmax.f32 %v3782, 0.0
    %v3785 = vadd.f32 %v3783, 1e-05
    %v3786 = vadd.f32 %v3784, 1e-05
    %v3787 = vrsqrt.pop %v3785
    %v3788 = vrsqrt.pop %v3786
    %v3791 = vcombine.low %v3787, %v3788
    %v3793 = vunpack.c.l.s4 1966171168
    %v3794 = vunpack.c.0.s8 %v3793
    %v3795 = vlaneseq
    %v3796 = vshrl.u32 %v3795, 7
    %v3797 = vsub.s32 %v3794, %v3796
    %v3798 = vrot.slane %v3791, %v3797
    %v3800 = vunpack.c.l.s4 1966171168
    %v3801 = vunpack.c.0.s8 %v3800
    %v3802 = vlaneseq
    %v3803 = vshrl.u32 %v3802, 7
    %v3804 = vsub.s32 %v3801, %v3803
    %v3805 = vrot.slane %v3798, %v3804
    %v3807 = vmul.f32 %v3728, %v3805
    %v3809 = vlaneseq
    %v3810 = vshrl.u32 %v3809, 7
    %v3811 = vsub.s32 0, %v3810
    %v3812 = vrot.slane %v3807, %v3811
    %v3813 = vlaneseq
    %v3814 = vshrl.u32 %v3813, 7
    %v3815 = vsub.s32 1, %v3814
    %v3816 = vrot.slane %v3807, %v3815
    %v3819 = vmul.f32 %v3749, %v3812
    %v3820 = vmul.f32 %v3750, %v3816
    %v3823 = vcombine.low %v3819, %v3820
    %v3825 = vunpack.c.l.s4 1966171168
    %v3826 = vunpack.c.0.s8 %v3825
    %v3827 = vlaneseq
    %v3828 = vshrl.u32 %v3827, 7
    %v3829 = vsub.s32 %v3826, %v3828
    %v3830 = vrot.slane %v3823, %v3829
    %v3832 = vunpack.c.l.s4 1966171168
    %v3833 = vunpack.c.0.s8 %v3832
    %v3834 = vlaneseq
    %v3835 = vshrl.u32 %v3834, 7
    %v3836 = vsub.s32 %v3833, %v3835
    %v3837 = vrot.slane %v3830, %v3836
    %v3839 = vsub.f32 %v3730, %v3837
    %v3840 = vmul.f32 %v3709, %v3812
    %v3841 = vmul.f32 %v3711, %v3816
    %v3842 = vmul.f32 %v3713, %v3812
    %v3843 = vmul.f32 %v3715, %v3816
    %v3844 = vmul.f32 %v3719, %v3812
    %v3845 = vmul.f32 %v3721, %v3816
    %v3846 = vmul.f32 %v3723, %v3812
    %v3847 = vmul.f32 %v3725, %v3816
    %v3849 = vlaneseq
    %v3850 = vshrl.u32 %v3849, 7
    %v3851 = vsub.s32 0, %v3850
    %v3852 = vrot.slane %v3839, %v3851
    %v3853 = vlaneseq
    %v3854 = vshrl.u32 %v3853, 7
    %v3855 = vsub.s32 1, %v3854
    %v3856 = vrot.slane %v3839, %v3855
    %v3859 = vadd.f32 %v3840, %v3852
    %v3860 = vadd.f32 %v3841, %v3856
    %v3861 = vadd.f32 %v3842, %v3852
    %v3862 = vadd.f32 %v3843, %v3856
    %v3863 = vadd.f32 %v3844, %v3852
    %v3864 = vadd.f32 %v3845, %v3856
    %v3865 = vadd.f32 %v3846, %v3852
    %v3866 = vadd.f32 %v3847, %v3856
    %v3867 = vmax.f32 %v3859, 0.0
    %v3868 = vmax.f32 %v3860, 0.0
    %v3869 = vmax.f32 %v3861, 0.0
    %v3870 = vmax.f32 %v3862, 0.0
    %v3871 = vmax.f32 %v3863, 0.0
    %v3872 = vmax.f32 %v3864, 0.0
    %v3873 = vmax.f32 %v3865, 0.0
    %v3874 = vmax.f32 %v3866, 0.0
    %s3875 = scalar_lea.vmem [#allocation5], 1536
    %v3876 = vld [vmem:[%s3875] sm:$0xff]
    %v3877 = vld [vmem:[%s3875 + $0x8] sm:$0xff]
    %v3878 = vld [vmem:[%s3875 + $0x10] sm:$0xff]
    %v3879 = vld [vmem:[%s3875 + $0x18] sm:$0xff]
    %v3880 = vld [vmem:[%s3875 + $0x20] sm:$0xff]
    %v3881 = vld [vmem:[%s3875 + $0x28] sm:$0xff]
    %v3882 = vld [vmem:[%s3875 + $0x30] sm:$0xff]
    %v3883 = vld [vmem:[%s3875 + $0x38] sm:$0xff]
    %v3884 = vld [vmem:[%s3875 + $0x40] sm:$0xff]
    %v3885 = vld [vmem:[%s3875 + $0x48] sm:$0xff]
    %v3886 = vld [vmem:[%s3875 + $0x50] sm:$0xff]
    %v3887 = vld [vmem:[%s3875 + $0x58] sm:$0xff]
    %v3888 = vld [vmem:[%s3875 + $0x60] sm:$0xff]
    %v3889 = vld [vmem:[%s3875 + $0x68] sm:$0xff]
    %v3890 = vld [vmem:[%s3875 + $0x70] sm:$0xff]
    %v3891 = vld [vmem:[%s3875 + $0x78] sm:$0xff]
    %v3892 = vld [vmem:[%s3875 + $0x80] sm:$0xff]
    %v3893 = vld [vmem:[%s3875 + $0x88] sm:$0xff]
    %v3894 = vld [vmem:[%s3875 + $0x90] sm:$0xff]
    %v3895 = vld [vmem:[%s3875 + $0x98] sm:$0xff]
    %v3896 = vld [vmem:[%s3875 + $0xa0] sm:$0xff]
    %v3897 = vld [vmem:[%s3875 + $0xa8] sm:$0xff]
    %v3898 = vld [vmem:[%s3875 + $0xb0] sm:$0xff]
    %v3899 = vld [vmem:[%s3875 + $0xb8] sm:$0xff]
    %v3900 = vld [vmem:[%s3875 + $0xc0] sm:$0xff]
    %v3901 = vld [vmem:[%s3875 + $0xc8] sm:$0xff]
    %v3902 = vld [vmem:[%s3875 + $0xd0] sm:$0xff]
    %v3903 = vld [vmem:[%s3875 + $0xd8] sm:$0xff]
    %v3904 = vld [vmem:[%s3875 + $0xe0] sm:$0xff]
    %v3905 = vld [vmem:[%s3875 + $0xe8] sm:$0xff]
    %v3906 = vld [vmem:[%s3875 + $0xf0] sm:$0xff]
    %v3907 = vld [vmem:[%s3875 + $0xf8] sm:$0xff]
    %v3908 = vpack.c.bf16 %v3869, %v3867
    %v3909 = vpack.c.bf16 %v3870, %v3868
    %v3910 = vpack.c.bf16 %v3873, %v3871
    %v3911 = vpack.c.bf16 %v3874, %v3872
    %3912 = vmatprep.subr.bf16.mxu0 %v3877
    %3913 = vmatpush1.bf16.msra.mxu0 %v3876
    %3914 = vmatprep.subr.bf16.mxu0 %v3879
    %3915 = vmatpush1.bf16.msra.mxu0 %v3878
    %3916 = vmatprep.subr.bf16.mxu0 %v3881
    %3917 = vmatpush1.bf16.msra.mxu0 %v3880
    %3918 = vmatprep.subr.bf16.mxu0 %v3883
    %3919 = vmatpush1.bf16.msra.mxu0 %v3882
    %3920 = vmatprep.subr.bf16.mxu0 %v3885
    %3921 = vmatpush1.bf16.msra.mxu0 %v3884
    %3922 = vmatprep.subr.bf16.mxu0 %v3887
    %3923 = vmatpush1.bf16.msra.mxu0 %v3886
    %3924 = vmatprep.subr.bf16.mxu0 %v3889
    %3925 = vmatpush1.bf16.msra.mxu0 %v3888
    %3926 = vmatprep.subr.bf16.mxu0 %v3891
    %3927 = vmatpush1.bf16.msra.mxu0 %v3890
    %3928 = vmatprep.subr.bf16.mxu0 %v3893
    %3929 = vmatpush1.bf16.msra.mxu0 %v3892
    %3930 = vmatprep.subr.bf16.mxu0 %v3895
    %3931 = vmatpush1.bf16.msra.mxu0 %v3894
    %3932 = vmatprep.subr.bf16.mxu0 %v3897
    %3933 = vmatpush1.bf16.msra.mxu0 %v3896
    %3934 = vmatprep.subr.bf16.mxu0 %v3899
    %3935 = vmatpush1.bf16.msra.mxu0 %v3898
    %3936 = vmatprep.subr.bf16.mxu0 %v3901
    %3937 = vmatpush1.bf16.msra.mxu0 %v3900
    %3938 = vmatprep.subr.bf16.mxu0 %v3903
    %3939 = vmatpush1.bf16.msra.mxu0 %v3902
    %3940 = vmatprep.subr.bf16.mxu0 %v3905
    %3941 = vmatpush1.bf16.msra.mxu0 %v3904
    %3942 = vmatprep.subr.bf16.mxu0 %v3907
    %3943 = vmatpush1.bf16.msra.mxu0 %v3906
    %3944 = vmatprep.mubr.bf16.mxu0 %v3909
    %3945 = vmatmul.mubr.bf16.gmra.mrb[0].mxu0 %v3908
    %v3946 = vpop.f32.mrb[0].mxu0
    %v3947 = vadd.f32 0.0, %v3946
    %v3948 = vpop.f32.mrb[0].mxu0
    %v3949 = vadd.f32 0.0, %v3948
    %v3950 = vpop.f32.mrb[0].mxu0
    %v3951 = vadd.f32 0.0, %v3950
    %v3952 = vpop.f32.mrb[0].mxu0
    %v3953 = vadd.f32 0.0, %v3952
    %3954 = vmatprep.mubr.bf16.mxu0 %v3911
    %3955 = vmatmul.mubr.bf16.gmra.mrb[0].mxu0 %v3910
    %v3956 = vpop.f32.mrb[0].mxu0
    %v3957 = vadd.f32 0.0, %v3956
    %v3958 = vpop.f32.mrb[0].mxu0
    %v3959 = vadd.f32 0.0, %v3958
    %v3960 = vpop.f32.mrb[0].mxu0
    %v3961 = vadd.f32 0.0, %v3960
    %v3962 = vpop.f32.mrb[0].mxu0
    %v3963 = vadd.f32 0.0, %v3962
    %3964 = vdwg.mxu0
    %s3965 = scalar_lea.vmem [#allocation20], 22
    %v3966 = vld [vmem:[%s3965] ss:$8 sm:$0x3]
    %s3967 = scalar_lea.vmem [#allocation20], 23
    %v3968 = vld [vmem:[%s3967] ss:$8 sm:$0x3]
    %v3969 = vadd.f32 %v3947, %v3951
    %v3970 = vadd.f32 %v3969, %v3957
    %v3971 = vadd.f32 %v3970, %v3961
    %v3972 = vrot.slane %v3971, 4
    %v3973 = vadd.f32 %v3971, %v3972
    %v3974 = vrot.slane %v3973, 2
    %v3975 = vadd.f32 %v3973, %v3974
    %v3976 = vrot.slane %v3975, 1
    %v3977 = vadd.f32 %v3975, %v3976
    %v3978 = vadd.f32 %v3949, %v3953
    %v3979 = vadd.f32 %v3978, %v3959
    %v3980 = vadd.f32 %v3979, %v3963
    %v3981 = vrot.slane %v3980, 4
    %v3982 = vadd.f32 %v3980, %v3981
    %v3983 = vrot.slane %v3982, 2
    %v3984 = vadd.f32 %v3982, %v3983
    %v3985 = vrot.slane %v3984, 1
    %v3986 = vadd.f32 %v3984, %v3985
    %v3987 = vmul.f32 %v3977, %v394
    %v3988 = vmul.f32 %v3986, %v394
    %v3989 = vmul.f32 %v3947, %v3947
    %v3990 = vmul.f32 %v3949, %v3949
    %v3991 = vmul.f32 %v3951, %v3951
    %v3992 = vmul.f32 %v3953, %v3953
    %v3993 = vmul.f32 %v3957, %v3957
    %v3994 = vmul.f32 %v3959, %v3959
    %v3995 = vmul.f32 %v3961, %v3961
    %v3996 = vmul.f32 %v3963, %v3963
    %v3997 = vadd.f32 %v3989, %v3991
    %v3998 = vadd.f32 %v3997, %v3993
    %v3999 = vadd.f32 %v3998, %v3995
    %v4000 = vrot.slane %v3999, 4
    %v4001 = vadd.f32 %v3999, %v4000
    %v4002 = vrot.slane %v4001, 2
    %v4003 = vadd.f32 %v4001, %v4002
    %v4004 = vrot.slane %v4003, 1
    %v4005 = vadd.f32 %v4003, %v4004
    %v4006 = vadd.f32 %v3990, %v3992
    %v4007 = vadd.f32 %v4006, %v3994
    %v4008 = vadd.f32 %v4007, %v3996
    %v4009 = vrot.slane %v4008, 4
    %v4010 = vadd.f32 %v4008, %v4009
    %v4011 = vrot.slane %v4010, 2
    %v4012 = vadd.f32 %v4010, %v4011
    %v4013 = vrot.slane %v4012, 1
    %v4014 = vadd.f32 %v4012, %v4013
    %v4015 = vmul.f32 %v4005, %v394
    %v4016 = vmul.f32 %v4014, %v394
    %v4017 = vmul.f32 %v3987, %v3987
    %v4018 = vmul.f32 %v3988, %v3988
    %v4019 = vsub.f32 %v4015, %v4017
    %v4020 = vsub.f32 %v4016, %v4018
    %v4021 = vmax.f32 %v4019, 0.0
    %v4022 = vmax.f32 %v4020, 0.0
    %v4023 = vadd.f32 %v4021, 1e-05
    %v4024 = vadd.f32 %v4022, 1e-05
    %v4025 = vrsqrt.pop %v4023
    %v4026 = vrsqrt.pop %v4024
    %v4029 = vcombine.low %v4025, %v4026
    %v4031 = vunpack.c.l.s4 1966171168
    %v4032 = vunpack.c.0.s8 %v4031
    %v4033 = vlaneseq
    %v4034 = vshrl.u32 %v4033, 7
    %v4035 = vsub.s32 %v4032, %v4034
    %v4036 = vrot.slane %v4029, %v4035
    %v4038 = vunpack.c.l.s4 1966171168
    %v4039 = vunpack.c.0.s8 %v4038
    %v4040 = vlaneseq
    %v4041 = vshrl.u32 %v4040, 7
    %v4042 = vsub.s32 %v4039, %v4041
    %v4043 = vrot.slane %v4036, %v4042
    %v4045 = vmul.f32 %v3966, %v4043
    %v4047 = vlaneseq
    %v4048 = vshrl.u32 %v4047, 7
    %v4049 = vsub.s32 0, %v4048
    %v4050 = vrot.slane %v4045, %v4049
    %v4051 = vlaneseq
    %v4052 = vshrl.u32 %v4051, 7
    %v4053 = vsub.s32 1, %v4052
    %v4054 = vrot.slane %v4045, %v4053
    %v4057 = vmul.f32 %v3987, %v4050
    %v4058 = vmul.f32 %v3988, %v4054
    %v4061 = vcombine.low %v4057, %v4058
    %v4063 = vunpack.c.l.s4 1966171168
    %v4064 = vunpack.c.0.s8 %v4063
    %v4065 = vlaneseq
    %v4066 = vshrl.u32 %v4065, 7
    %v4067 = vsub.s32 %v4064, %v4066
    %v4068 = vrot.slane %v4061, %v4067
    %v4070 = vunpack.c.l.s4 1966171168
    %v4071 = vunpack.c.0.s8 %v4070
    %v4072 = vlaneseq
    %v4073 = vshrl.u32 %v4072, 7
    %v4074 = vsub.s32 %v4071, %v4073
    %v4075 = vrot.slane %v4068, %v4074
    %v4077 = vsub.f32 %v3968, %v4075
    %v4078 = vmul.f32 %v3947, %v4050
    %v4079 = vmul.f32 %v3949, %v4054
    %v4080 = vmul.f32 %v3951, %v4050
    %v4081 = vmul.f32 %v3953, %v4054
    %v4082 = vmul.f32 %v3957, %v4050
    %v4083 = vmul.f32 %v3959, %v4054
    %v4084 = vmul.f32 %v3961, %v4050
    %v4085 = vmul.f32 %v3963, %v4054
    %v4087 = vlaneseq
    %v4088 = vshrl.u32 %v4087, 7
    %v4089 = vsub.s32 0, %v4088
    %v4090 = vrot.slane %v4077, %v4089
    %v4091 = vlaneseq
    %v4092 = vshrl.u32 %v4091, 7
    %v4093 = vsub.s32 1, %v4092
    %v4094 = vrot.slane %v4077, %v4093
    %v4097 = vadd.f32 %v4078, %v4090
    %v4098 = vadd.f32 %v4079, %v4094
    %v4099 = vadd.f32 %v4080, %v4090
    %v4100 = vadd.f32 %v4081, %v4094
    %v4101 = vadd.f32 %v4082, %v4090
    %v4102 = vadd.f32 %v4083, %v4094
    %v4103 = vadd.f32 %v4084, %v4090
    %v4104 = vadd.f32 %v4085, %v4094
    %s4105 = scalar_lea.vmem [#allocation5], 1792
    %v4106 = vld [vmem:[%s4105] sm:$0xff]
    %v4107 = vld [vmem:[%s4105 + $0x8] sm:$0xff]
    %v4108 = vld [vmem:[%s4105 + $0x10] sm:$0xff]
    %v4109 = vld [vmem:[%s4105 + $0x18] sm:$0xff]
    %v4110 = vld [vmem:[%s4105 + $0x20] sm:$0xff]
    %v4111 = vld [vmem:[%s4105 + $0x28] sm:$0xff]
    %v4112 = vld [vmem:[%s4105 + $0x30] sm:$0xff]
    %v4113 = vld [vmem:[%s4105 + $0x38] sm:$0xff]
    %v4114 = vld [vmem:[%s4105 + $0x40] sm:$0xff]
    %v4115 = vld [vmem:[%s4105 + $0x48] sm:$0xff]
    %v4116 = vld [vmem:[%s4105 + $0x50] sm:$0xff]
    %v4117 = vld [vmem:[%s4105 + $0x58] sm:$0xff]
    %v4118 = vld [vmem:[%s4105 + $0x60] sm:$0xff]
    %v4119 = vld [vmem:[%s4105 + $0x68] sm:$0xff]
    %v4120 = vld [vmem:[%s4105 + $0x70] sm:$0xff]
    %v4121 = vld [vmem:[%s4105 + $0x78] sm:$0xff]
    %v4122 = vld [vmem:[%s4105 + $0x80] sm:$0xff]
    %v4123 = vld [vmem:[%s4105 + $0x88] sm:$0xff]
    %v4124 = vld [vmem:[%s4105 + $0x90] sm:$0xff]
    %v4125 = vld [vmem:[%s4105 + $0x98] sm:$0xff]
    %v4126 = vld [vmem:[%s4105 + $0xa0] sm:$0xff]
    %v4127 = vld [vmem:[%s4105 + $0xa8] sm:$0xff]
    %v4128 = vld [vmem:[%s4105 + $0xb0] sm:$0xff]
    %v4129 = vld [vmem:[%s4105 + $0xb8] sm:$0xff]
    %v4130 = vld [vmem:[%s4105 + $0xc0] sm:$0xff]
    %v4131 = vld [vmem:[%s4105 + $0xc8] sm:$0xff]
    %v4132 = vld [vmem:[%s4105 + $0xd0] sm:$0xff]
    %v4133 = vld [vmem:[%s4105 + $0xd8] sm:$0xff]
    %v4134 = vld [vmem:[%s4105 + $0xe0] sm:$0xff]
    %v4135 = vld [vmem:[%s4105 + $0xe8] sm:$0xff]
    %v4136 = vld [vmem:[%s4105 + $0xf0] sm:$0xff]
    %v4137 = vld [vmem:[%s4105 + $0xf8] sm:$0xff]
    %v4138 = vpack.c.bf16 %v4099, %v4097
    %v4139 = vpack.c.bf16 %v4100, %v4098
    %v4140 = vpack.c.bf16 %v4103, %v4101
    %v4141 = vpack.c.bf16 %v4104, %v4102
    %4142 = vmatprep.subr.bf16.mxu0 %v4107
    %4143 = vmatpush1.bf16.msra.mxu0 %v4106
    %4144 = vmatprep.subr.bf16.mxu0 %v4109
    %4145 = vmatpush1.bf16.msra.mxu0 %v4108
    %4146 = vmatprep.subr.bf16.mxu0 %v4111
    %4147 = vmatpush1.bf16.msra.mxu0 %v4110
    %4148 = vmatprep.subr.bf16.mxu0 %v4113
    %4149 = vmatpush1.bf16.msra.mxu0 %v4112
    %4150 = vmatprep.subr.bf16.mxu0 %v4115
    %4151 = vmatpush1.bf16.msra.mxu0 %v4114
    %4152 = vmatprep.subr.bf16.mxu0 %v4117
    %4153 = vmatpush1.bf16.msra.mxu0 %v4116
    %4154 = vmatprep.subr.bf16.mxu0 %v4119
    %4155 = vmatpush1.bf16.msra.mxu0 %v4118
    %4156 = vmatprep.subr.bf16.mxu0 %v4121
    %4157 = vmatpush1.bf16.msra.mxu0 %v4120
    %4158 = vmatprep.subr.bf16.mxu0 %v4123
    %4159 = vmatpush1.bf16.msra.mxu0 %v4122
    %4160 = vmatprep.subr.bf16.mxu0 %v4125
    %4161 = vmatpush1.bf16.msra.mxu0 %v4124
    %4162 = vmatprep.subr.bf16.mxu0 %v4127
    %4163 = vmatpush1.bf16.msra.mxu0 %v4126
    %4164 = vmatprep.subr.bf16.mxu0 %v4129
    %4165 = vmatpush1.bf16.msra.mxu0 %v4128
    %4166 = vmatprep.subr.bf16.mxu0 %v4131
    %4167 = vmatpush1.bf16.msra.mxu0 %v4130
    %4168 = vmatprep.subr.bf16.mxu0 %v4133
    %4169 = vmatpush1.bf16.msra.mxu0 %v4132
    %4170 = vmatprep.subr.bf16.mxu0 %v4135
    %4171 = vmatpush1.bf16.msra.mxu0 %v4134
    %4172 = vmatprep.subr.bf16.mxu0 %v4137
    %4173 = vmatpush1.bf16.msra.mxu0 %v4136
    %4174 = vmatprep.mubr.bf16.mxu0 %v4139
    %4175 = vmatmul.mubr.bf16.gmra.mrb[0].mxu0 %v4138
    %v4176 = vpop.f32.mrb[0].mxu0
    %v4177 = vadd.f32 0.0, %v4176
    %v4178 = vpop.f32.mrb[0].mxu0
    %v4179 = vadd.f32 0.0, %v4178
    %v4180 = vpop.f32.mrb[0].mxu0
    %v4181 = vadd.f32 0.0, %v4180
    %v4182 = vpop.f32.mrb[0].mxu0
    %v4183 = vadd.f32 0.0, %v4182
    %4184 = vmatprep.mubr.bf16.mxu0 %v4141
    %4185 = vmatmul.mubr.bf16.gmra.mrb[0].mxu0 %v4140
    %v4186 = vpop.f32.mrb[0].mxu0
    %v4187 = vadd.f32 0.0, %v4186
    %v4188 = vpop.f32.mrb[0].mxu0
    %v4189 = vadd.f32 0.0, %v4188
    %v4190 = vpop.f32.mrb[0].mxu0
    %v4191 = vadd.f32 0.0, %v4190
    %v4192 = vpop.f32.mrb[0].mxu0
    %v4193 = vadd.f32 0.0, %v4192
    %4194 = vdwg.mxu0
    %s4195 = scalar_lea.vmem [#allocation20], 32
    %v4196 = vld [vmem:[%s4195] ss:$8 sm:$0x3]
    %s4197 = scalar_lea.vmem [#allocation20], 33
    %v4198 = vld [vmem:[%s4197] ss:$8 sm:$0x3]
    %v4199 = vadd.f32 %v4177, %v4181
    %v4200 = vadd.f32 %v4199, %v4187
    %v4201 = vadd.f32 %v4200, %v4191
    %v4202 = vrot.slane %v4201, 4
    %v4203 = vadd.f32 %v4201, %v4202
    %v4204 = vrot.slane %v4203, 2
    %v4205 = vadd.f32 %v4203, %v4204
    %v4206 = vrot.slane %v4205, 1
    %v4207 = vadd.f32 %v4205, %v4206
    %v4208 = vadd.f32 %v4179, %v4183
    %v4209 = vadd.f32 %v4208, %v4189
    %v4210 = vadd.f32 %v4209, %v4193
    %v4211 = vrot.slane %v4210, 4
    %v4212 = vadd.f32 %v4210, %v4211
    %v4213 = vrot.slane %v4212, 2
    %v4214 = vadd.f32 %v4212, %v4213
    %v4215 = vrot.slane %v4214, 1
    %v4216 = vadd.f32 %v4214, %v4215
    %v4217 = vmul.f32 %v4207, %v394
    %v4218 = vmul.f32 %v4216, %v394
    %v4219 = vmul.f32 %v4177, %v4177
    %v4220 = vmul.f32 %v4179, %v4179
    %v4221 = vmul.f32 %v4181, %v4181
    %v4222 = vmul.f32 %v4183, %v4183
    %v4223 = vmul.f32 %v4187, %v4187
    %v4224 = vmul.f32 %v4189, %v4189
    %v4225 = vmul.f32 %v4191, %v4191
    %v4226 = vmul.f32 %v4193, %v4193
    %v4227 = vadd.f32 %v4219, %v4221
    %v4228 = vadd.f32 %v4227, %v4223
    %v4229 = vadd.f32 %v4228, %v4225
    %v4230 = vrot.slane %v4229, 4
    %v4231 = vadd.f32 %v4229, %v4230
    %v4232 = vrot.slane %v4231, 2
    %v4233 = vadd.f32 %v4231, %v4232
    %v4234 = vrot.slane %v4233, 1
    %v4235 = vadd.f32 %v4233, %v4234
    %v4236 = vadd.f32 %v4220, %v4222
    %v4237 = vadd.f32 %v4236, %v4224
    %v4238 = vadd.f32 %v4237, %v4226
    %v4239 = vrot.slane %v4238, 4
    %v4240 = vadd.f32 %v4238, %v4239
    %v4241 = vrot.slane %v4240, 2
    %v4242 = vadd.f32 %v4240, %v4241
    %v4243 = vrot.slane %v4242, 1
    %v4244 = vadd.f32 %v4242, %v4243
    %v4245 = vmul.f32 %v4235, %v394
    %v4246 = vmul.f32 %v4244, %v394
    %v4247 = vmul.f32 %v4217, %v4217
    %v4248 = vmul.f32 %v4218, %v4218
    %v4249 = vsub.f32 %v4245, %v4247
    %v4250 = vsub.f32 %v4246, %v4248
    %v4251 = vmax.f32 %v4249, 0.0
    %v4252 = vmax.f32 %v4250, 0.0
    %v4253 = vadd.f32 %v4251, 1e-05
    %v4254 = vadd.f32 %v4252, 1e-05
    %v4255 = vrsqrt.pop %v4253
    %v4256 = vrsqrt.pop %v4254
    %v4259 = vcombine.low %v4255, %v4256
    %v4261 = vunpack.c.l.s4 1966171168
    %v4262 = vunpack.c.0.s8 %v4261
    %v4263 = vlaneseq
    %v4264 = vshrl.u32 %v4263, 7
    %v4265 = vsub.s32 %v4262, %v4264
    %v4266 = vrot.slane %v4259, %v4265
    %v4268 = vunpack.c.l.s4 1966171168
    %v4269 = vunpack.c.0.s8 %v4268
    %v4270 = vlaneseq
    %v4271 = vshrl.u32 %v4270, 7
    %v4272 = vsub.s32 %v4269, %v4271
    %v4273 = vrot.slane %v4266, %v4272
    %v4275 = vmul.f32 %v4196, %v4273
    %v4277 = vlaneseq
    %v4278 = vshrl.u32 %v4277, 7
    %v4279 = vsub.s32 0, %v4278
    %v4280 = vrot.slane %v4275, %v4279
    %v4281 = vlaneseq
    %v4282 = vshrl.u32 %v4281, 7
    %v4283 = vsub.s32 1, %v4282
    %v4284 = vrot.slane %v4275, %v4283
    %v4287 = vmul.f32 %v4217, %v4280
    %v4288 = vmul.f32 %v4218, %v4284
    %v4291 = vcombine.low %v4287, %v4288
    %v4293 = vunpack.c.l.s4 1966171168
    %v4294 = vunpack.c.0.s8 %v4293
    %v4295 = vlaneseq
    %v4296 = vshrl.u32 %v4295, 7
    %v4297 = vsub.s32 %v4294, %v4296
    %v4298 = vrot.slane %v4291, %v4297
    %v4300 = vunpack.c.l.s4 1966171168
    %v4301 = vunpack.c.0.s8 %v4300
    %v4302 = vlaneseq
    %v4303 = vshrl.u32 %v4302, 7
    %v4304 = vsub.s32 %v4301, %v4303
    %v4305 = vrot.slane %v4298, %v4304
    %v4307 = vsub.f32 %v4198, %v4305
    %v4308 = vmul.f32 %v4177, %v4280
    %v4309 = vmul.f32 %v4179, %v4284
    %v4310 = vmul.f32 %v4181, %v4280
    %v4311 = vmul.f32 %v4183, %v4284
    %v4312 = vmul.f32 %v4187, %v4280
    %v4313 = vmul.f32 %v4189, %v4284
    %v4314 = vmul.f32 %v4191, %v4280
    %v4315 = vmul.f32 %v4193, %v4284
    %v4317 = vlaneseq
    %v4318 = vshrl.u32 %v4317, 7
    %v4319 = vsub.s32 0, %v4318
    %v4320 = vrot.slane %v4307, %v4319
    %v4321 = vlaneseq
    %v4322 = vshrl.u32 %v4321, 7
    %v4323 = vsub.s32 1, %v4322
    %v4324 = vrot.slane %v4307, %v4323
    %v4327 = vadd.f32 %v4308, %v4320
    %v4328 = vadd.f32 %v4309, %v4324
    %v4329 = vadd.f32 %v4310, %v4320
    %v4330 = vadd.f32 %v4311, %v4324
    %v4331 = vadd.f32 %v4312, %v4320
    %v4332 = vadd.f32 %v4313, %v4324
    %v4333 = vadd.f32 %v4314, %v4320
    %v4334 = vadd.f32 %v4315, %v4324
    %v4335 = vmax.f32 %v4327, 0.0
    %v4336 = vmax.f32 %v4328, 0.0
    %v4337 = vmax.f32 %v4329, 0.0
    %v4338 = vmax.f32 %v4330, 0.0
    %v4339 = vmax.f32 %v4331, 0.0
    %v4340 = vmax.f32 %v4332, 0.0
    %v4341 = vmax.f32 %v4333, 0.0
    %v4342 = vmax.f32 %v4334, 0.0
    %s4343 = scalar_lea.vmem [#allocation5], 2048
    %v4344 = vld [vmem:[%s4343] sm:$0xff]
    %v4345 = vld [vmem:[%s4343 + $0x8] sm:$0xff]
    %v4346 = vld [vmem:[%s4343 + $0x10] sm:$0xff]
    %v4347 = vld [vmem:[%s4343 + $0x18] sm:$0xff]
    %v4348 = vld [vmem:[%s4343 + $0x20] sm:$0xff]
    %v4349 = vld [vmem:[%s4343 + $0x28] sm:$0xff]
    %v4350 = vld [vmem:[%s4343 + $0x30] sm:$0xff]
    %v4351 = vld [vmem:[%s4343 + $0x38] sm:$0xff]
    %v4352 = vld [vmem:[%s4343 + $0x40] sm:$0xff]
    %v4353 = vld [vmem:[%s4343 + $0x48] sm:$0xff]
    %v4354 = vld [vmem:[%s4343 + $0x50] sm:$0xff]
    %v4355 = vld [vmem:[%s4343 + $0x58] sm:$0xff]
    %v4356 = vld [vmem:[%s4343 + $0x60] sm:$0xff]
    %v4357 = vld [vmem:[%s4343 + $0x68] sm:$0xff]
    %v4358 = vld [vmem:[%s4343 + $0x70] sm:$0xff]
    %v4359 = vld [vmem:[%s4343 + $0x78] sm:$0xff]
    %v4360 = vld [vmem:[%s4343 + $0x80] sm:$0xff]
    %v4361 = vld [vmem:[%s4343 + $0x88] sm:$0xff]
    %v4362 = vld [vmem:[%s4343 + $0x90] sm:$0xff]
    %v4363 = vld [vmem:[%s4343 + $0x98] sm:$0xff]
    %v4364 = vld [vmem:[%s4343 + $0xa0] sm:$0xff]
    %v4365 = vld [vmem:[%s4343 + $0xa8] sm:$0xff]
    %v4366 = vld [vmem:[%s4343 + $0xb0] sm:$0xff]
    %v4367 = vld [vmem:[%s4343 + $0xb8] sm:$0xff]
    %v4368 = vld [vmem:[%s4343 + $0xc0] sm:$0xff]
    %v4369 = vld [vmem:[%s4343 + $0xc8] sm:$0xff]
    %v4370 = vld [vmem:[%s4343 + $0xd0] sm:$0xff]
    %v4371 = vld [vmem:[%s4343 + $0xd8] sm:$0xff]
    %v4372 = vld [vmem:[%s4343 + $0xe0] sm:$0xff]
    %v4373 = vld [vmem:[%s4343 + $0xe8] sm:$0xff]
    %v4374 = vld [vmem:[%s4343 + $0xf0] sm:$0xff]
    %v4375 = vld [vmem:[%s4343 + $0xf8] sm:$0xff]
    %v4376 = vpack.c.bf16 %v4337, %v4335
    %v4377 = vpack.c.bf16 %v4338, %v4336
    %v4378 = vpack.c.bf16 %v4341, %v4339
    %v4379 = vpack.c.bf16 %v4342, %v4340
    %4380 = vmatprep.subr.bf16.mxu0 %v4345
    %4381 = vmatpush1.bf16.msra.mxu0 %v4344
    %4382 = vmatprep.subr.bf16.mxu0 %v4347
    %4383 = vmatpush1.bf16.msra.mxu0 %v4346
    %4384 = vmatprep.subr.bf16.mxu0 %v4349
    %4385 = vmatpush1.bf16.msra.mxu0 %v4348
    %4386 = vmatprep.subr.bf16.mxu0 %v4351
    %4387 = vmatpush1.bf16.msra.mxu0 %v4350
    %4388 = vmatprep.subr.bf16.mxu0 %v4353
    %4389 = vmatpush1.bf16.msra.mxu0 %v4352
    %4390 = vmatprep.subr.bf16.mxu0 %v4355
    %4391 = vmatpush1.bf16.msra.mxu0 %v4354
    %4392 = vmatprep.subr.bf16.mxu0 %v4357
    %4393 = vmatpush1.bf16.msra.mxu0 %v4356
    %4394 = vmatprep.subr.bf16.mxu0 %v4359
    %4395 = vmatpush1.bf16.msra.mxu0 %v4358
    %4396 = vmatprep.subr.bf16.mxu0 %v4361
    %4397 = vmatpush1.bf16.msra.mxu0 %v4360
    %4398 = vmatprep.subr.bf16.mxu0 %v4363
    %4399 = vmatpush1.bf16.msra.mxu0 %v4362
    %4400 = vmatprep.subr.bf16.mxu0 %v4365
    %4401 = vmatpush1.bf16.msra.mxu0 %v4364
    %4402 = vmatprep.subr.bf16.mxu0 %v4367
    %4403 = vmatpush1.bf16.msra.mxu0 %v4366
    %4404 = vmatprep.subr.bf16.mxu0 %v4369
    %4405 = vmatpush1.bf16.msra.mxu0 %v4368
    %4406 = vmatprep.subr.bf16.mxu0 %v4371
    %4407 = vmatpush1.bf16.msra.mxu0 %v4370
    %4408 = vmatprep.subr.bf16.mxu0 %v4373
    %4409 = vmatpush1.bf16.msra.mxu0 %v4372
    %4410 = vmatprep.subr.bf16.mxu0 %v4375
    %4411 = vmatpush1.bf16.msra.mxu0 %v4374
    %4412 = vmatprep.mubr.bf16.mxu0 %v4377
    %4413 = vmatmul.mubr.bf16.gmra.mrb[0].mxu0 %v4376
    %v4414 = vpop.f32.mrb[0].mxu0
    %v4415 = vadd.f32 0.0, %v4414
    %v4416 = vpop.f32.mrb[0].mxu0
    %v4417 = vadd.f32 0.0, %v4416
    %v4418 = vpop.f32.mrb[0].mxu0
    %v4419 = vadd.f32 0.0, %v4418
    %v4420 = vpop.f32.mrb[0].mxu0
    %v4421 = vadd.f32 0.0, %v4420
    %4422 = vmatprep.mubr.bf16.mxu0 %v4379
    %4423 = vmatmul.mubr.bf16.gmra.mrb[0].mxu0 %v4378
    %v4424 = vpop.f32.mrb[0].mxu0
    %v4425 = vadd.f32 0.0, %v4424
    %v4426 = vpop.f32.mrb[0].mxu0
    %v4427 = vadd.f32 0.0, %v4426
    %v4428 = vpop.f32.mrb[0].mxu0
    %v4429 = vadd.f32 0.0, %v4428
    %v4430 = vpop.f32.mrb[0].mxu0
    %v4431 = vadd.f32 0.0, %v4430
    %4432 = vdwg.mxu0
    %s4433 = scalar_lea.vmem [#allocation20], 34
    %v4434 = vld [vmem:[%s4433] ss:$8 sm:$0x3]
    %s4435 = scalar_lea.vmem [#allocation20], 35
    %v4436 = vld [vmem:[%s4435] ss:$8 sm:$0x3]
    %v4437 = vadd.f32 %v4415, %v4419
    %v4438 = vadd.f32 %v4437, %v4425
    %v4439 = vadd.f32 %v4438, %v4429
    %v4440 = vrot.slane %v4439, 4
    %v4441 = vadd.f32 %v4439, %v4440
    %v4442 = vrot.slane %v4441, 2
    %v4443 = vadd.f32 %v4441, %v4442
    %v4444 = vrot.slane %v4443, 1
    %v4445 = vadd.f32 %v4443, %v4444
    %v4446 = vadd.f32 %v4417, %v4421
    %v4447 = vadd.f32 %v4446, %v4427
    %v4448 = vadd.f32 %v4447, %v4431
    %v4449 = vrot.slane %v4448, 4
    %v4450 = vadd.f32 %v4448, %v4449
    %v4451 = vrot.slane %v4450, 2
    %v4452 = vadd.f32 %v4450, %v4451
    %v4453 = vrot.slane %v4452, 1
    %v4454 = vadd.f32 %v4452, %v4453
    %v4455 = vmul.f32 %v4445, %v394
    %v4456 = vmul.f32 %v4454, %v394
    %v4457 = vmul.f32 %v4415, %v4415
    %v4458 = vmul.f32 %v4417, %v4417
    %v4459 = vmul.f32 %v4419, %v4419
    %v4460 = vmul.f32 %v4421, %v4421
    %v4461 = vmul.f32 %v4425, %v4425
    %v4462 = vmul.f32 %v4427, %v4427
    %v4463 = vmul.f32 %v4429, %v4429
    %v4464 = vmul.f32 %v4431, %v4431
    %v4465 = vadd.f32 %v4457, %v4459
    %v4466 = vadd.f32 %v4465, %v4461
    %v4467 = vadd.f32 %v4466, %v4463
    %v4468 = vrot.slane %v4467, 4
    %v4469 = vadd.f32 %v4467, %v4468
    %v4470 = vrot.slane %v4469, 2
    %v4471 = vadd.f32 %v4469, %v4470
    %v4472 = vrot.slane %v4471, 1
    %v4473 = vadd.f32 %v4471, %v4472
    %v4474 = vadd.f32 %v4458, %v4460
    %v4475 = vadd.f32 %v4474, %v4462
    %v4476 = vadd.f32 %v4475, %v4464
    %v4477 = vrot.slane %v4476, 4
    %v4478 = vadd.f32 %v4476, %v4477
    %v4479 = vrot.slane %v4478, 2
    %v4480 = vadd.f32 %v4478, %v4479
    %v4481 = vrot.slane %v4480, 1
    %v4482 = vadd.f32 %v4480, %v4481
    %v4483 = vmul.f32 %v4473, %v394
    %v4484 = vmul.f32 %v4482, %v394
    %v4485 = vmul.f32 %v4455, %v4455
    %v4486 = vmul.f32 %v4456, %v4456
    %v4487 = vsub.f32 %v4483, %v4485
    %v4488 = vsub.f32 %v4484, %v4486
    %v4489 = vmax.f32 %v4487, 0.0
    %v4490 = vmax.f32 %v4488, 0.0
    %v4491 = vadd.f32 %v4489, 1e-05
    %v4492 = vadd.f32 %v4490, 1e-05
    %v4493 = vrsqrt.pop %v4491
    %v4494 = vrsqrt.pop %v4492
    %v4497 = vcombine.low %v4493, %v4494
    %v4499 = vunpack.c.l.s4 1966171168
    %v4500 = vunpack.c.0.s8 %v4499
    %v4501 = vlaneseq
    %v4502 = vshrl.u32 %v4501, 7
    %v4503 = vsub.s32 %v4500, %v4502
    %v4504 = vrot.slane %v4497, %v4503
    %v4506 = vunpack.c.l.s4 1966171168
    %v4507 = vunpack.c.0.s8 %v4506
    %v4508 = vlaneseq
    %v4509 = vshrl.u32 %v4508, 7
    %v4510 = vsub.s32 %v4507, %v4509
    %v4511 = vrot.slane %v4504, %v4510
    %v4513 = vmul.f32 %v4434, %v4511
    %v4515 = vlaneseq
    %v4516 = vshrl.u32 %v4515, 7
    %v4517 = vsub.s32 0, %v4516
    %v4518 = vrot.slane %v4513, %v4517
    %v4519 = vlaneseq
    %v4520 = vshrl.u32 %v4519, 7
    %v4521 = vsub.s32 1, %v4520
    %v4522 = vrot.slane %v4513, %v4521
    %v4525 = vmul.f32 %v4455, %v4518
    %v4526 = vmul.f32 %v4456, %v4522
    %v4529 = vcombine.low %v4525, %v4526
    %v4531 = vunpack.c.l.s4 1966171168
    %v4532 = vunpack.c.0.s8 %v4531
    %v4533 = vlaneseq
    %v4534 = vshrl.u32 %v4533, 7
    %v4535 = vsub.s32 %v4532, %v4534
    %v4536 = vrot.slane %v4529, %v4535
    %v4538 = vunpack.c.l.s4 1966171168
    %v4539 = vunpack.c.0.s8 %v4538
    %v4540 = vlaneseq
    %v4541 = vshrl.u32 %v4540, 7
    %v4542 = vsub.s32 %v4539, %v4541
    %v4543 = vrot.slane %v4536, %v4542
    %v4545 = vsub.f32 %v4436, %v4543
    %v4546 = vmul.f32 %v4415, %v4518
    %v4547 = vmul.f32 %v4417, %v4522
    %v4548 = vmul.f32 %v4419, %v4518
    %v4549 = vmul.f32 %v4421, %v4522
    %v4550 = vmul.f32 %v4425, %v4518
    %v4551 = vmul.f32 %v4427, %v4522
    %v4552 = vmul.f32 %v4429, %v4518
    %v4553 = vmul.f32 %v4431, %v4522
    %v4555 = vlaneseq
    %v4556 = vshrl.u32 %v4555, 7
    %v4557 = vsub.s32 0, %v4556
    %v4558 = vrot.slane %v4545, %v4557
    %v4559 = vlaneseq
    %v4560 = vshrl.u32 %v4559, 7
    %v4561 = vsub.s32 1, %v4560
    %v4562 = vrot.slane %v4545, %v4561
    %v4565 = vadd.f32 %v4546, %v4558
    %v4566 = vadd.f32 %v4547, %v4562
    %v4567 = vadd.f32 %v4548, %v4558
    %v4568 = vadd.f32 %v4549, %v4562
    %v4569 = vadd.f32 %v4550, %v4558
    %v4570 = vadd.f32 %v4551, %v4562
    %v4571 = vadd.f32 %v4552, %v4558
    %v4572 = vadd.f32 %v4553, %v4562
    %s4573 = scalar_lea.vmem [#allocation5], 2304
    %v4574 = vld [vmem:[%s4573] sm:$0xff]
    %v4575 = vld [vmem:[%s4573 + $0x8] sm:$0xff]
    %v4576 = vld [vmem:[%s4573 + $0x10] sm:$0xff]
    %v4577 = vld [vmem:[%s4573 + $0x18] sm:$0xff]
    %v4578 = vld [vmem:[%s4573 + $0x20] sm:$0xff]
    %v4579 = vld [vmem:[%s4573 + $0x28] sm:$0xff]
    %v4580 = vld [vmem:[%s4573 + $0x30] sm:$0xff]
    %v4581 = vld [vmem:[%s4573 + $0x38] sm:$0xff]
    %v4582 = vld [vmem:[%s4573 + $0x40] sm:$0xff]
    %v4583 = vld [vmem:[%s4573 + $0x48] sm:$0xff]
    %v4584 = vld [vmem:[%s4573 + $0x50] sm:$0xff]
    %v4585 = vld [vmem:[%s4573 + $0x58] sm:$0xff]
    %v4586 = vld [vmem:[%s4573 + $0x60] sm:$0xff]
    %v4587 = vld [vmem:[%s4573 + $0x68] sm:$0xff]
    %v4588 = vld [vmem:[%s4573 + $0x70] sm:$0xff]
    %v4589 = vld [vmem:[%s4573 + $0x78] sm:$0xff]
    %v4590 = vld [vmem:[%s4573 + $0x80] sm:$0xff]
    %v4591 = vld [vmem:[%s4573 + $0x88] sm:$0xff]
    %v4592 = vld [vmem:[%s4573 + $0x90] sm:$0xff]
    %v4593 = vld [vmem:[%s4573 + $0x98] sm:$0xff]
    %v4594 = vld [vmem:[%s4573 + $0xa0] sm:$0xff]
    %v4595 = vld [vmem:[%s4573 + $0xa8] sm:$0xff]
    %v4596 = vld [vmem:[%s4573 + $0xb0] sm:$0xff]
    %v4597 = vld [vmem:[%s4573 + $0xb8] sm:$0xff]
    %v4598 = vld [vmem:[%s4573 + $0xc0] sm:$0xff]
    %v4599 = vld [vmem:[%s4573 + $0xc8] sm:$0xff]
    %v4600 = vld [vmem:[%s4573 + $0xd0] sm:$0xff]
    %v4601 = vld [vmem:[%s4573 + $0xd8] sm:$0xff]
    %v4602 = vld [vmem:[%s4573 + $0xe0] sm:$0xff]
    %v4603 = vld [vmem:[%s4573 + $0xe8] sm:$0xff]
    %v4604 = vld [vmem:[%s4573 + $0xf0] sm:$0xff]
    %v4605 = vld [vmem:[%s4573 + $0xf8] sm:$0xff]
    %v4606 = vpack.c.bf16 %v4567, %v4565
    %v4607 = vpack.c.bf16 %v4568, %v4566
    %v4608 = vpack.c.bf16 %v4571, %v4569
    %v4609 = vpack.c.bf16 %v4572, %v4570
    %4610 = vmatprep.subr.bf16.mxu0 %v4575
    %4611 = vmatpush1.bf16.msra.mxu0 %v4574
    %4612 = vmatprep.subr.bf16.mxu0 %v4577
    %4613 = vmatpush1.bf16.msra.mxu0 %v4576
    %4614 = vmatprep.subr.bf16.mxu0 %v4579
    %4615 = vmatpush1.bf16.msra.mxu0 %v4578
    %4616 = vmatprep.subr.bf16.mxu0 %v4581
    %4617 = vmatpush1.bf16.msra.mxu0 %v4580
    %4618 = vmatprep.subr.bf16.mxu0 %v4583
    %4619 = vmatpush1.bf16.msra.mxu0 %v4582
    %4620 = vmatprep.subr.bf16.mxu0 %v4585
    %4621 = vmatpush1.bf16.msra.mxu0 %v4584
    %4622 = vmatprep.subr.bf16.mxu0 %v4587
    %4623 = vmatpush1.bf16.msra.mxu0 %v4586
    %4624 = vmatprep.subr.bf16.mxu0 %v4589
    %4625 = vmatpush1.bf16.msra.mxu0 %v4588
    %4626 = vmatprep.subr.bf16.mxu0 %v4591
    %4627 = vmatpush1.bf16.msra.mxu0 %v4590
    %4628 = vmatprep.subr.bf16.mxu0 %v4593
    %4629 = vmatpush1.bf16.msra.mxu0 %v4592
    %4630 = vmatprep.subr.bf16.mxu0 %v4595
    %4631 = vmatpush1.bf16.msra.mxu0 %v4594
    %4632 = vmatprep.subr.bf16.mxu0 %v4597
    %4633 = vmatpush1.bf16.msra.mxu0 %v4596
    %4634 = vmatprep.subr.bf16.mxu0 %v4599
    %4635 = vmatpush1.bf16.msra.mxu0 %v4598
    %4636 = vmatprep.subr.bf16.mxu0 %v4601
    %4637 = vmatpush1.bf16.msra.mxu0 %v4600
    %4638 = vmatprep.subr.bf16.mxu0 %v4603
    %4639 = vmatpush1.bf16.msra.mxu0 %v4602
    %4640 = vmatprep.subr.bf16.mxu0 %v4605
    %4641 = vmatpush1.bf16.msra.mxu0 %v4604
    %4642 = vmatprep.mubr.bf16.mxu0 %v4607
    %4643 = vmatmul.mubr.bf16.gmra.mrb[0].mxu0 %v4606
    %v4644 = vpop.f32.mrb[0].mxu0
    %v4645 = vadd.f32 0.0, %v4644
    %v4646 = vpop.f32.mrb[0].mxu0
    %v4647 = vadd.f32 0.0, %v4646
    %v4648 = vpop.f32.mrb[0].mxu0
    %v4649 = vadd.f32 0.0, %v4648
    %v4650 = vpop.f32.mrb[0].mxu0
    %v4651 = vadd.f32 0.0, %v4650
    %4652 = vmatprep.mubr.bf16.mxu0 %v4609
    %4653 = vmatmul.mubr.bf16.gmra.mrb[0].mxu0 %v4608
    %v4654 = vpop.f32.mrb[0].mxu0
    %v4655 = vadd.f32 0.0, %v4654
    %v4656 = vpop.f32.mrb[0].mxu0
    %v4657 = vadd.f32 0.0, %v4656
    %v4658 = vpop.f32.mrb[0].mxu0
    %v4659 = vadd.f32 0.0, %v4658
    %v4660 = vpop.f32.mrb[0].mxu0
    %v4661 = vadd.f32 0.0, %v4660
    %4662 = vdwg.mxu0
    %s4663 = scalar_lea.vmem [#allocation20], 36
    %v4664 = vld [vmem:[%s4663] ss:$8 sm:$0x3]
    %s4665 = scalar_lea.vmem [#allocation20], 37
    %v4666 = vld [vmem:[%s4665] ss:$8 sm:$0x3]
    %v4667 = vadd.f32 %v4645, %v4649
    %v4668 = vadd.f32 %v4667, %v4655
    %v4669 = vadd.f32 %v4668, %v4659
    %v4670 = vrot.slane %v4669, 4
    %v4671 = vadd.f32 %v4669, %v4670
    %v4672 = vrot.slane %v4671, 2
    %v4673 = vadd.f32 %v4671, %v4672
    %v4674 = vrot.slane %v4673, 1
    %v4675 = vadd.f32 %v4673, %v4674
    %v4676 = vadd.f32 %v4647, %v4651
    %v4677 = vadd.f32 %v4676, %v4657
    %v4678 = vadd.f32 %v4677, %v4661
    %v4679 = vrot.slane %v4678, 4
    %v4680 = vadd.f32 %v4678, %v4679
    %v4681 = vrot.slane %v4680, 2
    %v4682 = vadd.f32 %v4680, %v4681
    %v4683 = vrot.slane %v4682, 1
    %v4684 = vadd.f32 %v4682, %v4683
    %v4685 = vmul.f32 %v4675, %v394
    %v4686 = vmul.f32 %v4684, %v394
    %v4687 = vmul.f32 %v4645, %v4645
    %v4688 = vmul.f32 %v4647, %v4647
    %v4689 = vmul.f32 %v4649, %v4649
    %v4690 = vmul.f32 %v4651, %v4651
    %v4691 = vmul.f32 %v4655, %v4655
    %v4692 = vmul.f32 %v4657, %v4657
    %v4693 = vmul.f32 %v4659, %v4659
    %v4694 = vmul.f32 %v4661, %v4661
    %v4695 = vadd.f32 %v4687, %v4689
    %v4696 = vadd.f32 %v4695, %v4691
    %v4697 = vadd.f32 %v4696, %v4693
    %v4698 = vrot.slane %v4697, 4
    %v4699 = vadd.f32 %v4697, %v4698
    %v4700 = vrot.slane %v4699, 2
    %v4701 = vadd.f32 %v4699, %v4700
    %v4702 = vrot.slane %v4701, 1
    %v4703 = vadd.f32 %v4701, %v4702
    %v4704 = vadd.f32 %v4688, %v4690
    %v4705 = vadd.f32 %v4704, %v4692
    %v4706 = vadd.f32 %v4705, %v4694
    %v4707 = vrot.slane %v4706, 4
    %v4708 = vadd.f32 %v4706, %v4707
    %v4709 = vrot.slane %v4708, 2
    %v4710 = vadd.f32 %v4708, %v4709
    %v4711 = vrot.slane %v4710, 1
    %v4712 = vadd.f32 %v4710, %v4711
    %v4713 = vmul.f32 %v4703, %v394
    %v4714 = vmul.f32 %v4712, %v394
    %v4715 = vmul.f32 %v4685, %v4685
    %v4716 = vmul.f32 %v4686, %v4686
    %v4717 = vsub.f32 %v4713, %v4715
    %v4718 = vsub.f32 %v4714, %v4716
    %v4719 = vmax.f32 %v4717, 0.0
    %v4720 = vmax.f32 %v4718, 0.0
    %v4721 = vadd.f32 %v4719, 1e-05
    %v4722 = vadd.f32 %v4720, 1e-05
    %v4723 = vrsqrt.pop %v4721
    %v4724 = vrsqrt.pop %v4722
    %v4727 = vcombine.low %v4723, %v4724
    %v4729 = vunpack.c.l.s4 1966171168
    %v4730 = vunpack.c.0.s8 %v4729
    %v4731 = vlaneseq
    %v4732 = vshrl.u32 %v4731, 7
    %v4733 = vsub.s32 %v4730, %v4732
    %v4734 = vrot.slane %v4727, %v4733
    %v4736 = vunpack.c.l.s4 1966171168
    %v4737 = vunpack.c.0.s8 %v4736
    %v4738 = vlaneseq
    %v4739 = vshrl.u32 %v4738, 7
    %v4740 = vsub.s32 %v4737, %v4739
    %v4741 = vrot.slane %v4734, %v4740
    %v4743 = vmul.f32 %v4664, %v4741
    %v4745 = vlaneseq
    %v4746 = vshrl.u32 %v4745, 7
    %v4747 = vsub.s32 0, %v4746
    %v4748 = vrot.slane %v4743, %v4747
    %v4749 = vlaneseq
    %v4750 = vshrl.u32 %v4749, 7
    %v4751 = vsub.s32 1, %v4750
    %v4752 = vrot.slane %v4743, %v4751
    %v4755 = vmul.f32 %v4685, %v4748
    %v4756 = vmul.f32 %v4686, %v4752
    %v4759 = vcombine.low %v4755, %v4756
    %v4761 = vunpack.c.l.s4 1966171168
    %v4762 = vunpack.c.0.s8 %v4761
    %v4763 = vlaneseq
    %v4764 = vshrl.u32 %v4763, 7
    %v4765 = vsub.s32 %v4762, %v4764
    %v4766 = vrot.slane %v4759, %v4765
    %v4768 = vunpack.c.l.s4 1966171168
    %v4769 = vunpack.c.0.s8 %v4768
    %v4770 = vlaneseq
    %v4771 = vshrl.u32 %v4770, 7
    %v4772 = vsub.s32 %v4769, %v4771
    %v4773 = vrot.slane %v4766, %v4772
    %v4775 = vsub.f32 %v4666, %v4773
    %v4776 = vmul.f32 %v4645, %v4748
    %v4777 = vmul.f32 %v4647, %v4752
    %v4778 = vmul.f32 %v4649, %v4748
    %v4779 = vmul.f32 %v4651, %v4752
    %v4780 = vmul.f32 %v4655, %v4748
    %v4781 = vmul.f32 %v4657, %v4752
    %v4782 = vmul.f32 %v4659, %v4748
    %v4783 = vmul.f32 %v4661, %v4752
    %v4785 = vlaneseq
    %v4786 = vshrl.u32 %v4785, 7
    %v4787 = vsub.s32 0, %v4786
    %v4788 = vrot.slane %v4775, %v4787
    %v4789 = vlaneseq
    %v4790 = vshrl.u32 %v4789, 7
    %v4791 = vsub.s32 1, %v4790
    %v4792 = vrot.slane %v4775, %v4791
    %v4795 = vadd.f32 %v4776, %v4788
    %v4796 = vadd.f32 %v4777, %v4792
    %v4797 = vadd.f32 %v4778, %v4788
    %v4798 = vadd.f32 %v4779, %v4792
    %v4799 = vadd.f32 %v4780, %v4788
    %v4800 = vadd.f32 %v4781, %v4792
    %v4801 = vadd.f32 %v4782, %v4788
    %v4802 = vadd.f32 %v4783, %v4792
    %v4803 = vmax.f32 %v4795, 0.0
    %v4804 = vmax.f32 %v4796, 0.0
    %v4805 = vmax.f32 %v4797, 0.0
    %v4806 = vmax.f32 %v4798, 0.0
    %v4807 = vmax.f32 %v4799, 0.0
    %v4808 = vmax.f32 %v4800, 0.0
    %v4809 = vmax.f32 %v4801, 0.0
    %v4810 = vmax.f32 %v4802, 0.0
    %s4811 = scalar_lea.vmem [#allocation5], 2560
    %v4812 = vld [vmem:[%s4811] sm:$0xff]
    %v4813 = vld [vmem:[%s4811 + $0x8] sm:$0xff]
    %v4814 = vld [vmem:[%s4811 + $0x10] sm:$0xff]
    %v4815 = vld [vmem:[%s4811 + $0x18] sm:$0xff]
    %v4816 = vld [vmem:[%s4811 + $0x20] sm:$0xff]
    %v4817 = vld [vmem:[%s4811 + $0x28] sm:$0xff]
    %v4818 = vld [vmem:[%s4811 + $0x30] sm:$0xff]
    %v4819 = vld [vmem:[%s4811 + $0x38] sm:$0xff]
    %v4820 = vld [vmem:[%s4811 + $0x40] sm:$0xff]
    %v4821 = vld [vmem:[%s4811 + $0x48] sm:$0xff]
    %v4822 = vld [vmem:[%s4811 + $0x50] sm:$0xff]
    %v4823 = vld [vmem:[%s4811 + $0x58] sm:$0xff]
    %v4824 = vld [vmem:[%s4811 + $0x60] sm:$0xff]
    %v4825 = vld [vmem:[%s4811 + $0x68] sm:$0xff]
    %v4826 = vld [vmem:[%s4811 + $0x70] sm:$0xff]
    %v4827 = vld [vmem:[%s4811 + $0x78] sm:$0xff]
    %v4828 = vld [vmem:[%s4811 + $0x80] sm:$0xff]
    %v4829 = vld [vmem:[%s4811 + $0x88] sm:$0xff]
    %v4830 = vld [vmem:[%s4811 + $0x90] sm:$0xff]
    %v4831 = vld [vmem:[%s4811 + $0x98] sm:$0xff]
    %v4832 = vld [vmem:[%s4811 + $0xa0] sm:$0xff]
    %v4833 = vld [vmem:[%s4811 + $0xa8] sm:$0xff]
    %v4834 = vld [vmem:[%s4811 + $0xb0] sm:$0xff]
    %v4835 = vld [vmem:[%s4811 + $0xb8] sm:$0xff]
    %v4836 = vld [vmem:[%s4811 + $0xc0] sm:$0xff]
    %v4837 = vld [vmem:[%s4811 + $0xc8] sm:$0xff]
    %v4838 = vld [vmem:[%s4811 + $0xd0] sm:$0xff]
    %v4839 = vld [vmem:[%s4811 + $0xd8] sm:$0xff]
    %v4840 = vld [vmem:[%s4811 + $0xe0] sm:$0xff]
    %v4841 = vld [vmem:[%s4811 + $0xe8] sm:$0xff]
    %v4842 = vld [vmem:[%s4811 + $0xf0] sm:$0xff]
    %v4843 = vld [vmem:[%s4811 + $0xf8] sm:$0xff]
    %v4844 = vpack.c.bf16 %v4805, %v4803
    %v4845 = vpack.c.bf16 %v4806, %v4804
    %v4846 = vpack.c.bf16 %v4809, %v4807
    %v4847 = vpack.c.bf16 %v4810, %v4808
    %4848 = vmatprep.subr.bf16.mxu0 %v4813
    %4849 = vmatpush1.bf16.msra.mxu0 %v4812
    %4850 = vmatprep.subr.bf16.mxu0 %v4815
    %4851 = vmatpush1.bf16.msra.mxu0 %v4814
    %4852 = vmatprep.subr.bf16.mxu0 %v4817
    %4853 = vmatpush1.bf16.msra.mxu0 %v4816
    %4854 = vmatprep.subr.bf16.mxu0 %v4819
    %4855 = vmatpush1.bf16.msra.mxu0 %v4818
    %4856 = vmatprep.subr.bf16.mxu0 %v4821
    %4857 = vmatpush1.bf16.msra.mxu0 %v4820
    %4858 = vmatprep.subr.bf16.mxu0 %v4823
    %4859 = vmatpush1.bf16.msra.mxu0 %v4822
    %4860 = vmatprep.subr.bf16.mxu0 %v4825
    %4861 = vmatpush1.bf16.msra.mxu0 %v4824
    %4862 = vmatprep.subr.bf16.mxu0 %v4827
    %4863 = vmatpush1.bf16.msra.mxu0 %v4826
    %4864 = vmatprep.subr.bf16.mxu0 %v4829
    %4865 = vmatpush1.bf16.msra.mxu0 %v4828
    %4866 = vmatprep.subr.bf16.mxu0 %v4831
    %4867 = vmatpush1.bf16.msra.mxu0 %v4830
    %4868 = vmatprep.subr.bf16.mxu0 %v4833
    %4869 = vmatpush1.bf16.msra.mxu0 %v4832
    %4870 = vmatprep.subr.bf16.mxu0 %v4835
    %4871 = vmatpush1.bf16.msra.mxu0 %v4834
    %4872 = vmatprep.subr.bf16.mxu0 %v4837
    %4873 = vmatpush1.bf16.msra.mxu0 %v4836
    %4874 = vmatprep.subr.bf16.mxu0 %v4839
    %4875 = vmatpush1.bf16.msra.mxu0 %v4838
    %4876 = vmatprep.subr.bf16.mxu0 %v4841
    %4877 = vmatpush1.bf16.msra.mxu0 %v4840
    %4878 = vmatprep.subr.bf16.mxu0 %v4843
    %4879 = vmatpush1.bf16.msra.mxu0 %v4842
    %4880 = vmatprep.mubr.bf16.mxu0 %v4845
    %4881 = vmatmul.mubr.bf16.gmra.mrb[0].mxu0 %v4844
    %v4882 = vpop.f32.mrb[0].mxu0
    %v4883 = vadd.f32 0.0, %v4882
    %v4884 = vpop.f32.mrb[0].mxu0
    %v4885 = vadd.f32 0.0, %v4884
    %v4886 = vpop.f32.mrb[0].mxu0
    %v4887 = vadd.f32 0.0, %v4886
    %v4888 = vpop.f32.mrb[0].mxu0
    %v4889 = vadd.f32 0.0, %v4888
    %4890 = vmatprep.mubr.bf16.mxu0 %v4847
    %4891 = vmatmul.mubr.bf16.gmra.mrb[0].mxu0 %v4846
    %v4892 = vpop.f32.mrb[0].mxu0
    %v4893 = vadd.f32 0.0, %v4892
    %v4894 = vpop.f32.mrb[0].mxu0
    %v4895 = vadd.f32 0.0, %v4894
    %v4896 = vpop.f32.mrb[0].mxu0
    %v4897 = vadd.f32 0.0, %v4896
    %v4898 = vpop.f32.mrb[0].mxu0
    %v4899 = vadd.f32 0.0, %v4898
    %4900 = vdwg.mxu0
    %s4901 = scalar_lea.vmem [#allocation20], 38
    %v4902 = vld [vmem:[%s4901] ss:$8 sm:$0x3]
    %s4903 = scalar_lea.vmem [#allocation20], 39
    %v4904 = vld [vmem:[%s4903] ss:$8 sm:$0x3]
    %v4905 = vadd.f32 %v4883, %v4887
    %v4906 = vadd.f32 %v4905, %v4893
    %v4907 = vadd.f32 %v4906, %v4897
    %v4908 = vrot.slane %v4907, 4
    %v4909 = vadd.f32 %v4907, %v4908
    %v4910 = vrot.slane %v4909, 2
    %v4911 = vadd.f32 %v4909, %v4910
    %v4912 = vrot.slane %v4911, 1
    %v4913 = vadd.f32 %v4911, %v4912
    %v4914 = vadd.f32 %v4885, %v4889
    %v4915 = vadd.f32 %v4914, %v4895
    %v4916 = vadd.f32 %v4915, %v4899
    %v4917 = vrot.slane %v4916, 4
    %v4918 = vadd.f32 %v4916, %v4917
    %v4919 = vrot.slane %v4918, 2
    %v4920 = vadd.f32 %v4918, %v4919
    %v4921 = vrot.slane %v4920, 1
    %v4922 = vadd.f32 %v4920, %v4921
    %v4923 = vmul.f32 %v4913, %v394
    %v4924 = vmul.f32 %v4922, %v394
    %v4925 = vmul.f32 %v4883, %v4883
    %v4926 = vmul.f32 %v4885, %v4885
    %v4927 = vmul.f32 %v4887, %v4887
    %v4928 = vmul.f32 %v4889, %v4889
    %v4929 = vmul.f32 %v4893, %v4893
    %v4930 = vmul.f32 %v4895, %v4895
    %v4931 = vmul.f32 %v4897, %v4897
    %v4932 = vmul.f32 %v4899, %v4899
    %v4933 = vadd.f32 %v4925, %v4927
    %v4934 = vadd.f32 %v4933, %v4929
    %v4935 = vadd.f32 %v4934, %v4931
    %v4936 = vrot.slane %v4935, 4
    %v4937 = vadd.f32 %v4935, %v4936
    %v4938 = vrot.slane %v4937, 2
    %v4939 = vadd.f32 %v4937, %v4938
    %v4940 = vrot.slane %v4939, 1
    %v4941 = vadd.f32 %v4939, %v4940
    %v4942 = vadd.f32 %v4926, %v4928
    %v4943 = vadd.f32 %v4942, %v4930
    %v4944 = vadd.f32 %v4943, %v4932
    %v4945 = vrot.slane %v4944, 4
    %v4946 = vadd.f32 %v4944, %v4945
    %v4947 = vrot.slane %v4946, 2
    %v4948 = vadd.f32 %v4946, %v4947
    %v4949 = vrot.slane %v4948, 1
    %v4950 = vadd.f32 %v4948, %v4949
    %v4951 = vmul.f32 %v4941, %v394
    %v4952 = vmul.f32 %v4950, %v394
    %v4953 = vmul.f32 %v4923, %v4923
    %v4954 = vmul.f32 %v4924, %v4924
    %v4955 = vsub.f32 %v4951, %v4953
    %v4956 = vsub.f32 %v4952, %v4954
    %v4957 = vmax.f32 %v4955, 0.0
    %v4958 = vmax.f32 %v4956, 0.0
    %v4959 = vadd.f32 %v4957, 1e-05
    %v4960 = vadd.f32 %v4958, 1e-05
    %v4961 = vrsqrt.pop %v4959
    %v4962 = vrsqrt.pop %v4960
    %v4965 = vcombine.low %v4961, %v4962
    %v4967 = vunpack.c.l.s4 1966171168
    %v4968 = vunpack.c.0.s8 %v4967
    %v4969 = vlaneseq
    %v4970 = vshrl.u32 %v4969, 7
    %v4971 = vsub.s32 %v4968, %v4970
    %v4972 = vrot.slane %v4965, %v4971
    %v4974 = vunpack.c.l.s4 1966171168
    %v4975 = vunpack.c.0.s8 %v4974
    %v4976 = vlaneseq
    %v4977 = vshrl.u32 %v4976, 7
    %v4978 = vsub.s32 %v4975, %v4977
    %v4979 = vrot.slane %v4972, %v4978
    %v4981 = vmul.f32 %v4902, %v4979
    %v4983 = vlaneseq
    %v4984 = vshrl.u32 %v4983, 7
    %v4985 = vsub.s32 0, %v4984
    %v4986 = vrot.slane %v4981, %v4985
    %v4987 = vlaneseq
    %v4988 = vshrl.u32 %v4987, 7
    %v4989 = vsub.s32 1, %v4988
    %v4990 = vrot.slane %v4981, %v4989
    %v4993 = vmul.f32 %v4923, %v4986
    %v4994 = vmul.f32 %v4924, %v4990
    %v4997 = vcombine.low %v4993, %v4994
    %v4999 = vunpack.c.l.s4 1966171168
    %v5000 = vunpack.c.0.s8 %v4999
    %v5001 = vlaneseq
    %v5002 = vshrl.u32 %v5001, 7
    %v5003 = vsub.s32 %v5000, %v5002
    %v5004 = vrot.slane %v4997, %v5003
    %v5006 = vunpack.c.l.s4 1966171168
    %v5007 = vunpack.c.0.s8 %v5006
    %v5008 = vlaneseq
    %v5009 = vshrl.u32 %v5008, 7
    %v5010 = vsub.s32 %v5007, %v5009
    %v5011 = vrot.slane %v5004, %v5010
    %v5013 = vsub.f32 %v4904, %v5011
    %v5014 = vmul.f32 %v4883, %v4986
    %v5015 = vmul.f32 %v4885, %v4990
    %v5016 = vmul.f32 %v4887, %v4986
    %v5017 = vmul.f32 %v4889, %v4990
    %v5018 = vmul.f32 %v4893, %v4986
    %v5019 = vmul.f32 %v4895, %v4990
    %v5020 = vmul.f32 %v4897, %v4986
    %v5021 = vmul.f32 %v4899, %v4990
    %v5023 = vlaneseq
    %v5024 = vshrl.u32 %v5023, 7
    %v5025 = vsub.s32 0, %v5024
    %v5026 = vrot.slane %v5013, %v5025
    %v5027 = vlaneseq
    %v5028 = vshrl.u32 %v5027, 7
    %v5029 = vsub.s32 1, %v5028
    %v5030 = vrot.slane %v5013, %v5029
    %v5033 = vadd.f32 %v5014, %v5026
    %v5034 = vadd.f32 %v5015, %v5030
    %v5035 = vadd.f32 %v5016, %v5026
    %v5036 = vadd.f32 %v5017, %v5030
    %v5037 = vadd.f32 %v5018, %v5026
    %v5038 = vadd.f32 %v5019, %v5030
    %v5039 = vadd.f32 %v5020, %v5026
    %v5040 = vadd.f32 %v5021, %v5030
    %s5041 = smul.u32 4, 32
    %s5042 = smul.u32 %s5041, 4
    %s5043 = sshll.u32 %s5042, 4
    %5044 = dma.done %s273, %s5043
    %s5045 = smul.u32 4, 5
    %s5046 = smul.u32 %s5045, 64
    %s5047 = smul.u32 %s5046, 4
    %s5048 = sshll.u32 %s5047, 4
    %5049 = dma.done %s308, %s5048
    %v5050 = vld [vmem:[#allocation6] sm:$0xff]
    %v5051 = vld [vmem:[#allocation6 + $0x8] sm:$0xff]
    %v5052 = vld [vmem:[#allocation6 + $0x10] sm:$0xff]
    %v5053 = vld [vmem:[#allocation6 + $0x18] sm:$0xff]
    %v5054 = vld [vmem:[#allocation6 + $0x20] sm:$0xff]
    %v5055 = vld [vmem:[#allocation6 + $0x28] sm:$0xff]
    %v5056 = vld [vmem:[#allocation6 + $0x30] sm:$0xff]
    %v5057 = vld [vmem:[#allocation6 + $0x38] sm:$0xff]
    %v5058 = vld [vmem:[#allocation6 + $0x40] sm:$0xff]
    %v5059 = vld [vmem:[#allocation6 + $0x48] sm:$0xff]
    %v5060 = vld [vmem:[#allocation6 + $0x50] sm:$0xff]
    %v5061 = vld [vmem:[#allocation6 + $0x58] sm:$0xff]
    %v5062 = vld [vmem:[#allocation6 + $0x60] sm:$0xff]
    %v5063 = vld [vmem:[#allocation6 + $0x68] sm:$0xff]
    %v5064 = vld [vmem:[#allocation6 + $0x70] sm:$0xff]
    %v5065 = vld [vmem:[#allocation6 + $0x78] sm:$0xff]
    %v5066 = vld [vmem:[#allocation6 + $0x80] sm:$0xff]
    %v5067 = vld [vmem:[#allocation6 + $0x88] sm:$0xff]
    %v5068 = vld [vmem:[#allocation6 + $0x90] sm:$0xff]
    %v5069 = vld [vmem:[#allocation6 + $0x98] sm:$0xff]
    %v5070 = vld [vmem:[#allocation6 + $0xa0] sm:$0xff]
    %v5071 = vld [vmem:[#allocation6 + $0xa8] sm:$0xff]
    %v5072 = vld [vmem:[#allocation6 + $0xb0] sm:$0xff]
    %v5073 = vld [vmem:[#allocation6 + $0xb8] sm:$0xff]
    %v5074 = vld [vmem:[#allocation6 + $0xc0] sm:$0xff]
    %v5075 = vld [vmem:[#allocation6 + $0xc8] sm:$0xff]
    %v5076 = vld [vmem:[#allocation6 + $0xd0] sm:$0xff]
    %v5077 = vld [vmem:[#allocation6 + $0xd8] sm:$0xff]
    %v5078 = vld [vmem:[#allocation6 + $0xe0] sm:$0xff]
    %v5079 = vld [vmem:[#allocation6 + $0xe8] sm:$0xff]
    %v5080 = vld [vmem:[#allocation6 + $0xf0] sm:$0xff]
    %v5081 = vld [vmem:[#allocation6 + $0xf8] sm:$0xff]
    %v5082 = vld [vmem:[#allocation6 + $0x100] sm:$0xff]
    %v5083 = vld [vmem:[#allocation6 + $0x108] sm:$0xff]
    %v5084 = vld [vmem:[#allocation6 + $0x110] sm:$0xff]
    %v5085 = vld [vmem:[#allocation6 + $0x118] sm:$0xff]
    %v5086 = vld [vmem:[#allocation6 + $0x120] sm:$0xff]
    %v5087 = vld [vmem:[#allocation6 + $0x128] sm:$0xff]
    %v5088 = vld [vmem:[#allocation6 + $0x130] sm:$0xff]
    %v5089 = vld [vmem:[#allocation6 + $0x138] sm:$0xff]
    %v5090 = vld [vmem:[#allocation6 + $0x140] sm:$0xff]
    %v5091 = vld [vmem:[#allocation6 + $0x148] sm:$0xff]
    %v5092 = vld [vmem:[#allocation6 + $0x150] sm:$0xff]
    %v5093 = vld [vmem:[#allocation6 + $0x158] sm:$0xff]
    %v5094 = vld [vmem:[#allocation6 + $0x160] sm:$0xff]
    %v5095 = vld [vmem:[#allocation6 + $0x168] sm:$0xff]
    %v5096 = vld [vmem:[#allocation6 + $0x170] sm:$0xff]
    %v5097 = vld [vmem:[#allocation6 + $0x178] sm:$0xff]
    %v5098 = vld [vmem:[#allocation6 + $0x180] sm:$0xff]
    %v5099 = vld [vmem:[#allocation6 + $0x188] sm:$0xff]
    %v5100 = vld [vmem:[#allocation6 + $0x190] sm:$0xff]
    %v5101 = vld [vmem:[#allocation6 + $0x198] sm:$0xff]
    %v5102 = vld [vmem:[#allocation6 + $0x1a0] sm:$0xff]
    %v5103 = vld [vmem:[#allocation6 + $0x1a8] sm:$0xff]
    %v5104 = vld [vmem:[#allocation6 + $0x1b0] sm:$0xff]
    %v5105 = vld [vmem:[#allocation6 + $0x1b8] sm:$0xff]
    %v5106 = vld [vmem:[#allocation6 + $0x1c0] sm:$0xff]
    %v5107 = vld [vmem:[#allocation6 + $0x1c8] sm:$0xff]
    %v5108 = vld [vmem:[#allocation6 + $0x1d0] sm:$0xff]
    %v5109 = vld [vmem:[#allocation6 + $0x1d8] sm:$0xff]
    %v5110 = vld [vmem:[#allocation6 + $0x1e0] sm:$0xff]
    %v5111 = vld [vmem:[#allocation6 + $0x1e8] sm:$0xff]
    %v5112 = vld [vmem:[#allocation6 + $0x1f0] sm:$0xff]
    %v5113 = vld [vmem:[#allocation6 + $0x1f8] sm:$0xff]
    %v5114 = vpack.c.bf16 %v5035, %v5033
    %v5115 = vpack.c.bf16 %v5036, %v5034
    %v5116 = vpack.c.bf16 %v5039, %v5037
    %v5117 = vpack.c.bf16 %v5040, %v5038
    %5118 = vmatprep.subr.bf16.mxu0 %v5051
    %5119 = vmatpush1.bf16.msra.mxu0 %v5050
    %5120 = vmatprep.subr.bf16.mxu0 %v5055
    %5121 = vmatpush1.bf16.msra.mxu0 %v5054
    %5122 = vmatprep.subr.bf16.mxu0 %v5059
    %5123 = vmatpush1.bf16.msra.mxu0 %v5058
    %5124 = vmatprep.subr.bf16.mxu0 %v5063
    %5125 = vmatpush1.bf16.msra.mxu0 %v5062
    %5126 = vmatprep.subr.bf16.mxu0 %v5067
    %5127 = vmatpush1.bf16.msra.mxu0 %v5066
    %5128 = vmatprep.subr.bf16.mxu0 %v5071
    %5129 = vmatpush1.bf16.msra.mxu0 %v5070
    %5130 = vmatprep.subr.bf16.mxu0 %v5075
    %5131 = vmatpush1.bf16.msra.mxu0 %v5074
    %5132 = vmatprep.subr.bf16.mxu0 %v5079
    %5133 = vmatpush1.bf16.msra.mxu0 %v5078
    %5134 = vmatprep.subr.bf16.mxu0 %v5083
    %5135 = vmatpush1.bf16.msra.mxu0 %v5082
    %5136 = vmatprep.subr.bf16.mxu0 %v5087
    %5137 = vmatpush1.bf16.msra.mxu0 %v5086
    %5138 = vmatprep.subr.bf16.mxu0 %v5091
    %5139 = vmatpush1.bf16.msra.mxu0 %v5090
    %5140 = vmatprep.subr.bf16.mxu0 %v5095
    %5141 = vmatpush1.bf16.msra.mxu0 %v5094
    %5142 = vmatprep.subr.bf16.mxu0 %v5099
    %5143 = vmatpush1.bf16.msra.mxu0 %v5098
    %5144 = vmatprep.subr.bf16.mxu0 %v5103
    %5145 = vmatpush1.bf16.msra.mxu0 %v5102
    %5146 = vmatprep.subr.bf16.mxu0 %v5107
    %5147 = vmatpush1.bf16.msra.mxu0 %v5106
    %5148 = vmatprep.subr.bf16.mxu0 %v5111
    %5149 = vmatpush1.bf16.msra.mxu0 %v5110
    %5150 = vmatprep.mubr.bf16.mxu0 %v5115
    %5151 = vmatmul.mubr.bf16.gmra.mrb[0].mxu0 %v5114
    %v5152 = vpop.f32.mrb[0].mxu0
    %v5153 = vadd.f32 0.0, %v5152
    %v5154 = vpop.f32.mrb[0].mxu0
    %v5155 = vadd.f32 0.0, %v5154
    %v5156 = vpop.f32.mrb[0].mxu0
    %v5157 = vadd.f32 0.0, %v5156
    %v5158 = vpop.f32.mrb[0].mxu0
    %v5159 = vadd.f32 0.0, %v5158
    %5160 = vmatprep.mubr.bf16.mxu0 %v5117
    %5161 = vmatmul.mubr.bf16.gmra.mrb[0].mxu0 %v5116
    %v5162 = vpop.f32.mrb[0].mxu0
    %v5163 = vadd.f32 0.0, %v5162
    %v5164 = vpop.f32.mrb[0].mxu0
    %v5165 = vadd.f32 0.0, %v5164
    %v5166 = vpop.f32.mrb[0].mxu0
    %v5167 = vadd.f32 0.0, %v5166
    %v5168 = vpop.f32.mrb[0].mxu0
    %v5169 = vadd.f32 0.0, %v5168
    %5170 = vdwg.mxu0
    %5171 = vmatprep.subr.bf16.mxu0 %v5053
    %5172 = vmatpush1.bf16.msra.mxu0 %v5052
    %5173 = vmatprep.subr.bf16.mxu0 %v5057
    %5174 = vmatpush1.bf16.msra.mxu0 %v5056
    %5175 = vmatprep.subr.bf16.mxu0 %v5061
    %5176 = vmatpush1.bf16.msra.mxu0 %v5060
    %5177 = vmatprep.subr.bf16.mxu0 %v5065
    %5178 = vmatpush1.bf16.msra.mxu0 %v5064
    %5179 = vmatprep.subr.bf16.mxu0 %v5069
    %5180 = vmatpush1.bf16.msra.mxu0 %v5068
    %5181 = vmatprep.subr.bf16.mxu0 %v5073
    %5182 = vmatpush1.bf16.msra.mxu0 %v5072
    %5183 = vmatprep.subr.bf16.mxu0 %v5077
    %5184 = vmatpush1.bf16.msra.mxu0 %v5076
    %5185 = vmatprep.subr.bf16.mxu0 %v5081
    %5186 = vmatpush1.bf16.msra.mxu0 %v5080
    %5187 = vmatprep.subr.bf16.mxu0 %v5085
    %5188 = vmatpush1.bf16.msra.mxu0 %v5084
    %5189 = vmatprep.subr.bf16.mxu0 %v5089
    %5190 = vmatpush1.bf16.msra.mxu0 %v5088
    %5191 = vmatprep.subr.bf16.mxu0 %v5093
    %5192 = vmatpush1.bf16.msra.mxu0 %v5092
    %5193 = vmatprep.subr.bf16.mxu0 %v5097
    %5194 = vmatpush1.bf16.msra.mxu0 %v5096
    %5195 = vmatprep.subr.bf16.mxu0 %v5101
    %5196 = vmatpush1.bf16.msra.mxu0 %v5100
    %5197 = vmatprep.subr.bf16.mxu0 %v5105
    %5198 = vmatpush1.bf16.msra.mxu0 %v5104
    %5199 = vmatprep.subr.bf16.mxu0 %v5109
    %5200 = vmatpush1.bf16.msra.mxu0 %v5108
    %5201 = vmatprep.subr.bf16.mxu0 %v5113
    %5202 = vmatpush1.bf16.msra.mxu0 %v5112
    %5203 = vmatprep.mubr.bf16.mxu0 %v5115
    %5204 = vmatmul.mubr.bf16.gmra.mrb[0].mxu0 %v5114
    %v5205 = vpop.f32.mrb[0].mxu0
    %v5206 = vadd.f32 0.0, %v5205
    %v5207 = vpop.f32.mrb[0].mxu0
    %v5208 = vadd.f32 0.0, %v5207
    %v5209 = vpop.f32.mrb[0].mxu0
    %v5210 = vadd.f32 0.0, %v5209
    %v5211 = vpop.f32.mrb[0].mxu0
    %v5212 = vadd.f32 0.0, %v5211
    %5213 = vmatprep.mubr.bf16.mxu0 %v5117
    %5214 = vmatmul.mubr.bf16.gmra.mrb[0].mxu0 %v5116
    %v5215 = vpop.f32.mrb[0].mxu0
    %v5216 = vadd.f32 0.0, %v5215
    %v5217 = vpop.f32.mrb[0].mxu0
    %v5218 = vadd.f32 0.0, %v5217
    %v5219 = vpop.f32.mrb[0].mxu0
    %v5220 = vadd.f32 0.0, %v5219
    %v5221 = vpop.f32.mrb[0].mxu0
    %v5222 = vadd.f32 0.0, %v5221
    %5223 = vdwg.mxu0
    %v5224 = vld [vmem:[#allocation21] ss:$8 sm:$0xf]
    %s5225 = scalar_lea.vmem [#allocation21], 1
    %v5226 = vld [vmem:[%s5225] ss:$8 sm:$0xf]
    %v5227 = vadd.f32 %v5153, %v5157
    %v5228 = vadd.f32 %v5227, %v5163
    %v5229 = vadd.f32 %v5228, %v5167
    %v5230 = vrot.slane %v5229, 4
    %v5231 = vadd.f32 %v5229, %v5230
    %v5232 = vrot.slane %v5231, 2
    %v5233 = vadd.f32 %v5231, %v5232
    %v5234 = vrot.slane %v5233, 1
    %v5235 = vadd.f32 %v5233, %v5234
    %v5236 = vadd.f32 %v5155, %v5159
    %v5237 = vadd.f32 %v5236, %v5165
    %v5238 = vadd.f32 %v5237, %v5169
    %v5239 = vrot.slane %v5238, 4
    %v5240 = vadd.f32 %v5238, %v5239
    %v5241 = vrot.slane %v5240, 2
    %v5242 = vadd.f32 %v5240, %v5241
    %v5243 = vrot.slane %v5242, 1
    %v5244 = vadd.f32 %v5242, %v5243
    %v5245 = vadd.f32 %v5206, %v5210
    %v5246 = vadd.f32 %v5245, %v5216
    %v5247 = vadd.f32 %v5246, %v5220
    %v5248 = vrot.slane %v5247, 4
    %v5249 = vadd.f32 %v5247, %v5248
    %v5250 = vrot.slane %v5249, 2
    %v5251 = vadd.f32 %v5249, %v5250
    %v5252 = vrot.slane %v5251, 1
    %v5253 = vadd.f32 %v5251, %v5252
    %v5254 = vadd.f32 %v5208, %v5212
    %v5255 = vadd.f32 %v5254, %v5218
    %v5256 = vadd.f32 %v5255, %v5222
    %v5257 = vrot.slane %v5256, 4
    %v5258 = vadd.f32 %v5256, %v5257
    %v5259 = vrot.slane %v5258, 2
    %v5260 = vadd.f32 %v5258, %v5259
    %v5261 = vrot.slane %v5260, 1
    %v5262 = vadd.f32 %v5260, %v5261
    %v5263 = vmul.f32 %v5235, %v394
    %v5264 = vmul.f32 %v5244, %v394
    %v5265 = vmul.f32 %v5253, %v394
    %v5266 = vmul.f32 %v5262, %v394
    %v5267 = vmul.f32 %v5153, %v5153
    %v5268 = vmul.f32 %v5155, %v5155
    %v5269 = vmul.f32 %v5206, %v5206
    %v5270 = vmul.f32 %v5208, %v5208
    %v5271 = vmul.f32 %v5157, %v5157
    %v5272 = vmul.f32 %v5159, %v5159
    %v5273 = vmul.f32 %v5210, %v5210
    %v5274 = vmul.f32 %v5212, %v5212
    %v5275 = vmul.f32 %v5163, %v5163
    %v5276 = vmul.f32 %v5165, %v5165
    %v5277 = vmul.f32 %v5216, %v5216
    %v5278 = vmul.f32 %v5218, %v5218
    %v5279 = vmul.f32 %v5167, %v5167
    %v5280 = vmul.f32 %v5169, %v5169
    %v5281 = vmul.f32 %v5220, %v5220
    %v5282 = vmul.f32 %v5222, %v5222
    %v5283 = vadd.f32 %v5267, %v5271
    %v5284 = vadd.f32 %v5283, %v5275
    %v5285 = vadd.f32 %v5284, %v5279
    %v5286 = vrot.slane %v5285, 4
    %v5287 = vadd.f32 %v5285, %v5286
    %v5288 = vrot.slane %v5287, 2
    %v5289 = vadd.f32 %v5287, %v5288
    %v5290 = vrot.slane %v5289, 1
    %v5291 = vadd.f32 %v5289, %v5290
    %v5292 = vadd.f32 %v5268, %v5272
    %v5293 = vadd.f32 %v5292, %v5276
    %v5294 = vadd.f32 %v5293, %v5280
    %v5295 = vrot.slane %v5294, 4
    %v5296 = vadd.f32 %v5294, %v5295
    %v5297 = vrot.slane %v5296, 2
    %v5298 = vadd.f32 %v5296, %v5297
    %v5299 = vrot.slane %v5298, 1
    %v5300 = vadd.f32 %v5298, %v5299
    %v5301 = vadd.f32 %v5269, %v5273
    %v5302 = vadd.f32 %v5301, %v5277
    %v5303 = vadd.f32 %v5302, %v5281
    %v5304 = vrot.slane %v5303, 4
    %v5305 = vadd.f32 %v5303, %v5304
    %v5306 = vrot.slane %v5305, 2
    %v5307 = vadd.f32 %v5305, %v5306
    %v5308 = vrot.slane %v5307, 1
    %v5309 = vadd.f32 %v5307, %v5308
    %v5310 = vadd.f32 %v5270, %v5274
    %v5311 = vadd.f32 %v5310, %v5278
    %v5312 = vadd.f32 %v5311, %v5282
    %v5313 = vrot.slane %v5312, 4
    %v5314 = vadd.f32 %v5312, %v5313
    %v5315 = vrot.slane %v5314, 2
    %v5316 = vadd.f32 %v5314, %v5315
    %v5317 = vrot.slane %v5316, 1
    %v5318 = vadd.f32 %v5316, %v5317
    %v5319 = vmul.f32 %v5291, %v394
    %v5320 = vmul.f32 %v5300, %v394
    %v5321 = vmul.f32 %v5309, %v394
    %v5322 = vmul.f32 %v5318, %v394
    %v5323 = vmul.f32 %v5263, %v5263
    %v5324 = vmul.f32 %v5264, %v5264
    %v5325 = vmul.f32 %v5265, %v5265
    %v5326 = vmul.f32 %v5266, %v5266
    %v5327 = vsub.f32 %v5319, %v5323
    %v5328 = vsub.f32 %v5320, %v5324
    %v5329 = vsub.f32 %v5321, %v5325
    %v5330 = vsub.f32 %v5322, %v5326
    %v5331 = vmax.f32 %v5327, 0.0
    %v5332 = vmax.f32 %v5328, 0.0
    %v5333 = vmax.f32 %v5329, 0.0
    %v5334 = vmax.f32 %v5330, 0.0
    %v5335 = vadd.f32 %v5331, 1e-05
    %v5336 = vadd.f32 %v5332, 1e-05
    %v5337 = vadd.f32 %v5333, 1e-05
    %v5338 = vadd.f32 %v5334, 1e-05
    %v5339 = vrsqrt.pop %v5335
    %v5340 = vrsqrt.pop %v5336
    %v5341 = vrsqrt.pop %v5337
    %v5342 = vrsqrt.pop %v5338
    %v5347 = vcombine.low %v5339, %v5340
    %v5348 = vcombine.low %v5341, %v5342
    %v5350 = vunpack.c.l.s4 1966171168
    %v5351 = vunpack.c.0.s8 %v5350
    %v5352 = vlaneseq
    %v5353 = vshrl.u32 %v5352, 7
    %v5354 = vsub.s32 %v5351, %v5353
    %v5355 = vrot.slane %v5347, %v5354
    %v5357 = vunpack.c.l.s4 1966171168
    %v5358 = vunpack.c.0.s8 %v5357
    %v5359 = vlaneseq
    %v5360 = vshrl.u32 %v5359, 7
    %v5361 = vsub.s32 %v5358, %v5360
    %v5362 = vrot.slane %v5348, %v5361
    %v5363 = vcombine.low %v5355, %v5362
    %v5365 = vunpack.c.l.s4 1966171168
    %v5366 = vunpack.c.0.s8 %v5365
    %v5367 = vlaneseq
    %v5368 = vshrl.u32 %v5367, 7
    %v5369 = vsub.s32 %v5366, %v5368
    %v5370 = vrot.slane %v5363, %v5369
    %v5372 = vmul.f32 %v5224, %v5370
    %v5374 = vlaneseq
    %v5375 = vshrl.u32 %v5374, 7
    %v5376 = vsub.s32 0, %v5375
    %v5377 = vrot.slane %v5372, %v5376
    %v5378 = vlaneseq
    %v5379 = vshrl.u32 %v5378, 7
    %v5380 = vsub.s32 1, %v5379
    %v5381 = vrot.slane %v5372, %v5380
    %v5382 = vlaneseq
    %v5383 = vshrl.u32 %v5382, 7
    %v5384 = vsub.s32 2, %v5383
    %v5385 = vrot.slane %v5372, %v5384
    %v5386 = vlaneseq
    %v5387 = vshrl.u32 %v5386, 7
    %v5388 = vsub.s32 3, %v5387
    %v5389 = vrot.slane %v5372, %v5388
    %v5394 = vmul.f32 %v5263, %v5377
    %v5395 = vmul.f32 %v5264, %v5381
    %v5396 = vmul.f32 %v5265, %v5385
    %v5397 = vmul.f32 %v5266, %v5389
    %v5402 = vcombine.low %v5394, %v5395
    %v5403 = vcombine.low %v5396, %v5397
    %v5405 = vunpack.c.l.s4 1966171168
    %v5406 = vunpack.c.0.s8 %v5405
    %v5407 = vlaneseq
    %v5408 = vshrl.u32 %v5407, 7
    %v5409 = vsub.s32 %v5406, %v5408
    %v5410 = vrot.slane %v5402, %v5409
    %v5412 = vunpack.c.l.s4 1966171168
    %v5413 = vunpack.c.0.s8 %v5412
    %v5414 = vlaneseq
    %v5415 = vshrl.u32 %v5414, 7
    %v5416 = vsub.s32 %v5413, %v5415
    %v5417 = vrot.slane %v5403, %v5416
    %v5418 = vcombine.low %v5410, %v5417
    %v5420 = vunpack.c.l.s4 1966171168
    %v5421 = vunpack.c.0.s8 %v5420
    %v5422 = vlaneseq
    %v5423 = vshrl.u32 %v5422, 7
    %v5424 = vsub.s32 %v5421, %v5423
    %v5425 = vrot.slane %v5418, %v5424
    %v5427 = vsub.f32 %v5226, %v5425
    %v5428 = vmul.f32 %v5153, %v5377
    %v5429 = vmul.f32 %v5155, %v5381
    %v5430 = vmul.f32 %v5206, %v5385
    %v5431 = vmul.f32 %v5208, %v5389
    %v5432 = vmul.f32 %v5157, %v5377
    %v5433 = vmul.f32 %v5159, %v5381
    %v5434 = vmul.f32 %v5210, %v5385
    %v5435 = vmul.f32 %v5212, %v5389
    %v5436 = vmul.f32 %v5163, %v5377
    %v5437 = vmul.f32 %v5165, %v5381
    %v5438 = vmul.f32 %v5216, %v5385
    %v5439 = vmul.f32 %v5218, %v5389
    %v5440 = vmul.f32 %v5167, %v5377
    %v5441 = vmul.f32 %v5169, %v5381
    %v5442 = vmul.f32 %v5220, %v5385
    %v5443 = vmul.f32 %v5222, %v5389
    %v5445 = vlaneseq
    %v5446 = vshrl.u32 %v5445, 7
    %v5447 = vsub.s32 0, %v5446
    %v5448 = vrot.slane %v5427, %v5447
    %v5449 = vlaneseq
    %v5450 = vshrl.u32 %v5449, 7
    %v5451 = vsub.s32 1, %v5450
    %v5452 = vrot.slane %v5427, %v5451
    %v5453 = vlaneseq
    %v5454 = vshrl.u32 %v5453, 7
    %v5455 = vsub.s32 2, %v5454
    %v5456 = vrot.slane %v5427, %v5455
    %v5457 = vlaneseq
    %v5458 = vshrl.u32 %v5457, 7
    %v5459 = vsub.s32 3, %v5458
    %v5460 = vrot.slane %v5427, %v5459
    %v5465 = vadd.f32 %v5428, %v5448
    %v5466 = vadd.f32 %v5429, %v5452
    %v5467 = vadd.f32 %v5430, %v5456
    %v5468 = vadd.f32 %v5431, %v5460
    %v5469 = vadd.f32 %v5432, %v5448
    %v5470 = vadd.f32 %v5433, %v5452
    %v5471 = vadd.f32 %v5434, %v5456
    %v5472 = vadd.f32 %v5435, %v5460
    %v5473 = vadd.f32 %v5436, %v5448
    %v5474 = vadd.f32 %v5437, %v5452
    %v5475 = vadd.f32 %v5438, %v5456
    %v5476 = vadd.f32 %v5439, %v5460
    %v5477 = vadd.f32 %v5440, %v5448
    %v5478 = vadd.f32 %v5441, %v5452
    %v5479 = vadd.f32 %v5442, %v5456
    %v5480 = vadd.f32 %v5443, %v5460
    %v5481 = vmax.f32 %v5465, 0.0
    %v5482 = vmax.f32 %v5466, 0.0
    %v5483 = vmax.f32 %v5467, 0.0
    %v5484 = vmax.f32 %v5468, 0.0
    %v5485 = vmax.f32 %v5469, 0.0
    %v5486 = vmax.f32 %v5470, 0.0
    %v5487 = vmax.f32 %v5471, 0.0
    %v5488 = vmax.f32 %v5472, 0.0
    %v5489 = vmax.f32 %v5473, 0.0
    %v5490 = vmax.f32 %v5474, 0.0
    %v5491 = vmax.f32 %v5475, 0.0
    %v5492 = vmax.f32 %v5476, 0.0
    %v5493 = vmax.f32 %v5477, 0.0
    %v5494 = vmax.f32 %v5478, 0.0
    %v5495 = vmax.f32 %v5479, 0.0
    %v5496 = vmax.f32 %v5480, 0.0
    %v5497 = vld [vmem:[#allocation7] sm:$0xff]
    %v5498 = vld [vmem:[#allocation7 + $0x8] sm:$0xff]
    %v5499 = vld [vmem:[#allocation7 + $0x10] sm:$0xff]
    %v5500 = vld [vmem:[#allocation7 + $0x18] sm:$0xff]
    %v5501 = vld [vmem:[#allocation7 + $0x20] sm:$0xff]
    %v5502 = vld [vmem:[#allocation7 + $0x28] sm:$0xff]
    %v5503 = vld [vmem:[#allocation7 + $0x30] sm:$0xff]
    %v5504 = vld [vmem:[#allocation7 + $0x38] sm:$0xff]
    %v5505 = vld [vmem:[#allocation7 + $0x40] sm:$0xff]
    %v5506 = vld [vmem:[#allocation7 + $0x48] sm:$0xff]
    %v5507 = vld [vmem:[#allocation7 + $0x50] sm:$0xff]
    %v5508 = vld [vmem:[#allocation7 + $0x58] sm:$0xff]
    %v5509 = vld [vmem:[#allocation7 + $0x60] sm:$0xff]
    %v5510 = vld [vmem:[#allocation7 + $0x68] sm:$0xff]
    %v5511 = vld [vmem:[#allocation7 + $0x70] sm:$0xff]
    %v5512 = vld [vmem:[#allocation7 + $0x78] sm:$0xff]
    %v5513 = vld [vmem:[#allocation7 + $0x80] sm:$0xff]
    %v5514 = vld [vmem:[#allocation7 + $0x88] sm:$0xff]
    %v5515 = vld [vmem:[#allocation7 + $0x90] sm:$0xff]
    %v5516 = vld [vmem:[#allocation7 + $0x98] sm:$0xff]
    %v5517 = vld [vmem:[#allocation7 + $0xa0] sm:$0xff]
    %v5518 = vld [vmem:[#allocation7 + $0xa8] sm:$0xff]
    %v5519 = vld [vmem:[#allocation7 + $0xb0] sm:$0xff]
    %v5520 = vld [vmem:[#allocation7 + $0xb8] sm:$0xff]
    %v5521 = vld [vmem:[#allocation7 + $0xc0] sm:$0xff]
    %v5522 = vld [vmem:[#allocation7 + $0xc8] sm:$0xff]
    %v5523 = vld [vmem:[#allocation7 + $0xd0] sm:$0xff]
    %v5524 = vld [vmem:[#allocation7 + $0xd8] sm:$0xff]
    %v5525 = vld [vmem:[#allocation7 + $0xe0] sm:$0xff]
    %v5526 = vld [vmem:[#allocation7 + $0xe8] sm:$0xff]
    %v5527 = vld [vmem:[#allocation7 + $0xf0] sm:$0xff]
    %v5528 = vld [vmem:[#allocation7 + $0xf8] sm:$0xff]
    %v5529 = vld [vmem:[#allocation7 + $0x100] sm:$0xff]
    %v5530 = vld [vmem:[#allocation7 + $0x108] sm:$0xff]
    %v5531 = vld [vmem:[#allocation7 + $0x110] sm:$0xff]
    %v5532 = vld [vmem:[#allocation7 + $0x118] sm:$0xff]
    %v5533 = vld [vmem:[#allocation7 + $0x120] sm:$0xff]
    %v5534 = vld [vmem:[#allocation7 + $0x128] sm:$0xff]
    %v5535 = vld [vmem:[#allocation7 + $0x130] sm:$0xff]
    %v5536 = vld [vmem:[#allocation7 + $0x138] sm:$0xff]
    %v5537 = vld [vmem:[#allocation7 + $0x140] sm:$0xff]
    %v5538 = vld [vmem:[#allocation7 + $0x148] sm:$0xff]
    %v5539 = vld [vmem:[#allocation7 + $0x150] sm:$0xff]
    %v5540 = vld [vmem:[#allocation7 + $0x158] sm:$0xff]
    %v5541 = vld [vmem:[#allocation7 + $0x160] sm:$0xff]
    %v5542 = vld [vmem:[#allocation7 + $0x168] sm:$0xff]
    %v5543 = vld [vmem:[#allocation7 + $0x170] sm:$0xff]
    %v5544 = vld [vmem:[#allocation7 + $0x178] sm:$0xff]
    %v5545 = vld [vmem:[#allocation7 + $0x180] sm:$0xff]
    %v5546 = vld [vmem:[#allocation7 + $0x188] sm:$0xff]
    %v5547 = vld [vmem:[#allocation7 + $0x190] sm:$0xff]
    %v5548 = vld [vmem:[#allocation7 + $0x198] sm:$0xff]
    %v5549 = vld [vmem:[#allocation7 + $0x1a0] sm:$0xff]
    %v5550 = vld [vmem:[#allocation7 + $0x1a8] sm:$0xff]
    %v5551 = vld [vmem:[#allocation7 + $0x1b0] sm:$0xff]
    %v5552 = vld [vmem:[#allocation7 + $0x1b8] sm:$0xff]
    %v5553 = vld [vmem:[#allocation7 + $0x1c0] sm:$0xff]
    %v5554 = vld [vmem:[#allocation7 + $0x1c8] sm:$0xff]
    %v5555 = vld [vmem:[#allocation7 + $0x1d0] sm:$0xff]
    %v5556 = vld [vmem:[#allocation7 + $0x1d8] sm:$0xff]
    %v5557 = vld [vmem:[#allocation7 + $0x1e0] sm:$0xff]
    %v5558 = vld [vmem:[#allocation7 + $0x1e8] sm:$0xff]
    %v5559 = vld [vmem:[#allocation7 + $0x1f0] sm:$0xff]
    %v5560 = vld [vmem:[#allocation7 + $0x1f8] sm:$0xff]
    %v5561 = vld [vmem:[#allocation7 + $0x200] sm:$0xff]
    %v5562 = vld [vmem:[#allocation7 + $0x208] sm:$0xff]
    %v5563 = vld [vmem:[#allocation7 + $0x210] sm:$0xff]
    %v5564 = vld [vmem:[#allocation7 + $0x218] sm:$0xff]
    %v5565 = vld [vmem:[#allocation7 + $0x220] sm:$0xff]
    %v5566 = vld [vmem:[#allocation7 + $0x228] sm:$0xff]
    %v5567 = vld [vmem:[#allocation7 + $0x230] sm:$0xff]
    %v5568 = vld [vmem:[#allocation7 + $0x238] sm:$0xff]
    %v5569 = vld [vmem:[#allocation7 + $0x240] sm:$0xff]
    %v5570 = vld [vmem:[#allocation7 + $0x248] sm:$0xff]
    %v5571 = vld [vmem:[#allocation7 + $0x250] sm:$0xff]
    %v5572 = vld [vmem:[#allocation7 + $0x258] sm:$0xff]
    %v5573 = vld [vmem:[#allocation7 + $0x260] sm:$0xff]
    %v5574 = vld [vmem:[#allocation7 + $0x268] sm:$0xff]
    %v5575 = vld [vmem:[#allocation7 + $0x270] sm:$0xff]
    %v5576 = vld [vmem:[#allocation7 + $0x278] sm:$0xff]
    %v5577 = vld [vmem:[#allocation7 + $0x280] sm:$0xff]
    %v5578 = vld [vmem:[#allocation7 + $0x288] sm:$0xff]
    %v5579 = vld [vmem:[#allocation7 + $0x290] sm:$0xff]
    %v5580 = vld [vmem:[#allocation7 + $0x298] sm:$0xff]
    %v5581 = vld [vmem:[#allocation7 + $0x2a0] sm:$0xff]
    %v5582 = vld [vmem:[#allocation7 + $0x2a8] sm:$0xff]
    %v5583 = vld [vmem:[#allocation7 + $0x2b0] sm:$0xff]
    %v5584 = vld [vmem:[#allocation7 + $0x2b8] sm:$0xff]
    %v5585 = vld [vmem:[#allocation7 + $0x2c0] sm:$0xff]
    %v5586 = vld [vmem:[#allocation7 + $0x2c8] sm:$0xff]
    %v5587 = vld [vmem:[#allocation7 + $0x2d0] sm:$0xff]
    %v5588 = vld [vmem:[#allocation7 + $0x2d8] sm:$0xff]
    %v5589 = vld [vmem:[#allocation7 + $0x2e0] sm:$0xff]
    %v5590 = vld [vmem:[#allocation7 + $0x2e8] sm:$0xff]
    %v5591 = vld [vmem:[#allocation7 + $0x2f0] sm:$0xff]
    %v5592 = vld [vmem:[#allocation7 + $0x2f8] sm:$0xff]
    %v5593 = vld [vmem:[#allocation7 + $0x300] sm:$0xff]
    %v5594 = vld [vmem:[#allocation7 + $0x308] sm:$0xff]
    %v5595 = vld [vmem:[#allocation7 + $0x310] sm:$0xff]
    %v5596 = vld [vmem:[#allocation7 + $0x318] sm:$0xff]
    %v5597 = vld [vmem:[#allocation7 + $0x320] sm:$0xff]
    %v5598 = vld [vmem:[#allocation7 + $0x328] sm:$0xff]
    %v5599 = vld [vmem:[#allocation7 + $0x330] sm:$0xff]
    %v5600 = vld [vmem:[#allocation7 + $0x338] sm:$0xff]
    %v5601 = vld [vmem:[#allocation7 + $0x340] sm:$0xff]
    %v5602 = vld [vmem:[#allocation7 + $0x348] sm:$0xff]
    %v5603 = vld [vmem:[#allocation7 + $0x350] sm:$0xff]
    %v5604 = vld [vmem:[#allocation7 + $0x358] sm:$0xff]
    %v5605 = vld [vmem:[#allocation7 + $0x360] sm:$0xff]
    %v5606 = vld [vmem:[#allocation7 + $0x368] sm:$0xff]
    %v5607 = vld [vmem:[#allocation7 + $0x370] sm:$0xff]
    %v5608 = vld [vmem:[#allocation7 + $0x378] sm:$0xff]
    %v5609 = vld [vmem:[#allocation7 + $0x380] sm:$0xff]
    %v5610 = vld [vmem:[#allocation7 + $0x388] sm:$0xff]
    %v5611 = vld [vmem:[#allocation7 + $0x390] sm:$0xff]
    %v5612 = vld [vmem:[#allocation7 + $0x398] sm:$0xff]
    %v5613 = vld [vmem:[#allocation7 + $0x3a0] sm:$0xff]
    %v5614 = vld [vmem:[#allocation7 + $0x3a8] sm:$0xff]
    %v5615 = vld [vmem:[#allocation7 + $0x3b0] sm:$0xff]
    %v5616 = vld [vmem:[#allocation7 + $0x3b8] sm:$0xff]
    %v5617 = vld [vmem:[#allocation7 + $0x3c0] sm:$0xff]
    %v5618 = vld [vmem:[#allocation7 + $0x3c8] sm:$0xff]
    %v5619 = vld [vmem:[#allocation7 + $0x3d0] sm:$0xff]
    %v5620 = vld [vmem:[#allocation7 + $0x3d8] sm:$0xff]
    %v5621 = vld [vmem:[#allocation7 + $0x3e0] sm:$0xff]
    %v5622 = vld [vmem:[#allocation7 + $0x3e8] sm:$0xff]
    %v5623 = vld [vmem:[#allocation7 + $0x3f0] sm:$0xff]
    %v5624 = vld [vmem:[#allocation7 + $0x3f8] sm:$0xff]
    %v5625 = vpack.c.bf16 %v5485, %v5481
    %v5626 = vpack.c.bf16 %v5486, %v5482
    %v5627 = vpack.c.bf16 %v5487, %v5483
    %v5628 = vpack.c.bf16 %v5488, %v5484
    %v5629 = vpack.c.bf16 %v5493, %v5489
    %v5630 = vpack.c.bf16 %v5494, %v5490
    %v5631 = vpack.c.bf16 %v5495, %v5491
    %v5632 = vpack.c.bf16 %v5496, %v5492
    %5633 = vmatprep.subr.bf16.mxu0 %v5498
    %5634 = vmatpush1.bf16.msra.mxu0 %v5497
    %5635 = vmatprep.subr.bf16.mxu0 %v5502
    %5636 = vmatpush1.bf16.msra.mxu0 %v5501
    %5637 = vmatprep.subr.bf16.mxu0 %v5506
    %5638 = vmatpush1.bf16.msra.mxu0 %v5505
    %5639 = vmatprep.subr.bf16.mxu0 %v5510
    %5640 = vmatpush1.bf16.msra.mxu0 %v5509
    %5641 = vmatprep.subr.bf16.mxu0 %v5514
    %5642 = vmatpush1.bf16.msra.mxu0 %v5513
    %5643 = vmatprep.subr.bf16.mxu0 %v5518
    %5644 = vmatpush1.bf16.msra.mxu0 %v5517
    %5645 = vmatprep.subr.bf16.mxu0 %v5522
    %5646 = vmatpush1.bf16.msra.mxu0 %v5521
    %5647 = vmatprep.subr.bf16.mxu0 %v5526
    %5648 = vmatpush1.bf16.msra.mxu0 %v5525
    %5649 = vmatprep.subr.bf16.mxu0 %v5530
    %5650 = vmatpush1.bf16.msra.mxu0 %v5529
    %5651 = vmatprep.subr.bf16.mxu0 %v5534
    %5652 = vmatpush1.bf16.msra.mxu0 %v5533
    %5653 = vmatprep.subr.bf16.mxu0 %v5538
    %5654 = vmatpush1.bf16.msra.mxu0 %v5537
    %5655 = vmatprep.subr.bf16.mxu0 %v5542
    %5656 = vmatpush1.bf16.msra.mxu0 %v5541
    %5657 = vmatprep.subr.bf16.mxu0 %v5546
    %5658 = vmatpush1.bf16.msra.mxu0 %v5545
    %5659 = vmatprep.subr.bf16.mxu0 %v5550
    %5660 = vmatpush1.bf16.msra.mxu0 %v5549
    %5661 = vmatprep.subr.bf16.mxu0 %v5554
    %5662 = vmatpush1.bf16.msra.mxu0 %v5553
    %5663 = vmatprep.subr.bf16.mxu0 %v5558
    %5664 = vmatpush1.bf16.msra.mxu0 %v5557
    %5665 = vmatprep.mubr.bf16.mxu0 %v5626
    %5666 = vmatmul.mubr.bf16.gmra.mrb[0].mxu0 %v5625
    %v5667 = vpop.f32.mrb[0].mxu0
    %v5668 = vadd.f32 0.0, %v5667
    %v5669 = vpop.f32.mrb[0].mxu0
    %v5670 = vadd.f32 0.0, %v5669
    %v5671 = vpop.f32.mrb[0].mxu0
    %v5672 = vadd.f32 0.0, %v5671
    %v5673 = vpop.f32.mrb[0].mxu0
    %v5674 = vadd.f32 0.0, %v5673
    %5675 = vmatprep.mubr.bf16.mxu0 %v5630
    %5676 = vmatmul.mubr.bf16.gmra.mrb[0].mxu0 %v5629
    %v5677 = vpop.f32.mrb[0].mxu0
    %v5678 = vadd.f32 0.0, %v5677
    %v5679 = vpop.f32.mrb[0].mxu0
    %v5680 = vadd.f32 0.0, %v5679
    %v5681 = vpop.f32.mrb[0].mxu0
    %v5682 = vadd.f32 0.0, %v5681
    %v5683 = vpop.f32.mrb[0].mxu0
    %v5684 = vadd.f32 0.0, %v5683
    %5685 = vdwg.mxu0
    %5686 = vmatprep.subr.bf16.mxu0 %v5562
    %5687 = vmatpush1.bf16.msra.mxu0 %v5561
    %5688 = vmatprep.subr.bf16.mxu0 %v5566
    %5689 = vmatpush1.bf16.msra.mxu0 %v5565
    %5690 = vmatprep.subr.bf16.mxu0 %v5570
    %5691 = vmatpush1.bf16.msra.mxu0 %v5569
    %5692 = vmatprep.subr.bf16.mxu0 %v5574
    %5693 = vmatpush1.bf16.msra.mxu0 %v5573
    %5694 = vmatprep.subr.bf16.mxu0 %v5578
    %5695 = vmatpush1.bf16.msra.mxu0 %v5577
    %5696 = vmatprep.subr.bf16.mxu0 %v5582
    %5697 = vmatpush1.bf16.msra.mxu0 %v5581
    %5698 = vmatprep.subr.bf16.mxu0 %v5586
    %5699 = vmatpush1.bf16.msra.mxu0 %v5585
    %5700 = vmatprep.subr.bf16.mxu0 %v5590
    %5701 = vmatpush1.bf16.msra.mxu0 %v5589
    %5702 = vmatprep.subr.bf16.mxu0 %v5594
    %5703 = vmatpush1.bf16.msra.mxu0 %v5593
    %5704 = vmatprep.subr.bf16.mxu0 %v5598
    %5705 = vmatpush1.bf16.msra.mxu0 %v5597
    %5706 = vmatprep.subr.bf16.mxu0 %v5602
    %5707 = vmatpush1.bf16.msra.mxu0 %v5601
    %5708 = vmatprep.subr.bf16.mxu0 %v5606
    %5709 = vmatpush1.bf16.msra.mxu0 %v5605
    %5710 = vmatprep.subr.bf16.mxu0 %v5610
    %5711 = vmatpush1.bf16.msra.mxu0 %v5609
    %5712 = vmatprep.subr.bf16.mxu0 %v5614
    %5713 = vmatpush1.bf16.msra.mxu0 %v5613
    %5714 = vmatprep.subr.bf16.mxu0 %v5618
    %5715 = vmatpush1.bf16.msra.mxu0 %v5617
    %5716 = vmatprep.subr.bf16.mxu0 %v5622
    %5717 = vmatpush1.bf16.msra.mxu0 %v5621
    %5718 = vmatprep.mubr.bf16.mxu0 %v5628
    %5719 = vmatmul.mubr.bf16.gmra.mrb[0].mxu0 %v5627
    %v5720 = vpop.f32.mrb[0].mxu0
    %v5721 = vadd.f32 %v5668, %v5720
    %v5722 = vpop.f32.mrb[0].mxu0
    %v5723 = vadd.f32 %v5670, %v5722
    %v5724 = vpop.f32.mrb[0].mxu0
    %v5725 = vadd.f32 %v5672, %v5724
    %v5726 = vpop.f32.mrb[0].mxu0
    %v5727 = vadd.f32 %v5674, %v5726
    %5728 = vmatprep.mubr.bf16.mxu0 %v5632
    %5729 = vmatmul.mubr.bf16.gmra.mrb[0].mxu0 %v5631
    %v5730 = vpop.f32.mrb[0].mxu0
    %v5731 = vadd.f32 %v5678, %v5730
    %v5732 = vpop.f32.mrb[0].mxu0
    %v5733 = vadd.f32 %v5680, %v5732
    %v5734 = vpop.f32.mrb[0].mxu0
    %v5735 = vadd.f32 %v5682, %v5734
    %v5736 = vpop.f32.mrb[0].mxu0
    %v5737 = vadd.f32 %v5684, %v5736
    %5738 = vdwg.mxu0
    %5739 = vmatprep.subr.bf16.mxu0 %v5500
    %5740 = vmatpush1.bf16.msra.mxu0 %v5499
    %5741 = vmatprep.subr.bf16.mxu0 %v5504
    %5742 = vmatpush1.bf16.msra.mxu0 %v5503
    %5743 = vmatprep.subr.bf16.mxu0 %v5508
    %5744 = vmatpush1.bf16.msra.mxu0 %v5507
    %5745 = vmatprep.subr.bf16.mxu0 %v5512
    %5746 = vmatpush1.bf16.msra.mxu0 %v5511
    %5747 = vmatprep.subr.bf16.mxu0 %v5516
    %5748 = vmatpush1.bf16.msra.mxu0 %v5515
    %5749 = vmatprep.subr.bf16.mxu0 %v5520
    %5750 = vmatpush1.bf16.msra.mxu0 %v5519
    %5751 = vmatprep.subr.bf16.mxu0 %v5524
    %5752 = vmatpush1.bf16.msra.mxu0 %v5523
    %5753 = vmatprep.subr.bf16.mxu0 %v5528
    %5754 = vmatpush1.bf16.msra.mxu0 %v5527
    %5755 = vmatprep.subr.bf16.mxu0 %v5532
    %5756 = vmatpush1.bf16.msra.mxu0 %v5531
    %5757 = vmatprep.subr.bf16.mxu0 %v5536
    %5758 = vmatpush1.bf16.msra.mxu0 %v5535
    %5759 = vmatprep.subr.bf16.mxu0 %v5540
    %5760 = vmatpush1.bf16.msra.mxu0 %v5539
    %5761 = vmatprep.subr.bf16.mxu0 %v5544
    %5762 = vmatpush1.bf16.msra.mxu0 %v5543
    %5763 = vmatprep.subr.bf16.mxu0 %v5548
    %5764 = vmatpush1.bf16.msra.mxu0 %v5547
    %5765 = vmatprep.subr.bf16.mxu0 %v5552
    %5766 = vmatpush1.bf16.msra.mxu0 %v5551
    %5767 = vmatprep.subr.bf16.mxu0 %v5556
    %5768 = vmatpush1.bf16.msra.mxu0 %v5555
    %5769 = vmatprep.subr.bf16.mxu0 %v5560
    %5770 = vmatpush1.bf16.msra.mxu0 %v5559
    %5771 = vmatprep.mubr.bf16.mxu0 %v5626
    %5772 = vmatmul.mubr.bf16.gmra.mrb[0].mxu0 %v5625
    %v5773 = vpop.f32.mrb[0].mxu0
    %v5774 = vadd.f32 0.0, %v5773
    %v5775 = vpop.f32.mrb[0].mxu0
    %v5776 = vadd.f32 0.0, %v5775
    %v5777 = vpop.f32.mrb[0].mxu0
    %v5778 = vadd.f32 0.0, %v5777
    %v5779 = vpop.f32.mrb[0].mxu0
    %v5780 = vadd.f32 0.0, %v5779
    %5781 = vmatprep.mubr.bf16.mxu0 %v5630
    %5782 = vmatmul.mubr.bf16.gmra.mrb[0].mxu0 %v5629
    %v5783 = vpop.f32.mrb[0].mxu0
    %v5784 = vadd.f32 0.0, %v5783
    %v5785 = vpop.f32.mrb[0].mxu0
    %v5786 = vadd.f32 0.0, %v5785
    %v5787 = vpop.f32.mrb[0].mxu0
    %v5788 = vadd.f32 0.0, %v5787
    %v5789 = vpop.f32.mrb[0].mxu0
    %v5790 = vadd.f32 0.0, %v5789
    %5791 = vdwg.mxu0
    %5792 = vmatprep.subr.bf16.mxu0 %v5564
    %5793 = vmatpush1.bf16.msra.mxu0 %v5563
    %5794 = vmatprep.subr.bf16.mxu0 %v5568
    %5795 = vmatpush1.bf16.msra.mxu0 %v5567
    %5796 = vmatprep.subr.bf16.mxu0 %v5572
    %5797 = vmatpush1.bf16.msra.mxu0 %v5571
    %5798 = vmatprep.subr.bf16.mxu0 %v5576
    %5799 = vmatpush1.bf16.msra.mxu0 %v5575
    %5800 = vmatprep.subr.bf16.mxu0 %v5580
    %5801 = vmatpush1.bf16.msra.mxu0 %v5579
    %5802 = vmatprep.subr.bf16.mxu0 %v5584
    %5803 = vmatpush1.bf16.msra.mxu0 %v5583
    %5804 = vmatprep.subr.bf16.mxu0 %v5588
    %5805 = vmatpush1.bf16.msra.mxu0 %v5587
    %5806 = vmatprep.subr.bf16.mxu0 %v5592
    %5807 = vmatpush1.bf16.msra.mxu0 %v5591
    %5808 = vmatprep.subr.bf16.mxu0 %v5596
    %5809 = vmatpush1.bf16.msra.mxu0 %v5595
    %5810 = vmatprep.subr.bf16.mxu0 %v5600
    %5811 = vmatpush1.bf16.msra.mxu0 %v5599
    %5812 = vmatprep.subr.bf16.mxu0 %v5604
    %5813 = vmatpush1.bf16.msra.mxu0 %v5603
    %5814 = vmatprep.subr.bf16.mxu0 %v5608
    %5815 = vmatpush1.bf16.msra.mxu0 %v5607
    %5816 = vmatprep.subr.bf16.mxu0 %v5612
    %5817 = vmatpush1.bf16.msra.mxu0 %v5611
    %5818 = vmatprep.subr.bf16.mxu0 %v5616
    %5819 = vmatpush1.bf16.msra.mxu0 %v5615
    %5820 = vmatprep.subr.bf16.mxu0 %v5620
    %5821 = vmatpush1.bf16.msra.mxu0 %v5619
    %5822 = vmatprep.subr.bf16.mxu0 %v5624
    %5823 = vmatpush1.bf16.msra.mxu0 %v5623
    %5824 = vmatprep.mubr.bf16.mxu0 %v5628
    %5825 = vmatmul.mubr.bf16.gmra.mrb[0].mxu0 %v5627
    %v5826 = vpop.f32.mrb[0].mxu0
    %v5827 = vadd.f32 %v5774, %v5826
    %v5828 = vpop.f32.mrb[0].mxu0
    %v5829 = vadd.f32 %v5776, %v5828
    %v5830 = vpop.f32.mrb[0].mxu0
    %v5831 = vadd.f32 %v5778, %v5830
    %v5832 = vpop.f32.mrb[0].mxu0
    %v5833 = vadd.f32 %v5780, %v5832
    %5834 = vmatprep.mubr.bf16.mxu0 %v5632
    %5835 = vmatmul.mubr.bf16.gmra.mrb[0].mxu0 %v5631
    %v5836 = vpop.f32.mrb[0].mxu0
    %v5837 = vadd.f32 %v5784, %v5836
    %v5838 = vpop.f32.mrb[0].mxu0
    %v5839 = vadd.f32 %v5786, %v5838
    %v5840 = vpop.f32.mrb[0].mxu0
    %v5841 = vadd.f32 %v5788, %v5840
    %v5842 = vpop.f32.mrb[0].mxu0
    %v5843 = vadd.f32 %v5790, %v5842
    %5844 = vdwg.mxu0
    %s5845 = scalar_lea.vmem [#allocation21], 2
    %v5846 = vld [vmem:[%s5845] ss:$8 sm:$0xf]
    %s5847 = scalar_lea.vmem [#allocation21], 3
    %v5848 = vld [vmem:[%s5847] ss:$8 sm:$0xf]
    %v5849 = vadd.f32 %v5721, %v5725
    %v5850 = vadd.f32 %v5849, %v5731
    %v5851 = vadd.f32 %v5850, %v5735
    %v5852 = vrot.slane %v5851, 4
    %v5853 = vadd.f32 %v5851, %v5852
    %v5854 = vrot.slane %v5853, 2
    %v5855 = vadd.f32 %v5853, %v5854
    %v5856 = vrot.slane %v5855, 1
    %v5857 = vadd.f32 %v5855, %v5856
    %v5858 = vadd.f32 %v5723, %v5727
    %v5859 = vadd.f32 %v5858, %v5733
    %v5860 = vadd.f32 %v5859, %v5737
    %v5861 = vrot.slane %v5860, 4
    %v5862 = vadd.f32 %v5860, %v5861
    %v5863 = vrot.slane %v5862, 2
    %v5864 = vadd.f32 %v5862, %v5863
    %v5865 = vrot.slane %v5864, 1
    %v5866 = vadd.f32 %v5864, %v5865
    %v5867 = vadd.f32 %v5827, %v5831
    %v5868 = vadd.f32 %v5867, %v5837
    %v5869 = vadd.f32 %v5868, %v5841
    %v5870 = vrot.slane %v5869, 4
    %v5871 = vadd.f32 %v5869, %v5870
    %v5872 = vrot.slane %v5871, 2
    %v5873 = vadd.f32 %v5871, %v5872
    %v5874 = vrot.slane %v5873, 1
    %v5875 = vadd.f32 %v5873, %v5874
    %v5876 = vadd.f32 %v5829, %v5833
    %v5877 = vadd.f32 %v5876, %v5839
    %v5878 = vadd.f32 %v5877, %v5843
    %v5879 = vrot.slane %v5878, 4
    %v5880 = vadd.f32 %v5878, %v5879
    %v5881 = vrot.slane %v5880, 2
    %v5882 = vadd.f32 %v5880, %v5881
    %v5883 = vrot.slane %v5882, 1
    %v5884 = vadd.f32 %v5882, %v5883
    %v5885 = vmul.f32 %v5857, %v394
    %v5886 = vmul.f32 %v5866, %v394
    %v5887 = vmul.f32 %v5875, %v394
    %v5888 = vmul.f32 %v5884, %v394
    %v5889 = vmul.f32 %v5721, %v5721
    %v5890 = vmul.f32 %v5723, %v5723
    %v5891 = vmul.f32 %v5827, %v5827
    %v5892 = vmul.f32 %v5829, %v5829
    %v5893 = vmul.f32 %v5725, %v5725
    %v5894 = vmul.f32 %v5727, %v5727
    %v5895 = vmul.f32 %v5831, %v5831
    %v5896 = vmul.f32 %v5833, %v5833
    %v5897 = vmul.f32 %v5731, %v5731
    %v5898 = vmul.f32 %v5733, %v5733
    %v5899 = vmul.f32 %v5837, %v5837
    %v5900 = vmul.f32 %v5839, %v5839
    %v5901 = vmul.f32 %v5735, %v5735
    %v5902 = vmul.f32 %v5737, %v5737
    %v5903 = vmul.f32 %v5841, %v5841
    %v5904 = vmul.f32 %v5843, %v5843
    %v5905 = vadd.f32 %v5889, %v5893
    %v5906 = vadd.f32 %v5905, %v5897
    %v5907 = vadd.f32 %v5906, %v5901
    %v5908 = vrot.slane %v5907, 4
    %v5909 = vadd.f32 %v5907, %v5908
    %v5910 = vrot.slane %v5909, 2
    %v5911 = vadd.f32 %v5909, %v5910
    %v5912 = vrot.slane %v5911, 1
    %v5913 = vadd.f32 %v5911, %v5912
    %v5914 = vadd.f32 %v5890, %v5894
    %v5915 = vadd.f32 %v5914, %v5898
    %v5916 = vadd.f32 %v5915, %v5902
    %v5917 = vrot.slane %v5916, 4
    %v5918 = vadd.f32 %v5916, %v5917
    %v5919 = vrot.slane %v5918, 2
    %v5920 = vadd.f32 %v5918, %v5919
    %v5921 = vrot.slane %v5920, 1
    %v5922 = vadd.f32 %v5920, %v5921
    %v5923 = vadd.f32 %v5891, %v5895
    %v5924 = vadd.f32 %v5923, %v5899
    %v5925 = vadd.f32 %v5924, %v5903
    %v5926 = vrot.slane %v5925, 4
    %v5927 = vadd.f32 %v5925, %v5926
    %v5928 = vrot.slane %v5927, 2
    %v5929 = vadd.f32 %v5927, %v5928
    %v5930 = vrot.slane %v5929, 1
    %v5931 = vadd.f32 %v5929, %v5930
    %v5932 = vadd.f32 %v5892, %v5896
    %v5933 = vadd.f32 %v5932, %v5900
    %v5934 = vadd.f32 %v5933, %v5904
    %v5935 = vrot.slane %v5934, 4
    %v5936 = vadd.f32 %v5934, %v5935
    %v5937 = vrot.slane %v5936, 2
    %v5938 = vadd.f32 %v5936, %v5937
    %v5939 = vrot.slane %v5938, 1
    %v5940 = vadd.f32 %v5938, %v5939
    %v5941 = vmul.f32 %v5913, %v394
    %v5942 = vmul.f32 %v5922, %v394
    %v5943 = vmul.f32 %v5931, %v394
    %v5944 = vmul.f32 %v5940, %v394
    %v5945 = vmul.f32 %v5885, %v5885
    %v5946 = vmul.f32 %v5886, %v5886
    %v5947 = vmul.f32 %v5887, %v5887
    %v5948 = vmul.f32 %v5888, %v5888
    %v5949 = vsub.f32 %v5941, %v5945
    %v5950 = vsub.f32 %v5942, %v5946
    %v5951 = vsub.f32 %v5943, %v5947
    %v5952 = vsub.f32 %v5944, %v5948
    %v5953 = vmax.f32 %v5949, 0.0
    %v5954 = vmax.f32 %v5950, 0.0
    %v5955 = vmax.f32 %v5951, 0.0
    %v5956 = vmax.f32 %v5952, 0.0
    %v5957 = vadd.f32 %v5953, 1e-05
    %v5958 = vadd.f32 %v5954, 1e-05
    %v5959 = vadd.f32 %v5955, 1e-05
    %v5960 = vadd.f32 %v5956, 1e-05
    %v5961 = vrsqrt.pop %v5957
    %v5962 = vrsqrt.pop %v5958
    %v5963 = vrsqrt.pop %v5959
    %v5964 = vrsqrt.pop %v5960
    %v5969 = vcombine.low %v5961, %v5962
    %v5970 = vcombine.low %v5963, %v5964
    %v5972 = vunpack.c.l.s4 1966171168
    %v5973 = vunpack.c.0.s8 %v5972
    %v5974 = vlaneseq
    %v5975 = vshrl.u32 %v5974, 7
    %v5976 = vsub.s32 %v5973, %v5975
    %v5977 = vrot.slane %v5969, %v5976
    %v5979 = vunpack.c.l.s4 1966171168
    %v5980 = vunpack.c.0.s8 %v5979
    %v5981 = vlaneseq
    %v5982 = vshrl.u32 %v5981, 7
    %v5983 = vsub.s32 %v5980, %v5982
    %v5984 = vrot.slane %v5970, %v5983
    %v5985 = vcombine.low %v5977, %v5984
    %v5987 = vunpack.c.l.s4 1966171168
    %v5988 = vunpack.c.0.s8 %v5987
    %v5989 = vlaneseq
    %v5990 = vshrl.u32 %v5989, 7
    %v5991 = vsub.s32 %v5988, %v5990
    %v5992 = vrot.slane %v5985, %v5991
    %v5994 = vmul.f32 %v5846, %v5992
    %v5996 = vlaneseq
    %v5997 = vshrl.u32 %v5996, 7
    %v5998 = vsub.s32 0, %v5997
    %v5999 = vrot.slane %v5994, %v5998
    %v6000 = vlaneseq
    %v6001 = vshrl.u32 %v6000, 7
    %v6002 = vsub.s32 1, %v6001
    %v6003 = vrot.slane %v5994, %v6002
    %v6004 = vlaneseq
    %v6005 = vshrl.u32 %v6004, 7
    %v6006 = vsub.s32 2, %v6005
    %v6007 = vrot.slane %v5994, %v6006
    %v6008 = vlaneseq
    %v6009 = vshrl.u32 %v6008, 7
    %v6010 = vsub.s32 3, %v6009
    %v6011 = vrot.slane %v5994, %v6010
    %v6016 = vmul.f32 %v5885, %v5999
    %v6017 = vmul.f32 %v5886, %v6003
    %v6018 = vmul.f32 %v5887, %v6007
    %v6019 = vmul.f32 %v5888, %v6011
    %v6024 = vcombine.low %v6016, %v6017
    %v6025 = vcombine.low %v6018, %v6019
    %v6027 = vunpack.c.l.s4 1966171168
    %v6028 = vunpack.c.0.s8 %v6027
    %v6029 = vlaneseq
    %v6030 = vshrl.u32 %v6029, 7
    %v6031 = vsub.s32 %v6028, %v6030
    %v6032 = vrot.slane %v6024, %v6031
    %v6034 = vunpack.c.l.s4 1966171168
    %v6035 = vunpack.c.0.s8 %v6034
    %v6036 = vlaneseq
    %v6037 = vshrl.u32 %v6036, 7
    %v6038 = vsub.s32 %v6035, %v6037
    %v6039 = vrot.slane %v6025, %v6038
    %v6040 = vcombine.low %v6032, %v6039
    %v6042 = vunpack.c.l.s4 1966171168
    %v6043 = vunpack.c.0.s8 %v6042
    %v6044 = vlaneseq
    %v6045 = vshrl.u32 %v6044, 7
    %v6046 = vsub.s32 %v6043, %v6045
    %v6047 = vrot.slane %v6040, %v6046
    %v6049 = vsub.f32 %v5848, %v6047
    %v6050 = vmul.f32 %v5721, %v5999
    %v6051 = vmul.f32 %v5723, %v6003
    %v6052 = vmul.f32 %v5827, %v6007
    %v6053 = vmul.f32 %v5829, %v6011
    %v6054 = vmul.f32 %v5725, %v5999
    %v6055 = vmul.f32 %v5727, %v6003
    %v6056 = vmul.f32 %v5831, %v6007
    %v6057 = vmul.f32 %v5833, %v6011
    %v6058 = vmul.f32 %v5731, %v5999
    %v6059 = vmul.f32 %v5733, %v6003
    %v6060 = vmul.f32 %v5837, %v6007
    %v6061 = vmul.f32 %v5839, %v6011
    %v6062 = vmul.f32 %v5735, %v5999
    %v6063 = vmul.f32 %v5737, %v6003
    %v6064 = vmul.f32 %v5841, %v6007
    %v6065 = vmul.f32 %v5843, %v6011
    %v6067 = vlaneseq
    %v6068 = vshrl.u32 %v6067, 7
    %v6069 = vsub.s32 0, %v6068
    %v6070 = vrot.slane %v6049, %v6069
    %v6071 = vlaneseq
    %v6072 = vshrl.u32 %v6071, 7
    %v6073 = vsub.s32 1, %v6072
    %v6074 = vrot.slane %v6049, %v6073
    %v6075 = vlaneseq
    %v6076 = vshrl.u32 %v6075, 7
    %v6077 = vsub.s32 2, %v6076
    %v6078 = vrot.slane %v6049, %v6077
    %v6079 = vlaneseq
    %v6080 = vshrl.u32 %v6079, 7
    %v6081 = vsub.s32 3, %v6080
    %v6082 = vrot.slane %v6049, %v6081
    %v6087 = vadd.f32 %v6050, %v6070
    %v6088 = vadd.f32 %v6051, %v6074
    %v6089 = vadd.f32 %v6052, %v6078
    %v6090 = vadd.f32 %v6053, %v6082
    %v6091 = vadd.f32 %v6054, %v6070
    %v6092 = vadd.f32 %v6055, %v6074
    %v6093 = vadd.f32 %v6056, %v6078
    %v6094 = vadd.f32 %v6057, %v6082
    %v6095 = vadd.f32 %v6058, %v6070
    %v6096 = vadd.f32 %v6059, %v6074
    %v6097 = vadd.f32 %v6060, %v6078
    %v6098 = vadd.f32 %v6061, %v6082
    %v6099 = vadd.f32 %v6062, %v6070
    %v6100 = vadd.f32 %v6063, %v6074
    %v6101 = vadd.f32 %v6064, %v6078
    %v6102 = vadd.f32 %v6065, %v6082
    %s6103 = scalar_lea.vmem [#allocation7], 1024
    %v6104 = vld [vmem:[%s6103] sm:$0xff]
    %v6105 = vld [vmem:[%s6103 + $0x8] sm:$0xff]
    %v6106 = vld [vmem:[%s6103 + $0x10] sm:$0xff]
    %v6107 = vld [vmem:[%s6103 + $0x18] sm:$0xff]
    %v6108 = vld [vmem:[%s6103 + $0x20] sm:$0xff]
    %v6109 = vld [vmem:[%s6103 + $0x28] sm:$0xff]
    %v6110 = vld [vmem:[%s6103 + $0x30] sm:$0xff]
    %v6111 = vld [vmem:[%s6103 + $0x38] sm:$0xff]
    %v6112 = vld [vmem:[%s6103 + $0x40] sm:$0xff]
    %v6113 = vld [vmem:[%s6103 + $0x48] sm:$0xff]
    %v6114 = vld [vmem:[%s6103 + $0x50] sm:$0xff]
    %v6115 = vld [vmem:[%s6103 + $0x58] sm:$0xff]
    %v6116 = vld [vmem:[%s6103 + $0x60] sm:$0xff]
    %v6117 = vld [vmem:[%s6103 + $0x68] sm:$0xff]
    %v6118 = vld [vmem:[%s6103 + $0x70] sm:$0xff]
    %v6119 = vld [vmem:[%s6103 + $0x78] sm:$0xff]
    %v6120 = vld [vmem:[%s6103 + $0x80] sm:$0xff]
    %v6121 = vld [vmem:[%s6103 + $0x88] sm:$0xff]
    %v6122 = vld [vmem:[%s6103 + $0x90] sm:$0xff]
    %v6123 = vld [vmem:[%s6103 + $0x98] sm:$0xff]
    %v6124 = vld [vmem:[%s6103 + $0xa0] sm:$0xff]
    %v6125 = vld [vmem:[%s6103 + $0xa8] sm:$0xff]
    %v6126 = vld [vmem:[%s6103 + $0xb0] sm:$0xff]
    %v6127 = vld [vmem:[%s6103 + $0xb8] sm:$0xff]
    %v6128 = vld [vmem:[%s6103 + $0xc0] sm:$0xff]
    %v6129 = vld [vmem:[%s6103 + $0xc8] sm:$0xff]
    %v6130 = vld [vmem:[%s6103 + $0xd0] sm:$0xff]
    %v6131 = vld [vmem:[%s6103 + $0xd8] sm:$0xff]
    %v6132 = vld [vmem:[%s6103 + $0xe0] sm:$0xff]
    %v6133 = vld [vmem:[%s6103 + $0xe8] sm:$0xff]
    %v6134 = vld [vmem:[%s6103 + $0xf0] sm:$0xff]
    %v6135 = vld [vmem:[%s6103 + $0xf8] sm:$0xff]
    %v6136 = vld [vmem:[%s6103 + $0x100] sm:$0xff]
    %v6137 = vld [vmem:[%s6103 + $0x108] sm:$0xff]
    %v6138 = vld [vmem:[%s6103 + $0x110] sm:$0xff]
    %v6139 = vld [vmem:[%s6103 + $0x118] sm:$0xff]
    %v6140 = vld [vmem:[%s6103 + $0x120] sm:$0xff]
    %v6141 = vld [vmem:[%s6103 + $0x128] sm:$0xff]
    %v6142 = vld [vmem:[%s6103 + $0x130] sm:$0xff]
    %v6143 = vld [vmem:[%s6103 + $0x138] sm:$0xff]
    %v6144 = vld [vmem:[%s6103 + $0x140] sm:$0xff]
    %v6145 = vld [vmem:[%s6103 + $0x148] sm:$0xff]
    %v6146 = vld [vmem:[%s6103 + $0x150] sm:$0xff]
    %v6147 = vld [vmem:[%s6103 + $0x158] sm:$0xff]
    %v6148 = vld [vmem:[%s6103 + $0x160] sm:$0xff]
    %v6149 = vld [vmem:[%s6103 + $0x168] sm:$0xff]
    %v6150 = vld [vmem:[%s6103 + $0x170] sm:$0xff]
    %v6151 = vld [vmem:[%s6103 + $0x178] sm:$0xff]
    %v6152 = vld [vmem:[%s6103 + $0x180] sm:$0xff]
    %v6153 = vld [vmem:[%s6103 + $0x188] sm:$0xff]
    %v6154 = vld [vmem:[%s6103 + $0x190] sm:$0xff]
    %v6155 = vld [vmem:[%s6103 + $0x198] sm:$0xff]
    %v6156 = vld [vmem:[%s6103 + $0x1a0] sm:$0xff]
    %v6157 = vld [vmem:[%s6103 + $0x1a8] sm:$0xff]
    %v6158 = vld [vmem:[%s6103 + $0x1b0] sm:$0xff]
    %v6159 = vld [vmem:[%s6103 + $0x1b8] sm:$0xff]
    %v6160 = vld [vmem:[%s6103 + $0x1c0] sm:$0xff]
    %v6161 = vld [vmem:[%s6103 + $0x1c8] sm:$0xff]
    %v6162 = vld [vmem:[%s6103 + $0x1d0] sm:$0xff]
    %v6163 = vld [vmem:[%s6103 + $0x1d8] sm:$0xff]
    %v6164 = vld [vmem:[%s6103 + $0x1e0] sm:$0xff]
    %v6165 = vld [vmem:[%s6103 + $0x1e8] sm:$0xff]
    %v6166 = vld [vmem:[%s6103 + $0x1f0] sm:$0xff]
    %v6167 = vld [vmem:[%s6103 + $0x1f8] sm:$0xff]
    %v6168 = vld [vmem:[%s6103 + $0x200] sm:$0xff]
    %v6169 = vld [vmem:[%s6103 + $0x208] sm:$0xff]
    %v6170 = vld [vmem:[%s6103 + $0x210] sm:$0xff]
    %v6171 = vld [vmem:[%s6103 + $0x218] sm:$0xff]
    %v6172 = vld [vmem:[%s6103 + $0x220] sm:$0xff]
    %v6173 = vld [vmem:[%s6103 + $0x228] sm:$0xff]
    %v6174 = vld [vmem:[%s6103 + $0x230] sm:$0xff]
    %v6175 = vld [vmem:[%s6103 + $0x238] sm:$0xff]
    %v6176 = vld [vmem:[%s6103 + $0x240] sm:$0xff]
    %v6177 = vld [vmem:[%s6103 + $0x248] sm:$0xff]
    %v6178 = vld [vmem:[%s6103 + $0x250] sm:$0xff]
    %v6179 = vld [vmem:[%s6103 + $0x258] sm:$0xff]
    %v6180 = vld [vmem:[%s6103 + $0x260] sm:$0xff]
    %v6181 = vld [vmem:[%s6103 + $0x268] sm:$0xff]
    %v6182 = vld [vmem:[%s6103 + $0x270] sm:$0xff]
    %v6183 = vld [vmem:[%s6103 + $0x278] sm:$0xff]
    %v6184 = vld [vmem:[%s6103 + $0x280] sm:$0xff]
    %v6185 = vld [vmem:[%s6103 + $0x288] sm:$0xff]
    %v6186 = vld [vmem:[%s6103 + $0x290] sm:$0xff]
    %v6187 = vld [vmem:[%s6103 + $0x298] sm:$0xff]
    %v6188 = vld [vmem:[%s6103 + $0x2a0] sm:$0xff]
    %v6189 = vld [vmem:[%s6103 + $0x2a8] sm:$0xff]
    %v6190 = vld [vmem:[%s6103 + $0x2b0] sm:$0xff]
    %v6191 = vld [vmem:[%s6103 + $0x2b8] sm:$0xff]
    %v6192 = vld [vmem:[%s6103 + $0x2c0] sm:$0xff]
    %v6193 = vld [vmem:[%s6103 + $0x2c8] sm:$0xff]
    %v6194 = vld [vmem:[%s6103 + $0x2d0] sm:$0xff]
    %v6195 = vld [vmem:[%s6103 + $0x2d8] sm:$0xff]
    %v6196 = vld [vmem:[%s6103 + $0x2e0] sm:$0xff]
    %v6197 = vld [vmem:[%s6103 + $0x2e8] sm:$0xff]
    %v6198 = vld [vmem:[%s6103 + $0x2f0] sm:$0xff]
    %v6199 = vld [vmem:[%s6103 + $0x2f8] sm:$0xff]
    %v6200 = vld [vmem:[%s6103 + $0x300] sm:$0xff]
    %v6201 = vld [vmem:[%s6103 + $0x308] sm:$0xff]
    %v6202 = vld [vmem:[%s6103 + $0x310] sm:$0xff]
    %v6203 = vld [vmem:[%s6103 + $0x318] sm:$0xff]
    %v6204 = vld [vmem:[%s6103 + $0x320] sm:$0xff]
    %v6205 = vld [vmem:[%s6103 + $0x328] sm:$0xff]
    %v6206 = vld [vmem:[%s6103 + $0x330] sm:$0xff]
    %v6207 = vld [vmem:[%s6103 + $0x338] sm:$0xff]
    %v6208 = vld [vmem:[%s6103 + $0x340] sm:$0xff]
    %v6209 = vld [vmem:[%s6103 + $0x348] sm:$0xff]
    %v6210 = vld [vmem:[%s6103 + $0x350] sm:$0xff]
    %v6211 = vld [vmem:[%s6103 + $0x358] sm:$0xff]
    %v6212 = vld [vmem:[%s6103 + $0x360] sm:$0xff]
    %v6213 = vld [vmem:[%s6103 + $0x368] sm:$0xff]
    %v6214 = vld [vmem:[%s6103 + $0x370] sm:$0xff]
    %v6215 = vld [vmem:[%s6103 + $0x378] sm:$0xff]
    %v6216 = vld [vmem:[%s6103 + $0x380] sm:$0xff]
    %v6217 = vld [vmem:[%s6103 + $0x388] sm:$0xff]
    %v6218 = vld [vmem:[%s6103 + $0x390] sm:$0xff]
    %v6219 = vld [vmem:[%s6103 + $0x398] sm:$0xff]
    %v6220 = vld [vmem:[%s6103 + $0x3a0] sm:$0xff]
    %v6221 = vld [vmem:[%s6103 + $0x3a8] sm:$0xff]
    %v6222 = vld [vmem:[%s6103 + $0x3b0] sm:$0xff]
    %v6223 = vld [vmem:[%s6103 + $0x3b8] sm:$0xff]
    %v6224 = vld [vmem:[%s6103 + $0x3c0] sm:$0xff]
    %v6225 = vld [vmem:[%s6103 + $0x3c8] sm:$0xff]
    %v6226 = vld [vmem:[%s6103 + $0x3d0] sm:$0xff]
    %v6227 = vld [vmem:[%s6103 + $0x3d8] sm:$0xff]
    %v6228 = vld [vmem:[%s6103 + $0x3e0] sm:$0xff]
    %v6229 = vld [vmem:[%s6103 + $0x3e8] sm:$0xff]
    %v6230 = vld [vmem:[%s6103 + $0x3f0] sm:$0xff]
    %v6231 = vld [vmem:[%s6103 + $0x3f8] sm:$0xff]
    %v6232 = vpack.c.bf16 %v6091, %v6087
    %v6233 = vpack.c.bf16 %v6092, %v6088
    %v6234 = vpack.c.bf16 %v6093, %v6089
    %v6235 = vpack.c.bf16 %v6094, %v6090
    %v6236 = vpack.c.bf16 %v6099, %v6095
    %v6237 = vpack.c.bf16 %v6100, %v6096
    %v6238 = vpack.c.bf16 %v6101, %v6097
    %v6239 = vpack.c.bf16 %v6102, %v6098
    %6240 = vmatprep.subr.bf16.mxu0 %v6105
    %6241 = vmatpush1.bf16.msra.mxu0 %v6104
    %6242 = vmatprep.subr.bf16.mxu0 %v6109
    %6243 = vmatpush1.bf16.msra.mxu0 %v6108
    %6244 = vmatprep.subr.bf16.mxu0 %v6113
    %6245 = vmatpush1.bf16.msra.mxu0 %v6112
    %6246 = vmatprep.subr.bf16.mxu0 %v6117
    %6247 = vmatpush1.bf16.msra.mxu0 %v6116
    %6248 = vmatprep.subr.bf16.mxu0 %v6121
    %6249 = vmatpush1.bf16.msra.mxu0 %v6120
    %6250 = vmatprep.subr.bf16.mxu0 %v6125
    %6251 = vmatpush1.bf16.msra.mxu0 %v6124
    %6252 = vmatprep.subr.bf16.mxu0 %v6129
    %6253 = vmatpush1.bf16.msra.mxu0 %v6128
    %6254 = vmatprep.subr.bf16.mxu0 %v6133
    %6255 = vmatpush1.bf16.msra.mxu0 %v6132
    %6256 = vmatprep.subr.bf16.mxu0 %v6137
    %6257 = vmatpush1.bf16.msra.mxu0 %v6136
    %6258 = vmatprep.subr.bf16.mxu0 %v6141
    %6259 = vmatpush1.bf16.msra.mxu0 %v6140
    %6260 = vmatprep.subr.bf16.mxu0 %v6145
    %6261 = vmatpush1.bf16.msra.mxu0 %v6144
    %6262 = vmatprep.subr.bf16.mxu0 %v6149
    %6263 = vmatpush1.bf16.msra.mxu0 %v6148
    %6264 = vmatprep.subr.bf16.mxu0 %v6153
    %6265 = vmatpush1.bf16.msra.mxu0 %v6152
    %6266 = vmatprep.subr.bf16.mxu0 %v6157
    %6267 = vmatpush1.bf16.msra.mxu0 %v6156
    %6268 = vmatprep.subr.bf16.mxu0 %v6161
    %6269 = vmatpush1.bf16.msra.mxu0 %v6160
    %6270 = vmatprep.subr.bf16.mxu0 %v6165
    %6271 = vmatpush1.bf16.msra.mxu0 %v6164
    %6272 = vmatprep.mubr.bf16.mxu0 %v6233
    %6273 = vmatmul.mubr.bf16.gmra.mrb[0].mxu0 %v6232
    %v6274 = vpop.f32.mrb[0].mxu0
    %v6275 = vadd.f32 0.0, %v6274
    %v6276 = vpop.f32.mrb[0].mxu0
    %v6277 = vadd.f32 0.0, %v6276
    %v6278 = vpop.f32.mrb[0].mxu0
    %v6279 = vadd.f32 0.0, %v6278
    %v6280 = vpop.f32.mrb[0].mxu0
    %v6281 = vadd.f32 0.0, %v6280
    %6282 = vmatprep.mubr.bf16.mxu0 %v6237
    %6283 = vmatmul.mubr.bf16.gmra.mrb[0].mxu0 %v6236
    %v6284 = vpop.f32.mrb[0].mxu0
    %v6285 = vadd.f32 0.0, %v6284
    %v6286 = vpop.f32.mrb[0].mxu0
    %v6287 = vadd.f32 0.0, %v6286
    %v6288 = vpop.f32.mrb[0].mxu0
    %v6289 = vadd.f32 0.0, %v6288
    %v6290 = vpop.f32.mrb[0].mxu0
    %v6291 = vadd.f32 0.0, %v6290
    %6292 = vdwg.mxu0
    %6293 = vmatprep.subr.bf16.mxu0 %v6169
    %6294 = vmatpush1.bf16.msra.mxu0 %v6168
    %6295 = vmatprep.subr.bf16.mxu0 %v6173
    %6296 = vmatpush1.bf16.msra.mxu0 %v6172
    %6297 = vmatprep.subr.bf16.mxu0 %v6177
    %6298 = vmatpush1.bf16.msra.mxu0 %v6176
    %6299 = vmatprep.subr.bf16.mxu0 %v6181
    %6300 = vmatpush1.bf16.msra.mxu0 %v6180
    %6301 = vmatprep.subr.bf16.mxu0 %v6185
    %6302 = vmatpush1.bf16.msra.mxu0 %v6184
    %6303 = vmatprep.subr.bf16.mxu0 %v6189
    %6304 = vmatpush1.bf16.msra.mxu0 %v6188
    %6305 = vmatprep.subr.bf16.mxu0 %v6193
    %6306 = vmatpush1.bf16.msra.mxu0 %v6192
    %6307 = vmatprep.subr.bf16.mxu0 %v6197
    %6308 = vmatpush1.bf16.msra.mxu0 %v6196
    %6309 = vmatprep.subr.bf16.mxu0 %v6201
    %6310 = vmatpush1.bf16.msra.mxu0 %v6200
    %6311 = vmatprep.subr.bf16.mxu0 %v6205
    %6312 = vmatpush1.bf16.msra.mxu0 %v6204
    %6313 = vmatprep.subr.bf16.mxu0 %v6209
    %6314 = vmatpush1.bf16.msra.mxu0 %v6208
    %6315 = vmatprep.subr.bf16.mxu0 %v6213
    %6316 = vmatpush1.bf16.msra.mxu0 %v6212
    %6317 = vmatprep.subr.bf16.mxu0 %v6217
    %6318 = vmatpush1.bf16.msra.mxu0 %v6216
    %6319 = vmatprep.subr.bf16.mxu0 %v6221
    %6320 = vmatpush1.bf16.msra.mxu0 %v6220
    %6321 = vmatprep.subr.bf16.mxu0 %v6225
    %6322 = vmatpush1.bf16.msra.mxu0 %v6224
    %6323 = vmatprep.subr.bf16.mxu0 %v6229
    %6324 = vmatpush1.bf16.msra.mxu0 %v6228
    %6325 = vmatprep.mubr.bf16.mxu0 %v6235
    %6326 = vmatmul.mubr.bf16.gmra.mrb[0].mxu0 %v6234
    %v6327 = vpop.f32.mrb[0].mxu0
    %v6328 = vadd.f32 %v6275, %v6327
    %v6329 = vpop.f32.mrb[0].mxu0
    %v6330 = vadd.f32 %v6277, %v6329
    %v6331 = vpop.f32.mrb[0].mxu0
    %v6332 = vadd.f32 %v6279, %v6331
    %v6333 = vpop.f32.mrb[0].mxu0
    %v6334 = vadd.f32 %v6281, %v6333
    %6335 = vmatprep.mubr.bf16.mxu0 %v6239
    %6336 = vmatmul.mubr.bf16.gmra.mrb[0].mxu0 %v6238
    %v6337 = vpop.f32.mrb[0].mxu0
    %v6338 = vadd.f32 %v6285, %v6337
    %v6339 = vpop.f32.mrb[0].mxu0
    %v6340 = vadd.f32 %v6287, %v6339
    %v6341 = vpop.f32.mrb[0].mxu0
    %v6342 = vadd.f32 %v6289, %v6341
    %v6343 = vpop.f32.mrb[0].mxu0
    %v6344 = vadd.f32 %v6291, %v6343
    %6345 = vdwg.mxu0
    %6346 = vmatprep.subr.bf16.mxu0 %v6107
    %6347 = vmatpush1.bf16.msra.mxu0 %v6106
    %6348 = vmatprep.subr.bf16.mxu0 %v6111
    %6349 = vmatpush1.bf16.msra.mxu0 %v6110
    %6350 = vmatprep.subr.bf16.mxu0 %v6115
    %6351 = vmatpush1.bf16.msra.mxu0 %v6114
    %6352 = vmatprep.subr.bf16.mxu0 %v6119
    %6353 = vmatpush1.bf16.msra.mxu0 %v6118
    %6354 = vmatprep.subr.bf16.mxu0 %v6123
    %6355 = vmatpush1.bf16.msra.mxu0 %v6122
    %6356 = vmatprep.subr.bf16.mxu0 %v6127
    %6357 = vmatpush1.bf16.msra.mxu0 %v6126
    %6358 = vmatprep.subr.bf16.mxu0 %v6131
    %6359 = vmatpush1.bf16.msra.mxu0 %v6130
    %6360 = vmatprep.subr.bf16.mxu0 %v6135
    %6361 = vmatpush1.bf16.msra.mxu0 %v6134
    %6362 = vmatprep.subr.bf16.mxu0 %v6139
    %6363 = vmatpush1.bf16.msra.mxu0 %v6138
    %6364 = vmatprep.subr.bf16.mxu0 %v6143
    %6365 = vmatpush1.bf16.msra.mxu0 %v6142
    %6366 = vmatprep.subr.bf16.mxu0 %v6147
    %6367 = vmatpush1.bf16.msra.mxu0 %v6146
    %6368 = vmatprep.subr.bf16.mxu0 %v6151
    %6369 = vmatpush1.bf16.msra.mxu0 %v6150
    %6370 = vmatprep.subr.bf16.mxu0 %v6155
    %6371 = vmatpush1.bf16.msra.mxu0 %v6154
    %6372 = vmatprep.subr.bf16.mxu0 %v6159
    %6373 = vmatpush1.bf16.msra.mxu0 %v6158
    %6374 = vmatprep.subr.bf16.mxu0 %v6163
    %6375 = vmatpush1.bf16.msra.mxu0 %v6162
    %6376 = vmatprep.subr.bf16.mxu0 %v6167
    %6377 = vmatpush1.bf16.msra.mxu0 %v6166
    %6378 = vmatprep.mubr.bf16.mxu0 %v6233
    %6379 = vmatmul.mubr.bf16.gmra.mrb[0].mxu0 %v6232
    %v6380 = vpop.f32.mrb[0].mxu0
    %v6381 = vadd.f32 0.0, %v6380
    %v6382 = vpop.f32.mrb[0].mxu0
    %v6383 = vadd.f32 0.0, %v6382
    %v6384 = vpop.f32.mrb[0].mxu0
    %v6385 = vadd.f32 0.0, %v6384
    %v6386 = vpop.f32.mrb[0].mxu0
    %v6387 = vadd.f32 0.0, %v6386
    %6388 = vmatprep.mubr.bf16.mxu0 %v6237
    %6389 = vmatmul.mubr.bf16.gmra.mrb[0].mxu0 %v6236
    %v6390 = vpop.f32.mrb[0].mxu0
    %v6391 = vadd.f32 0.0, %v6390
    %v6392 = vpop.f32.mrb[0].mxu0
    %v6393 = vadd.f32 0.0, %v6392
    %v6394 = vpop.f32.mrb[0].mxu0
    %v6395 = vadd.f32 0.0, %v6394
    %v6396 = vpop.f32.mrb[0].mxu0
    %v6397 = vadd.f32 0.0, %v6396
    %6398 = vdwg.mxu0
    %6399 = vmatprep.subr.bf16.mxu0 %v6171
    %6400 = vmatpush1.bf16.msra.mxu0 %v6170
    %6401 = vmatprep.subr.bf16.mxu0 %v6175
    %6402 = vmatpush1.bf16.msra.mxu0 %v6174
    %6403 = vmatprep.subr.bf16.mxu0 %v6179
    %6404 = vmatpush1.bf16.msra.mxu0 %v6178
    %6405 = vmatprep.subr.bf16.mxu0 %v6183
    %6406 = vmatpush1.bf16.msra.mxu0 %v6182
    %6407 = vmatprep.subr.bf16.mxu0 %v6187
    %6408 = vmatpush1.bf16.msra.mxu0 %v6186
    %6409 = vmatprep.subr.bf16.mxu0 %v6191
    %6410 = vmatpush1.bf16.msra.mxu0 %v6190
    %6411 = vmatprep.subr.bf16.mxu0 %v6195
    %6412 = vmatpush1.bf16.msra.mxu0 %v6194
    %6413 = vmatprep.subr.bf16.mxu0 %v6199
    %6414 = vmatpush1.bf16.msra.mxu0 %v6198
    %6415 = vmatprep.subr.bf16.mxu0 %v6203
    %6416 = vmatpush1.bf16.msra.mxu0 %v6202
    %6417 = vmatprep.subr.bf16.mxu0 %v6207
    %6418 = vmatpush1.bf16.msra.mxu0 %v6206
    %6419 = vmatprep.subr.bf16.mxu0 %v6211
    %6420 = vmatpush1.bf16.msra.mxu0 %v6210
    %6421 = vmatprep.subr.bf16.mxu0 %v6215
    %6422 = vmatpush1.bf16.msra.mxu0 %v6214
    %6423 = vmatprep.subr.bf16.mxu0 %v6219
    %6424 = vmatpush1.bf16.msra.mxu0 %v6218
    %6425 = vmatprep.subr.bf16.mxu0 %v6223
    %6426 = vmatpush1.bf16.msra.mxu0 %v6222
    %6427 = vmatprep.subr.bf16.mxu0 %v6227
    %6428 = vmatpush1.bf16.msra.mxu0 %v6226
    %6429 = vmatprep.subr.bf16.mxu0 %v6231
    %6430 = vmatpush1.bf16.msra.mxu0 %v6230
    %6431 = vmatprep.mubr.bf16.mxu0 %v6235
    %6432 = vmatmul.mubr.bf16.gmra.mrb[0].mxu0 %v6234
    %v6433 = vpop.f32.mrb[0].mxu0
    %v6434 = vadd.f32 %v6381, %v6433
    %v6435 = vpop.f32.mrb[0].mxu0
    %v6436 = vadd.f32 %v6383, %v6435
    %v6437 = vpop.f32.mrb[0].mxu0
    %v6438 = vadd.f32 %v6385, %v6437
    %v6439 = vpop.f32.mrb[0].mxu0
    %v6440 = vadd.f32 %v6387, %v6439
    %6441 = vmatprep.mubr.bf16.mxu0 %v6239
    %6442 = vmatmul.mubr.bf16.gmra.mrb[0].mxu0 %v6238
    %v6443 = vpop.f32.mrb[0].mxu0
    %v6444 = vadd.f32 %v6391, %v6443
    %v6445 = vpop.f32.mrb[0].mxu0
    %v6446 = vadd.f32 %v6393, %v6445
    %v6447 = vpop.f32.mrb[0].mxu0
    %v6448 = vadd.f32 %v6395, %v6447
    %v6449 = vpop.f32.mrb[0].mxu0
    %v6450 = vadd.f32 %v6397, %v6449
    %6451 = vdwg.mxu0
    %s6452 = scalar_lea.vmem [#allocation21], 4
    %v6453 = vld [vmem:[%s6452] ss:$8 sm:$0xf]
    %s6454 = scalar_lea.vmem [#allocation21], 5
    %v6455 = vld [vmem:[%s6454] ss:$8 sm:$0xf]
    %v6456 = vadd.f32 %v6328, %v6332
    %v6457 = vadd.f32 %v6456, %v6338
    %v6458 = vadd.f32 %v6457, %v6342
    %v6459 = vrot.slane %v6458, 4
    %v6460 = vadd.f32 %v6458, %v6459
    %v6461 = vrot.slane %v6460, 2
    %v6462 = vadd.f32 %v6460, %v6461
    %v6463 = vrot.slane %v6462, 1
    %v6464 = vadd.f32 %v6462, %v6463
    %v6465 = vadd.f32 %v6330, %v6334
    %v6466 = vadd.f32 %v6465, %v6340
    %v6467 = vadd.f32 %v6466, %v6344
    %v6468 = vrot.slane %v6467, 4
    %v6469 = vadd.f32 %v6467, %v6468
    %v6470 = vrot.slane %v6469, 2
    %v6471 = vadd.f32 %v6469, %v6470
    %v6472 = vrot.slane %v6471, 1
    %v6473 = vadd.f32 %v6471, %v6472
    %v6474 = vadd.f32 %v6434, %v6438
    %v6475 = vadd.f32 %v6474, %v6444
    %v6476 = vadd.f32 %v6475, %v6448
    %v6477 = vrot.slane %v6476, 4
    %v6478 = vadd.f32 %v6476, %v6477
    %v6479 = vrot.slane %v6478, 2
    %v6480 = vadd.f32 %v6478, %v6479
    %v6481 = vrot.slane %v6480, 1
    %v6482 = vadd.f32 %v6480, %v6481
    %v6483 = vadd.f32 %v6436, %v6440
    %v6484 = vadd.f32 %v6483, %v6446
    %v6485 = vadd.f32 %v6484, %v6450
    %v6486 = vrot.slane %v6485, 4
    %v6487 = vadd.f32 %v6485, %v6486
    %v6488 = vrot.slane %v6487, 2
    %v6489 = vadd.f32 %v6487, %v6488
    %v6490 = vrot.slane %v6489, 1
    %v6491 = vadd.f32 %v6489, %v6490
    %v6492 = vmul.f32 %v6464, %v394
    %v6493 = vmul.f32 %v6473, %v394
    %v6494 = vmul.f32 %v6482, %v394
    %v6495 = vmul.f32 %v6491, %v394
    %v6496 = vmul.f32 %v6328, %v6328
    %v6497 = vmul.f32 %v6330, %v6330
    %v6498 = vmul.f32 %v6434, %v6434
    %v6499 = vmul.f32 %v6436, %v6436
    %v6500 = vmul.f32 %v6332, %v6332
    %v6501 = vmul.f32 %v6334, %v6334
    %v6502 = vmul.f32 %v6438, %v6438
    %v6503 = vmul.f32 %v6440, %v6440
    %v6504 = vmul.f32 %v6338, %v6338
    %v6505 = vmul.f32 %v6340, %v6340
    %v6506 = vmul.f32 %v6444, %v6444
    %v6507 = vmul.f32 %v6446, %v6446
    %v6508 = vmul.f32 %v6342, %v6342
    %v6509 = vmul.f32 %v6344, %v6344
    %v6510 = vmul.f32 %v6448, %v6448
    %v6511 = vmul.f32 %v6450, %v6450
    %v6512 = vadd.f32 %v6496, %v6500
    %v6513 = vadd.f32 %v6512, %v6504
    %v6514 = vadd.f32 %v6513, %v6508
    %v6515 = vrot.slane %v6514, 4
    %v6516 = vadd.f32 %v6514, %v6515
    %v6517 = vrot.slane %v6516, 2
    %v6518 = vadd.f32 %v6516, %v6517
    %v6519 = vrot.slane %v6518, 1
    %v6520 = vadd.f32 %v6518, %v6519
    %v6521 = vadd.f32 %v6497, %v6501
    %v6522 = vadd.f32 %v6521, %v6505
    %v6523 = vadd.f32 %v6522, %v6509
    %v6524 = vrot.slane %v6523, 4
    %v6525 = vadd.f32 %v6523, %v6524
    %v6526 = vrot.slane %v6525, 2
    %v6527 = vadd.f32 %v6525, %v6526
    %v6528 = vrot.slane %v6527, 1
    %v6529 = vadd.f32 %v6527, %v6528
    %v6530 = vadd.f32 %v6498, %v6502
    %v6531 = vadd.f32 %v6530, %v6506
    %v6532 = vadd.f32 %v6531, %v6510
    %v6533 = vrot.slane %v6532, 4
    %v6534 = vadd.f32 %v6532, %v6533
    %v6535 = vrot.slane %v6534, 2
    %v6536 = vadd.f32 %v6534, %v6535
    %v6537 = vrot.slane %v6536, 1
    %v6538 = vadd.f32 %v6536, %v6537
    %v6539 = vadd.f32 %v6499, %v6503
    %v6540 = vadd.f32 %v6539, %v6507
    %v6541 = vadd.f32 %v6540, %v6511
    %v6542 = vrot.slane %v6541, 4
    %v6543 = vadd.f32 %v6541, %v6542
    %v6544 = vrot.slane %v6543, 2
    %v6545 = vadd.f32 %v6543, %v6544
    %v6546 = vrot.slane %v6545, 1
    %v6547 = vadd.f32 %v6545, %v6546
    %v6548 = vmul.f32 %v6520, %v394
    %v6549 = vmul.f32 %v6529, %v394
    %v6550 = vmul.f32 %v6538, %v394
    %v6551 = vmul.f32 %v6547, %v394
    %v6552 = vmul.f32 %v6492, %v6492
    %v6553 = vmul.f32 %v6493, %v6493
    %v6554 = vmul.f32 %v6494, %v6494
    %v6555 = vmul.f32 %v6495, %v6495
    %v6556 = vsub.f32 %v6548, %v6552
    %v6557 = vsub.f32 %v6549, %v6553
    %v6558 = vsub.f32 %v6550, %v6554
    %v6559 = vsub.f32 %v6551, %v6555
    %v6560 = vmax.f32 %v6556, 0.0
    %v6561 = vmax.f32 %v6557, 0.0
    %v6562 = vmax.f32 %v6558, 0.0
    %v6563 = vmax.f32 %v6559, 0.0
    %v6564 = vadd.f32 %v6560, 1e-05
    %v6565 = vadd.f32 %v6561, 1e-05
    %v6566 = vadd.f32 %v6562, 1e-05
    %v6567 = vadd.f32 %v6563, 1e-05
    %v6568 = vrsqrt.pop %v6564
    %v6569 = vrsqrt.pop %v6565
    %v6570 = vrsqrt.pop %v6566
    %v6571 = vrsqrt.pop %v6567
    %v6576 = vcombine.low %v6568, %v6569
    %v6577 = vcombine.low %v6570, %v6571
    %v6579 = vunpack.c.l.s4 1966171168
    %v6580 = vunpack.c.0.s8 %v6579
    %v6581 = vlaneseq
    %v6582 = vshrl.u32 %v6581, 7
    %v6583 = vsub.s32 %v6580, %v6582
    %v6584 = vrot.slane %v6576, %v6583
    %v6586 = vunpack.c.l.s4 1966171168
    %v6587 = vunpack.c.0.s8 %v6586
    %v6588 = vlaneseq
    %v6589 = vshrl.u32 %v6588, 7
    %v6590 = vsub.s32 %v6587, %v6589
    %v6591 = vrot.slane %v6577, %v6590
    %v6592 = vcombine.low %v6584, %v6591
    %v6594 = vunpack.c.l.s4 1966171168
    %v6595 = vunpack.c.0.s8 %v6594
    %v6596 = vlaneseq
    %v6597 = vshrl.u32 %v6596, 7
    %v6598 = vsub.s32 %v6595, %v6597
    %v6599 = vrot.slane %v6592, %v6598
    %v6601 = vmul.f32 %v6453, %v6599
    %v6603 = vlaneseq
    %v6604 = vshrl.u32 %v6603, 7
    %v6605 = vsub.s32 0, %v6604
    %v6606 = vrot.slane %v6601, %v6605
    %v6607 = vlaneseq
    %v6608 = vshrl.u32 %v6607, 7
    %v6609 = vsub.s32 1, %v6608
    %v6610 = vrot.slane %v6601, %v6609
    %v6611 = vlaneseq
    %v6612 = vshrl.u32 %v6611, 7
    %v6613 = vsub.s32 2, %v6612
    %v6614 = vrot.slane %v6601, %v6613
    %v6615 = vlaneseq
    %v6616 = vshrl.u32 %v6615, 7
    %v6617 = vsub.s32 3, %v6616
    %v6618 = vrot.slane %v6601, %v6617
    %v6623 = vmul.f32 %v6492, %v6606
    %v6624 = vmul.f32 %v6493, %v6610
    %v6625 = vmul.f32 %v6494, %v6614
    %v6626 = vmul.f32 %v6495, %v6618
    %v6631 = vcombine.low %v6623, %v6624
    %v6632 = vcombine.low %v6625, %v6626
    %v6634 = vunpack.c.l.s4 1966171168
    %v6635 = vunpack.c.0.s8 %v6634
    %v6636 = vlaneseq
    %v6637 = vshrl.u32 %v6636, 7
    %v6638 = vsub.s32 %v6635, %v6637
    %v6639 = vrot.slane %v6631, %v6638
    %v6641 = vunpack.c.l.s4 1966171168
    %v6642 = vunpack.c.0.s8 %v6641
    %v6643 = vlaneseq
    %v6644 = vshrl.u32 %v6643, 7
    %v6645 = vsub.s32 %v6642, %v6644
    %v6646 = vrot.slane %v6632, %v6645
    %v6647 = vcombine.low %v6639, %v6646
    %v6649 = vunpack.c.l.s4 1966171168
    %v6650 = vunpack.c.0.s8 %v6649
    %v6651 = vlaneseq
    %v6652 = vshrl.u32 %v6651, 7
    %v6653 = vsub.s32 %v6650, %v6652
    %v6654 = vrot.slane %v6647, %v6653
    %v6656 = vsub.f32 %v6455, %v6654
    %v6657 = vmul.f32 %v6328, %v6606
    %v6658 = vmul.f32 %v6330, %v6610
    %v6659 = vmul.f32 %v6434, %v6614
    %v6660 = vmul.f32 %v6436, %v6618
    %v6661 = vmul.f32 %v6332, %v6606
    %v6662 = vmul.f32 %v6334, %v6610
    %v6663 = vmul.f32 %v6438, %v6614
    %v6664 = vmul.f32 %v6440, %v6618
    %v6665 = vmul.f32 %v6338, %v6606
    %v6666 = vmul.f32 %v6340, %v6610
    %v6667 = vmul.f32 %v6444, %v6614
    %v6668 = vmul.f32 %v6446, %v6618
    %v6669 = vmul.f32 %v6342, %v6606
    %v6670 = vmul.f32 %v6344, %v6610
    %v6671 = vmul.f32 %v6448, %v6614
    %v6672 = vmul.f32 %v6450, %v6618
    %v6674 = vlaneseq
    %v6675 = vshrl.u32 %v6674, 7
    %v6676 = vsub.s32 0, %v6675
    %v6677 = vrot.slane %v6656, %v6676
    %v6678 = vlaneseq
    %v6679 = vshrl.u32 %v6678, 7
    %v6680 = vsub.s32 1, %v6679
    %v6681 = vrot.slane %v6656, %v6680
    %v6682 = vlaneseq
    %v6683 = vshrl.u32 %v6682, 7
    %v6684 = vsub.s32 2, %v6683
    %v6685 = vrot.slane %v6656, %v6684
    %v6686 = vlaneseq
    %v6687 = vshrl.u32 %v6686, 7
    %v6688 = vsub.s32 3, %v6687
    %v6689 = vrot.slane %v6656, %v6688
    %v6694 = vadd.f32 %v6657, %v6677
    %v6695 = vadd.f32 %v6658, %v6681
    %v6696 = vadd.f32 %v6659, %v6685
    %v6697 = vadd.f32 %v6660, %v6689
    %v6698 = vadd.f32 %v6661, %v6677
    %v6699 = vadd.f32 %v6662, %v6681
    %v6700 = vadd.f32 %v6663, %v6685
    %v6701 = vadd.f32 %v6664, %v6689
    %v6702 = vadd.f32 %v6665, %v6677
    %v6703 = vadd.f32 %v6666, %v6681
    %v6704 = vadd.f32 %v6667, %v6685
    %v6705 = vadd.f32 %v6668, %v6689
    %v6706 = vadd.f32 %v6669, %v6677
    %v6707 = vadd.f32 %v6670, %v6681
    %v6708 = vadd.f32 %v6671, %v6685
    %v6709 = vadd.f32 %v6672, %v6689
    %v6710 = vmax.f32 %v6694, 0.0
    %v6711 = vmax.f32 %v6695, 0.0
    %v6712 = vmax.f32 %v6696, 0.0
    %v6713 = vmax.f32 %v6697, 0.0
    %v6714 = vmax.f32 %v6698, 0.0
    %v6715 = vmax.f32 %v6699, 0.0
    %v6716 = vmax.f32 %v6700, 0.0
    %v6717 = vmax.f32 %v6701, 0.0
    %v6718 = vmax.f32 %v6702, 0.0
    %v6719 = vmax.f32 %v6703, 0.0
    %v6720 = vmax.f32 %v6704, 0.0
    %v6721 = vmax.f32 %v6705, 0.0
    %v6722 = vmax.f32 %v6706, 0.0
    %v6723 = vmax.f32 %v6707, 0.0
    %v6724 = vmax.f32 %v6708, 0.0
    %v6725 = vmax.f32 %v6709, 0.0
    %s6726 = scalar_lea.vmem [#allocation7], 2048
    %v6727 = vld [vmem:[%s6726] sm:$0xff]
    %v6728 = vld [vmem:[%s6726 + $0x8] sm:$0xff]
    %v6729 = vld [vmem:[%s6726 + $0x10] sm:$0xff]
    %v6730 = vld [vmem:[%s6726 + $0x18] sm:$0xff]
    %v6731 = vld [vmem:[%s6726 + $0x20] sm:$0xff]
    %v6732 = vld [vmem:[%s6726 + $0x28] sm:$0xff]
    %v6733 = vld [vmem:[%s6726 + $0x30] sm:$0xff]
    %v6734 = vld [vmem:[%s6726 + $0x38] sm:$0xff]
    %v6735 = vld [vmem:[%s6726 + $0x40] sm:$0xff]
    %v6736 = vld [vmem:[%s6726 + $0x48] sm:$0xff]
    %v6737 = vld [vmem:[%s6726 + $0x50] sm:$0xff]
    %v6738 = vld [vmem:[%s6726 + $0x58] sm:$0xff]
    %v6739 = vld [vmem:[%s6726 + $0x60] sm:$0xff]
    %v6740 = vld [vmem:[%s6726 + $0x68] sm:$0xff]
    %v6741 = vld [vmem:[%s6726 + $0x70] sm:$0xff]
    %v6742 = vld [vmem:[%s6726 + $0x78] sm:$0xff]
    %v6743 = vld [vmem:[%s6726 + $0x80] sm:$0xff]
    %v6744 = vld [vmem:[%s6726 + $0x88] sm:$0xff]
    %v6745 = vld [vmem:[%s6726 + $0x90] sm:$0xff]
    %v6746 = vld [vmem:[%s6726 + $0x98] sm:$0xff]
    %v6747 = vld [vmem:[%s6726 + $0xa0] sm:$0xff]
    %v6748 = vld [vmem:[%s6726 + $0xa8] sm:$0xff]
    %v6749 = vld [vmem:[%s6726 + $0xb0] sm:$0xff]
    %v6750 = vld [vmem:[%s6726 + $0xb8] sm:$0xff]
    %v6751 = vld [vmem:[%s6726 + $0xc0] sm:$0xff]
    %v6752 = vld [vmem:[%s6726 + $0xc8] sm:$0xff]
    %v6753 = vld [vmem:[%s6726 + $0xd0] sm:$0xff]
    %v6754 = vld [vmem:[%s6726 + $0xd8] sm:$0xff]
    %v6755 = vld [vmem:[%s6726 + $0xe0] sm:$0xff]
    %v6756 = vld [vmem:[%s6726 + $0xe8] sm:$0xff]
    %v6757 = vld [vmem:[%s6726 + $0xf0] sm:$0xff]
    %v6758 = vld [vmem:[%s6726 + $0xf8] sm:$0xff]
    %v6759 = vld [vmem:[%s6726 + $0x100] sm:$0xff]
    %v6760 = vld [vmem:[%s6726 + $0x108] sm:$0xff]
    %v6761 = vld [vmem:[%s6726 + $0x110] sm:$0xff]
    %v6762 = vld [vmem:[%s6726 + $0x118] sm:$0xff]
    %v6763 = vld [vmem:[%s6726 + $0x120] sm:$0xff]
    %v6764 = vld [vmem:[%s6726 + $0x128] sm:$0xff]
    %v6765 = vld [vmem:[%s6726 + $0x130] sm:$0xff]
    %v6766 = vld [vmem:[%s6726 + $0x138] sm:$0xff]
    %v6767 = vld [vmem:[%s6726 + $0x140] sm:$0xff]
    %v6768 = vld [vmem:[%s6726 + $0x148] sm:$0xff]
    %v6769 = vld [vmem:[%s6726 + $0x150] sm:$0xff]
    %v6770 = vld [vmem:[%s6726 + $0x158] sm:$0xff]
    %v6771 = vld [vmem:[%s6726 + $0x160] sm:$0xff]
    %v6772 = vld [vmem:[%s6726 + $0x168] sm:$0xff]
    %v6773 = vld [vmem:[%s6726 + $0x170] sm:$0xff]
    %v6774 = vld [vmem:[%s6726 + $0x178] sm:$0xff]
    %v6775 = vld [vmem:[%s6726 + $0x180] sm:$0xff]
    %v6776 = vld [vmem:[%s6726 + $0x188] sm:$0xff]
    %v6777 = vld [vmem:[%s6726 + $0x190] sm:$0xff]
    %v6778 = vld [vmem:[%s6726 + $0x198] sm:$0xff]
    %v6779 = vld [vmem:[%s6726 + $0x1a0] sm:$0xff]
    %v6780 = vld [vmem:[%s6726 + $0x1a8] sm:$0xff]
    %v6781 = vld [vmem:[%s6726 + $0x1b0] sm:$0xff]
    %v6782 = vld [vmem:[%s6726 + $0x1b8] sm:$0xff]
    %v6783 = vld [vmem:[%s6726 + $0x1c0] sm:$0xff]
    %v6784 = vld [vmem:[%s6726 + $0x1c8] sm:$0xff]
    %v6785 = vld [vmem:[%s6726 + $0x1d0] sm:$0xff]
    %v6786 = vld [vmem:[%s6726 + $0x1d8] sm:$0xff]
    %v6787 = vld [vmem:[%s6726 + $0x1e0] sm:$0xff]
    %v6788 = vld [vmem:[%s6726 + $0x1e8] sm:$0xff]
    %v6789 = vld [vmem:[%s6726 + $0x1f0] sm:$0xff]
    %v6790 = vld [vmem:[%s6726 + $0x1f8] sm:$0xff]
    %v6791 = vld [vmem:[%s6726 + $0x200] sm:$0xff]
    %v6792 = vld [vmem:[%s6726 + $0x208] sm:$0xff]
    %v6793 = vld [vmem:[%s6726 + $0x210] sm:$0xff]
    %v6794 = vld [vmem:[%s6726 + $0x218] sm:$0xff]
    %v6795 = vld [vmem:[%s6726 + $0x220] sm:$0xff]
    %v6796 = vld [vmem:[%s6726 + $0x228] sm:$0xff]
    %v6797 = vld [vmem:[%s6726 + $0x230] sm:$0xff]
    %v6798 = vld [vmem:[%s6726 + $0x238] sm:$0xff]
    %v6799 = vld [vmem:[%s6726 + $0x240] sm:$0xff]
    %v6800 = vld [vmem:[%s6726 + $0x248] sm:$0xff]
    %v6801 = vld [vmem:[%s6726 + $0x250] sm:$0xff]
    %v6802 = vld [vmem:[%s6726 + $0x258] sm:$0xff]
    %v6803 = vld [vmem:[%s6726 + $0x260] sm:$0xff]
    %v6804 = vld [vmem:[%s6726 + $0x268] sm:$0xff]
    %v6805 = vld [vmem:[%s6726 + $0x270] sm:$0xff]
    %v6806 = vld [vmem:[%s6726 + $0x278] sm:$0xff]
    %v6807 = vld [vmem:[%s6726 + $0x280] sm:$0xff]
    %v6808 = vld [vmem:[%s6726 + $0x288] sm:$0xff]
    %v6809 = vld [vmem:[%s6726 + $0x290] sm:$0xff]
    %v6810 = vld [vmem:[%s6726 + $0x298] sm:$0xff]
    %v6811 = vld [vmem:[%s6726 + $0x2a0] sm:$0xff]
    %v6812 = vld [vmem:[%s6726 + $0x2a8] sm:$0xff]
    %v6813 = vld [vmem:[%s6726 + $0x2b0] sm:$0xff]
    %v6814 = vld [vmem:[%s6726 + $0x2b8] sm:$0xff]
    %v6815 = vld [vmem:[%s6726 + $0x2c0] sm:$0xff]
    %v6816 = vld [vmem:[%s6726 + $0x2c8] sm:$0xff]
    %v6817 = vld [vmem:[%s6726 + $0x2d0] sm:$0xff]
    %v6818 = vld [vmem:[%s6726 + $0x2d8] sm:$0xff]
    %v6819 = vld [vmem:[%s6726 + $0x2e0] sm:$0xff]
    %v6820 = vld [vmem:[%s6726 + $0x2e8] sm:$0xff]
    %v6821 = vld [vmem:[%s6726 + $0x2f0] sm:$0xff]
    %v6822 = vld [vmem:[%s6726 + $0x2f8] sm:$0xff]
    %v6823 = vld [vmem:[%s6726 + $0x300] sm:$0xff]
    %v6824 = vld [vmem:[%s6726 + $0x308] sm:$0xff]
    %v6825 = vld [vmem:[%s6726 + $0x310] sm:$0xff]
    %v6826 = vld [vmem:[%s6726 + $0x318] sm:$0xff]
    %v6827 = vld [vmem:[%s6726 + $0x320] sm:$0xff]
    %v6828 = vld [vmem:[%s6726 + $0x328] sm:$0xff]
    %v6829 = vld [vmem:[%s6726 + $0x330] sm:$0xff]
    %v6830 = vld [vmem:[%s6726 + $0x338] sm:$0xff]
    %v6831 = vld [vmem:[%s6726 + $0x340] sm:$0xff]
    %v6832 = vld [vmem:[%s6726 + $0x348] sm:$0xff]
    %v6833 = vld [vmem:[%s6726 + $0x350] sm:$0xff]
    %v6834 = vld [vmem:[%s6726 + $0x358] sm:$0xff]
    %v6835 = vld [vmem:[%s6726 + $0x360] sm:$0xff]
    %v6836 = vld [vmem:[%s6726 + $0x368] sm:$0xff]
    %v6837 = vld [vmem:[%s6726 + $0x370] sm:$0xff]
    %v6838 = vld [vmem:[%s6726 + $0x378] sm:$0xff]
    %v6839 = vld [vmem:[%s6726 + $0x380] sm:$0xff]
    %v6840 = vld [vmem:[%s6726 + $0x388] sm:$0xff]
    %v6841 = vld [vmem:[%s6726 + $0x390] sm:$0xff]
    %v6842 = vld [vmem:[%s6726 + $0x398] sm:$0xff]
    %v6843 = vld [vmem:[%s6726 + $0x3a0] sm:$0xff]
    %v6844 = vld [vmem:[%s6726 + $0x3a8] sm:$0xff]
    %v6845 = vld [vmem:[%s6726 + $0x3b0] sm:$0xff]
    %v6846 = vld [vmem:[%s6726 + $0x3b8] sm:$0xff]
    %v6847 = vld [vmem:[%s6726 + $0x3c0] sm:$0xff]
    %v6848 = vld [vmem:[%s6726 + $0x3c8] sm:$0xff]
    %v6849 = vld [vmem:[%s6726 + $0x3d0] sm:$0xff]
    %v6850 = vld [vmem:[%s6726 + $0x3d8] sm:$0xff]
    %v6851 = vld [vmem:[%s6726 + $0x3e0] sm:$0xff]
    %v6852 = vld [vmem:[%s6726 + $0x3e8] sm:$0xff]
    %v6853 = vld [vmem:[%s6726 + $0x3f0] sm:$0xff]
    %v6854 = vld [vmem:[%s6726 + $0x3f8] sm:$0xff]
    %v6855 = vpack.c.bf16 %v6714, %v6710
    %v6856 = vpack.c.bf16 %v6715, %v6711
    %v6857 = vpack.c.bf16 %v6716, %v6712
    %v6858 = vpack.c.bf16 %v6717, %v6713
    %v6859 = vpack.c.bf16 %v6722, %v6718
    %v6860 = vpack.c.bf16 %v6723, %v6719
    %v6861 = vpack.c.bf16 %v6724, %v6720
    %v6862 = vpack.c.bf16 %v6725, %v6721
    %6863 = vmatprep.subr.bf16.mxu0 %v6728
    %6864 = vmatpush1.bf16.msra.mxu0 %v6727
    %6865 = vmatprep.subr.bf16.mxu0 %v6732
    %6866 = vmatpush1.bf16.msra.mxu0 %v6731
    %6867 = vmatprep.subr.bf16.mxu0 %v6736
    %6868 = vmatpush1.bf16.msra.mxu0 %v6735
    %6869 = vmatprep.subr.bf16.mxu0 %v6740
    %6870 = vmatpush1.bf16.msra.mxu0 %v6739
    %6871 = vmatprep.subr.bf16.mxu0 %v6744
    %6872 = vmatpush1.bf16.msra.mxu0 %v6743
    %6873 = vmatprep.subr.bf16.mxu0 %v6748
    %6874 = vmatpush1.bf16.msra.mxu0 %v6747
    %6875 = vmatprep.subr.bf16.mxu0 %v6752
    %6876 = vmatpush1.bf16.msra.mxu0 %v6751
    %6877 = vmatprep.subr.bf16.mxu0 %v6756
    %6878 = vmatpush1.bf16.msra.mxu0 %v6755
    %6879 = vmatprep.subr.bf16.mxu0 %v6760
    %6880 = vmatpush1.bf16.msra.mxu0 %v6759
    %6881 = vmatprep.subr.bf16.mxu0 %v6764
    %6882 = vmatpush1.bf16.msra.mxu0 %v6763
    %6883 = vmatprep.subr.bf16.mxu0 %v6768
    %6884 = vmatpush1.bf16.msra.mxu0 %v6767
    %6885 = vmatprep.subr.bf16.mxu0 %v6772
    %6886 = vmatpush1.bf16.msra.mxu0 %v6771
    %6887 = vmatprep.subr.bf16.mxu0 %v6776
    %6888 = vmatpush1.bf16.msra.mxu0 %v6775
    %6889 = vmatprep.subr.bf16.mxu0 %v6780
    %6890 = vmatpush1.bf16.msra.mxu0 %v6779
    %6891 = vmatprep.subr.bf16.mxu0 %v6784
    %6892 = vmatpush1.bf16.msra.mxu0 %v6783
    %6893 = vmatprep.subr.bf16.mxu0 %v6788
    %6894 = vmatpush1.bf16.msra.mxu0 %v6787
    %6895 = vmatprep.mubr.bf16.mxu0 %v6856
    %6896 = vmatmul.mubr.bf16.gmra.mrb[0].mxu0 %v6855
    %v6897 = vpop.f32.mrb[0].mxu0
    %v6898 = vadd.f32 0.0, %v6897
    %v6899 = vpop.f32.mrb[0].mxu0
    %v6900 = vadd.f32 0.0, %v6899
    %v6901 = vpop.f32.mrb[0].mxu0
    %v6902 = vadd.f32 0.0, %v6901
    %v6903 = vpop.f32.mrb[0].mxu0
    %v6904 = vadd.f32 0.0, %v6903
    %6905 = vmatprep.mubr.bf16.mxu0 %v6860
    %6906 = vmatmul.mubr.bf16.gmra.mrb[0].mxu0 %v6859
    %v6907 = vpop.f32.mrb[0].mxu0
    %v6908 = vadd.f32 0.0, %v6907
    %v6909 = vpop.f32.mrb[0].mxu0
    %v6910 = vadd.f32 0.0, %v6909
    %v6911 = vpop.f32.mrb[0].mxu0
    %v6912 = vadd.f32 0.0, %v6911
    %v6913 = vpop.f32.mrb[0].mxu0
    %v6914 = vadd.f32 0.0, %v6913
    %6915 = vdwg.mxu0
    %6916 = vmatprep.subr.bf16.mxu0 %v6792
    %6917 = vmatpush1.bf16.msra.mxu0 %v6791
    %6918 = vmatprep.subr.bf16.mxu0 %v6796
    %6919 = vmatpush1.bf16.msra.mxu0 %v6795
    %6920 = vmatprep.subr.bf16.mxu0 %v6800
    %6921 = vmatpush1.bf16.msra.mxu0 %v6799
    %6922 = vmatprep.subr.bf16.mxu0 %v6804
    %6923 = vmatpush1.bf16.msra.mxu0 %v6803
    %6924 = vmatprep.subr.bf16.mxu0 %v6808
    %6925 = vmatpush1.bf16.msra.mxu0 %v6807
    %6926 = vmatprep.subr.bf16.mxu0 %v6812
    %6927 = vmatpush1.bf16.msra.mxu0 %v6811
    %6928 = vmatprep.subr.bf16.mxu0 %v6816
    %6929 = vmatpush1.bf16.msra.mxu0 %v6815
    %6930 = vmatprep.subr.bf16.mxu0 %v6820
    %6931 = vmatpush1.bf16.msra.mxu0 %v6819
    %6932 = vmatprep.subr.bf16.mxu0 %v6824
    %6933 = vmatpush1.bf16.msra.mxu0 %v6823
    %6934 = vmatprep.subr.bf16.mxu0 %v6828
    %6935 = vmatpush1.bf16.msra.mxu0 %v6827
    %6936 = vmatprep.subr.bf16.mxu0 %v6832
    %6937 = vmatpush1.bf16.msra.mxu0 %v6831
    %6938 = vmatprep.subr.bf16.mxu0 %v6836
    %6939 = vmatpush1.bf16.msra.mxu0 %v6835
    %6940 = vmatprep.subr.bf16.mxu0 %v6840
    %6941 = vmatpush1.bf16.msra.mxu0 %v6839
    %6942 = vmatprep.subr.bf16.mxu0 %v6844
    %6943 = vmatpush1.bf16.msra.mxu0 %v6843
    %6944 = vmatprep.subr.bf16.mxu0 %v6848
    %6945 = vmatpush1.bf16.msra.mxu0 %v6847
    %6946 = vmatprep.subr.bf16.mxu0 %v6852
    %6947 = vmatpush1.bf16.msra.mxu0 %v6851
    %6948 = vmatprep.mubr.bf16.mxu0 %v6858
    %6949 = vmatmul.mubr.bf16.gmra.mrb[0].mxu0 %v6857
    %v6950 = vpop.f32.mrb[0].mxu0
    %v6951 = vadd.f32 %v6898, %v6950
    %v6952 = vpop.f32.mrb[0].mxu0
    %v6953 = vadd.f32 %v6900, %v6952
    %v6954 = vpop.f32.mrb[0].mxu0
    %v6955 = vadd.f32 %v6902, %v6954
    %v6956 = vpop.f32.mrb[0].mxu0
    %v6957 = vadd.f32 %v6904, %v6956
    %6958 = vmatprep.mubr.bf16.mxu0 %v6862
    %6959 = vmatmul.mubr.bf16.gmra.mrb[0].mxu0 %v6861
    %v6960 = vpop.f32.mrb[0].mxu0
    %v6961 = vadd.f32 %v6908, %v6960
    %v6962 = vpop.f32.mrb[0].mxu0
    %v6963 = vadd.f32 %v6910, %v6962
    %v6964 = vpop.f32.mrb[0].mxu0
    %v6965 = vadd.f32 %v6912, %v6964
    %v6966 = vpop.f32.mrb[0].mxu0
    %v6967 = vadd.f32 %v6914, %v6966
    %6968 = vdwg.mxu0
    %6969 = vmatprep.subr.bf16.mxu0 %v6730
    %6970 = vmatpush1.bf16.msra.mxu0 %v6729
    %6971 = vmatprep.subr.bf16.mxu0 %v6734
    %6972 = vmatpush1.bf16.msra.mxu0 %v6733
    %6973 = vmatprep.subr.bf16.mxu0 %v6738
    %6974 = vmatpush1.bf16.msra.mxu0 %v6737
    %6975 = vmatprep.subr.bf16.mxu0 %v6742
    %6976 = vmatpush1.bf16.msra.mxu0 %v6741
    %6977 = vmatprep.subr.bf16.mxu0 %v6746
    %6978 = vmatpush1.bf16.msra.mxu0 %v6745
    %6979 = vmatprep.subr.bf16.mxu0 %v6750
    %6980 = vmatpush1.bf16.msra.mxu0 %v6749
    %6981 = vmatprep.subr.bf16.mxu0 %v6754
    %6982 = vmatpush1.bf16.msra.mxu0 %v6753
    %6983 = vmatprep.subr.bf16.mxu0 %v6758
    %6984 = vmatpush1.bf16.msra.mxu0 %v6757
    %6985 = vmatprep.subr.bf16.mxu0 %v6762
    %6986 = vmatpush1.bf16.msra.mxu0 %v6761
    %6987 = vmatprep.subr.bf16.mxu0 %v6766
    %6988 = vmatpush1.bf16.msra.mxu0 %v6765
    %6989 = vmatprep.subr.bf16.mxu0 %v6770
    %6990 = vmatpush1.bf16.msra.mxu0 %v6769
    %6991 = vmatprep.subr.bf16.mxu0 %v6774
    %6992 = vmatpush1.bf16.msra.mxu0 %v6773
    %6993 = vmatprep.subr.bf16.mxu0 %v6778
    %6994 = vmatpush1.bf16.msra.mxu0 %v6777
    %6995 = vmatprep.subr.bf16.mxu0 %v6782
    %6996 = vmatpush1.bf16.msra.mxu0 %v6781
    %6997 = vmatprep.subr.bf16.mxu0 %v6786
    %6998 = vmatpush1.bf16.msra.mxu0 %v6785
    %6999 = vmatprep.subr.bf16.mxu0 %v6790
    %7000 = vmatpush1.bf16.msra.mxu0 %v6789
    %7001 = vmatprep.mubr.bf16.mxu0 %v6856
    %7002 = vmatmul.mubr.bf16.gmra.mrb[0].mxu0 %v6855
    %v7003 = vpop.f32.mrb[0].mxu0
    %v7004 = vadd.f32 0.0, %v7003
    %v7005 = vpop.f32.mrb[0].mxu0
    %v7006 = vadd.f32 0.0, %v7005
    %v7007 = vpop.f32.mrb[0].mxu0
    %v7008 = vadd.f32 0.0, %v7007
    %v7009 = vpop.f32.mrb[0].mxu0
    %v7010 = vadd.f32 0.0, %v7009
    %7011 = vmatprep.mubr.bf16.mxu0 %v6860
    %7012 = vmatmul.mubr.bf16.gmra.mrb[0].mxu0 %v6859
    %v7013 = vpop.f32.mrb[0].mxu0
    %v7014 = vadd.f32 0.0, %v7013
    %v7015 = vpop.f32.mrb[0].mxu0
    %v7016 = vadd.f32 0.0, %v7015
    %v7017 = vpop.f32.mrb[0].mxu0
    %v7018 = vadd.f32 0.0, %v7017
    %v7019 = vpop.f32.mrb[0].mxu0
    %v7020 = vadd.f32 0.0, %v7019
    %7021 = vdwg.mxu0
    %7022 = vmatprep.subr.bf16.mxu0 %v6794
    %7023 = vmatpush1.bf16.msra.mxu0 %v6793
    %7024 = vmatprep.subr.bf16.mxu0 %v6798
    %7025 = vmatpush1.bf16.msra.mxu0 %v6797
    %7026 = vmatprep.subr.bf16.mxu0 %v6802
    %7027 = vmatpush1.bf16.msra.mxu0 %v6801
    %7028 = vmatprep.subr.bf16.mxu0 %v6806
    %7029 = vmatpush1.bf16.msra.mxu0 %v6805
    %7030 = vmatprep.subr.bf16.mxu0 %v6810
    %7031 = vmatpush1.bf16.msra.mxu0 %v6809
    %7032 = vmatprep.subr.bf16.mxu0 %v6814
    %7033 = vmatpush1.bf16.msra.mxu0 %v6813
    %7034 = vmatprep.subr.bf16.mxu0 %v6818
    %7035 = vmatpush1.bf16.msra.mxu0 %v6817
    %7036 = vmatprep.subr.bf16.mxu0 %v6822
    %7037 = vmatpush1.bf16.msra.mxu0 %v6821
    %7038 = vmatprep.subr.bf16.mxu0 %v6826
    %7039 = vmatpush1.bf16.msra.mxu0 %v6825
    %7040 = vmatprep.subr.bf16.mxu0 %v6830
    %7041 = vmatpush1.bf16.msra.mxu0 %v6829
    %7042 = vmatprep.subr.bf16.mxu0 %v6834
    %7043 = vmatpush1.bf16.msra.mxu0 %v6833
    %7044 = vmatprep.subr.bf16.mxu0 %v6838
    %7045 = vmatpush1.bf16.msra.mxu0 %v6837
    %7046 = vmatprep.subr.bf16.mxu0 %v6842
    %7047 = vmatpush1.bf16.msra.mxu0 %v6841
    %7048 = vmatprep.subr.bf16.mxu0 %v6846
    %7049 = vmatpush1.bf16.msra.mxu0 %v6845
    %7050 = vmatprep.subr.bf16.mxu0 %v6850
    %7051 = vmatpush1.bf16.msra.mxu0 %v6849
    %7052 = vmatprep.subr.bf16.mxu0 %v6854
    %7053 = vmatpush1.bf16.msra.mxu0 %v6853
    %7054 = vmatprep.mubr.bf16.mxu0 %v6858
    %7055 = vmatmul.mubr.bf16.gmra.mrb[0].mxu0 %v6857
    %v7056 = vpop.f32.mrb[0].mxu0
    %v7057 = vadd.f32 %v7004, %v7056
    %v7058 = vpop.f32.mrb[0].mxu0
    %v7059 = vadd.f32 %v7006, %v7058
    %v7060 = vpop.f32.mrb[0].mxu0
    %v7061 = vadd.f32 %v7008, %v7060
    %v7062 = vpop.f32.mrb[0].mxu0
    %v7063 = vadd.f32 %v7010, %v7062
    %7064 = vmatprep.mubr.bf16.mxu0 %v6862
    %7065 = vmatmul.mubr.bf16.gmra.mrb[0].mxu0 %v6861
    %v7066 = vpop.f32.mrb[0].mxu0
    %v7067 = vadd.f32 %v7014, %v7066
    %v7068 = vpop.f32.mrb[0].mxu0
    %v7069 = vadd.f32 %v7016, %v7068
    %v7070 = vpop.f32.mrb[0].mxu0
    %v7071 = vadd.f32 %v7018, %v7070
    %v7072 = vpop.f32.mrb[0].mxu0
    %v7073 = vadd.f32 %v7020, %v7072
    %7074 = vdwg.mxu0
    %s7075 = scalar_lea.vmem [#allocation21], 6
    %v7076 = vld [vmem:[%s7075] ss:$8 sm:$0xf]
    %s7077 = scalar_lea.vmem [#allocation21], 7
    %v7078 = vld [vmem:[%s7077] ss:$8 sm:$0xf]
    %v7079 = vadd.f32 %v6951, %v6955
    %v7080 = vadd.f32 %v7079, %v6961
    %v7081 = vadd.f32 %v7080, %v6965
    %v7082 = vrot.slane %v7081, 4
    %v7083 = vadd.f32 %v7081, %v7082
    %v7084 = vrot.slane %v7083, 2
    %v7085 = vadd.f32 %v7083, %v7084
    %v7086 = vrot.slane %v7085, 1
    %v7087 = vadd.f32 %v7085, %v7086
    %v7088 = vadd.f32 %v6953, %v6957
    %v7089 = vadd.f32 %v7088, %v6963
    %v7090 = vadd.f32 %v7089, %v6967
    %v7091 = vrot.slane %v7090, 4
    %v7092 = vadd.f32 %v7090, %v7091
    %v7093 = vrot.slane %v7092, 2
    %v7094 = vadd.f32 %v7092, %v7093
    %v7095 = vrot.slane %v7094, 1
    %v7096 = vadd.f32 %v7094, %v7095
    %v7097 = vadd.f32 %v7057, %v7061
    %v7098 = vadd.f32 %v7097, %v7067
    %v7099 = vadd.f32 %v7098, %v7071
    %v7100 = vrot.slane %v7099, 4
    %v7101 = vadd.f32 %v7099, %v7100
    %v7102 = vrot.slane %v7101, 2
    %v7103 = vadd.f32 %v7101, %v7102
    %v7104 = vrot.slane %v7103, 1
    %v7105 = vadd.f32 %v7103, %v7104
    %v7106 = vadd.f32 %v7059, %v7063
    %v7107 = vadd.f32 %v7106, %v7069
    %v7108 = vadd.f32 %v7107, %v7073
    %v7109 = vrot.slane %v7108, 4
    %v7110 = vadd.f32 %v7108, %v7109
    %v7111 = vrot.slane %v7110, 2
    %v7112 = vadd.f32 %v7110, %v7111
    %v7113 = vrot.slane %v7112, 1
    %v7114 = vadd.f32 %v7112, %v7113
    %v7115 = vmul.f32 %v7087, %v394
    %v7116 = vmul.f32 %v7096, %v394
    %v7117 = vmul.f32 %v7105, %v394
    %v7118 = vmul.f32 %v7114, %v394
    %v7119 = vmul.f32 %v6951, %v6951
    %v7120 = vmul.f32 %v6953, %v6953
    %v7121 = vmul.f32 %v7057, %v7057
    %v7122 = vmul.f32 %v7059, %v7059
    %v7123 = vmul.f32 %v6955, %v6955
    %v7124 = vmul.f32 %v6957, %v6957
    %v7125 = vmul.f32 %v7061, %v7061
    %v7126 = vmul.f32 %v7063, %v7063
    %v7127 = vmul.f32 %v6961, %v6961
    %v7128 = vmul.f32 %v6963, %v6963
    %v7129 = vmul.f32 %v7067, %v7067
    %v7130 = vmul.f32 %v7069, %v7069
    %v7131 = vmul.f32 %v6965, %v6965
    %v7132 = vmul.f32 %v6967, %v6967
    %v7133 = vmul.f32 %v7071, %v7071
    %v7134 = vmul.f32 %v7073, %v7073
    %v7135 = vadd.f32 %v7119, %v7123
    %v7136 = vadd.f32 %v7135, %v7127
    %v7137 = vadd.f32 %v7136, %v7131
    %v7138 = vrot.slane %v7137, 4
    %v7139 = vadd.f32 %v7137, %v7138
    %v7140 = vrot.slane %v7139, 2
    %v7141 = vadd.f32 %v7139, %v7140
    %v7142 = vrot.slane %v7141, 1
    %v7143 = vadd.f32 %v7141, %v7142
    %v7144 = vadd.f32 %v7120, %v7124
    %v7145 = vadd.f32 %v7144, %v7128
    %v7146 = vadd.f32 %v7145, %v7132
    %v7147 = vrot.slane %v7146, 4
    %v7148 = vadd.f32 %v7146, %v7147
    %v7149 = vrot.slane %v7148, 2
    %v7150 = vadd.f32 %v7148, %v7149
    %v7151 = vrot.slane %v7150, 1
    %v7152 = vadd.f32 %v7150, %v7151
    %v7153 = vadd.f32 %v7121, %v7125
    %v7154 = vadd.f32 %v7153, %v7129
    %v7155 = vadd.f32 %v7154, %v7133
    %v7156 = vrot.slane %v7155, 4
    %v7157 = vadd.f32 %v7155, %v7156
    %v7158 = vrot.slane %v7157, 2
    %v7159 = vadd.f32 %v7157, %v7158
    %v7160 = vrot.slane %v7159, 1
    %v7161 = vadd.f32 %v7159, %v7160
    %v7162 = vadd.f32 %v7122, %v7126
    %v7163 = vadd.f32 %v7162, %v7130
    %v7164 = vadd.f32 %v7163, %v7134
    %v7165 = vrot.slane %v7164, 4
    %v7166 = vadd.f32 %v7164, %v7165
    %v7167 = vrot.slane %v7166, 2
    %v7168 = vadd.f32 %v7166, %v7167
    %v7169 = vrot.slane %v7168, 1
    %v7170 = vadd.f32 %v7168, %v7169
    %v7171 = vmul.f32 %v7143, %v394
    %v7172 = vmul.f32 %v7152, %v394
    %v7173 = vmul.f32 %v7161, %v394
    %v7174 = vmul.f32 %v7170, %v394
    %v7175 = vmul.f32 %v7115, %v7115
    %v7176 = vmul.f32 %v7116, %v7116
    %v7177 = vmul.f32 %v7117, %v7117
    %v7178 = vmul.f32 %v7118, %v7118
    %v7179 = vsub.f32 %v7171, %v7175
    %v7180 = vsub.f32 %v7172, %v7176
    %v7181 = vsub.f32 %v7173, %v7177
    %v7182 = vsub.f32 %v7174, %v7178
    %v7183 = vmax.f32 %v7179, 0.0
    %v7184 = vmax.f32 %v7180, 0.0
    %v7185 = vmax.f32 %v7181, 0.0
    %v7186 = vmax.f32 %v7182, 0.0
    %v7187 = vadd.f32 %v7183, 1e-05
    %v7188 = vadd.f32 %v7184, 1e-05
    %v7189 = vadd.f32 %v7185, 1e-05
    %v7190 = vadd.f32 %v7186, 1e-05
    %v7191 = vrsqrt.pop %v7187
    %v7192 = vrsqrt.pop %v7188
    %v7193 = vrsqrt.pop %v7189
    %v7194 = vrsqrt.pop %v7190
    %v7199 = vcombine.low %v7191, %v7192
    %v7200 = vcombine.low %v7193, %v7194
    %v7202 = vunpack.c.l.s4 1966171168
    %v7203 = vunpack.c.0.s8 %v7202
    %v7204 = vlaneseq
    %v7205 = vshrl.u32 %v7204, 7
    %v7206 = vsub.s32 %v7203, %v7205
    %v7207 = vrot.slane %v7199, %v7206
    %v7209 = vunpack.c.l.s4 1966171168
    %v7210 = vunpack.c.0.s8 %v7209
    %v7211 = vlaneseq
    %v7212 = vshrl.u32 %v7211, 7
    %v7213 = vsub.s32 %v7210, %v7212
    %v7214 = vrot.slane %v7200, %v7213
    %v7215 = vcombine.low %v7207, %v7214
    %v7217 = vunpack.c.l.s4 1966171168
    %v7218 = vunpack.c.0.s8 %v7217
    %v7219 = vlaneseq
    %v7220 = vshrl.u32 %v7219, 7
    %v7221 = vsub.s32 %v7218, %v7220
    %v7222 = vrot.slane %v7215, %v7221
    %v7224 = vmul.f32 %v7076, %v7222
    %v7226 = vlaneseq
    %v7227 = vshrl.u32 %v7226, 7
    %v7228 = vsub.s32 0, %v7227
    %v7229 = vrot.slane %v7224, %v7228
    %v7230 = vlaneseq
    %v7231 = vshrl.u32 %v7230, 7
    %v7232 = vsub.s32 1, %v7231
    %v7233 = vrot.slane %v7224, %v7232
    %v7234 = vlaneseq
    %v7235 = vshrl.u32 %v7234, 7
    %v7236 = vsub.s32 2, %v7235
    %v7237 = vrot.slane %v7224, %v7236
    %v7238 = vlaneseq
    %v7239 = vshrl.u32 %v7238, 7
    %v7240 = vsub.s32 3, %v7239
    %v7241 = vrot.slane %v7224, %v7240
    %v7246 = vmul.f32 %v7115, %v7229
    %v7247 = vmul.f32 %v7116, %v7233
    %v7248 = vmul.f32 %v7117, %v7237
    %v7249 = vmul.f32 %v7118, %v7241
    %v7254 = vcombine.low %v7246, %v7247
    %v7255 = vcombine.low %v7248, %v7249
    %v7257 = vunpack.c.l.s4 1966171168
    %v7258 = vunpack.c.0.s8 %v7257
    %v7259 = vlaneseq
    %v7260 = vshrl.u32 %v7259, 7
    %v7261 = vsub.s32 %v7258, %v7260
    %v7262 = vrot.slane %v7254, %v7261
    %v7264 = vunpack.c.l.s4 1966171168
    %v7265 = vunpack.c.0.s8 %v7264
    %v7266 = vlaneseq
    %v7267 = vshrl.u32 %v7266, 7
    %v7268 = vsub.s32 %v7265, %v7267
    %v7269 = vrot.slane %v7255, %v7268
    %v7270 = vcombine.low %v7262, %v7269
    %v7272 = vunpack.c.l.s4 1966171168
    %v7273 = vunpack.c.0.s8 %v7272
    %v7274 = vlaneseq
    %v7275 = vshrl.u32 %v7274, 7
    %v7276 = vsub.s32 %v7273, %v7275
    %v7277 = vrot.slane %v7270, %v7276
    %v7279 = vsub.f32 %v7078, %v7277
    %v7280 = vmul.f32 %v6951, %v7229
    %v7281 = vmul.f32 %v6953, %v7233
    %v7282 = vmul.f32 %v7057, %v7237
    %v7283 = vmul.f32 %v7059, %v7241
    %v7284 = vmul.f32 %v6955, %v7229
    %v7285 = vmul.f32 %v6957, %v7233
    %v7286 = vmul.f32 %v7061, %v7237
    %v7287 = vmul.f32 %v7063, %v7241
    %v7288 = vmul.f32 %v6961, %v7229
    %v7289 = vmul.f32 %v6963, %v7233
    %v7290 = vmul.f32 %v7067, %v7237
    %v7291 = vmul.f32 %v7069, %v7241
    %v7292 = vmul.f32 %v6965, %v7229
    %v7293 = vmul.f32 %v6967, %v7233
    %v7294 = vmul.f32 %v7071, %v7237
    %v7295 = vmul.f32 %v7073, %v7241
    %v7297 = vlaneseq
    %v7298 = vshrl.u32 %v7297, 7
    %v7299 = vsub.s32 0, %v7298
    %v7300 = vrot.slane %v7279, %v7299
    %v7301 = vlaneseq
    %v7302 = vshrl.u32 %v7301, 7
    %v7303 = vsub.s32 1, %v7302
    %v7304 = vrot.slane %v7279, %v7303
    %v7305 = vlaneseq
    %v7306 = vshrl.u32 %v7305, 7
    %v7307 = vsub.s32 2, %v7306
    %v7308 = vrot.slane %v7279, %v7307
    %v7309 = vlaneseq
    %v7310 = vshrl.u32 %v7309, 7
    %v7311 = vsub.s32 3, %v7310
    %v7312 = vrot.slane %v7279, %v7311
    %v7317 = vadd.f32 %v7280, %v7300
    %v7318 = vadd.f32 %v7281, %v7304
    %v7319 = vadd.f32 %v7282, %v7308
    %v7320 = vadd.f32 %v7283, %v7312
    %v7321 = vadd.f32 %v7284, %v7300
    %v7322 = vadd.f32 %v7285, %v7304
    %v7323 = vadd.f32 %v7286, %v7308
    %v7324 = vadd.f32 %v7287, %v7312
    %v7325 = vadd.f32 %v7288, %v7300
    %v7326 = vadd.f32 %v7289, %v7304
    %v7327 = vadd.f32 %v7290, %v7308
    %v7328 = vadd.f32 %v7291, %v7312
    %v7329 = vadd.f32 %v7292, %v7300
    %v7330 = vadd.f32 %v7293, %v7304
    %v7331 = vadd.f32 %v7294, %v7308
    %v7332 = vadd.f32 %v7295, %v7312
    %s7333 = scalar_lea.vmem [#allocation7], 3072
    %v7334 = vld [vmem:[%s7333] sm:$0xff]
    %v7335 = vld [vmem:[%s7333 + $0x8] sm:$0xff]
    %v7336 = vld [vmem:[%s7333 + $0x10] sm:$0xff]
    %v7337 = vld [vmem:[%s7333 + $0x18] sm:$0xff]
    %v7338 = vld [vmem:[%s7333 + $0x20] sm:$0xff]
    %v7339 = vld [vmem:[%s7333 + $0x28] sm:$0xff]
    %v7340 = vld [vmem:[%s7333 + $0x30] sm:$0xff]
    %v7341 = vld [vmem:[%s7333 + $0x38] sm:$0xff]
    %v7342 = vld [vmem:[%s7333 + $0x40] sm:$0xff]
    %v7343 = vld [vmem:[%s7333 + $0x48] sm:$0xff]
    %v7344 = vld [vmem:[%s7333 + $0x50] sm:$0xff]
    %v7345 = vld [vmem:[%s7333 + $0x58] sm:$0xff]
    %v7346 = vld [vmem:[%s7333 + $0x60] sm:$0xff]
    %v7347 = vld [vmem:[%s7333 + $0x68] sm:$0xff]
    %v7348 = vld [vmem:[%s7333 + $0x70] sm:$0xff]
    %v7349 = vld [vmem:[%s7333 + $0x78] sm:$0xff]
    %v7350 = vld [vmem:[%s7333 + $0x80] sm:$0xff]
    %v7351 = vld [vmem:[%s7333 + $0x88] sm:$0xff]
    %v7352 = vld [vmem:[%s7333 + $0x90] sm:$0xff]
    %v7353 = vld [vmem:[%s7333 + $0x98] sm:$0xff]
    %v7354 = vld [vmem:[%s7333 + $0xa0] sm:$0xff]
    %v7355 = vld [vmem:[%s7333 + $0xa8] sm:$0xff]
    %v7356 = vld [vmem:[%s7333 + $0xb0] sm:$0xff]
    %v7357 = vld [vmem:[%s7333 + $0xb8] sm:$0xff]
    %v7358 = vld [vmem:[%s7333 + $0xc0] sm:$0xff]
    %v7359 = vld [vmem:[%s7333 + $0xc8] sm:$0xff]
    %v7360 = vld [vmem:[%s7333 + $0xd0] sm:$0xff]
    %v7361 = vld [vmem:[%s7333 + $0xd8] sm:$0xff]
    %v7362 = vld [vmem:[%s7333 + $0xe0] sm:$0xff]
    %v7363 = vld [vmem:[%s7333 + $0xe8] sm:$0xff]
    %v7364 = vld [vmem:[%s7333 + $0xf0] sm:$0xff]
    %v7365 = vld [vmem:[%s7333 + $0xf8] sm:$0xff]
    %v7366 = vld [vmem:[%s7333 + $0x100] sm:$0xff]
    %v7367 = vld [vmem:[%s7333 + $0x108] sm:$0xff]
    %v7368 = vld [vmem:[%s7333 + $0x110] sm:$0xff]
    %v7369 = vld [vmem:[%s7333 + $0x118] sm:$0xff]
    %v7370 = vld [vmem:[%s7333 + $0x120] sm:$0xff]
    %v7371 = vld [vmem:[%s7333 + $0x128] sm:$0xff]
    %v7372 = vld [vmem:[%s7333 + $0x130] sm:$0xff]
    %v7373 = vld [vmem:[%s7333 + $0x138] sm:$0xff]
    %v7374 = vld [vmem:[%s7333 + $0x140] sm:$0xff]
    %v7375 = vld [vmem:[%s7333 + $0x148] sm:$0xff]
    %v7376 = vld [vmem:[%s7333 + $0x150] sm:$0xff]
    %v7377 = vld [vmem:[%s7333 + $0x158] sm:$0xff]
    %v7378 = vld [vmem:[%s7333 + $0x160] sm:$0xff]
    %v7379 = vld [vmem:[%s7333 + $0x168] sm:$0xff]
    %v7380 = vld [vmem:[%s7333 + $0x170] sm:$0xff]
    %v7381 = vld [vmem:[%s7333 + $0x178] sm:$0xff]
    %v7382 = vld [vmem:[%s7333 + $0x180] sm:$0xff]
    %v7383 = vld [vmem:[%s7333 + $0x188] sm:$0xff]
    %v7384 = vld [vmem:[%s7333 + $0x190] sm:$0xff]
    %v7385 = vld [vmem:[%s7333 + $0x198] sm:$0xff]
    %v7386 = vld [vmem:[%s7333 + $0x1a0] sm:$0xff]
    %v7387 = vld [vmem:[%s7333 + $0x1a8] sm:$0xff]
    %v7388 = vld [vmem:[%s7333 + $0x1b0] sm:$0xff]
    %v7389 = vld [vmem:[%s7333 + $0x1b8] sm:$0xff]
    %v7390 = vld [vmem:[%s7333 + $0x1c0] sm:$0xff]
    %v7391 = vld [vmem:[%s7333 + $0x1c8] sm:$0xff]
    %v7392 = vld [vmem:[%s7333 + $0x1d0] sm:$0xff]
    %v7393 = vld [vmem:[%s7333 + $0x1d8] sm:$0xff]
    %v7394 = vld [vmem:[%s7333 + $0x1e0] sm:$0xff]
    %v7395 = vld [vmem:[%s7333 + $0x1e8] sm:$0xff]
    %v7396 = vld [vmem:[%s7333 + $0x1f0] sm:$0xff]
    %v7397 = vld [vmem:[%s7333 + $0x1f8] sm:$0xff]
    %v7398 = vld [vmem:[%s7333 + $0x200] sm:$0xff]
    %v7399 = vld [vmem:[%s7333 + $0x208] sm:$0xff]
    %v7400 = vld [vmem:[%s7333 + $0x210] sm:$0xff]
    %v7401 = vld [vmem:[%s7333 + $0x218] sm:$0xff]
    %v7402 = vld [vmem:[%s7333 + $0x220] sm:$0xff]
    %v7403 = vld [vmem:[%s7333 + $0x228] sm:$0xff]
    %v7404 = vld [vmem:[%s7333 + $0x230] sm:$0xff]
    %v7405 = vld [vmem:[%s7333 + $0x238] sm:$0xff]
    %v7406 = vld [vmem:[%s7333 + $0x240] sm:$0xff]
    %v7407 = vld [vmem:[%s7333 + $0x248] sm:$0xff]
    %v7408 = vld [vmem:[%s7333 + $0x250] sm:$0xff]
    %v7409 = vld [vmem:[%s7333 + $0x258] sm:$0xff]
    %v7410 = vld [vmem:[%s7333 + $0x260] sm:$0xff]
    %v7411 = vld [vmem:[%s7333 + $0x268] sm:$0xff]
    %v7412 = vld [vmem:[%s7333 + $0x270] sm:$0xff]
    %v7413 = vld [vmem:[%s7333 + $0x278] sm:$0xff]
    %v7414 = vld [vmem:[%s7333 + $0x280] sm:$0xff]
    %v7415 = vld [vmem:[%s7333 + $0x288] sm:$0xff]
    %v7416 = vld [vmem:[%s7333 + $0x290] sm:$0xff]
    %v7417 = vld [vmem:[%s7333 + $0x298] sm:$0xff]
    %v7418 = vld [vmem:[%s7333 + $0x2a0] sm:$0xff]
    %v7419 = vld [vmem:[%s7333 + $0x2a8] sm:$0xff]
    %v7420 = vld [vmem:[%s7333 + $0x2b0] sm:$0xff]
    %v7421 = vld [vmem:[%s7333 + $0x2b8] sm:$0xff]
    %v7422 = vld [vmem:[%s7333 + $0x2c0] sm:$0xff]
    %v7423 = vld [vmem:[%s7333 + $0x2c8] sm:$0xff]
    %v7424 = vld [vmem:[%s7333 + $0x2d0] sm:$0xff]
    %v7425 = vld [vmem:[%s7333 + $0x2d8] sm:$0xff]
    %v7426 = vld [vmem:[%s7333 + $0x2e0] sm:$0xff]
    %v7427 = vld [vmem:[%s7333 + $0x2e8] sm:$0xff]
    %v7428 = vld [vmem:[%s7333 + $0x2f0] sm:$0xff]
    %v7429 = vld [vmem:[%s7333 + $0x2f8] sm:$0xff]
    %v7430 = vld [vmem:[%s7333 + $0x300] sm:$0xff]
    %v7431 = vld [vmem:[%s7333 + $0x308] sm:$0xff]
    %v7432 = vld [vmem:[%s7333 + $0x310] sm:$0xff]
    %v7433 = vld [vmem:[%s7333 + $0x318] sm:$0xff]
    %v7434 = vld [vmem:[%s7333 + $0x320] sm:$0xff]
    %v7435 = vld [vmem:[%s7333 + $0x328] sm:$0xff]
    %v7436 = vld [vmem:[%s7333 + $0x330] sm:$0xff]
    %v7437 = vld [vmem:[%s7333 + $0x338] sm:$0xff]
    %v7438 = vld [vmem:[%s7333 + $0x340] sm:$0xff]
    %v7439 = vld [vmem:[%s7333 + $0x348] sm:$0xff]
    %v7440 = vld [vmem:[%s7333 + $0x350] sm:$0xff]
    %v7441 = vld [vmem:[%s7333 + $0x358] sm:$0xff]
    %v7442 = vld [vmem:[%s7333 + $0x360] sm:$0xff]
    %v7443 = vld [vmem:[%s7333 + $0x368] sm:$0xff]
    %v7444 = vld [vmem:[%s7333 + $0x370] sm:$0xff]
    %v7445 = vld [vmem:[%s7333 + $0x378] sm:$0xff]
    %v7446 = vld [vmem:[%s7333 + $0x380] sm:$0xff]
    %v7447 = vld [vmem:[%s7333 + $0x388] sm:$0xff]
    %v7448 = vld [vmem:[%s7333 + $0x390] sm:$0xff]
    %v7449 = vld [vmem:[%s7333 + $0x398] sm:$0xff]
    %v7450 = vld [vmem:[%s7333 + $0x3a0] sm:$0xff]
    %v7451 = vld [vmem:[%s7333 + $0x3a8] sm:$0xff]
    %v7452 = vld [vmem:[%s7333 + $0x3b0] sm:$0xff]
    %v7453 = vld [vmem:[%s7333 + $0x3b8] sm:$0xff]
    %v7454 = vld [vmem:[%s7333 + $0x3c0] sm:$0xff]
    %v7455 = vld [vmem:[%s7333 + $0x3c8] sm:$0xff]
    %v7456 = vld [vmem:[%s7333 + $0x3d0] sm:$0xff]
    %v7457 = vld [vmem:[%s7333 + $0x3d8] sm:$0xff]
    %v7458 = vld [vmem:[%s7333 + $0x3e0] sm:$0xff]
    %v7459 = vld [vmem:[%s7333 + $0x3e8] sm:$0xff]
    %v7460 = vld [vmem:[%s7333 + $0x3f0] sm:$0xff]
    %v7461 = vld [vmem:[%s7333 + $0x3f8] sm:$0xff]
    %v7462 = vpack.c.bf16 %v7321, %v7317
    %v7463 = vpack.c.bf16 %v7322, %v7318
    %v7464 = vpack.c.bf16 %v7323, %v7319
    %v7465 = vpack.c.bf16 %v7324, %v7320
    %v7466 = vpack.c.bf16 %v7329, %v7325
    %v7467 = vpack.c.bf16 %v7330, %v7326
    %v7468 = vpack.c.bf16 %v7331, %v7327
    %v7469 = vpack.c.bf16 %v7332, %v7328
    %7470 = vmatprep.subr.bf16.mxu0 %v7335
    %7471 = vmatpush1.bf16.msra.mxu0 %v7334
    %7472 = vmatprep.subr.bf16.mxu0 %v7339
    %7473 = vmatpush1.bf16.msra.mxu0 %v7338
    %7474 = vmatprep.subr.bf16.mxu0 %v7343
    %7475 = vmatpush1.bf16.msra.mxu0 %v7342
    %7476 = vmatprep.subr.bf16.mxu0 %v7347
    %7477 = vmatpush1.bf16.msra.mxu0 %v7346
    %7478 = vmatprep.subr.bf16.mxu0 %v7351
    %7479 = vmatpush1.bf16.msra.mxu0 %v7350
    %7480 = vmatprep.subr.bf16.mxu0 %v7355
    %7481 = vmatpush1.bf16.msra.mxu0 %v7354
    %7482 = vmatprep.subr.bf16.mxu0 %v7359
    %7483 = vmatpush1.bf16.msra.mxu0 %v7358
    %7484 = vmatprep.subr.bf16.mxu0 %v7363
    %7485 = vmatpush1.bf16.msra.mxu0 %v7362
    %7486 = vmatprep.subr.bf16.mxu0 %v7367
    %7487 = vmatpush1.bf16.msra.mxu0 %v7366
    %7488 = vmatprep.subr.bf16.mxu0 %v7371
    %7489 = vmatpush1.bf16.msra.mxu0 %v7370
    %7490 = vmatprep.subr.bf16.mxu0 %v7375
    %7491 = vmatpush1.bf16.msra.mxu0 %v7374
    %7492 = vmatprep.subr.bf16.mxu0 %v7379
    %7493 = vmatpush1.bf16.msra.mxu0 %v7378
    %7494 = vmatprep.subr.bf16.mxu0 %v7383
    %7495 = vmatpush1.bf16.msra.mxu0 %v7382
    %7496 = vmatprep.subr.bf16.mxu0 %v7387
    %7497 = vmatpush1.bf16.msra.mxu0 %v7386
    %7498 = vmatprep.subr.bf16.mxu0 %v7391
    %7499 = vmatpush1.bf16.msra.mxu0 %v7390
    %7500 = vmatprep.subr.bf16.mxu0 %v7395
    %7501 = vmatpush1.bf16.msra.mxu0 %v7394
    %7502 = vmatprep.mubr.bf16.mxu0 %v7463
    %7503 = vmatmul.mubr.bf16.gmra.mrb[0].mxu0 %v7462
    %v7504 = vpop.f32.mrb[0].mxu0
    %v7505 = vadd.f32 0.0, %v7504
    %v7506 = vpop.f32.mrb[0].mxu0
    %v7507 = vadd.f32 0.0, %v7506
    %v7508 = vpop.f32.mrb[0].mxu0
    %v7509 = vadd.f32 0.0, %v7508
    %v7510 = vpop.f32.mrb[0].mxu0
    %v7511 = vadd.f32 0.0, %v7510
    %7512 = vmatprep.mubr.bf16.mxu0 %v7467
    %7513 = vmatmul.mubr.bf16.gmra.mrb[0].mxu0 %v7466
    %v7514 = vpop.f32.mrb[0].mxu0
    %v7515 = vadd.f32 0.0, %v7514
    %v7516 = vpop.f32.mrb[0].mxu0
    %v7517 = vadd.f32 0.0, %v7516
    %v7518 = vpop.f32.mrb[0].mxu0
    %v7519 = vadd.f32 0.0, %v7518
    %v7520 = vpop.f32.mrb[0].mxu0
    %v7521 = vadd.f32 0.0, %v7520
    %7522 = vdwg.mxu0
    %7523 = vmatprep.subr.bf16.mxu0 %v7399
    %7524 = vmatpush1.bf16.msra.mxu0 %v7398
    %7525 = vmatprep.subr.bf16.mxu0 %v7403
    %7526 = vmatpush1.bf16.msra.mxu0 %v7402
    %7527 = vmatprep.subr.bf16.mxu0 %v7407
    %7528 = vmatpush1.bf16.msra.mxu0 %v7406
    %7529 = vmatprep.subr.bf16.mxu0 %v7411
    %7530 = vmatpush1.bf16.msra.mxu0 %v7410
    %7531 = vmatprep.subr.bf16.mxu0 %v7415
    %7532 = vmatpush1.bf16.msra.mxu0 %v7414
    %7533 = vmatprep.subr.bf16.mxu0 %v7419
    %7534 = vmatpush1.bf16.msra.mxu0 %v7418
    %7535 = vmatprep.subr.bf16.mxu0 %v7423
    %7536 = vmatpush1.bf16.msra.mxu0 %v7422
    %7537 = vmatprep.subr.bf16.mxu0 %v7427
    %7538 = vmatpush1.bf16.msra.mxu0 %v7426
    %7539 = vmatprep.subr.bf16.mxu0 %v7431
    %7540 = vmatpush1.bf16.msra.mxu0 %v7430
    %7541 = vmatprep.subr.bf16.mxu0 %v7435
    %7542 = vmatpush1.bf16.msra.mxu0 %v7434
    %7543 = vmatprep.subr.bf16.mxu0 %v7439
    %7544 = vmatpush1.bf16.msra.mxu0 %v7438
    %7545 = vmatprep.subr.bf16.mxu0 %v7443
    %7546 = vmatpush1.bf16.msra.mxu0 %v7442
    %7547 = vmatprep.subr.bf16.mxu0 %v7447
    %7548 = vmatpush1.bf16.msra.mxu0 %v7446
    %7549 = vmatprep.subr.bf16.mxu0 %v7451
    %7550 = vmatpush1.bf16.msra.mxu0 %v7450
    %7551 = vmatprep.subr.bf16.mxu0 %v7455
    %7552 = vmatpush1.bf16.msra.mxu0 %v7454
    %7553 = vmatprep.subr.bf16.mxu0 %v7459
    %7554 = vmatpush1.bf16.msra.mxu0 %v7458
    %7555 = vmatprep.mubr.bf16.mxu0 %v7465
    %7556 = vmatmul.mubr.bf16.gmra.mrb[0].mxu0 %v7464
    %v7557 = vpop.f32.mrb[0].mxu0
    %v7558 = vadd.f32 %v7505, %v7557
    %v7559 = vpop.f32.mrb[0].mxu0
    %v7560 = vadd.f32 %v7507, %v7559
    %v7561 = vpop.f32.mrb[0].mxu0
    %v7562 = vadd.f32 %v7509, %v7561
    %v7563 = vpop.f32.mrb[0].mxu0
    %v7564 = vadd.f32 %v7511, %v7563
    %7565 = vmatprep.mubr.bf16.mxu0 %v7469
    %7566 = vmatmul.mubr.bf16.gmra.mrb[0].mxu0 %v7468
    %v7567 = vpop.f32.mrb[0].mxu0
    %v7568 = vadd.f32 %v7515, %v7567
    %v7569 = vpop.f32.mrb[0].mxu0
    %v7570 = vadd.f32 %v7517, %v7569
    %v7571 = vpop.f32.mrb[0].mxu0
    %v7572 = vadd.f32 %v7519, %v7571
    %v7573 = vpop.f32.mrb[0].mxu0
    %v7574 = vadd.f32 %v7521, %v7573
    %7575 = vdwg.mxu0
    %7576 = vmatprep.subr.bf16.mxu0 %v7337
    %7577 = vmatpush1.bf16.msra.mxu0 %v7336
    %7578 = vmatprep.subr.bf16.mxu0 %v7341
    %7579 = vmatpush1.bf16.msra.mxu0 %v7340
    %7580 = vmatprep.subr.bf16.mxu0 %v7345
    %7581 = vmatpush1.bf16.msra.mxu0 %v7344
    %7582 = vmatprep.subr.bf16.mxu0 %v7349
    %7583 = vmatpush1.bf16.msra.mxu0 %v7348
    %7584 = vmatprep.subr.bf16.mxu0 %v7353
    %7585 = vmatpush1.bf16.msra.mxu0 %v7352
    %7586 = vmatprep.subr.bf16.mxu0 %v7357
    %7587 = vmatpush1.bf16.msra.mxu0 %v7356
    %7588 = vmatprep.subr.bf16.mxu0 %v7361
    %7589 = vmatpush1.bf16.msra.mxu0 %v7360
    %7590 = vmatprep.subr.bf16.mxu0 %v7365
    %7591 = vmatpush1.bf16.msra.mxu0 %v7364
    %7592 = vmatprep.subr.bf16.mxu0 %v7369
    %7593 = vmatpush1.bf16.msra.mxu0 %v7368
    %7594 = vmatprep.subr.bf16.mxu0 %v7373
    %7595 = vmatpush1.bf16.msra.mxu0 %v7372
    %7596 = vmatprep.subr.bf16.mxu0 %v7377
    %7597 = vmatpush1.bf16.msra.mxu0 %v7376
    %7598 = vmatprep.subr.bf16.mxu0 %v7381
    %7599 = vmatpush1.bf16.msra.mxu0 %v7380
    %7600 = vmatprep.subr.bf16.mxu0 %v7385
    %7601 = vmatpush1.bf16.msra.mxu0 %v7384
    %7602 = vmatprep.subr.bf16.mxu0 %v7389
    %7603 = vmatpush1.bf16.msra.mxu0 %v7388
    %7604 = vmatprep.subr.bf16.mxu0 %v7393
    %7605 = vmatpush1.bf16.msra.mxu0 %v7392
    %7606 = vmatprep.subr.bf16.mxu0 %v7397
    %7607 = vmatpush1.bf16.msra.mxu0 %v7396
    %7608 = vmatprep.mubr.bf16.mxu0 %v7463
    %7609 = vmatmul.mubr.bf16.gmra.mrb[0].mxu0 %v7462
    %v7610 = vpop.f32.mrb[0].mxu0
    %v7611 = vadd.f32 0.0, %v7610
    %v7612 = vpop.f32.mrb[0].mxu0
    %v7613 = vadd.f32 0.0, %v7612
    %v7614 = vpop.f32.mrb[0].mxu0
    %v7615 = vadd.f32 0.0, %v7614
    %v7616 = vpop.f32.mrb[0].mxu0
    %v7617 = vadd.f32 0.0, %v7616
    %7618 = vmatprep.mubr.bf16.mxu0 %v7467
    %7619 = vmatmul.mubr.bf16.gmra.mrb[0].mxu0 %v7466
    %v7620 = vpop.f32.mrb[0].mxu0
    %v7621 = vadd.f32 0.0, %v7620
    %v7622 = vpop.f32.mrb[0].mxu0
    %v7623 = vadd.f32 0.0, %v7622
    %v7624 = vpop.f32.mrb[0].mxu0
    %v7625 = vadd.f32 0.0, %v7624
    %v7626 = vpop.f32.mrb[0].mxu0
    %v7627 = vadd.f32 0.0, %v7626
    %7628 = vdwg.mxu0
    %7629 = vmatprep.subr.bf16.mxu0 %v7401
    %7630 = vmatpush1.bf16.msra.mxu0 %v7400
    %7631 = vmatprep.subr.bf16.mxu0 %v7405
    %7632 = vmatpush1.bf16.msra.mxu0 %v7404
    %7633 = vmatprep.subr.bf16.mxu0 %v7409
    %7634 = vmatpush1.bf16.msra.mxu0 %v7408
    %7635 = vmatprep.subr.bf16.mxu0 %v7413
    %7636 = vmatpush1.bf16.msra.mxu0 %v7412
    %7637 = vmatprep.subr.bf16.mxu0 %v7417
    %7638 = vmatpush1.bf16.msra.mxu0 %v7416
    %7639 = vmatprep.subr.bf16.mxu0 %v7421
    %7640 = vmatpush1.bf16.msra.mxu0 %v7420
    %7641 = vmatprep.subr.bf16.mxu0 %v7425
    %7642 = vmatpush1.bf16.msra.mxu0 %v7424
    %7643 = vmatprep.subr.bf16.mxu0 %v7429
    %7644 = vmatpush1.bf16.msra.mxu0 %v7428
    %7645 = vmatprep.subr.bf16.mxu0 %v7433
    %7646 = vmatpush1.bf16.msra.mxu0 %v7432
    %7647 = vmatprep.subr.bf16.mxu0 %v7437
    %7648 = vmatpush1.bf16.msra.mxu0 %v7436
    %7649 = vmatprep.subr.bf16.mxu0 %v7441
    %7650 = vmatpush1.bf16.msra.mxu0 %v7440
    %7651 = vmatprep.subr.bf16.mxu0 %v7445
    %7652 = vmatpush1.bf16.msra.mxu0 %v7444
    %7653 = vmatprep.subr.bf16.mxu0 %v7449
    %7654 = vmatpush1.bf16.msra.mxu0 %v7448
    %7655 = vmatprep.subr.bf16.mxu0 %v7453
    %7656 = vmatpush1.bf16.msra.mxu0 %v7452
    %7657 = vmatprep.subr.bf16.mxu0 %v7457
    %7658 = vmatpush1.bf16.msra.mxu0 %v7456
    %7659 = vmatprep.subr.bf16.mxu0 %v7461
    %7660 = vmatpush1.bf16.msra.mxu0 %v7460
    %7661 = vmatprep.mubr.bf16.mxu0 %v7465
    %7662 = vmatmul.mubr.bf16.gmra.mrb[0].mxu0 %v7464
    %v7663 = vpop.f32.mrb[0].mxu0
    %v7664 = vadd.f32 %v7611, %v7663
    %v7665 = vpop.f32.mrb[0].mxu0
    %v7666 = vadd.f32 %v7613, %v7665
    %v7667 = vpop.f32.mrb[0].mxu0
    %v7668 = vadd.f32 %v7615, %v7667
    %v7669 = vpop.f32.mrb[0].mxu0
    %v7670 = vadd.f32 %v7617, %v7669
    %7671 = vmatprep.mubr.bf16.mxu0 %v7469
    %7672 = vmatmul.mubr.bf16.gmra.mrb[0].mxu0 %v7468
    %v7673 = vpop.f32.mrb[0].mxu0
    %v7674 = vadd.f32 %v7621, %v7673
    %v7675 = vpop.f32.mrb[0].mxu0
    %v7676 = vadd.f32 %v7623, %v7675
    %v7677 = vpop.f32.mrb[0].mxu0
    %v7678 = vadd.f32 %v7625, %v7677
    %v7679 = vpop.f32.mrb[0].mxu0
    %v7680 = vadd.f32 %v7627, %v7679
    %7681 = vdwg.mxu0
    %s7682 = scalar_lea.vmem [#allocation21], 32
    %v7683 = vld [vmem:[%s7682] ss:$8 sm:$0xf]
    %s7684 = scalar_lea.vmem [#allocation21], 33
    %v7685 = vld [vmem:[%s7684] ss:$8 sm:$0xf]
    %v7686 = vadd.f32 %v7558, %v7562
    %v7687 = vadd.f32 %v7686, %v7568
    %v7688 = vadd.f32 %v7687, %v7572
    %v7689 = vrot.slane %v7688, 4
    %v7690 = vadd.f32 %v7688, %v7689
    %v7691 = vrot.slane %v7690, 2
    %v7692 = vadd.f32 %v7690, %v7691
    %v7693 = vrot.slane %v7692, 1
    %v7694 = vadd.f32 %v7692, %v7693
    %v7695 = vadd.f32 %v7560, %v7564
    %v7696 = vadd.f32 %v7695, %v7570
    %v7697 = vadd.f32 %v7696, %v7574
    %v7698 = vrot.slane %v7697, 4
    %v7699 = vadd.f32 %v7697, %v7698
    %v7700 = vrot.slane %v7699, 2
    %v7701 = vadd.f32 %v7699, %v7700
    %v7702 = vrot.slane %v7701, 1
    %v7703 = vadd.f32 %v7701, %v7702
    %v7704 = vadd.f32 %v7664, %v7668
    %v7705 = vadd.f32 %v7704, %v7674
    %v7706 = vadd.f32 %v7705, %v7678
    %v7707 = vrot.slane %v7706, 4
    %v7708 = vadd.f32 %v7706, %v7707
    %v7709 = vrot.slane %v7708, 2
    %v7710 = vadd.f32 %v7708, %v7709
    %v7711 = vrot.slane %v7710, 1
    %v7712 = vadd.f32 %v7710, %v7711
    %v7713 = vadd.f32 %v7666, %v7670
    %v7714 = vadd.f32 %v7713, %v7676
    %v7715 = vadd.f32 %v7714, %v7680
    %v7716 = vrot.slane %v7715, 4
    %v7717 = vadd.f32 %v7715, %v7716
    %v7718 = vrot.slane %v7717, 2
    %v7719 = vadd.f32 %v7717, %v7718
    %v7720 = vrot.slane %v7719, 1
    %v7721 = vadd.f32 %v7719, %v7720
    %v7722 = vmul.f32 %v7694, %v394
    %v7723 = vmul.f32 %v7703, %v394
    %v7724 = vmul.f32 %v7712, %v394
    %v7725 = vmul.f32 %v7721, %v394
    %v7726 = vmul.f32 %v7558, %v7558
    %v7727 = vmul.f32 %v7560, %v7560
    %v7728 = vmul.f32 %v7664, %v7664
    %v7729 = vmul.f32 %v7666, %v7666
    %v7730 = vmul.f32 %v7562, %v7562
    %v7731 = vmul.f32 %v7564, %v7564
    %v7732 = vmul.f32 %v7668, %v7668
    %v7733 = vmul.f32 %v7670, %v7670
    %v7734 = vmul.f32 %v7568, %v7568
    %v7735 = vmul.f32 %v7570, %v7570
    %v7736 = vmul.f32 %v7674, %v7674
    %v7737 = vmul.f32 %v7676, %v7676
    %v7738 = vmul.f32 %v7572, %v7572
    %v7739 = vmul.f32 %v7574, %v7574
    %v7740 = vmul.f32 %v7678, %v7678
    %v7741 = vmul.f32 %v7680, %v7680
    %v7742 = vadd.f32 %v7726, %v7730
    %v7743 = vadd.f32 %v7742, %v7734
    %v7744 = vadd.f32 %v7743, %v7738
    %v7745 = vrot.slane %v7744, 4
    %v7746 = vadd.f32 %v7744, %v7745
    %v7747 = vrot.slane %v7746, 2
    %v7748 = vadd.f32 %v7746, %v7747
    %v7749 = vrot.slane %v7748, 1
    %v7750 = vadd.f32 %v7748, %v7749
    %v7751 = vadd.f32 %v7727, %v7731
    %v7752 = vadd.f32 %v7751, %v7735
    %v7753 = vadd.f32 %v7752, %v7739
    %v7754 = vrot.slane %v7753, 4
    %v7755 = vadd.f32 %v7753, %v7754
    %v7756 = vrot.slane %v7755, 2
    %v7757 = vadd.f32 %v7755, %v7756
    %v7758 = vrot.slane %v7757, 1
    %v7759 = vadd.f32 %v7757, %v7758
    %v7760 = vadd.f32 %v7728, %v7732
    %v7761 = vadd.f32 %v7760, %v7736
    %v7762 = vadd.f32 %v7761, %v7740
    %v7763 = vrot.slane %v7762, 4
    %v7764 = vadd.f32 %v7762, %v7763
    %v7765 = vrot.slane %v7764, 2
    %v7766 = vadd.f32 %v7764, %v7765
    %v7767 = vrot.slane %v7766, 1
    %v7768 = vadd.f32 %v7766, %v7767
    %v7769 = vadd.f32 %v7729, %v7733
    %v7770 = vadd.f32 %v7769, %v7737
    %v7771 = vadd.f32 %v7770, %v7741
    %v7772 = vrot.slane %v7771, 4
    %v7773 = vadd.f32 %v7771, %v7772
    %v7774 = vrot.slane %v7773, 2
    %v7775 = vadd.f32 %v7773, %v7774
    %v7776 = vrot.slane %v7775, 1
    %v7777 = vadd.f32 %v7775, %v7776
    %v7778 = vmul.f32 %v7750, %v394
    %v7779 = vmul.f32 %v7759, %v394
    %v7780 = vmul.f32 %v7768, %v394
    %v7781 = vmul.f32 %v7777, %v394
    %v7782 = vmul.f32 %v7722, %v7722
    %v7783 = vmul.f32 %v7723, %v7723
    %v7784 = vmul.f32 %v7724, %v7724
    %v7785 = vmul.f32 %v7725, %v7725
    %v7786 = vsub.f32 %v7778, %v7782
    %v7787 = vsub.f32 %v7779, %v7783
    %v7788 = vsub.f32 %v7780, %v7784
    %v7789 = vsub.f32 %v7781, %v7785
    %v7790 = vmax.f32 %v7786, 0.0
    %v7791 = vmax.f32 %v7787, 0.0
    %v7792 = vmax.f32 %v7788, 0.0
    %v7793 = vmax.f32 %v7789, 0.0
    %v7794 = vadd.f32 %v7790, 1e-05
    %v7795 = vadd.f32 %v7791, 1e-05
    %v7796 = vadd.f32 %v7792, 1e-05
    %v7797 = vadd.f32 %v7793, 1e-05
    %v7798 = vrsqrt.pop %v7794
    %v7799 = vrsqrt.pop %v7795
    %v7800 = vrsqrt.pop %v7796
    %v7801 = vrsqrt.pop %v7797
    %v7806 = vcombine.low %v7798, %v7799
    %v7807 = vcombine.low %v7800, %v7801
    %v7809 = vunpack.c.l.s4 1966171168
    %v7810 = vunpack.c.0.s8 %v7809
    %v7811 = vlaneseq
    %v7812 = vshrl.u32 %v7811, 7
    %v7813 = vsub.s32 %v7810, %v7812
    %v7814 = vrot.slane %v7806, %v7813
    %v7816 = vunpack.c.l.s4 1966171168
    %v7817 = vunpack.c.0.s8 %v7816
    %v7818 = vlaneseq
    %v7819 = vshrl.u32 %v7818, 7
    %v7820 = vsub.s32 %v7817, %v7819
    %v7821 = vrot.slane %v7807, %v7820
    %v7822 = vcombine.low %v7814, %v7821
    %v7824 = vunpack.c.l.s4 1966171168
    %v7825 = vunpack.c.0.s8 %v7824
    %v7826 = vlaneseq
    %v7827 = vshrl.u32 %v7826, 7
    %v7828 = vsub.s32 %v7825, %v7827
    %v7829 = vrot.slane %v7822, %v7828
    %v7831 = vmul.f32 %v7683, %v7829
    %v7833 = vlaneseq
    %v7834 = vshrl.u32 %v7833, 7
    %v7835 = vsub.s32 0, %v7834
    %v7836 = vrot.slane %v7831, %v7835
    %v7837 = vlaneseq
    %v7838 = vshrl.u32 %v7837, 7
    %v7839 = vsub.s32 1, %v7838
    %v7840 = vrot.slane %v7831, %v7839
    %v7841 = vlaneseq
    %v7842 = vshrl.u32 %v7841, 7
    %v7843 = vsub.s32 2, %v7842
    %v7844 = vrot.slane %v7831, %v7843
    %v7845 = vlaneseq
    %v7846 = vshrl.u32 %v7845, 7
    %v7847 = vsub.s32 3, %v7846
    %v7848 = vrot.slane %v7831, %v7847
    %v7853 = vmul.f32 %v7722, %v7836
    %v7854 = vmul.f32 %v7723, %v7840
    %v7855 = vmul.f32 %v7724, %v7844
    %v7856 = vmul.f32 %v7725, %v7848
    %v7861 = vcombine.low %v7853, %v7854
    %v7862 = vcombine.low %v7855, %v7856
    %v7864 = vunpack.c.l.s4 1966171168
    %v7865 = vunpack.c.0.s8 %v7864
    %v7866 = vlaneseq
    %v7867 = vshrl.u32 %v7866, 7
    %v7868 = vsub.s32 %v7865, %v7867
    %v7869 = vrot.slane %v7861, %v7868
    %v7871 = vunpack.c.l.s4 1966171168
    %v7872 = vunpack.c.0.s8 %v7871
    %v7873 = vlaneseq
    %v7874 = vshrl.u32 %v7873, 7
    %v7875 = vsub.s32 %v7872, %v7874
    %v7876 = vrot.slane %v7862, %v7875
    %v7877 = vcombine.low %v7869, %v7876
    %v7879 = vunpack.c.l.s4 1966171168
    %v7880 = vunpack.c.0.s8 %v7879
    %v7881 = vlaneseq
    %v7882 = vshrl.u32 %v7881, 7
    %v7883 = vsub.s32 %v7880, %v7882
    %v7884 = vrot.slane %v7877, %v7883
    %v7886 = vsub.f32 %v7685, %v7884
    %v7887 = vmul.f32 %v7558, %v7836
    %v7888 = vmul.f32 %v7560, %v7840
    %v7889 = vmul.f32 %v7664, %v7844
    %v7890 = vmul.f32 %v7666, %v7848
    %v7891 = vmul.f32 %v7562, %v7836
    %v7892 = vmul.f32 %v7564, %v7840
    %v7893 = vmul.f32 %v7668, %v7844
    %v7894 = vmul.f32 %v7670, %v7848
    %v7895 = vmul.f32 %v7568, %v7836
    %v7896 = vmul.f32 %v7570, %v7840
    %v7897 = vmul.f32 %v7674, %v7844
    %v7898 = vmul.f32 %v7676, %v7848
    %v7899 = vmul.f32 %v7572, %v7836
    %v7900 = vmul.f32 %v7574, %v7840
    %v7901 = vmul.f32 %v7678, %v7844
    %v7902 = vmul.f32 %v7680, %v7848
    %v7904 = vlaneseq
    %v7905 = vshrl.u32 %v7904, 7
    %v7906 = vsub.s32 0, %v7905
    %v7907 = vrot.slane %v7886, %v7906
    %v7908 = vlaneseq
    %v7909 = vshrl.u32 %v7908, 7
    %v7910 = vsub.s32 1, %v7909
    %v7911 = vrot.slane %v7886, %v7910
    %v7912 = vlaneseq
    %v7913 = vshrl.u32 %v7912, 7
    %v7914 = vsub.s32 2, %v7913
    %v7915 = vrot.slane %v7886, %v7914
    %v7916 = vlaneseq
    %v7917 = vshrl.u32 %v7916, 7
    %v7918 = vsub.s32 3, %v7917
    %v7919 = vrot.slane %v7886, %v7918
    %v7924 = vadd.f32 %v7887, %v7907
    %v7925 = vadd.f32 %v7888, %v7911
    %v7926 = vadd.f32 %v7889, %v7915
    %v7927 = vadd.f32 %v7890, %v7919
    %v7928 = vadd.f32 %v7891, %v7907
    %v7929 = vadd.f32 %v7892, %v7911
    %v7930 = vadd.f32 %v7893, %v7915
    %v7931 = vadd.f32 %v7894, %v7919
    %v7932 = vadd.f32 %v7895, %v7907
    %v7933 = vadd.f32 %v7896, %v7911
    %v7934 = vadd.f32 %v7897, %v7915
    %v7935 = vadd.f32 %v7898, %v7919
    %v7936 = vadd.f32 %v7899, %v7907
    %v7937 = vadd.f32 %v7900, %v7911
    %v7938 = vadd.f32 %v7901, %v7915
    %v7939 = vadd.f32 %v7902, %v7919
    %v7940 = vmax.f32 %v7924, 0.0
    %v7941 = vmax.f32 %v7925, 0.0
    %v7942 = vmax.f32 %v7926, 0.0
    %v7943 = vmax.f32 %v7927, 0.0
    %v7944 = vmax.f32 %v7928, 0.0
    %v7945 = vmax.f32 %v7929, 0.0
    %v7946 = vmax.f32 %v7930, 0.0
    %v7947 = vmax.f32 %v7931, 0.0
    %v7948 = vmax.f32 %v7932, 0.0
    %v7949 = vmax.f32 %v7933, 0.0
    %v7950 = vmax.f32 %v7934, 0.0
    %v7951 = vmax.f32 %v7935, 0.0
    %v7952 = vmax.f32 %v7936, 0.0
    %v7953 = vmax.f32 %v7937, 0.0
    %v7954 = vmax.f32 %v7938, 0.0
    %v7955 = vmax.f32 %v7939, 0.0
    %s7956 = scalar_lea.vmem [#allocation7], 4096
    %v7957 = vld [vmem:[%s7956] sm:$0xff]
    %v7958 = vld [vmem:[%s7956 + $0x8] sm:$0xff]
    %v7959 = vld [vmem:[%s7956 + $0x10] sm:$0xff]
    %v7960 = vld [vmem:[%s7956 + $0x18] sm:$0xff]
    %v7961 = vld [vmem:[%s7956 + $0x20] sm:$0xff]
    %v7962 = vld [vmem:[%s7956 + $0x28] sm:$0xff]
    %v7963 = vld [vmem:[%s7956 + $0x30] sm:$0xff]
    %v7964 = vld [vmem:[%s7956 + $0x38] sm:$0xff]
    %v7965 = vld [vmem:[%s7956 + $0x40] sm:$0xff]
    %v7966 = vld [vmem:[%s7956 + $0x48] sm:$0xff]
    %v7967 = vld [vmem:[%s7956 + $0x50] sm:$0xff]
    %v7968 = vld [vmem:[%s7956 + $0x58] sm:$0xff]
    %v7969 = vld [vmem:[%s7956 + $0x60] sm:$0xff]
    %v7970 = vld [vmem:[%s7956 + $0x68] sm:$0xff]
    %v7971 = vld [vmem:[%s7956 + $0x70] sm:$0xff]
    %v7972 = vld [vmem:[%s7956 + $0x78] sm:$0xff]
    %v7973 = vld [vmem:[%s7956 + $0x80] sm:$0xff]
    %v7974 = vld [vmem:[%s7956 + $0x88] sm:$0xff]
    %v7975 = vld [vmem:[%s7956 + $0x90] sm:$0xff]
    %v7976 = vld [vmem:[%s7956 + $0x98] sm:$0xff]
    %v7977 = vld [vmem:[%s7956 + $0xa0] sm:$0xff]
    %v7978 = vld [vmem:[%s7956 + $0xa8] sm:$0xff]
    %v7979 = vld [vmem:[%s7956 + $0xb0] sm:$0xff]
    %v7980 = vld [vmem:[%s7956 + $0xb8] sm:$0xff]
    %v7981 = vld [vmem:[%s7956 + $0xc0] sm:$0xff]
    %v7982 = vld [vmem:[%s7956 + $0xc8] sm:$0xff]
    %v7983 = vld [vmem:[%s7956 + $0xd0] sm:$0xff]
    %v7984 = vld [vmem:[%s7956 + $0xd8] sm:$0xff]
    %v7985 = vld [vmem:[%s7956 + $0xe0] sm:$0xff]
    %v7986 = vld [vmem:[%s7956 + $0xe8] sm:$0xff]
    %v7987 = vld [vmem:[%s7956 + $0xf0] sm:$0xff]
    %v7988 = vld [vmem:[%s7956 + $0xf8] sm:$0xff]
    %v7989 = vld [vmem:[%s7956 + $0x100] sm:$0xff]
    %v7990 = vld [vmem:[%s7956 + $0x108] sm:$0xff]
    %v7991 = vld [vmem:[%s7956 + $0x110] sm:$0xff]
    %v7992 = vld [vmem:[%s7956 + $0x118] sm:$0xff]
    %v7993 = vld [vmem:[%s7956 + $0x120] sm:$0xff]
    %v7994 = vld [vmem:[%s7956 + $0x128] sm:$0xff]
    %v7995 = vld [vmem:[%s7956 + $0x130] sm:$0xff]
    %v7996 = vld [vmem:[%s7956 + $0x138] sm:$0xff]
    %v7997 = vld [vmem:[%s7956 + $0x140] sm:$0xff]
    %v7998 = vld [vmem:[%s7956 + $0x148] sm:$0xff]
    %v7999 = vld [vmem:[%s7956 + $0x150] sm:$0xff]
    %v8000 = vld [vmem:[%s7956 + $0x158] sm:$0xff]
    %v8001 = vld [vmem:[%s7956 + $0x160] sm:$0xff]
    %v8002 = vld [vmem:[%s7956 + $0x168] sm:$0xff]
    %v8003 = vld [vmem:[%s7956 + $0x170] sm:$0xff]
    %v8004 = vld [vmem:[%s7956 + $0x178] sm:$0xff]
    %v8005 = vld [vmem:[%s7956 + $0x180] sm:$0xff]
    %v8006 = vld [vmem:[%s7956 + $0x188] sm:$0xff]
    %v8007 = vld [vmem:[%s7956 + $0x190] sm:$0xff]
    %v8008 = vld [vmem:[%s7956 + $0x198] sm:$0xff]
    %v8009 = vld [vmem:[%s7956 + $0x1a0] sm:$0xff]
    %v8010 = vld [vmem:[%s7956 + $0x1a8] sm:$0xff]
    %v8011 = vld [vmem:[%s7956 + $0x1b0] sm:$0xff]
    %v8012 = vld [vmem:[%s7956 + $0x1b8] sm:$0xff]
    %v8013 = vld [vmem:[%s7956 + $0x1c0] sm:$0xff]
    %v8014 = vld [vmem:[%s7956 + $0x1c8] sm:$0xff]
    %v8015 = vld [vmem:[%s7956 + $0x1d0] sm:$0xff]
    %v8016 = vld [vmem:[%s7956 + $0x1d8] sm:$0xff]
    %v8017 = vld [vmem:[%s7956 + $0x1e0] sm:$0xff]
    %v8018 = vld [vmem:[%s7956 + $0x1e8] sm:$0xff]
    %v8019 = vld [vmem:[%s7956 + $0x1f0] sm:$0xff]
    %v8020 = vld [vmem:[%s7956 + $0x1f8] sm:$0xff]
    %v8021 = vld [vmem:[%s7956 + $0x200] sm:$0xff]
    %v8022 = vld [vmem:[%s7956 + $0x208] sm:$0xff]
    %v8023 = vld [vmem:[%s7956 + $0x210] sm:$0xff]
    %v8024 = vld [vmem:[%s7956 + $0x218] sm:$0xff]
    %v8025 = vld [vmem:[%s7956 + $0x220] sm:$0xff]
    %v8026 = vld [vmem:[%s7956 + $0x228] sm:$0xff]
    %v8027 = vld [vmem:[%s7956 + $0x230] sm:$0xff]
    %v8028 = vld [vmem:[%s7956 + $0x238] sm:$0xff]
    %v8029 = vld [vmem:[%s7956 + $0x240] sm:$0xff]
    %v8030 = vld [vmem:[%s7956 + $0x248] sm:$0xff]
    %v8031 = vld [vmem:[%s7956 + $0x250] sm:$0xff]
    %v8032 = vld [vmem:[%s7956 + $0x258] sm:$0xff]
    %v8033 = vld [vmem:[%s7956 + $0x260] sm:$0xff]
    %v8034 = vld [vmem:[%s7956 + $0x268] sm:$0xff]
    %v8035 = vld [vmem:[%s7956 + $0x270] sm:$0xff]
    %v8036 = vld [vmem:[%s7956 + $0x278] sm:$0xff]
    %v8037 = vld [vmem:[%s7956 + $0x280] sm:$0xff]
    %v8038 = vld [vmem:[%s7956 + $0x288] sm:$0xff]
    %v8039 = vld [vmem:[%s7956 + $0x290] sm:$0xff]
    %v8040 = vld [vmem:[%s7956 + $0x298] sm:$0xff]
    %v8041 = vld [vmem:[%s7956 + $0x2a0] sm:$0xff]
    %v8042 = vld [vmem:[%s7956 + $0x2a8] sm:$0xff]
    %v8043 = vld [vmem:[%s7956 + $0x2b0] sm:$0xff]
    %v8044 = vld [vmem:[%s7956 + $0x2b8] sm:$0xff]
    %v8045 = vld [vmem:[%s7956 + $0x2c0] sm:$0xff]
    %v8046 = vld [vmem:[%s7956 + $0x2c8] sm:$0xff]
    %v8047 = vld [vmem:[%s7956 + $0x2d0] sm:$0xff]
    %v8048 = vld [vmem:[%s7956 + $0x2d8] sm:$0xff]
    %v8049 = vld [vmem:[%s7956 + $0x2e0] sm:$0xff]
    %v8050 = vld [vmem:[%s7956 + $0x2e8] sm:$0xff]
    %v8051 = vld [vmem:[%s7956 + $0x2f0] sm:$0xff]
    %v8052 = vld [vmem:[%s7956 + $0x2f8] sm:$0xff]
    %v8053 = vld [vmem:[%s7956 + $0x300] sm:$0xff]
    %v8054 = vld [vmem:[%s7956 + $0x308] sm:$0xff]
    %v8055 = vld [vmem:[%s7956 + $0x310] sm:$0xff]
    %v8056 = vld [vmem:[%s7956 + $0x318] sm:$0xff]
    %v8057 = vld [vmem:[%s7956 + $0x320] sm:$0xff]
    %v8058 = vld [vmem:[%s7956 + $0x328] sm:$0xff]
    %v8059 = vld [vmem:[%s7956 + $0x330] sm:$0xff]
    %v8060 = vld [vmem:[%s7956 + $0x338] sm:$0xff]
    %v8061 = vld [vmem:[%s7956 + $0x340] sm:$0xff]
    %v8062 = vld [vmem:[%s7956 + $0x348] sm:$0xff]
    %v8063 = vld [vmem:[%s7956 + $0x350] sm:$0xff]
    %v8064 = vld [vmem:[%s7956 + $0x358] sm:$0xff]
    %v8065 = vld [vmem:[%s7956 + $0x360] sm:$0xff]
    %v8066 = vld [vmem:[%s7956 + $0x368] sm:$0xff]
    %v8067 = vld [vmem:[%s7956 + $0x370] sm:$0xff]
    %v8068 = vld [vmem:[%s7956 + $0x378] sm:$0xff]
    %v8069 = vld [vmem:[%s7956 + $0x380] sm:$0xff]
    %v8070 = vld [vmem:[%s7956 + $0x388] sm:$0xff]
    %v8071 = vld [vmem:[%s7956 + $0x390] sm:$0xff]
    %v8072 = vld [vmem:[%s7956 + $0x398] sm:$0xff]
    %v8073 = vld [vmem:[%s7956 + $0x3a0] sm:$0xff]
    %v8074 = vld [vmem:[%s7956 + $0x3a8] sm:$0xff]
    %v8075 = vld [vmem:[%s7956 + $0x3b0] sm:$0xff]
    %v8076 = vld [vmem:[%s7956 + $0x3b8] sm:$0xff]
    %v8077 = vld [vmem:[%s7956 + $0x3c0] sm:$0xff]
    %v8078 = vld [vmem:[%s7956 + $0x3c8] sm:$0xff]
    %v8079 = vld [vmem:[%s7956 + $0x3d0] sm:$0xff]
    %v8080 = vld [vmem:[%s7956 + $0x3d8] sm:$0xff]
    %v8081 = vld [vmem:[%s7956 + $0x3e0] sm:$0xff]
    %v8082 = vld [vmem:[%s7956 + $0x3e8] sm:$0xff]
    %v8083 = vld [vmem:[%s7956 + $0x3f0] sm:$0xff]
    %v8084 = vld [vmem:[%s7956 + $0x3f8] sm:$0xff]
    %v8085 = vpack.c.bf16 %v7944, %v7940
    %v8086 = vpack.c.bf16 %v7945, %v7941
    %v8087 = vpack.c.bf16 %v7946, %v7942
    %v8088 = vpack.c.bf16 %v7947, %v7943
    %v8089 = vpack.c.bf16 %v7952, %v7948
    %v8090 = vpack.c.bf16 %v7953, %v7949
    %v8091 = vpack.c.bf16 %v7954, %v7950
    %v8092 = vpack.c.bf16 %v7955, %v7951
    %8093 = vmatprep.subr.bf16.mxu0 %v7958
    %8094 = vmatpush1.bf16.msra.mxu0 %v7957
    %8095 = vmatprep.subr.bf16.mxu0 %v7962
    %8096 = vmatpush1.bf16.msra.mxu0 %v7961
    %8097 = vmatprep.subr.bf16.mxu0 %v7966
    %8098 = vmatpush1.bf16.msra.mxu0 %v7965
    %8099 = vmatprep.subr.bf16.mxu0 %v7970
    %8100 = vmatpush1.bf16.msra.mxu0 %v7969
    %8101 = vmatprep.subr.bf16.mxu0 %v7974
    %8102 = vmatpush1.bf16.msra.mxu0 %v7973
    %8103 = vmatprep.subr.bf16.mxu0 %v7978
    %8104 = vmatpush1.bf16.msra.mxu0 %v7977
    %8105 = vmatprep.subr.bf16.mxu0 %v7982
    %8106 = vmatpush1.bf16.msra.mxu0 %v7981
    %8107 = vmatprep.subr.bf16.mxu0 %v7986
    %8108 = vmatpush1.bf16.msra.mxu0 %v7985
    %8109 = vmatprep.subr.bf16.mxu0 %v7990
    %8110 = vmatpush1.bf16.msra.mxu0 %v7989
    %8111 = vmatprep.subr.bf16.mxu0 %v7994
    %8112 = vmatpush1.bf16.msra.mxu0 %v7993
    %8113 = vmatprep.subr.bf16.mxu0 %v7998
    %8114 = vmatpush1.bf16.msra.mxu0 %v7997
    %8115 = vmatprep.subr.bf16.mxu0 %v8002
    %8116 = vmatpush1.bf16.msra.mxu0 %v8001
    %8117 = vmatprep.subr.bf16.mxu0 %v8006
    %8118 = vmatpush1.bf16.msra.mxu0 %v8005
    %8119 = vmatprep.subr.bf16.mxu0 %v8010
    %8120 = vmatpush1.bf16.msra.mxu0 %v8009
    %8121 = vmatprep.subr.bf16.mxu0 %v8014
    %8122 = vmatpush1.bf16.msra.mxu0 %v8013
    %8123 = vmatprep.subr.bf16.mxu0 %v8018
    %8124 = vmatpush1.bf16.msra.mxu0 %v8017
    %8125 = vmatprep.mubr.bf16.mxu0 %v8086
    %8126 = vmatmul.mubr.bf16.gmra.mrb[0].mxu0 %v8085
    %v8127 = vpop.f32.mrb[0].mxu0
    %v8128 = vadd.f32 0.0, %v8127
    %v8129 = vpop.f32.mrb[0].mxu0
    %v8130 = vadd.f32 0.0, %v8129
    %v8131 = vpop.f32.mrb[0].mxu0
    %v8132 = vadd.f32 0.0, %v8131
    %v8133 = vpop.f32.mrb[0].mxu0
    %v8134 = vadd.f32 0.0, %v8133
    %8135 = vmatprep.mubr.bf16.mxu0 %v8090
    %8136 = vmatmul.mubr.bf16.gmra.mrb[0].mxu0 %v8089
    %v8137 = vpop.f32.mrb[0].mxu0
    %v8138 = vadd.f32 0.0, %v8137
    %v8139 = vpop.f32.mrb[0].mxu0
    %v8140 = vadd.f32 0.0, %v8139
    %v8141 = vpop.f32.mrb[0].mxu0
    %v8142 = vadd.f32 0.0, %v8141
    %v8143 = vpop.f32.mrb[0].mxu0
    %v8144 = vadd.f32 0.0, %v8143
    %8145 = vdwg.mxu0
    %8146 = vmatprep.subr.bf16.mxu0 %v8022
    %8147 = vmatpush1.bf16.msra.mxu0 %v8021
    %8148 = vmatprep.subr.bf16.mxu0 %v8026
    %8149 = vmatpush1.bf16.msra.mxu0 %v8025
    %8150 = vmatprep.subr.bf16.mxu0 %v8030
    %8151 = vmatpush1.bf16.msra.mxu0 %v8029
    %8152 = vmatprep.subr.bf16.mxu0 %v8034
    %8153 = vmatpush1.bf16.msra.mxu0 %v8033
    %8154 = vmatprep.subr.bf16.mxu0 %v8038
    %8155 = vmatpush1.bf16.msra.mxu0 %v8037
    %8156 = vmatprep.subr.bf16.mxu0 %v8042
    %8157 = vmatpush1.bf16.msra.mxu0 %v8041
    %8158 = vmatprep.subr.bf16.mxu0 %v8046
    %8159 = vmatpush1.bf16.msra.mxu0 %v8045
    %8160 = vmatprep.subr.bf16.mxu0 %v8050
    %8161 = vmatpush1.bf16.msra.mxu0 %v8049
    %8162 = vmatprep.subr.bf16.mxu0 %v8054
    %8163 = vmatpush1.bf16.msra.mxu0 %v8053
    %8164 = vmatprep.subr.bf16.mxu0 %v8058
    %8165 = vmatpush1.bf16.msra.mxu0 %v8057
    %8166 = vmatprep.subr.bf16.mxu0 %v8062
    %8167 = vmatpush1.bf16.msra.mxu0 %v8061
    %8168 = vmatprep.subr.bf16.mxu0 %v8066
    %8169 = vmatpush1.bf16.msra.mxu0 %v8065
    %8170 = vmatprep.subr.bf16.mxu0 %v8070
    %8171 = vmatpush1.bf16.msra.mxu0 %v8069
    %8172 = vmatprep.subr.bf16.mxu0 %v8074
    %8173 = vmatpush1.bf16.msra.mxu0 %v8073
    %8174 = vmatprep.subr.bf16.mxu0 %v8078
    %8175 = vmatpush1.bf16.msra.mxu0 %v8077
    %8176 = vmatprep.subr.bf16.mxu0 %v8082
    %8177 = vmatpush1.bf16.msra.mxu0 %v8081
    %8178 = vmatprep.mubr.bf16.mxu0 %v8088
    %8179 = vmatmul.mubr.bf16.gmra.mrb[0].mxu0 %v8087
    %v8180 = vpop.f32.mrb[0].mxu0
    %v8181 = vadd.f32 %v8128, %v8180
    %v8182 = vpop.f32.mrb[0].mxu0
    %v8183 = vadd.f32 %v8130, %v8182
    %v8184 = vpop.f32.mrb[0].mxu0
    %v8185 = vadd.f32 %v8132, %v8184
    %v8186 = vpop.f32.mrb[0].mxu0
    %v8187 = vadd.f32 %v8134, %v8186
    %8188 = vmatprep.mubr.bf16.mxu0 %v8092
    %8189 = vmatmul.mubr.bf16.gmra.mrb[0].mxu0 %v8091
    %v8190 = vpop.f32.mrb[0].mxu0
    %v8191 = vadd.f32 %v8138, %v8190
    %v8192 = vpop.f32.mrb[0].mxu0
    %v8193 = vadd.f32 %v8140, %v8192
    %v8194 = vpop.f32.mrb[0].mxu0
    %v8195 = vadd.f32 %v8142, %v8194
    %v8196 = vpop.f32.mrb[0].mxu0
    %v8197 = vadd.f32 %v8144, %v8196
    %8198 = vdwg.mxu0
    %8199 = vmatprep.subr.bf16.mxu0 %v7960
    %8200 = vmatpush1.bf16.msra.mxu0 %v7959
    %8201 = vmatprep.subr.bf16.mxu0 %v7964
    %8202 = vmatpush1.bf16.msra.mxu0 %v7963
    %8203 = vmatprep.subr.bf16.mxu0 %v7968
    %8204 = vmatpush1.bf16.msra.mxu0 %v7967
    %8205 = vmatprep.subr.bf16.mxu0 %v7972
    %8206 = vmatpush1.bf16.msra.mxu0 %v7971
    %8207 = vmatprep.subr.bf16.mxu0 %v7976
    %8208 = vmatpush1.bf16.msra.mxu0 %v7975
    %8209 = vmatprep.subr.bf16.mxu0 %v7980
    %8210 = vmatpush1.bf16.msra.mxu0 %v7979
    %8211 = vmatprep.subr.bf16.mxu0 %v7984
    %8212 = vmatpush1.bf16.msra.mxu0 %v7983
    %8213 = vmatprep.subr.bf16.mxu0 %v7988
    %8214 = vmatpush1.bf16.msra.mxu0 %v7987
    %8215 = vmatprep.subr.bf16.mxu0 %v7992
    %8216 = vmatpush1.bf16.msra.mxu0 %v7991
    %8217 = vmatprep.subr.bf16.mxu0 %v7996
    %8218 = vmatpush1.bf16.msra.mxu0 %v7995
    %8219 = vmatprep.subr.bf16.mxu0 %v8000
    %8220 = vmatpush1.bf16.msra.mxu0 %v7999
    %8221 = vmatprep.subr.bf16.mxu0 %v8004
    %8222 = vmatpush1.bf16.msra.mxu0 %v8003
    %8223 = vmatprep.subr.bf16.mxu0 %v8008
    %8224 = vmatpush1.bf16.msra.mxu0 %v8007
    %8225 = vmatprep.subr.bf16.mxu0 %v8012
    %8226 = vmatpush1.bf16.msra.mxu0 %v8011
    %8227 = vmatprep.subr.bf16.mxu0 %v8016
    %8228 = vmatpush1.bf16.msra.mxu0 %v8015
    %8229 = vmatprep.subr.bf16.mxu0 %v8020
    %8230 = vmatpush1.bf16.msra.mxu0 %v8019
    %8231 = vmatprep.mubr.bf16.mxu0 %v8086
    %8232 = vmatmul.mubr.bf16.gmra.mrb[0].mxu0 %v8085
    %v8233 = vpop.f32.mrb[0].mxu0
    %v8234 = vadd.f32 0.0, %v8233
    %v8235 = vpop.f32.mrb[0].mxu0
    %v8236 = vadd.f32 0.0, %v8235
    %v8237 = vpop.f32.mrb[0].mxu0
    %v8238 = vadd.f32 0.0, %v8237
    %v8239 = vpop.f32.mrb[0].mxu0
    %v8240 = vadd.f32 0.0, %v8239
    %8241 = vmatprep.mubr.bf16.mxu0 %v8090
    %8242 = vmatmul.mubr.bf16.gmra.mrb[0].mxu0 %v8089
    %v8243 = vpop.f32.mrb[0].mxu0
    %v8244 = vadd.f32 0.0, %v8243
    %v8245 = vpop.f32.mrb[0].mxu0
    %v8246 = vadd.f32 0.0, %v8245
    %v8247 = vpop.f32.mrb[0].mxu0
    %v8248 = vadd.f32 0.0, %v8247
    %v8249 = vpop.f32.mrb[0].mxu0
    %v8250 = vadd.f32 0.0, %v8249
    %8251 = vdwg.mxu0
    %8252 = vmatprep.subr.bf16.mxu0 %v8024
    %8253 = vmatpush1.bf16.msra.mxu0 %v8023
    %8254 = vmatprep.subr.bf16.mxu0 %v8028
    %8255 = vmatpush1.bf16.msra.mxu0 %v8027
    %8256 = vmatprep.subr.bf16.mxu0 %v8032
    %8257 = vmatpush1.bf16.msra.mxu0 %v8031
    %8258 = vmatprep.subr.bf16.mxu0 %v8036
    %8259 = vmatpush1.bf16.msra.mxu0 %v8035
    %8260 = vmatprep.subr.bf16.mxu0 %v8040
    %8261 = vmatpush1.bf16.msra.mxu0 %v8039
    %8262 = vmatprep.subr.bf16.mxu0 %v8044
    %8263 = vmatpush1.bf16.msra.mxu0 %v8043
    %8264 = vmatprep.subr.bf16.mxu0 %v8048
    %8265 = vmatpush1.bf16.msra.mxu0 %v8047
    %8266 = vmatprep.subr.bf16.mxu0 %v8052
    %8267 = vmatpush1.bf16.msra.mxu0 %v8051
    %8268 = vmatprep.subr.bf16.mxu0 %v8056
    %8269 = vmatpush1.bf16.msra.mxu0 %v8055
    %8270 = vmatprep.subr.bf16.mxu0 %v8060
    %8271 = vmatpush1.bf16.msra.mxu0 %v8059
    %8272 = vmatprep.subr.bf16.mxu0 %v8064
    %8273 = vmatpush1.bf16.msra.mxu0 %v8063
    %8274 = vmatprep.subr.bf16.mxu0 %v8068
    %8275 = vmatpush1.bf16.msra.mxu0 %v8067
    %8276 = vmatprep.subr.bf16.mxu0 %v8072
    %8277 = vmatpush1.bf16.msra.mxu0 %v8071
    %8278 = vmatprep.subr.bf16.mxu0 %v8076
    %8279 = vmatpush1.bf16.msra.mxu0 %v8075
    %8280 = vmatprep.subr.bf16.mxu0 %v8080
    %8281 = vmatpush1.bf16.msra.mxu0 %v8079
    %8282 = vmatprep.subr.bf16.mxu0 %v8084
    %8283 = vmatpush1.bf16.msra.mxu0 %v8083
    %8284 = vmatprep.mubr.bf16.mxu0 %v8088
    %8285 = vmatmul.mubr.bf16.gmra.mrb[0].mxu0 %v8087
    %v8286 = vpop.f32.mrb[0].mxu0
    %v8287 = vadd.f32 %v8234, %v8286
    %v8288 = vpop.f32.mrb[0].mxu0
    %v8289 = vadd.f32 %v8236, %v8288
    %v8290 = vpop.f32.mrb[0].mxu0
    %v8291 = vadd.f32 %v8238, %v8290
    %v8292 = vpop.f32.mrb[0].mxu0
    %v8293 = vadd.f32 %v8240, %v8292
    %8294 = vmatprep.mubr.bf16.mxu0 %v8092
    %8295 = vmatmul.mubr.bf16.gmra.mrb[0].mxu0 %v8091
    %v8296 = vpop.f32.mrb[0].mxu0
    %v8297 = vadd.f32 %v8244, %v8296
    %v8298 = vpop.f32.mrb[0].mxu0
    %v8299 = vadd.f32 %v8246, %v8298
    %v8300 = vpop.f32.mrb[0].mxu0
    %v8301 = vadd.f32 %v8248, %v8300
    %v8302 = vpop.f32.mrb[0].mxu0
    %v8303 = vadd.f32 %v8250, %v8302
    %8304 = vdwg.mxu0
    %s8305 = scalar_lea.vmem [#allocation21], 34
    %v8306 = vld [vmem:[%s8305] ss:$8 sm:$0xf]
    %s8307 = scalar_lea.vmem [#allocation21], 35
    %v8308 = vld [vmem:[%s8307] ss:$8 sm:$0xf]
    %v8309 = vadd.f32 %v8181, %v8185
    %v8310 = vadd.f32 %v8309, %v8191
    %v8311 = vadd.f32 %v8310, %v8195
    %v8312 = vrot.slane %v8311, 4
    %v8313 = vadd.f32 %v8311, %v8312
    %v8314 = vrot.slane %v8313, 2
    %v8315 = vadd.f32 %v8313, %v8314
    %v8316 = vrot.slane %v8315, 1
    %v8317 = vadd.f32 %v8315, %v8316
    %v8318 = vadd.f32 %v8183, %v8187
    %v8319 = vadd.f32 %v8318, %v8193
    %v8320 = vadd.f32 %v8319, %v8197
    %v8321 = vrot.slane %v8320, 4
    %v8322 = vadd.f32 %v8320, %v8321
    %v8323 = vrot.slane %v8322, 2
    %v8324 = vadd.f32 %v8322, %v8323
    %v8325 = vrot.slane %v8324, 1
    %v8326 = vadd.f32 %v8324, %v8325
    %v8327 = vadd.f32 %v8287, %v8291
    %v8328 = vadd.f32 %v8327, %v8297
    %v8329 = vadd.f32 %v8328, %v8301
    %v8330 = vrot.slane %v8329, 4
    %v8331 = vadd.f32 %v8329, %v8330
    %v8332 = vrot.slane %v8331, 2
    %v8333 = vadd.f32 %v8331, %v8332
    %v8334 = vrot.slane %v8333, 1
    %v8335 = vadd.f32 %v8333, %v8334
    %v8336 = vadd.f32 %v8289, %v8293
    %v8337 = vadd.f32 %v8336, %v8299
    %v8338 = vadd.f32 %v8337, %v8303
    %v8339 = vrot.slane %v8338, 4
    %v8340 = vadd.f32 %v8338, %v8339
    %v8341 = vrot.slane %v8340, 2
    %v8342 = vadd.f32 %v8340, %v8341
    %v8343 = vrot.slane %v8342, 1
    %v8344 = vadd.f32 %v8342, %v8343
    %v8345 = vmul.f32 %v8317, %v394
    %v8346 = vmul.f32 %v8326, %v394
    %v8347 = vmul.f32 %v8335, %v394
    %v8348 = vmul.f32 %v8344, %v394
    %v8349 = vmul.f32 %v8181, %v8181
    %v8350 = vmul.f32 %v8183, %v8183
    %v8351 = vmul.f32 %v8287, %v8287
    %v8352 = vmul.f32 %v8289, %v8289
    %v8353 = vmul.f32 %v8185, %v8185
    %v8354 = vmul.f32 %v8187, %v8187
    %v8355 = vmul.f32 %v8291, %v8291
    %v8356 = vmul.f32 %v8293, %v8293
    %v8357 = vmul.f32 %v8191, %v8191
    %v8358 = vmul.f32 %v8193, %v8193
    %v8359 = vmul.f32 %v8297, %v8297
    %v8360 = vmul.f32 %v8299, %v8299
    %v8361 = vmul.f32 %v8195, %v8195
    %v8362 = vmul.f32 %v8197, %v8197
    %v8363 = vmul.f32 %v8301, %v8301
    %v8364 = vmul.f32 %v8303, %v8303
    %v8365 = vadd.f32 %v8349, %v8353
    %v8366 = vadd.f32 %v8365, %v8357
    %v8367 = vadd.f32 %v8366, %v8361
    %v8368 = vrot.slane %v8367, 4
    %v8369 = vadd.f32 %v8367, %v8368
    %v8370 = vrot.slane %v8369, 2
    %v8371 = vadd.f32 %v8369, %v8370
    %v8372 = vrot.slane %v8371, 1
    %v8373 = vadd.f32 %v8371, %v8372
    %v8374 = vadd.f32 %v8350, %v8354
    %v8375 = vadd.f32 %v8374, %v8358
    %v8376 = vadd.f32 %v8375, %v8362
    %v8377 = vrot.slane %v8376, 4
    %v8378 = vadd.f32 %v8376, %v8377
    %v8379 = vrot.slane %v8378, 2
    %v8380 = vadd.f32 %v8378, %v8379
    %v8381 = vrot.slane %v8380, 1
    %v8382 = vadd.f32 %v8380, %v8381
    %v8383 = vadd.f32 %v8351, %v8355
    %v8384 = vadd.f32 %v8383, %v8359
    %v8385 = vadd.f32 %v8384, %v8363
    %v8386 = vrot.slane %v8385, 4
    %v8387 = vadd.f32 %v8385, %v8386
    %v8388 = vrot.slane %v8387, 2
    %v8389 = vadd.f32 %v8387, %v8388
    %v8390 = vrot.slane %v8389, 1
    %v8391 = vadd.f32 %v8389, %v8390
    %v8392 = vadd.f32 %v8352, %v8356
    %v8393 = vadd.f32 %v8392, %v8360
    %v8394 = vadd.f32 %v8393, %v8364
    %v8395 = vrot.slane %v8394, 4
    %v8396 = vadd.f32 %v8394, %v8395
    %v8397 = vrot.slane %v8396, 2
    %v8398 = vadd.f32 %v8396, %v8397
    %v8399 = vrot.slane %v8398, 1
    %v8400 = vadd.f32 %v8398, %v8399
    %v8401 = vmul.f32 %v8373, %v394
    %v8402 = vmul.f32 %v8382, %v394
    %v8403 = vmul.f32 %v8391, %v394
    %v8404 = vmul.f32 %v8400, %v394
    %v8405 = vmul.f32 %v8345, %v8345
    %v8406 = vmul.f32 %v8346, %v8346
    %v8407 = vmul.f32 %v8347, %v8347
    %v8408 = vmul.f32 %v8348, %v8348
    %v8409 = vsub.f32 %v8401, %v8405
    %v8410 = vsub.f32 %v8402, %v8406
    %v8411 = vsub.f32 %v8403, %v8407
    %v8412 = vsub.f32 %v8404, %v8408
    %v8413 = vmax.f32 %v8409, 0.0
    %v8414 = vmax.f32 %v8410, 0.0
    %v8415 = vmax.f32 %v8411, 0.0
    %v8416 = vmax.f32 %v8412, 0.0
    %v8417 = vadd.f32 %v8413, 1e-05
    %v8418 = vadd.f32 %v8414, 1e-05
    %v8419 = vadd.f32 %v8415, 1e-05
    %v8420 = vadd.f32 %v8416, 1e-05
    %v8421 = vrsqrt.pop %v8417
    %v8422 = vrsqrt.pop %v8418
    %v8423 = vrsqrt.pop %v8419
    %v8424 = vrsqrt.pop %v8420
    %v8429 = vcombine.low %v8421, %v8422
    %v8430 = vcombine.low %v8423, %v8424
    %v8432 = vunpack.c.l.s4 1966171168
    %v8433 = vunpack.c.0.s8 %v8432
    %v8434 = vlaneseq
    %v8435 = vshrl.u32 %v8434, 7
    %v8436 = vsub.s32 %v8433, %v8435
    %v8437 = vrot.slane %v8429, %v8436
    %v8439 = vunpack.c.l.s4 1966171168
    %v8440 = vunpack.c.0.s8 %v8439
    %v8441 = vlaneseq
    %v8442 = vshrl.u32 %v8441, 7
    %v8443 = vsub.s32 %v8440, %v8442
    %v8444 = vrot.slane %v8430, %v8443
    %v8445 = vcombine.low %v8437, %v8444
    %v8447 = vunpack.c.l.s4 1966171168
    %v8448 = vunpack.c.0.s8 %v8447
    %v8449 = vlaneseq
    %v8450 = vshrl.u32 %v8449, 7
    %v8451 = vsub.s32 %v8448, %v8450
    %v8452 = vrot.slane %v8445, %v8451
    %v8454 = vmul.f32 %v8306, %v8452
    %v8456 = vlaneseq
    %v8457 = vshrl.u32 %v8456, 7
    %v8458 = vsub.s32 0, %v8457
    %v8459 = vrot.slane %v8454, %v8458
    %v8460 = vlaneseq
    %v8461 = vshrl.u32 %v8460, 7
    %v8462 = vsub.s32 1, %v8461
    %v8463 = vrot.slane %v8454, %v8462
    %v8464 = vlaneseq
    %v8465 = vshrl.u32 %v8464, 7
    %v8466 = vsub.s32 2, %v8465
    %v8467 = vrot.slane %v8454, %v8466
    %v8468 = vlaneseq
    %v8469 = vshrl.u32 %v8468, 7
    %v8470 = vsub.s32 3, %v8469
    %v8471 = vrot.slane %v8454, %v8470
    %v8476 = vmul.f32 %v8345, %v8459
    %v8477 = vmul.f32 %v8346, %v8463
    %v8478 = vmul.f32 %v8347, %v8467
    %v8479 = vmul.f32 %v8348, %v8471
    %v8484 = vcombine.low %v8476, %v8477
    %v8485 = vcombine.low %v8478, %v8479
    %v8487 = vunpack.c.l.s4 1966171168
    %v8488 = vunpack.c.0.s8 %v8487
    %v8489 = vlaneseq
    %v8490 = vshrl.u32 %v8489, 7
    %v8491 = vsub.s32 %v8488, %v8490
    %v8492 = vrot.slane %v8484, %v8491
    %v8494 = vunpack.c.l.s4 1966171168
    %v8495 = vunpack.c.0.s8 %v8494
    %v8496 = vlaneseq
    %v8497 = vshrl.u32 %v8496, 7
    %v8498 = vsub.s32 %v8495, %v8497
    %v8499 = vrot.slane %v8485, %v8498
    %v8500 = vcombine.low %v8492, %v8499
    %v8502 = vunpack.c.l.s4 1966171168
    %v8503 = vunpack.c.0.s8 %v8502
    %v8504 = vlaneseq
    %v8505 = vshrl.u32 %v8504, 7
    %v8506 = vsub.s32 %v8503, %v8505
    %v8507 = vrot.slane %v8500, %v8506
    %v8509 = vsub.f32 %v8308, %v8507
    %v8510 = vmul.f32 %v8181, %v8459
    %v8511 = vmul.f32 %v8183, %v8463
    %v8512 = vmul.f32 %v8287, %v8467
    %v8513 = vmul.f32 %v8289, %v8471
    %v8514 = vmul.f32 %v8185, %v8459
    %v8515 = vmul.f32 %v8187, %v8463
    %v8516 = vmul.f32 %v8291, %v8467
    %v8517 = vmul.f32 %v8293, %v8471
    %v8518 = vmul.f32 %v8191, %v8459
    %v8519 = vmul.f32 %v8193, %v8463
    %v8520 = vmul.f32 %v8297, %v8467
    %v8521 = vmul.f32 %v8299, %v8471
    %v8522 = vmul.f32 %v8195, %v8459
    %v8523 = vmul.f32 %v8197, %v8463
    %v8524 = vmul.f32 %v8301, %v8467
    %v8525 = vmul.f32 %v8303, %v8471
    %v8527 = vlaneseq
    %v8528 = vshrl.u32 %v8527, 7
    %v8529 = vsub.s32 0, %v8528
    %v8530 = vrot.slane %v8509, %v8529
    %v8531 = vlaneseq
    %v8532 = vshrl.u32 %v8531, 7
    %v8533 = vsub.s32 1, %v8532
    %v8534 = vrot.slane %v8509, %v8533
    %v8535 = vlaneseq
    %v8536 = vshrl.u32 %v8535, 7
    %v8537 = vsub.s32 2, %v8536
    %v8538 = vrot.slane %v8509, %v8537
    %v8539 = vlaneseq
    %v8540 = vshrl.u32 %v8539, 7
    %v8541 = vsub.s32 3, %v8540
    %v8542 = vrot.slane %v8509, %v8541
    %v8547 = vadd.f32 %v8510, %v8530
    %v8548 = vadd.f32 %v8511, %v8534
    %v8549 = vadd.f32 %v8512, %v8538
    %v8550 = vadd.f32 %v8513, %v8542
    %v8551 = vadd.f32 %v8514, %v8530
    %v8552 = vadd.f32 %v8515, %v8534
    %v8553 = vadd.f32 %v8516, %v8538
    %v8554 = vadd.f32 %v8517, %v8542
    %v8555 = vadd.f32 %v8518, %v8530
    %v8556 = vadd.f32 %v8519, %v8534
    %v8557 = vadd.f32 %v8520, %v8538
    %v8558 = vadd.f32 %v8521, %v8542
    %v8559 = vadd.f32 %v8522, %v8530
    %v8560 = vadd.f32 %v8523, %v8534
    %v8561 = vadd.f32 %v8524, %v8538
    %v8562 = vadd.f32 %v8525, %v8542
    %v8563 = vld [vmem:[%s1] sm:$0x1]
    %v8564 = vpack.c.bf16 %v8551, %v8547
    %v8565 = vpack.c.bf16 %v8552, %v8548
    %v8566 = vpack.c.bf16 %v8553, %v8549
    %v8567 = vpack.c.bf16 %v8554, %v8550
    %v8568 = vpack.c.bf16 %v8559, %v8555
    %v8569 = vpack.c.bf16 %v8560, %v8556
    %v8570 = vpack.c.bf16 %v8561, %v8557
    %v8571 = vpack.c.bf16 %v8562, %v8558
    %vm8572 = vcmask 261120
    %v8574 = vsel %vm8572, %v8563, 0
    %8576 = vmatprep.subr.bf16.mxu0 %v8565
    %8577 = vmatpush1.bf16.msra.mxu0 %v8564
    %8578 = vmatprep.subr.bf16.mxu0 %v8569
    %8579 = vmatpush1.bf16.msra.mxu0 %v8568
    %8580 = vmatprep.subr.bf16.mxu0 0
    %8581 = vmatpush1.bf16.msra.mxu0 0
    %8582 = vmatprep.subr.bf16.mxu0 0
    %8583 = vmatpush1.bf16.msra.mxu0 0
    %8584 = vmatprep.subr.bf16.mxu0 0
    %8585 = vmatpush1.bf16.msra.mxu0 0
    %8586 = vmatprep.subr.bf16.mxu0 0
    %8587 = vmatpush1.bf16.msra.mxu0 0
    %8588 = vmatprep.subr.bf16.mxu0 0
    %8589 = vmatpush1.bf16.msra.mxu0 0
    %8590 = vmatprep.subr.bf16.mxu0 0
    %8591 = vmatpush1.bf16.msra.mxu0 0
    %8592 = vmatprep.subr.bf16.mxu0 0
    %8593 = vmatpush1.bf16.msra.mxu0 0
    %8594 = vmatprep.subr.bf16.mxu0 0
    %8595 = vmatpush1.bf16.msra.mxu0 0
    %8596 = vmatprep.subr.bf16.mxu0 0
    %8597 = vmatpush1.bf16.msra.mxu0 0
    %8598 = vmatprep.subr.bf16.mxu0 0
    %8599 = vmatpush1.bf16.msra.mxu0 0
    %8600 = vmatprep.subr.bf16.mxu0 0
    %8601 = vmatpush1.bf16.msra.mxu0 0
    %8602 = vmatprep.subr.bf16.mxu0 0
    %8603 = vmatpush1.bf16.msra.mxu0 0
    %8604 = vmatprep.subr.bf16.mxu0 0
    %8605 = vmatpush1.bf16.msra.mxu0 0
    %8606 = vmatprep.subr.bf16.mxu0 0
    %8607 = vmatpush1.bf16.msra.mxu0 0
    %8608 = vmatprep.mubr.bf16.mxu0 0
    %8609 = vmatmul.mubr.bf16.gmra.mrb[0].mxu0 %v8574
    %v8610 = vpop.f32.mrb[0].mxu0
    %v8611 = vadd.f32 0.0, %v8610
    %v8612 = vpop.f32.mrb[0].mxu0
    %v8613 = vadd.f32 0.0, %v8612
    %v8614 = vpop.f32.mrb[0].mxu0
    %v8615 = vpop.f32.mrb[0].mxu0
    %8616 = vdwg.mxu0
    %8617 = vmatprep.subr.bf16.mxu0 %v8567
    %8618 = vmatpush1.bf16.msra.mxu0 %v8566
    %8619 = vmatprep.subr.bf16.mxu0 %v8571
    %8620 = vmatpush1.bf16.msra.mxu0 %v8570
    %8621 = vmatprep.subr.bf16.mxu0 0
    %8622 = vmatpush1.bf16.msra.mxu0 0
    %8623 = vmatprep.subr.bf16.mxu0 0
    %8624 = vmatpush1.bf16.msra.mxu0 0
    %8625 = vmatprep.subr.bf16.mxu0 0
    %8626 = vmatpush1.bf16.msra.mxu0 0
    %8627 = vmatprep.subr.bf16.mxu0 0
    %8628 = vmatpush1.bf16.msra.mxu0 0
    %8629 = vmatprep.subr.bf16.mxu0 0
    %8630 = vmatpush1.bf16.msra.mxu0 0
    %8631 = vmatprep.subr.bf16.mxu0 0
    %8632 = vmatpush1.bf16.msra.mxu0 0
    %8633 = vmatprep.subr.bf16.mxu0 0
    %8634 = vmatpush1.bf16.msra.mxu0 0
    %8635 = vmatprep.subr.bf16.mxu0 0
    %8636 = vmatpush1.bf16.msra.mxu0 0
    %8637 = vmatprep.subr.bf16.mxu0 0
    %8638 = vmatpush1.bf16.msra.mxu0 0
    %8639 = vmatprep.subr.bf16.mxu0 0
    %8640 = vmatpush1.bf16.msra.mxu0 0
    %8641 = vmatprep.subr.bf16.mxu0 0
    %8642 = vmatpush1.bf16.msra.mxu0 0
    %8643 = vmatprep.subr.bf16.mxu0 0
    %8644 = vmatpush1.bf16.msra.mxu0 0
    %8645 = vmatprep.subr.bf16.mxu0 0
    %8646 = vmatpush1.bf16.msra.mxu0 0
    %8647 = vmatprep.subr.bf16.mxu0 0
    %8648 = vmatpush1.bf16.msra.mxu0 0
    %8649 = vmatprep.mubr.bf16.mxu0 0
    %8650 = vmatmul.mubr.bf16.gmra.mrb[0].mxu0 %v8574
    %v8651 = vpop.f32.mrb[0].mxu0
    %v8652 = vadd.f32 0.0, %v8651
    %v8653 = vpop.f32.mrb[0].mxu0
    %v8654 = vadd.f32 0.0, %v8653
    %v8655 = vpop.f32.mrb[0].mxu0
    %v8656 = vpop.f32.mrb[0].mxu0
    %8657 = vdwg.mxu0
    %v8658 = vpack.c.bf16 %v8611, %v8611
    %v8659 = vpack.c.bf16 %v8613, %v8613
    %v8660 = vpack.c.bf16 %v8652, %v8652
    %v8661 = vpack.c.bf16 %v8654, %v8654
    %v8662 = vld [vmem:[#allocation23] sm:$0xf]
    %v8663 = vld [vmem:[#allocation23 + $0x4] sm:$0xf]
    %v8664 = vld [vmem:[#allocation23 + $0x8] sm:$0xf]
    %v8665 = vld [vmem:[#allocation23 + $0xc] sm:$0xf]
    %v8666 = vld [vmem:[#allocation23 + $0x10] sm:$0xf]
    %v8667 = vld [vmem:[#allocation23 + $0x14] sm:$0xf]
    %v8668 = vld [vmem:[#allocation23 + $0x18] sm:$0xf]
    %v8669 = vld [vmem:[#allocation23 + $0x1c] sm:$0xf]
    %v8670 = vld [vmem:[#allocation23 + $0x20] sm:$0xf]
    %v8671 = vld [vmem:[#allocation23 + $0x24] sm:$0xf]
    %v8672 = vld [vmem:[#allocation23 + $0x28] sm:$0xf]
    %v8673 = vld [vmem:[#allocation23 + $0x2c] sm:$0xf]
    %v8674 = vld [vmem:[#allocation23 + $0x30] sm:$0xf]
    %v8675 = vld [vmem:[#allocation23 + $0x34] sm:$0xf]
    %v8676 = vld [vmem:[#allocation23 + $0x38] sm:$0xf]
    %v8677 = vld [vmem:[#allocation23 + $0x3c] sm:$0xf]
    %v8678 = vld [vmem:[#allocation23 + $0x40] sm:$0xf]
    %v8679 = vld [vmem:[#allocation23 + $0x44] sm:$0xf]
    %v8680 = vld [vmem:[#allocation23 + $0x48] sm:$0xf]
    %v8681 = vld [vmem:[#allocation23 + $0x4c] sm:$0xf]
    %v8682 = vld [vmem:[#allocation23 + $0x50] sm:$0xf]
    %v8683 = vld [vmem:[#allocation23 + $0x54] sm:$0xf]
    %v8684 = vld [vmem:[#allocation23 + $0x58] sm:$0xf]
    %v8685 = vld [vmem:[#allocation23 + $0x5c] sm:$0xf]
    %v8686 = vld [vmem:[#allocation23 + $0x60] sm:$0xf]
    %v8687 = vld [vmem:[#allocation23 + $0x64] sm:$0xf]
    %v8688 = vld [vmem:[#allocation23 + $0x68] sm:$0xf]
    %v8689 = vld [vmem:[#allocation23 + $0x6c] sm:$0xf]
    %v8690 = vld [vmem:[#allocation23 + $0x70] sm:$0xf]
    %v8691 = vld [vmem:[#allocation23 + $0x74] sm:$0xf]
    %v8692 = vld [vmem:[#allocation23 + $0x78] sm:$0xf]
    %v8693 = vld [vmem:[#allocation23 + $0x7c] sm:$0xf]
    %v8694 = vld [vmem:[#allocation23 + $0x80] sm:$0xf]
    %v8695 = vld [vmem:[#allocation23 + $0x84] sm:$0xf]
    %v8696 = vld [vmem:[#allocation23 + $0x88] sm:$0xf]
    %v8697 = vld [vmem:[#allocation23 + $0x8c] sm:$0xf]
    %v8698 = vld [vmem:[#allocation23 + $0x90] sm:$0xf]
    %v8699 = vld [vmem:[#allocation23 + $0x94] sm:$0xf]
    %v8700 = vld [vmem:[#allocation23 + $0x98] sm:$0xf]
    %v8701 = vld [vmem:[#allocation23 + $0x9c] sm:$0xf]
    %v8702 = vld [vmem:[#allocation23 + $0xa0] sm:$0xf]
    %v8703 = vld [vmem:[#allocation23 + $0xa4] sm:$0xf]
    %v8704 = vld [vmem:[#allocation23 + $0xa8] sm:$0xf]
    %v8705 = vld [vmem:[#allocation23 + $0xac] sm:$0xf]
    %v8706 = vld [vmem:[#allocation23 + $0xb0] sm:$0xf]
    %v8707 = vld [vmem:[#allocation23 + $0xb4] sm:$0xf]
    %v8708 = vld [vmem:[#allocation23 + $0xb8] sm:$0xf]
    %v8709 = vld [vmem:[#allocation23 + $0xbc] sm:$0xf]
    %v8710 = vld [vmem:[#allocation23 + $0xc0] sm:$0xf]
    %v8711 = vld [vmem:[#allocation23 + $0xc4] sm:$0xf]
    %v8712 = vld [vmem:[#allocation23 + $0xc8] sm:$0xf]
    %v8713 = vld [vmem:[#allocation23 + $0xcc] sm:$0xf]
    %v8714 = vld [vmem:[#allocation23 + $0xd0] sm:$0xf]
    %v8715 = vld [vmem:[#allocation23 + $0xd4] sm:$0xf]
    %v8716 = vld [vmem:[#allocation23 + $0xd8] sm:$0xf]
    %v8717 = vld [vmem:[#allocation23 + $0xdc] sm:$0xf]
    %v8718 = vld [vmem:[#allocation23 + $0xe0] sm:$0xf]
    %v8719 = vld [vmem:[#allocation23 + $0xe4] sm:$0xf]
    %v8720 = vld [vmem:[#allocation23 + $0xe8] sm:$0xf]
    %v8721 = vld [vmem:[#allocation23 + $0xec] sm:$0xf]
    %v8722 = vld [vmem:[#allocation23 + $0xf0] sm:$0xf]
    %v8723 = vld [vmem:[#allocation23 + $0xf4] sm:$0xf]
    %v8724 = vld [vmem:[#allocation23 + $0xf8] sm:$0xf]
    %v8725 = vld [vmem:[#allocation23 + $0xfc] sm:$0xf]
    %v8726 = vld [vmem:[#allocation24] sm:$0x1]
    %v8728 = vlaneseq
    %v8729 = vshrl.u32 %v8728, 7
    %v8730 = vsub.s32 0, %v8729
    %v8731 = vrot.slane %v8726, %v8730
    %v8797 = vunpack.c.l.b16 %v8662
    %v8798 = vunpack.c.l.b16 %v8663
    %v8799 = vunpack.c.l.b16 %v8664
    %v8800 = vunpack.c.l.b16 %v8665
    %v8801 = vunpack.c.l.b16 %v8666
    %v8802 = vunpack.c.l.b16 %v8667
    %v8803 = vunpack.c.l.b16 %v8668
    %v8804 = vunpack.c.l.b16 %v8669
    %v8805 = vunpack.c.l.b16 %v8670
    %v8806 = vunpack.c.l.b16 %v8671
    %v8807 = vunpack.c.l.b16 %v8672
    %v8808 = vunpack.c.l.b16 %v8673
    %v8809 = vunpack.c.l.b16 %v8674
    %v8810 = vunpack.c.l.b16 %v8675
    %v8811 = vunpack.c.l.b16 %v8676
    %v8812 = vunpack.c.l.b16 %v8677
    %v8813 = vunpack.c.l.b16 %v8678
    %v8814 = vunpack.c.l.b16 %v8679
    %v8815 = vunpack.c.l.b16 %v8680
    %v8816 = vunpack.c.l.b16 %v8681
    %v8817 = vunpack.c.l.b16 %v8682
    %v8818 = vunpack.c.l.b16 %v8683
    %v8819 = vunpack.c.l.b16 %v8684
    %v8820 = vunpack.c.l.b16 %v8685
    %v8821 = vunpack.c.l.b16 %v8686
    %v8822 = vunpack.c.l.b16 %v8687
    %v8823 = vunpack.c.l.b16 %v8688
    %v8824 = vunpack.c.l.b16 %v8689
    %v8825 = vunpack.c.l.b16 %v8690
    %v8826 = vunpack.c.l.b16 %v8691
    %v8827 = vunpack.c.l.b16 %v8692
    %v8828 = vunpack.c.l.b16 %v8693
    %v8829 = vunpack.c.l.b16 %v8694
    %v8830 = vunpack.c.l.b16 %v8695
    %v8831 = vunpack.c.l.b16 %v8696
    %v8832 = vunpack.c.l.b16 %v8697
    %v8833 = vunpack.c.l.b16 %v8698
    %v8834 = vunpack.c.l.b16 %v8699
    %v8835 = vunpack.c.l.b16 %v8700
    %v8836 = vunpack.c.l.b16 %v8701
    %v8837 = vunpack.c.l.b16 %v8702
    %v8838 = vunpack.c.l.b16 %v8703
    %v8839 = vunpack.c.l.b16 %v8704
    %v8840 = vunpack.c.l.b16 %v8705
    %v8841 = vunpack.c.l.b16 %v8706
    %v8842 = vunpack.c.l.b16 %v8707
    %v8843 = vunpack.c.l.b16 %v8708
    %v8844 = vunpack.c.l.b16 %v8709
    %v8845 = vunpack.c.l.b16 %v8710
    %v8846 = vunpack.c.l.b16 %v8711
    %v8847 = vunpack.c.l.b16 %v8712
    %v8848 = vunpack.c.l.b16 %v8713
    %v8849 = vunpack.c.l.b16 %v8714
    %v8850 = vunpack.c.l.b16 %v8715
    %v8851 = vunpack.c.l.b16 %v8716
    %v8852 = vunpack.c.l.b16 %v8717
    %v8853 = vunpack.c.l.b16 %v8718
    %v8854 = vunpack.c.l.b16 %v8719
    %v8855 = vunpack.c.l.b16 %v8720
    %v8856 = vunpack.c.l.b16 %v8721
    %v8857 = vunpack.c.l.b16 %v8722
    %v8858 = vunpack.c.l.b16 %v8723
    %v8859 = vunpack.c.l.b16 %v8724
    %v8860 = vunpack.c.l.b16 %v8725
    %v8861 = vpack.c.b16 %v8798, %v8797
    %v8862 = vpack.c.b16 %v8800, %v8799
    %v8863 = vpack.c.b16 %v8802, %v8801
    %v8864 = vpack.c.b16 %v8804, %v8803
    %v8865 = vpack.c.b16 %v8806, %v8805
    %v8866 = vpack.c.b16 %v8808, %v8807
    %v8867 = vpack.c.b16 %v8810, %v8809
    %v8868 = vpack.c.b16 %v8812, %v8811
    %v8869 = vpack.c.b16 %v8814, %v8813
    %v8870 = vpack.c.b16 %v8816, %v8815
    %v8871 = vpack.c.b16 %v8818, %v8817
    %v8872 = vpack.c.b16 %v8820, %v8819
    %v8873 = vpack.c.b16 %v8822, %v8821
    %v8874 = vpack.c.b16 %v8824, %v8823
    %v8875 = vpack.c.b16 %v8826, %v8825
    %v8876 = vpack.c.b16 %v8828, %v8827
    %v8877 = vpack.c.b16 %v8830, %v8829
    %v8878 = vpack.c.b16 %v8832, %v8831
    %v8879 = vpack.c.b16 %v8834, %v8833
    %v8880 = vpack.c.b16 %v8836, %v8835
    %v8881 = vpack.c.b16 %v8838, %v8837
    %v8882 = vpack.c.b16 %v8840, %v8839
    %v8883 = vpack.c.b16 %v8842, %v8841
    %v8884 = vpack.c.b16 %v8844, %v8843
    %v8885 = vpack.c.b16 %v8846, %v8845
    %v8886 = vpack.c.b16 %v8848, %v8847
    %v8887 = vpack.c.b16 %v8850, %v8849
    %v8888 = vpack.c.b16 %v8852, %v8851
    %v8889 = vpack.c.b16 %v8854, %v8853
    %v8890 = vpack.c.b16 %v8856, %v8855
    %v8891 = vpack.c.b16 %v8858, %v8857
    %v8892 = vpack.c.b16 %v8860, %v8859
    %8925 = vmatprep.subr.bf16.mxu0 0
    %8926 = vmatpush1.bf16.msra.mxu0 %v8861
    %8927 = vmatprep.subr.bf16.mxu0 0
    %8928 = vmatpush1.bf16.msra.mxu0 %v8862
    %8929 = vmatprep.subr.bf16.mxu0 0
    %8930 = vmatpush1.bf16.msra.mxu0 %v8863
    %8931 = vmatprep.subr.bf16.mxu0 0
    %8932 = vmatpush1.bf16.msra.mxu0 %v8864
    %8933 = vmatprep.subr.bf16.mxu0 0
    %8934 = vmatpush1.bf16.msra.mxu0 %v8865
    %8935 = vmatprep.subr.bf16.mxu0 0
    %8936 = vmatpush1.bf16.msra.mxu0 %v8866
    %8937 = vmatprep.subr.bf16.mxu0 0
    %8938 = vmatpush1.bf16.msra.mxu0 %v8867
    %8939 = vmatprep.subr.bf16.mxu0 0
    %8940 = vmatpush1.bf16.msra.mxu0 %v8868
    %8941 = vmatprep.subr.bf16.mxu0 0
    %8942 = vmatpush1.bf16.msra.mxu0 %v8869
    %8943 = vmatprep.subr.bf16.mxu0 0
    %8944 = vmatpush1.bf16.msra.mxu0 %v8870
    %8945 = vmatprep.subr.bf16.mxu0 0
    %8946 = vmatpush1.bf16.msra.mxu0 %v8871
    %8947 = vmatprep.subr.bf16.mxu0 0
    %8948 = vmatpush1.bf16.msra.mxu0 %v8872
    %8949 = vmatprep.subr.bf16.mxu0 0
    %8950 = vmatpush1.bf16.msra.mxu0 %v8873
    %8951 = vmatprep.subr.bf16.mxu0 0
    %8952 = vmatpush1.bf16.msra.mxu0 %v8874
    %8953 = vmatprep.subr.bf16.mxu0 0
    %8954 = vmatpush1.bf16.msra.mxu0 %v8875
    %8955 = vmatprep.subr.bf16.mxu0 0
    %8956 = vmatpush1.bf16.msra.mxu0 %v8876
    %8957 = vmatprep.mubr.bf16.mxu0 %v8659
    %8958 = vmatmul.mubr.bf16.gmra.mrb[0].mxu0 %v8658
    %v8959 = vpop.f32.mrb[0].mxu0
    %v8960 = vadd.f32 %v8731, %v8959
    %v8961 = vpop.f32.mrb[0].mxu0
    %v8962 = vpop.f32.mrb[0].mxu0
    %v8963 = vpop.f32.mrb[0].mxu0
    %8964 = vdwg.mxu0
    %8965 = vmatprep.subr.bf16.mxu0 0
    %8966 = vmatpush1.bf16.msra.mxu0 %v8877
    %8967 = vmatprep.subr.bf16.mxu0 0
    %8968 = vmatpush1.bf16.msra.mxu0 %v8878
    %8969 = vmatprep.subr.bf16.mxu0 0
    %8970 = vmatpush1.bf16.msra.mxu0 %v8879
    %8971 = vmatprep.subr.bf16.mxu0 0
    %8972 = vmatpush1.bf16.msra.mxu0 %v8880
    %8973 = vmatprep.subr.bf16.mxu0 0
    %8974 = vmatpush1.bf16.msra.mxu0 %v8881
    %8975 = vmatprep.subr.bf16.mxu0 0
    %8976 = vmatpush1.bf16.msra.mxu0 %v8882
    %8977 = vmatprep.subr.bf16.mxu0 0
    %8978 = vmatpush1.bf16.msra.mxu0 %v8883
    %8979 = vmatprep.subr.bf16.mxu0 0
    %8980 = vmatpush1.bf16.msra.mxu0 %v8884
    %8981 = vmatprep.subr.bf16.mxu0 0
    %8982 = vmatpush1.bf16.msra.mxu0 %v8885
    %8983 = vmatprep.subr.bf16.mxu0 0
    %8984 = vmatpush1.bf16.msra.mxu0 %v8886
    %8985 = vmatprep.subr.bf16.mxu0 0
    %8986 = vmatpush1.bf16.msra.mxu0 %v8887
    %8987 = vmatprep.subr.bf16.mxu0 0
    %8988 = vmatpush1.bf16.msra.mxu0 %v8888
    %8989 = vmatprep.subr.bf16.mxu0 0
    %8990 = vmatpush1.bf16.msra.mxu0 %v8889
    %8991 = vmatprep.subr.bf16.mxu0 0
    %8992 = vmatpush1.bf16.msra.mxu0 %v8890
    %8993 = vmatprep.subr.bf16.mxu0 0
    %8994 = vmatpush1.bf16.msra.mxu0 %v8891
    %8995 = vmatprep.subr.bf16.mxu0 0
    %8996 = vmatpush1.bf16.msra.mxu0 %v8892
    %8997 = vmatprep.mubr.bf16.mxu0 %v8661
    %8998 = vmatmul.mubr.bf16.gmra.mrb[0].mxu0 %v8660
    %v8999 = vpop.f32.mrb[0].mxu0
    %v9000 = vadd.f32 %v8960, %v8999
    %v9001 = vpop.f32.mrb[0].mxu0
    %v9002 = vpop.f32.mrb[0].mxu0
    %v9003 = vpop.f32.mrb[0].mxu0
    %9004 = vdwg.mxu0
    %9005 = vst [vmem:[#allocation26] sm:$0x3] %v9000
    // Predicated region
    $region98: #{resnet1d_forward.1} parent=1 // pred_check
      _
    $region99: #{resnet1d_forward.1} parent=1 // pred_check_branch
      %9007 = sbr.rel (0) target = $region101
    $region100: #{resnet1d_forward.1} parent=1 // pred_region
      %s9009 = ssub.s32 32, 32
      %9010 = vsyncadd [#allocation11], %s9009
      %s9012 = sshll.u32 [#allocation26], 4
      %s9013 = int_to_ptr.vmem [resolvable:$true] %s9012
      %9015 = dma.vmem_to_hbm [thread:$0]  %s9013, 32, %s18, [#allocation11]
    $region101: #{resnet1d_forward.1} parent=1 // pred_fallthru
      _
    // Predicated region
    $region102: #{resnet1d_forward.1} parent=1 // pred_check
      _
    $region103: #{resnet1d_forward.1} parent=1 // pred_check_branch
      %9017 = sbr.rel (0) target = $region105
    $region104: #{resnet1d_forward.1} parent=1 // pred_region
      %9018 = dma.done [#allocation11], 32
    $region105: #{resnet1d_forward.1} parent=1 // pred_fallthru
      _
    %9019 = vsyncpa [#allocation10], 1
    %9020 = vsyncpa [#allocation13], 1
    %9021 = vsyncpa [#allocation16], 1
    %9022 = vsyncpa [#allocation19], 1
    %9023 = vsyncpa [#allocation22], 1
    %9024 = vsyncpa [#allocation25], 1
    %9025 = vsyncpa [#allocation11], 1
  %9026 = vsyncmov [#allocation8]
  %s9027 = vpop.sfrf %9026
  %p9028 = scmp.eq.s32.totalorder %s9027, 0
  %p9029 = pneg %p9028
  %9031 = shalt.err (%p9029)
  %s9032 = scalar_lea.sflag [#allocation8], 1
  %9033 = vsyncmov %s9032
  %s9034 = vpop.sfrf %9033
  %p9035 = scmp.eq.s32.totalorder %s9034, 0
  %p9036 = pneg %p9035
  %9038 = shalt.err (%p9036)
  %s9039 = scalar_lea.sflag [#allocation8], 2
  %9040 = vsyncmov %s9039
  %s9041 = vpop.sfrf %9040
  %p9042 = scmp.eq.s32.totalorder %s9041, 0
  %p9043 = pneg %p9042
  %9045 = shalt.err (%p9043)
  %s9046 = scalar_lea.sflag [#allocation8], 3
  %9047 = vsyncmov %s9046
  %s9048 = vpop.sfrf %9047
  %p9049 = scmp.eq.s32.totalorder %s9048, 0
  %p9050 = pneg %p9049
  %9052 = shalt.err (%p9050)
  %s9053 = scalar_lea.sflag [#allocation8], 4
  %9054 = vsyncmov %s9053
  %s9055 = vpop.sfrf %9054
  %p9056 = scmp.eq.s32.totalorder %s9055, 0
  %p9057 = pneg %p9056
  %9059 = shalt.err (%p9057)
  %s9060 = scalar_lea.sflag [#allocation8], 5
  %9061 = vsyncmov %s9060
  %s9062 = vpop.sfrf %9061
  %p9063 = scmp.eq.s32.totalorder %s9062, 0
  %p9064 = pneg %p9063
  %9066 = shalt.err (%p9064)

</llo_original>
